<compile_context>
chip_gen: v6e
topology: v6e:2x2x1
jax: 0.10.0
libtpu: 0.0.40
codegen_flags: <defaults>
</compile_context>

<pallas_src>
import math

import jax
import jax.numpy as jnp
from jax import lax
from jax.experimental import pallas as pl
from jax.experimental.pallas import tpu as pltpu

# ----------------------------- config (small) --------------------------------
B = 2             # batch
C = 3             # RGB channels (CLIP pixel_values)
IMG = 32          # image height = width
PATCH = 8         # patch size (conv kernel = stride)
GRID_HW = IMG // PATCH
NUM_PATCHES = GRID_HW * GRID_HW   # 16
SEQ = NUM_PATCHES + 1             # +1 CLS token -> 17
CPP = C * PATCH * PATCH           # flattened patch size = 192
D = 32            # vision hidden size
HEADS = 4
DH = D // HEADS   # 8
LAYERS = 2
MLP = 4 * D       # 128
PROJ = 16         # shared image/text embedding dim
NUM_TEXTS = 1     # wrapper is built with processor(text=[prompt]) -> one prompt
TGT = 0           # target index into the (single) text logit
LOGIT_SCALE = math.exp(2.6592)    # CLIP logit_scale.exp()
LN_EPS = 1e-5
OUT_PAD = 128     # lane-dense output slab width
ATTN_SCALE = DH ** -0.5
ROWS = B * SEQ    # 34: batch folded into the row dim of every matmul
SLAB_W = 128      # lane width of the constant-parameter slab


# ------------------------- constant-slab layout --------------------------------
def _build_layout():
    """name -> (row offset, rows, cols); every piece starts on an 8-row boundary."""
    layout, cur = {}, 0

    def reg(name, r, c):
        nonlocal cur
        layout[name] = (cur, r, c)
        cur += -(-r // 8) * 8

    reg("patch_w", CPP, D)          # conv weight, (c, kh, kw) flattened
    reg("tok", ROWS, D)             # pos_embed tiled over batch, CLS folded in
    reg("pre_ln", 2, D)             # row0 gamma, row1 beta
    reg("post_ln", 2, D)
    reg("vproj", D, PROJ)
    reg("txt", NUM_TEXTS, PROJ)     # fixed text-tower output (see TODO above)
    for l in range(LAYERS):
        reg(f"ln1_{l}", 2, D)
        reg(f"ln2_{l}", 2, D)
        reg(f"qkv_b_{l}", 1, 3 * D)
        reg(f"o_b_{l}", 1, D)
        reg(f"fc1_b_{l}", 1, MLP)
        reg(f"fc2_b_{l}", 1, D)
        reg(f"qkv_w_{l}", D, 3 * D)
        reg(f"o_w_{l}", D, D)
        reg(f"fc1_w_{l}", D, MLP)
        reg(f"fc2_wT_{l}", D, MLP)  # fc2 stored transposed (lane-dense 32x128)
    return layout, cur


_LAYOUT, SLAB_ROWS = _build_layout()   # SLAB_ROWS == 640 -> 320 KiB f32 slab


def _rd(slab_ref, name):
    """Static slice of the constant slab (free in VMEM)."""
    off, r, c = _LAYOUT[name]
    return slab_ref[off:off + r, 0:c]


# ------------------------------ fused kernel ----------------------------------
def _layer_norm(x, gb):                       # gb: (2, D) -> row0 gamma, row1 beta
    mean = jnp.mean(x, axis=-1, keepdims=True)
    xc = x - mean
    var = jnp.mean(xc * xc, axis=-1, keepdims=True)
    return xc * lax.rsqrt(var + LN_EPS) * gb[0:1, :] + gb[1:2, :]


def _fused_clip_kernel(patch_ref, slab_ref, prob_ref, img_ref):
    """Single invocation: whole vision tower for BOTH images, all state in VMEM."""
    f32 = jnp.float32

    # --- patch embedding (+ CLS + positional embedding) ---
    # Row 0 / row SEQ of patch_ref are zero (CLS slots); the class embedding is
    # folded into the "tok" table (pos_embed tiled over the batch, row0 += cls).
    x = jnp.dot(patch_ref[...], _rd(slab_ref, "patch_w"),
                preferred_element_type=f32) + _rd(slab_ref, "tok")      # (ROWS, D)

    # --- pre layernorm ---
    x = _layer_norm(x, _rd(slab_ref, "pre_ln"))

    for l in range(LAYERS):                   # statically unrolled
        # ---- self-attention block (pre-LN), fused QKV matmul over both images ----
        h = _layer_norm(x, _rd(slab_ref, f"ln1_{l}"))
        qkv = jnp.dot(h, _rd(slab_ref, f"qkv_w_{l}"),
                      preferred_element_type=f32) + _rd(slab_ref, f"qkv_b_{l}")

        # per-(image, head) scores; scores = q @ k^T without materializing k.T
        scores, values = [], []
        for b in range(B):
            qkv_i = qkv[b * SEQ:(b + 1) * SEQ, :]                        # (SEQ, 3D)
            for hd in range(HEADS):
                lo = hd * DH
                q = qkv_i[:, lo:lo + DH]
                k = qkv_i[:, D + lo:D + lo + DH]
                values.append(qkv_i[:, 2 * D + lo:2 * D + lo + DH])
                scores.append(lax.dot_general(q, k, (((1,), (1,)), ((), ())),
                                              preferred_element_type=f32))

        # one batched softmax over all (image, head) pairs
        s = jnp.stack(scores) * ATTN_SCALE                    # (B*HEADS, SEQ, SEQ)
        s = s - jnp.max(s, axis=-1, keepdims=True)
        p = jnp.exp(s)
        p = p * pl.reciprocal(jnp.sum(p, axis=-1, keepdims=True), approx=True)

        # per image: concat head outputs -> single output-projection matmul
        o_w = _rd(slab_ref, f"o_w_{l}")
        attn = []
        for b in range(B):
            heads = [jnp.dot(p[b * HEADS + hd], values[b * HEADS + hd],
                             preferred_element_type=f32)
                     for hd in range(HEADS)]
            cat = jnp.concatenate(heads, axis=-1)                       # (SEQ, D)
            attn.append(jnp.dot(cat, o_w, preferred_element_type=f32))
        x = x + jnp.concatenate(attn, axis=0) + _rd(slab_ref, f"o_b_{l}")

        # ---- MLP block (pre-LN, quick_gelu) ----
        h = _layer_norm(x, _rd(slab_ref, f"ln2_{l}"))
        h = jnp.dot(h, _rd(slab_ref, f"fc1_w_{l}"),
                    preferred_element_type=f32) + _rd(slab_ref, f"fc1_b_{l}")
        h = h * jax.nn.sigmoid(1.702 * h)                               # quick_gelu
        h = lax.dot_general(h, _rd(slab_ref, f"fc2_wT_{l}"),
                            (((1,), (1,)), ((), ())),
                            preferred_element_type=f32) + _rd(slab_ref, f"fc2_b_{l}")
        x = x + h                                                       # residual

    # ---- pooled CLS rows -> post layernorm -> visual projection ----
    pooled = jnp.concatenate([x[b * SEQ:b * SEQ + 1, :] for b in range(B)], axis=0)
    pooled = _layer_norm(pooled, _rd(slab_ref, "post_ln"))              # (B, D)
    img = jnp.dot(pooled, _rd(slab_ref, "vproj"),
                  preferred_element_type=f32)                           # (B, PROJ)

    # ---- CLIP head: L2 normalize, scaled cosine logits, softmax over texts ----
    img = img * lax.rsqrt(jnp.sum(img * img, axis=-1, keepdims=True))
    txt = _rd(slab_ref, "txt")
    txt = txt * lax.rsqrt(jnp.sum(txt * txt, axis=-1, keepdims=True))
    logits = lax.dot_general(img, txt, (((1,), (1,)), ((), ())),
                             preferred_element_type=f32) * LOGIT_SCALE  # (B, T)
    logits = logits - jnp.max(logits, axis=-1, keepdims=True)
    e = jnp.exp(logits)
    probs = e / jnp.sum(e, axis=-1, keepdims=True)     # one tiny exact divide

    # lane-dense (B, 128) store of the selected prob + debug image embedding
    prob_ref[...] = jnp.broadcast_to(probs[:, TGT:TGT + 1], (B, OUT_PAD))
    img_ref[...] = img


# ------------------------------ parameters ------------------------------------
def init_params(key):
    keys = iter(jax.random.split(key, 80))

    def nrm(shape, s=0.02):
        return s * jax.random.normal(next(keys), shape, dtype=jnp.float32)

    layers = []
    for _ in range(LAYERS):
        layers.append(dict(
            ln1_g=jnp.ones((D,), jnp.float32), ln1_b=jnp.zeros((D,), jnp.float32),
            q_w=nrm((D, D)), q_b=nrm((D,)),
            k_w=nrm((D, D)), k_b=nrm((D,)),
            v_w=nrm((D, D)), v_b=nrm((D,)),
            o_w=nrm((D, D)), o_b=nrm((D,)),
            ln2_g=jnp.ones((D,), jnp.float32), ln2_b=jnp.zeros((D,), jnp.float32),
            fc1_w=nrm((D, MLP)), fc1_b=nrm((MLP,)),
            fc2_w=nrm((MLP, D)), fc2_b=nrm((D,)),
        ))

    return dict(
        class_embedding=nrm((D,)),
        patch_w=nrm((CPP, D)),                      # conv weight, (c, kh, kw) flattened
        pos_embed=nrm((SEQ, D)),
        pre_ln_g=jnp.ones((D,), jnp.float32), pre_ln_b=jnp.zeros((D,), jnp.float32),
        post_ln_g=jnp.ones((D,), jnp.float32), post_ln_b=jnp.zeros((D,), jnp.float32),
        visual_proj=nrm((D, PROJ)),                 # Linear(D, PROJ, bias=False)
        text_embeds=nrm((NUM_TEXTS, PROJ), s=1.0),  # fixed text tower output (see TODO)
        layers=layers,
    )


def pack_slab(p):
    """Pack every constant into one lane-dense (SLAB_ROWS, 128) f32 slab."""
    slab = jnp.zeros((SLAB_ROWS, SLAB_W), jnp.float32)

    def put(s, name, arr):
        off, r, c = _LAYOUT[name]
        return s.at[off:off + r, 0:c].set(jnp.asarray(arr, jnp.float32).reshape(r, c))

    tok = p["pos_embed"].at[0].add(p["class_embedding"])    # fold CLS into pos row 0
    tok = jnp.tile(tok, (B, 1))                             # (B*SEQ, D)

    slab = put(slab, "patch_w", p["patch_w"])
    slab = put(slab, "tok", tok)
    slab = put(slab, "pre_ln", jnp.stack([p["pre_ln_g"], p["pre_ln_b"]]))
    slab = put(slab, "post_ln", jnp.stack([p["post_ln_g"], p["post_ln_b"]]))
    slab = put(slab, "vproj", p["visual_proj"])
    slab = put(slab, "txt", p["text_embeds"])
    for l, L in enumerate(p["layers"]):
        slab = put(slab, f"ln1_{l}", jnp.stack([L["ln1_g"], L["ln1_b"]]))
        slab = put(slab, f"ln2_{l}", jnp.stack([L["ln2_g"], L["ln2_b"]]))
        slab = put(slab, f"qkv_b_{l}", jnp.concatenate([L["q_b"], L["k_b"], L["v_b"]]))
        slab = put(slab, f"o_b_{l}", L["o_b"])
        slab = put(slab, f"fc1_b_{l}", L["fc1_b"])
        slab = put(slab, f"fc2_b_{l}", L["fc2_b"])
        slab = put(slab, f"qkv_w_{l}",
                   jnp.concatenate([L["q_w"], L["k_w"], L["v_w"]], axis=1))
        slab = put(slab, f"o_w_{l}", L["o_w"])
        slab = put(slab, f"fc1_w_{l}", L["fc1_w"])
        slab = put(slab, f"fc2_wT_{l}", L["fc2_w"].T)
    return slab


# ------------------------------ forward pass -----------------------------------
@jax.jit
def _forward_impl(pixel_values, slab):
    Bb, Cc, H, W = pixel_values.shape
    assert Bb == B and Cc == C and H == IMG and W == IMG
    gh, gw = H // PATCH, W // PATCH

    # Non-overlapping Conv2d as matmul: tiny fused XLA reshape/transpose/pad in
    # front of the kernel; inner order (c, kh, kw) matches the flattened weight.
    # Rows 0 and SEQ are zero CLS slots (CLS value lives in the "tok" slab block).
    patches = pixel_values.reshape(Bb, Cc, gh, PATCH, gw, PATCH)
    patches = patches.transpose(0, 2, 4, 1, 3, 5).reshape(Bb, gh * gw, CPP)
    patch_rows = jnp.pad(patches, ((0, 0), (1, 0), (0, 0))).reshape(Bb * SEQ, CPP)

    prob_slab, img_embed = pl.pallas_call(
        _fused_clip_kernel,
        out_shape=(jax.ShapeDtypeStruct((Bb, OUT_PAD), jnp.float32),
                   jax.ShapeDtypeStruct((Bb, PROJ), jnp.float32)),
        in_specs=[pl.BlockSpec(memory_space=pltpu.MemorySpace.VMEM),
                  pl.BlockSpec(memory_space=pltpu.MemorySpace.VMEM)],
        out_specs=(pl.BlockSpec(memory_space=pltpu.MemorySpace.VMEM),
                   pl.BlockSpec(memory_space=pltpu.MemorySpace.VMEM)),
    )(patch_rows, slab)

    return prob_slab[:, :1], img_embed            # (B, 1), (B, PROJ)


def clip_vision_wrapper_forward(pixel_values, slab):
    """Equivalent of CLIPVisionWrapper.forward: probs[:, tgt].unsqueeze(1)."""
    return _forward_impl(pixel_values, slab)[0]


# ---------------------- pure-JAX reference (for self-test) ---------------------
def _ref_ln(x, g, b):
    m = jnp.mean(x, axis=-1, keepdims=True)
    xc = x - m
    v = jnp.mean(xc * xc, axis=-1, keepdims=True)
    return xc * lax.rsqrt(v + LN_EPS) * g + b


@jax.jit
def reference_forward(pixel_values, params):
    Bb = pixel_values.shape[0]
    patches = pixel_values.reshape(Bb, C, GRID_HW, PATCH, GRID_HW, PATCH)
    patches = patches.transpose(0, 2, 4, 1, 3, 5).reshape(Bb, NUM_PATCHES, CPP)
    x = patches @ params["patch_w"]
    cls = jnp.broadcast_to(params["class_embedding"], (Bb, 1, D))
    x = jnp.concatenate([cls, x], axis=1) + params["pos_embed"]
    x = _ref_ln(x, params["pre_ln_g"], params["pre_ln_b"])
    for L in params["layers"]:
        h = _ref_ln(x, L["ln1_g"], L["ln1_b"])
        q = (h @ L["q_w"] + L["q_b"]).reshape(Bb, SEQ, HEADS, DH).transpose(0, 2, 1, 3)
        k = (h @ L["k_w"] + L["k_b"]).reshape(Bb, SEQ, HEADS, DH).transpose(0, 2, 1, 3)
        v = (h @ L["v_w"] + L["v_b"]).reshape(Bb, SEQ, HEADS, DH).transpose(0, 2, 1, 3)
        s = jnp.einsum("bhqd,bhkd->bhqk", q, k) * ATTN_SCALE
        p = jax.nn.softmax(s, axis=-1)
        o = jnp.einsum("bhqk,bhkd->bhqd", p, v).transpose(0, 2, 1, 3).reshape(Bb, SEQ, D)
        x = x + o @ L["o_w"] + L["o_b"]
        h = _ref_ln(x, L["ln2_g"], L["ln2_b"])
        h = h @ L["fc1_w"] + L["fc1_b"]
        h = h * jax.nn.sigmoid(1.702 * h)
        x = x + h @ L["fc2_w"] + L["fc2_b"]
    pooled = _ref_ln(x[:, 0, :], params["post_ln_g"], params["post_ln_b"])
    img = pooled @ params["visual_proj"]
    img = img / jnp.linalg.norm(img, axis=-1, keepdims=True)
    txt = params["text_embeds"]
    txt = txt / jnp.linalg.norm(txt, axis=-1, keepdims=True)
    logits = img @ txt.T * LOGIT_SCALE
    probs = jax.nn.softmax(logits, axis=-1)
    return probs[:, TGT:TGT + 1], img


# ---------------------------------- main ---------------------------------------
if __name__ == "__main__":
    key = jax.random.PRNGKey(0)
    k_params, k_pix = jax.random.split(key)
    params = init_params(k_params)
    slab = pack_slab(params)
    pixel_values = jax.random.normal(k_pix, (B, C, IMG, IMG), dtype=jnp.float32)

    probs, img_embed = _forward_impl(pixel_values, slab)
    probs, img_embed = jax.block_until_ready((probs, img_embed))

    # semantic output of the wrapper (== probs above)
    out = jax.block_until_ready(clip_vision_wrapper_forward(pixel_values, slab))

    ref_probs, ref_img = reference_forward(pixel_values, params)
    ref_probs, ref_img = jax.block_until_ready((ref_probs, ref_img))

    assert out.shape == (B, 1), out.shape
    assert bool(jnp.all(jnp.isfinite(out)))
    assert bool(jnp.all(jnp.isfinite(img_embed)))
    # vision tower validated against a pure-JAX reference (loose tol: the kernel
    # uses the approximate EUP reciprocal inside the attention softmax)
    assert bool(jnp.allclose(img_embed, ref_img, atol=2e-2)), (img_embed, ref_img)
    # with a single prompt, softmax over one logit == 1.0 (matches the wrapper)
    assert bool(jnp.allclose(out, ref_probs, atol=1e-5))
    assert bool(jnp.allclose(out, 1.0, atol=1e-5))
    print("KERNEL_OK")
</pallas_src>

<mosaic_0001>
module attributes {stable_mosaic.version = 11 : i64} {
  func.func @_fused_clip_kernel(%arg0: memref<34x192xf32, #tpu.memory_space<vmem>>, %arg1: memref<640x128xf32, #tpu.memory_space<vmem>>, %arg2: memref<2x128xf32, #tpu.memory_space<vmem>>, %arg3: memref<2x16xf32, #tpu.memory_space<vmem>>) attributes {dimension_semantics = [], scalar_prefetch = 0 : i64, scratch_operands = 0 : i64, tpu.core_type = #tpu.core_type<tc>} {
    %c0 = arith.constant 0 : index
    %c0_0 = arith.constant 0 : index
    %0 = vector.load %arg0[%c0, %c0_0] : memref<34x192xf32, #tpu.memory_space<vmem>>, vector<34x192xf32>
    %c0_1 = arith.constant 0 : index
    %c0_2 = arith.constant 0 : index
    %1 = vector.load %arg1[%c0_1, %c0_2] : memref<640x128xf32, #tpu.memory_space<vmem>>, vector<192x32xf32>
    %cst = arith.constant dense<0.000000e+00> : vector<34x32xf32>
    %2 = tpu.matmul %0, %1, %cst {dimension_numbers = #tpu.dot_dimension_numbers<[1], [0], [0], [1], [0, 0, 1, 1], [], []>} : vector<34x192xf32>, vector<192x32xf32>, vector<34x32xf32> -> vector<34x32xf32>
    %c192 = arith.constant 192 : index
    %c0_3 = arith.constant 0 : index
    %3 = vector.load %arg1[%c192, %c0_3] : memref<640x128xf32, #tpu.memory_space<vmem>>, vector<34x32xf32>
    %4 = arith.addf %2, %3 : vector<34x32xf32>
    %c232 = arith.constant 232 : index
    %c0_4 = arith.constant 0 : index
    %5 = vector.load %arg1[%c232, %c0_4] : memref<640x128xf32, #tpu.memory_space<vmem>>, vector<2x32xf32>
    %cst_5 = arith.constant dense<0.000000e+00> : vector<34xf32>
    %6 = vector.multi_reduction <add>, %4, %cst_5 [1] : vector<34x32xf32> to vector<34xf32>
    %7 = vector.shape_cast %6 : vector<34xf32> to vector<34x1xf32>
    %cst_6 = arith.constant 3.200000e+01 : f32
    %8 = vector.broadcast %cst_6 : f32 to vector<34x1xf32>
    %9 = arith.divf %7, %8 : vector<34x1xf32>
    %10 = vector.broadcast %9 : vector<34x1xf32> to vector<34x32xf32>
    %11 = arith.subf %4, %10 : vector<34x32xf32>
    %12 = arith.mulf %11, %11 : vector<34x32xf32>
    %cst_7 = arith.constant dense<0.000000e+00> : vector<34xf32>
    %13 = vector.multi_reduction <add>, %12, %cst_7 [1] : vector<34x32xf32> to vector<34xf32>
    %14 = vector.shape_cast %13 : vector<34xf32> to vector<34x1xf32>
    %cst_8 = arith.constant 3.200000e+01 : f32
    %15 = vector.broadcast %cst_8 : f32 to vector<34x1xf32>
    %16 = arith.divf %14, %15 : vector<34x1xf32>
    %cst_9 = arith.constant 9.99999974E-6 : f32
    %17 = vector.broadcast %cst_9 : f32 to vector<34x1xf32>
    %18 = arith.addf %16, %17 : vector<34x1xf32>
    %19 = math.rsqrt %18 : vector<34x1xf32>
    %20 = vector.broadcast %19 : vector<34x1xf32> to vector<34x32xf32>
    %21 = arith.mulf %11, %20 : vector<34x32xf32>
    %22 = vector.extract_strided_slice %5 {offsets = [0, 0], sizes = [1, 32], strides = [1, 1]} : vector<2x32xf32> to vector<1x32xf32>
    %23 = vector.broadcast %22 : vector<1x32xf32> to vector<34x32xf32>
    %24 = arith.mulf %21, %23 : vector<34x32xf32>
    %25 = vector.extract_strided_slice %5 {offsets = [1, 0], sizes = [1, 32], strides = [1, 1]} : vector<2x32xf32> to vector<1x32xf32>
    %26 = vector.broadcast %25 : vector<1x32xf32> to vector<34x32xf32>
    %27 = arith.addf %24, %26 : vector<34x32xf32>
    %c288 = arith.constant 288 : index
    %c0_10 = arith.constant 0 : index
    %28 = vector.load %arg1[%c288, %c0_10] : memref<640x128xf32, #tpu.memory_space<vmem>>, vector<2x32xf32>
    %cst_11 = arith.constant dense<0.000000e+00> : vector<34xf32>
    %29 = vector.multi_reduction <add>, %27, %cst_11 [1] : vector<34x32xf32> to vector<34xf32>
    %30 = vector.shape_cast %29 : vector<34xf32> to vector<34x1xf32>
    %cst_12 = arith.constant 3.200000e+01 : f32
    %31 = vector.broadcast %cst_12 : f32 to vector<34x1xf32>
    %32 = arith.divf %30, %31 : vector<34x1xf32>
    %33 = vector.broadcast %32 : vector<34x1xf32> to vector<34x32xf32>
    %34 = arith.subf %27, %33 : vector<34x32xf32>
    %35 = arith.mulf %34, %34 : vector<34x32xf32>
    %cst_13 = arith.constant dense<0.000000e+00> : vector<34xf32>
    %36 = vector.multi_reduction <add>, %35, %cst_13 [1] : vector<34x32xf32> to vector<34xf32>
    %37 = vector.shape_cast %36 : vector<34xf32> to vector<34x1xf32>
    %cst_14 = arith.constant 3.200000e+01 : f32
    %38 = vector.broadcast %cst_14 : f32 to vector<34x1xf32>
    %39 = arith.divf %37, %38 : vector<34x1xf32>
    %cst_15 = arith.constant 9.99999974E-6 : f32
    %40 = vector.broadcast %cst_15 : f32 to vector<34x1xf32>
    %41 = arith.addf %39, %40 : vector<34x1xf32>
    %42 = math.rsqrt %41 : vector<34x1xf32>
    %43 = vector.broadcast %42 : vector<34x1xf32> to vector<34x32xf32>
    %44 = arith.mulf %34, %43 : vector<34x32xf32>
    %45 = vector.extract_strided_slice %28 {offsets = [0, 0], sizes = [1, 32], strides = [1, 1]} : vector<2x32xf32> to vector<1x32xf32>
    %46 = vector.broadcast %45 : vector<1x32xf32> to vector<34x32xf32>
    %47 = arith.mulf %44, %46 : vector<34x32xf32>
    %48 = vector.extract_strided_slice %28 {offsets = [1, 0], sizes = [1, 32], strides = [1, 1]} : vector<2x32xf32> to vector<1x32xf32>
    %49 = vector.broadcast %48 : vector<1x32xf32> to vector<34x32xf32>
    %50 = arith.addf %47, %49 : vector<34x32xf32>
    %c336 = arith.constant 336 : index
    %c0_16 = arith.constant 0 : index
    %51 = vector.load %arg1[%c336, %c0_16] : memref<640x128xf32, #tpu.memory_space<vmem>>, vector<32x96xf32>
    %cst_17 = arith.constant dense<0.000000e+00> : vector<34x96xf32>
    %52 = tpu.matmul %50, %51, %cst_17 {dimension_numbers = #tpu.dot_dimension_numbers<[1], [0], [0], [1], [0, 0, 1, 1], [], []>} : vector<34x32xf32>, vector<32x96xf32>, vector<34x96xf32> -> vector<34x96xf32>
    %c304 = arith.constant 304 : index
    %c0_18 = arith.constant 0 : index
    %53 = vector.load %arg1[%c304, %c0_18] : memref<640x128xf32, #tpu.memory_space<vmem>>, vector<1x96xf32>
    %54 = vector.broadcast %53 : vector<1x96xf32> to vector<34x96xf32>
    %55 = arith.addf %52, %54 : vector<34x96xf32>
    %56 = vector.extract_strided_slice %55 {offsets = [0, 0], sizes = [17, 96], strides = [1, 1]} : vector<34x96xf32> to vector<17x96xf32>
    %57 = vector.extract_strided_slice %56 {offsets = [0, 0], sizes = [17, 8], strides = [1, 1]} : vector<17x96xf32> to vector<17x8xf32>
    %58 = vector.extract_strided_slice %56 {offsets = [0, 32], sizes = [17, 8], strides = [1, 1]} : vector<17x96xf32> to vector<17x8xf32>
    %59 = vector.extract_strided_slice %56 {offsets = [0, 64], sizes = [17, 8], strides = [1, 1]} : vector<17x96xf32> to vector<17x8xf32>
    %cst_19 = arith.constant dense<0.000000e+00> : vector<17x17xf32>
    %60 = tpu.matmul %57, %58, %cst_19 {dimension_numbers = #tpu.dot_dimension_numbers<[1], [1], [0], [0], [0, 0, 1, 0], [], []>} : vector<17x8xf32>, vector<17x8xf32>, vector<17x17xf32> -> vector<17x17xf32>
    %61 = vector.extract_strided_slice %56 {offsets = [0, 8], sizes = [17, 8], strides = [1, 1]} : vector<17x96xf32> to vector<17x8xf32>
    %62 = vector.extract_strided_slice %56 {offsets = [0, 40], sizes = [17, 8], strides = [1, 1]} : vector<17x96xf32> to vector<17x8xf32>
    %63 = vector.extract_strided_slice %56 {offsets = [0, 72], sizes = [17, 8], strides = [1, 1]} : vector<17x96xf32> to vector<17x8xf32>
    %cst_20 = arith.constant dense<0.000000e+00> : vector<17x17xf32>
    %64 = tpu.matmul %61, %62, %cst_20 {dimension_numbers = #tpu.dot_dimension_numbers<[1], [1], [0], [0], [0, 0, 1, 0], [], []>} : vector<17x8xf32>, vector<17x8xf32>, vector<17x17xf32> -> vector<17x17xf32>
    %65 = vector.extract_strided_slice %56 {offsets = [0, 16], sizes = [17, 8], strides = [1, 1]} : vector<17x96xf32> to vector<17x8xf32>
    %66 = vector.extract_strided_slice %56 {offsets = [0, 48], sizes = [17, 8], strides = [1, 1]} : vector<17x96xf32> to vector<17x8xf32>
    %67 = vector.extract_strided_slice %56 {offsets = [0, 80], sizes = [17, 8], strides = [1, 1]} : vector<17x96xf32> to vector<17x8xf32>
    %cst_21 = arith.constant dense<0.000000e+00> : vector<17x17xf32>
    %68 = tpu.matmul %65, %66, %cst_21 {dimension_numbers = #tpu.dot_dimension_numbers<[1], [1], [0], [0], [0, 0, 1, 0], [], []>} : vector<17x8xf32>, vector<17x8xf32>, vector<17x17xf32> -> vector<17x17xf32>
    %69 = vector.extract_strided_slice %56 {offsets = [0, 24], sizes = [17, 8], strides = [1, 1]} : vector<17x96xf32> to vector<17x8xf32>
    %70 = vector.extract_strided_slice %56 {offsets = [0, 56], sizes = [17, 8], strides = [1, 1]} : vector<17x96xf32> to vector<17x8xf32>
    %71 = vector.extract_strided_slice %56 {offsets = [0, 88], sizes = [17, 8], strides = [1, 1]} : vector<17x96xf32> to vector<17x8xf32>
    %cst_22 = arith.constant dense<0.000000e+00> : vector<17x17xf32>
    %72 = tpu.matmul %69, %70, %cst_22 {dimension_numbers = #tpu.dot_dimension_numbers<[1], [1], [0], [0], [0, 0, 1, 0], [], []>} : vector<17x8xf32>, vector<17x8xf32>, vector<17x17xf32> -> vector<17x17xf32>
    %73 = vector.extract_strided_slice %55 {offsets = [17, 0], sizes = [17, 96], strides = [1, 1]} : vector<34x96xf32> to vector<17x96xf32>
    %74 = vector.extract_strided_slice %73 {offsets = [0, 0], sizes = [17, 8], strides = [1, 1]} : vector<17x96xf32> to vector<17x8xf32>
    %75 = vector.extract_strided_slice %73 {offsets = [0, 32], sizes = [17, 8], strides = [1, 1]} : vector<17x96xf32> to vector<17x8xf32>
    %76 = vector.extract_strided_slice %73 {offsets = [0, 64], sizes = [17, 8], strides = [1, 1]} : vector<17x96xf32> to vector<17x8xf32>
    %cst_23 = arith.constant dense<0.000000e+00> : vector<17x17xf32>
    %77 = tpu.matmul %74, %75, %cst_23 {dimension_numbers = #tpu.dot_dimension_numbers<[1], [1], [0], [0], [0, 0, 1, 0], [], []>} : vector<17x8xf32>, vector<17x8xf32>, vector<17x17xf32> -> vector<17x17xf32>
    %78 = vector.extract_strided_slice %73 {offsets = [0, 8], sizes = [17, 8], strides = [1, 1]} : vector<17x96xf32> to vector<17x8xf32>
    %79 = vector.extract_strided_slice %73 {offsets = [0, 40], sizes = [17, 8], strides = [1, 1]} : vector<17x96xf32> to vector<17x8xf32>
    %80 = vector.extract_strided_slice %73 {offsets = [0, 72], sizes = [17, 8], strides = [1, 1]} : vector<17x96xf32> to vector<17x8xf32>
    %cst_24 = arith.constant dense<0.000000e+00> : vector<17x17xf32>
    %81 = tpu.matmul %78, %79, %cst_24 {dimension_numbers = #tpu.dot_dimension_numbers<[1], [1], [0], [0], [0, 0, 1, 0], [], []>} : vector<17x8xf32>, vector<17x8xf32>, vector<17x17xf32> -> vector<17x17xf32>
    %82 = vector.extract_strided_slice %73 {offsets = [0, 16], sizes = [17, 8], strides = [1, 1]} : vector<17x96xf32> to vector<17x8xf32>
    %83 = vector.extract_strided_slice %73 {offsets = [0, 48], sizes = [17, 8], strides = [1, 1]} : vector<17x96xf32> to vector<17x8xf32>
    %84 = vector.extract_strided_slice %73 {offsets = [0, 80], sizes = [17, 8], strides = [1, 1]} : vector<17x96xf32> to vector<17x8xf32>
    %cst_25 = arith.constant dense<0.000000e+00> : vector<17x17xf32>
    %85 = tpu.matmul %82, %83, %cst_25 {dimension_numbers = #tpu.dot_dimension_numbers<[1], [1], [0], [0], [0, 0, 1, 0], [], []>} : vector<17x8xf32>, vector<17x8xf32>, vector<17x17xf32> -> vector<17x17xf32>
    %86 = vector.extract_strided_slice %73 {offsets = [0, 24], sizes = [17, 8], strides = [1, 1]} : vector<17x96xf32> to vector<17x8xf32>
    %87 = vector.extract_strided_slice %73 {offsets = [0, 56], sizes = [17, 8], strides = [1, 1]} : vector<17x96xf32> to vector<17x8xf32>
    %88 = vector.extract_strided_slice %73 {offsets = [0, 88], sizes = [17, 8], strides = [1, 1]} : vector<17x96xf32> to vector<17x8xf32>
    %cst_26 = arith.constant dense<0.000000e+00> : vector<17x17xf32>
    %89 = tpu.matmul %86, %87, %cst_26 {dimension_numbers = #tpu.dot_dimension_numbers<[1], [1], [0], [0], [0, 0, 1, 0], [], []>} : vector<17x8xf32>, vector<17x8xf32>, vector<17x17xf32> -> vector<17x17xf32>
    %90 = vector.shape_cast %60 : vector<17x17xf32> to vector<1x17x17xf32>
    %91 = vector.shape_cast %64 : vector<17x17xf32> to vector<1x17x17xf32>
    %92 = vector.shape_cast %68 : vector<17x17xf32> to vector<1x17x17xf32>
    %93 = vector.shape_cast %72 : vector<17x17xf32> to vector<1x17x17xf32>
    %94 = vector.shape_cast %77 : vector<17x17xf32> to vector<1x17x17xf32>
    %95 = vector.shape_cast %81 : vector<17x17xf32> to vector<1x17x17xf32>
    %96 = vector.shape_cast %85 : vector<17x17xf32> to vector<1x17x17xf32>
    %97 = vector.shape_cast %89 : vector<17x17xf32> to vector<1x17x17xf32>
    %98 = tpu.concatenate %90, %91, %92, %93, %94, %95, %96, %97 in 0 : vector<1x17x17xf32>, vector<1x17x17xf32>, vector<1x17x17xf32>, vector<1x17x17xf32>, vector<1x17x17xf32>, vector<1x17x17xf32>, vector<1x17x17xf32>, vector<1x17x17xf32> -> vector<8x17x17xf32>
    %cst_27 = arith.constant 0.353553385 : f32
    %99 = vector.broadcast %cst_27 : f32 to vector<8x17x17xf32>
    %100 = arith.mulf %98, %99 : vector<8x17x17xf32>
    %cst_28 = arith.constant dense<0xFF800000> : vector<8x17xf32>
    %101 = vector.multi_reduction <maximumf>, %100, %cst_28 [2] : vector<8x17x17xf32> to vector<8x17xf32>
    %102 = vector.shape_cast %101 : vector<8x17xf32> to vector<8x17x1xf32>
    %103 = vector.broadcast %102 : vector<8x17x1xf32> to vector<8x17x17xf32>
    %104 = arith.subf %100, %103 : vector<8x17x17xf32>
    %105 = math.exp %104 : vector<8x17x17xf32>
    %cst_29 = arith.constant dense<0.000000e+00> : vector<8x17xf32>
    %106 = vector.multi_reduction <add>, %105, %cst_29 [2] : vector<8x17x17xf32> to vector<8x17xf32>
    %107 = vector.shape_cast %106 : vector<8x17xf32> to vector<8x17x1xf32>
    %108 = tpu.reciprocal %107 {approx = true} : vector<8x17x1xf32> -> vector<8x17x1xf32>
    %109 = vector.broadcast %108 : vector<8x17x1xf32> to vector<8x17x17xf32>
    %110 = arith.mulf %105, %109 : vector<8x17x17xf32>
    %c368 = arith.constant 368 : index
    %c0_30 = arith.constant 0 : index
    %111 = vector.load %arg1[%c368, %c0_30] : memref<640x128xf32, #tpu.memory_space<vmem>>, vector<32x32xf32>
    %112 = vector.extract_strided_slice %110 {offsets = [0, 0, 0], sizes = [1, 17, 17], strides = [1, 1, 1]} : vector<8x17x17xf32> to vector<1x17x17xf32>
    %113 = vector.shape_cast %112 : vector<1x17x17xf32> to vector<17x17xf32>
    %cst_31 = arith.constant dense<0.000000e+00> : vector<17x8xf32>
    %114 = tpu.matmul %113, %59, %cst_31 {dimension_numbers = #tpu.dot_dimension_numbers<[1], [0], [0], [1], [0, 0, 1, 1], [], []>} : vector<17x17xf32>, vector<17x8xf32>, vector<17x8xf32> -> vector<17x8xf32>
    %115 = vector.extract_strided_slice %110 {offsets = [1, 0, 0], sizes = [1, 17, 17], strides = [1, 1, 1]} : vector<8x17x17xf32> to vector<1x17x17xf32>
    %116 = vector.shape_cast %115 : vector<1x17x17xf32> to vector<17x17xf32>
    %cst_32 = arith.constant dense<0.000000e+00> : vector<17x8xf32>
    %117 = tpu.matmul %116, %63, %cst_32 {dimension_numbers = #tpu.dot_dimension_numbers<[1], [0], [0], [1], [0, 0, 1, 1], [], []>} : vector<17x17xf32>, vector<17x8xf32>, vector<17x8xf32> -> vector<17x8xf32>
    %118 = vector.extract_strided_slice %110 {offsets = [2, 0, 0], sizes = [1, 17, 17], strides = [1, 1, 1]} : vector<8x17x17xf32> to vector<1x17x17xf32>
    %119 = vector.shape_cast %118 : vector<1x17x17xf32> to vector<17x17xf32>
    %cst_33 = arith.constant dense<0.000000e+00> : vector<17x8xf32>
    %120 = tpu.matmul %119, %67, %cst_33 {dimension_numbers = #tpu.dot_dimension_numbers<[1], [0], [0], [1], [0, 0, 1, 1], [], []>} : vector<17x17xf32>, vector<17x8xf32>, vector<17x8xf32> -> vector<17x8xf32>
    %121 = vector.extract_strided_slice %110 {offsets = [3, 0, 0], sizes = [1, 17, 17], strides = [1, 1, 1]} : vector<8x17x17xf32> to vector<1x17x17xf32>
    %122 = vector.shape_cast %121 : vector<1x17x17xf32> to vector<17x17xf32>
    %cst_34 = arith.constant dense<0.000000e+00> : vector<17x8xf32>
    %123 = tpu.matmul %122, %71, %cst_34 {dimension_numbers = #tpu.dot_dimension_numbers<[1], [0], [0], [1], [0, 0, 1, 1], [], []>} : vector<17x17xf32>, vector<17x8xf32>, vector<17x8xf32> -> vector<17x8xf32>
    %124 = tpu.concatenate %114, %117, %120, %123 in 1 : vector<17x8xf32>, vector<17x8xf32>, vector<17x8xf32>, vector<17x8xf32> -> vector<17x32xf32>
    %cst_35 = arith.constant dense<0.000000e+00> : vector<17x32xf32>
    %125 = tpu.matmul %124, %111, %cst_35 {dimension_numbers = #tpu.dot_dimension_numbers<[1], [0], [0], [1], [0, 0, 1, 1], [], []>} : vector<17x32xf32>, vector<32x32xf32>, vector<17x32xf32> -> vector<17x32xf32>
    %126 = vector.extract_strided_slice %110 {offsets = [4, 0, 0], sizes = [1, 17, 17], strides = [1, 1, 1]} : vector<8x17x17xf32> to vector<1x17x17xf32>
    %127 = vector.shape_cast %126 : vector<1x17x17xf32> to vector<17x17xf32>
    %cst_36 = arith.constant dense<0.000000e+00> : vector<17x8xf32>
    %128 = tpu.matmul %127, %76, %cst_36 {dimension_numbers = #tpu.dot_dimension_numbers<[1], [0], [0], [1], [0, 0, 1, 1], [], []>} : vector<17x17xf32>, vector<17x8xf32>, vector<17x8xf32> -> vector<17x8xf32>
    %129 = vector.extract_strided_slice %110 {offsets = [5, 0, 0], sizes = [1, 17, 17], strides = [1, 1, 1]} : vector<8x17x17xf32> to vector<1x17x17xf32>
    %130 = vector.shape_cast %129 : vector<1x17x17xf32> to vector<17x17xf32>
    %cst_37 = arith.constant dense<0.000000e+00> : vector<17x8xf32>
    %131 = tpu.matmul %130, %80, %cst_37 {dimension_numbers = #tpu.dot_dimension_numbers<[1], [0], [0], [1], [0, 0, 1, 1], [], []>} : vector<17x17xf32>, vector<17x8xf32>, vector<17x8xf32> -> vector<17x8xf32>
    %132 = vector.extract_strided_slice %110 {offsets = [6, 0, 0], sizes = [1, 17, 17], strides = [1, 1, 1]} : vector<8x17x17xf32> to vector<1x17x17xf32>
    %133 = vector.shape_cast %132 : vector<1x17x17xf32> to vector<17x17xf32>
    %cst_38 = arith.constant dense<0.000000e+00> : vector<17x8xf32>
    %134 = tpu.matmul %133, %84, %cst_38 {dimension_numbers = #tpu.dot_dimension_numbers<[1], [0], [0], [1], [0, 0, 1, 1], [], []>} : vector<17x17xf32>, vector<17x8xf32>, vector<17x8xf32> -> vector<17x8xf32>
    %135 = vector.extract_strided_slice %110 {offsets = [7, 0, 0], sizes = [1, 17, 17], strides = [1, 1, 1]} : vector<8x17x17xf32> to vector<1x17x17xf32>
    %136 = vector.shape_cast %135 : vector<1x17x17xf32> to vector<17x17xf32>
    %cst_39 = arith.constant dense<0.000000e+00> : vector<17x8xf32>
    %137 = tpu.matmul %136, %88, %cst_39 {dimension_numbers = #tpu.dot_dimension_numbers<[1], [0], [0], [1], [0, 0, 1, 1], [], []>} : vector<17x17xf32>, vector<17x8xf32>, vector<17x8xf32> -> vector<17x8xf32>
    %138 = tpu.concatenate %128, %131, %134, %137 in 1 : vector<17x8xf32>, vector<17x8xf32>, vector<17x8xf32>, vector<17x8xf32> -> vector<17x32xf32>
    %cst_40 = arith.constant dense<0.000000e+00> : vector<17x32xf32>
    %139 = tpu.matmul %138, %111, %cst_40 {dimension_numbers = #tpu.dot_dimension_numbers<[1], [0], [0], [1], [0, 0, 1, 1], [], []>} : vector<17x32xf32>, vector<32x32xf32>, vector<17x32xf32> -> vector<17x32xf32>
    %140 = tpu.concatenate %125, %139 in 0 : vector<17x32xf32>, vector<17x32xf32> -> vector<34x32xf32>
    %141 = arith.addf %27, %140 : vector<34x32xf32>
    %c312 = arith.constant 312 : index
    %c0_41 = arith.constant 0 : index
    %142 = vector.load %arg1[%c312, %c0_41] : memref<640x128xf32, #tpu.memory_space<vmem>>, vector<1x32xf32>
    %143 = vector.broadcast %142 : vector<1x32xf32> to vector<34x32xf32>
    %144 = arith.addf %141, %143 : vector<34x32xf32>
    %c296 = arith.constant 296 : index
    %c0_42 = arith.constant 0 : index
    %145 = vector.load %arg1[%c296, %c0_42] : memref<640x128xf32, #tpu.memory_space<vmem>>, vector<2x32xf32>
    %cst_43 = arith.constant dense<0.000000e+00> : vector<34xf32>
    %146 = vector.multi_reduction <add>, %144, %cst_43 [1] : vector<34x32xf32> to vector<34xf32>
    %147 = vector.shape_cast %146 : vector<34xf32> to vector<34x1xf32>
    %cst_44 = arith.constant 3.200000e+01 : f32
    %148 = vector.broadcast %cst_44 : f32 to vector<34x1xf32>
    %149 = arith.divf %147, %148 : vector<34x1xf32>
    %150 = vector.broadcast %149 : vector<34x1xf32> to vector<34x32xf32>
    %151 = arith.subf %144, %150 : vector<34x32xf32>
    %152 = arith.mulf %151, %151 : vector<34x32xf32>
    %cst_45 = arith.constant dense<0.000000e+00> : vector<34xf32>
    %153 = vector.multi_reduction <add>, %152, %cst_45 [1] : vector<34x32xf32> to vector<34xf32>
    %154 = vector.shape_cast %153 : vector<34xf32> to vector<34x1xf32>
    %cst_46 = arith.constant 3.200000e+01 : f32
    %155 = vector.broadcast %cst_46 : f32 to vector<34x1xf32>
    %156 = arith.divf %154, %155 : vector<34x1xf32>
    %cst_47 = arith.constant 9.99999974E-6 : f32
    %157 = vector.broadcast %cst_47 : f32 to vector<34x1xf32>
    %158 = arith.addf %156, %157 : vector<34x1xf32>
    %159 = math.rsqrt %158 : vector<34x1xf32>
    %160 = vector.broadcast %159 : vector<34x1xf32> to vector<34x32xf32>
    %161 = arith.mulf %151, %160 : vector<34x32xf32>
    %162 = vector.extract_strided_slice %145 {offsets = [0, 0], sizes = [1, 32], strides = [1, 1]} : vector<2x32xf32> to vector<1x32xf32>
    %163 = vector.broadcast %162 : vector<1x32xf32> to vector<34x32xf32>
    %164 = arith.mulf %161, %163 : vector<34x32xf32>
    %165 = vector.extract_strided_slice %145 {offsets = [1, 0], sizes = [1, 32], strides = [1, 1]} : vector<2x32xf32> to vector<1x32xf32>
    %166 = vector.broadcast %165 : vector<1x32xf32> to vector<34x32xf32>
    %167 = arith.addf %164, %166 : vector<34x32xf32>
    %c400 = arith.constant 400 : index
    %c0_48 = arith.constant 0 : index
    %168 = vector.load %arg1[%c400, %c0_48] : memref<640x128xf32, #tpu.memory_space<vmem>>, vector<32x128xf32>
    %cst_49 = arith.constant dense<0.000000e+00> : vector<34x128xf32>
    %169 = tpu.matmul %167, %168, %cst_49 {dimension_numbers = #tpu.dot_dimension_numbers<[1], [0], [0], [1], [0, 0, 1, 1], [], []>} : vector<34x32xf32>, vector<32x128xf32>, vector<34x128xf32> -> vector<34x128xf32>
    %c320 = arith.constant 320 : index
    %c0_50 = arith.constant 0 : index
    %170 = vector.load %arg1[%c320, %c0_50] : memref<640x128xf32, #tpu.memory_space<vmem>>, vector<1x128xf32>
    %171 = vector.broadcast %170 : vector<1x128xf32> to vector<34x128xf32>
    %172 = arith.addf %169, %171 : vector<34x128xf32>
    %cst_51 = arith.constant 1.702000e+00 : f32
    %173 = vector.broadcast %cst_51 : f32 to vector<34x128xf32>
    %174 = arith.mulf %173, %172 : vector<34x128xf32>
    %175 = arith.negf %174 : vector<34x128xf32>
    %176 = math.exp %175 : vector<34x128xf32>
    %cst_52 = arith.constant 1.000000e+00 : f32
    %177 = vector.broadcast %cst_52 : f32 to vector<34x128xf32>
    %178 = arith.addf %177, %176 : vector<34x128xf32>
    %179 = arith.divf %177, %178 : vector<34x128xf32>
    %180 = arith.mulf %172, %179 : vector<34x128xf32>
    %c432 = arith.constant 432 : index
    %c0_53 = arith.constant 0 : index
    %181 = vector.load %arg1[%c432, %c0_53] : memref<640x128xf32, #tpu.memory_space<vmem>>, vector<32x128xf32>
    %cst_54 = arith.constant dense<0.000000e+00> : vector<34x32xf32>
    %182 = tpu.matmul %180, %181, %cst_54 {dimension_numbers = #tpu.dot_dimension_numbers<[1], [1], [0], [0], [0, 0, 1, 0], [], []>} : vector<34x128xf32>, vector<32x128xf32>, vector<34x32xf32> -> vector<34x32xf32>
    %c328 = arith.constant 328 : index
    %c0_55 = arith.constant 0 : index
    %183 = vector.load %arg1[%c328, %c0_55] : memref<640x128xf32, #tpu.memory_space<vmem>>, vector<1x32xf32>
    %184 = vector.broadcast %183 : vector<1x32xf32> to vector<34x32xf32>
    %185 = arith.addf %182, %184 : vector<34x32xf32>
    %186 = arith.addf %144, %185 : vector<34x32xf32>
    %c464 = arith.constant 464 : index
    %c0_56 = arith.constant 0 : index
    %187 = vector.load %arg1[%c464, %c0_56] : memref<640x128xf32, #tpu.memory_space<vmem>>, vector<2x32xf32>
    %cst_57 = arith.constant dense<0.000000e+00> : vector<34xf32>
    %188 = vector.multi_reduction <add>, %186, %cst_57 [1] : vector<34x32xf32> to vector<34xf32>
    %189 = vector.shape_cast %188 : vector<34xf32> to vector<34x1xf32>
    %cst_58 = arith.constant 3.200000e+01 : f32
    %190 = vector.broadcast %cst_58 : f32 to vector<34x1xf32>
    %191 = arith.divf %189, %190 : vector<34x1xf32>
    %192 = vector.broadcast %191 : vector<34x1xf32> to vector<34x32xf32>
    %193 = arith.subf %186, %192 : vector<34x32xf32>
    %194 = arith.mulf %193, %193 : vector<34x32xf32>
    %cst_59 = arith.constant dense<0.000000e+00> : vector<34xf32>
    %195 = vector.multi_reduction <add>, %194, %cst_59 [1] : vector<34x32xf32> to vector<34xf32>
    %196 = vector.shape_cast %195 : vector<34xf32> to vector<34x1xf32>
    %cst_60 = arith.constant 3.200000e+01 : f32
    %197 = vector.broadcast %cst_60 : f32 to vector<34x1xf32>
    %198 = arith.divf %196, %197 : vector<34x1xf32>
    %cst_61 = arith.constant 9.99999974E-6 : f32
    %199 = vector.broadcast %cst_61 : f32 to vector<34x1xf32>
    %200 = arith.addf %198, %199 : vector<34x1xf32>
    %201 = math.rsqrt %200 : vector<34x1xf32>
    %202 = vector.broadcast %201 : vector<34x1xf32> to vector<34x32xf32>
    %203 = arith.mulf %193, %202 : vector<34x32xf32>
    %204 = vector.extract_strided_slice %187 {offsets = [0, 0], sizes = [1, 32], strides = [1, 1]} : vector<2x32xf32> to vector<1x32xf32>
    %205 = vector.broadcast %204 : vector<1x32xf32> to vector<34x32xf32>
    %206 = arith.mulf %203, %205 : vector<34x32xf32>
    %207 = vector.extract_strided_slice %187 {offsets = [1, 0], sizes = [1, 32], strides = [1, 1]} : vector<2x32xf32> to vector<1x32xf32>
    %208 = vector.broadcast %207 : vector<1x32xf32> to vector<34x32xf32>
    %209 = arith.addf %206, %208 : vector<34x32xf32>
    %c512 = arith.constant 512 : index
    %c0_62 = arith.constant 0 : index
    %210 = vector.load %arg1[%c512, %c0_62] : memref<640x128xf32, #tpu.memory_space<vmem>>, vector<32x96xf32>
    %cst_63 = arith.constant dense<0.000000e+00> : vector<34x96xf32>
    %211 = tpu.matmul %209, %210, %cst_63 {dimension_numbers = #tpu.dot_dimension_numbers<[1], [0], [0], [1], [0, 0, 1, 1], [], []>} : vector<34x32xf32>, vector<32x96xf32>, vector<34x96xf32> -> vector<34x96xf32>
    %c480 = arith.constant 480 : index
    %c0_64 = arith.constant 0 : index
    %212 = vector.load %arg1[%c480, %c0_64] : memref<640x128xf32, #tpu.memory_space<vmem>>, vector<1x96xf32>
    %213 = vector.broadcast %212 : vector<1x96xf32> to vector<34x96xf32>
    %214 = arith.addf %211, %213 : vector<34x96xf32>
    %215 = vector.extract_strided_slice %214 {offsets = [0, 0], sizes = [17, 96], strides = [1, 1]} : vector<34x96xf32> to vector<17x96xf32>
    %216 = vector.extract_strided_slice %215 {offsets = [0, 0], sizes = [17, 8], strides = [1, 1]} : vector<17x96xf32> to vector<17x8xf32>
    %217 = vector.extract_strided_slice %215 {offsets = [0, 32], sizes = [17, 8], strides = [1, 1]} : vector<17x96xf32> to vector<17x8xf32>
    %218 = vector.extract_strided_slice %215 {offsets = [0, 64], sizes = [17, 8], strides = [1, 1]} : vector<17x96xf32> to vector<17x8xf32>
    %cst_65 = arith.constant dense<0.000000e+00> : vector<17x17xf32>
    %219 = tpu.matmul %216, %217, %cst_65 {dimension_numbers = #tpu.dot_dimension_numbers<[1], [1], [0], [0], [0, 0, 1, 0], [], []>} : vector<17x8xf32>, vector<17x8xf32>, vector<17x17xf32> -> vector<17x17xf32>
    %220 = vector.extract_strided_slice %215 {offsets = [0, 8], sizes = [17, 8], strides = [1, 1]} : vector<17x96xf32> to vector<17x8xf32>
    %221 = vector.extract_strided_slice %215 {offsets = [0, 40], sizes = [17, 8], strides = [1, 1]} : vector<17x96xf32> to vector<17x8xf32>
    %222 = vector.extract_strided_slice %215 {offsets = [0, 72], sizes = [17, 8], strides = [1, 1]} : vector<17x96xf32> to vector<17x8xf32>
    %cst_66 = arith.constant dense<0.000000e+00> : vector<17x17xf32>
    %223 = tpu.matmul %220, %221, %cst_66 {dimension_numbers = #tpu.dot_dimension_numbers<[1], [1], [0], [0], [0, 0, 1, 0], [], []>} : vector<17x8xf32>, vector<17x8xf32>, vector<17x17xf32> -> vector<17x17xf32>
    %224 = vector.extract_strided_slice %215 {offsets = [0, 16], sizes = [17, 8], strides = [1, 1]} : vector<17x96xf32> to vector<17x8xf32>
    %225 = vector.extract_strided_slice %215 {offsets = [0, 48], sizes = [17, 8], strides = [1, 1]} : vector<17x96xf32> to vector<17x8xf32>
    %226 = vector.extract_strided_slice %215 {offsets = [0, 80], sizes = [17, 8], strides = [1, 1]} : vector<17x96xf32> to vector<17x8xf32>
    %cst_67 = arith.constant dense<0.000000e+00> : vector<17x17xf32>
    %227 = tpu.matmul %224, %225, %cst_67 {dimension_numbers = #tpu.dot_dimension_numbers<[1], [1], [0], [0], [0, 0, 1, 0], [], []>} : vector<17x8xf32>, vector<17x8xf32>, vector<17x17xf32> -> vector<17x17xf32>
    %228 = vector.extract_strided_slice %215 {offsets = [0, 24], sizes = [17, 8], strides = [1, 1]} : vector<17x96xf32> to vector<17x8xf32>
    %229 = vector.extract_strided_slice %215 {offsets = [0, 56], sizes = [17, 8], strides = [1, 1]} : vector<17x96xf32> to vector<17x8xf32>
    %230 = vector.extract_strided_slice %215 {offsets = [0, 88], sizes = [17, 8], strides = [1, 1]} : vector<17x96xf32> to vector<17x8xf32>
    %cst_68 = arith.constant dense<0.000000e+00> : vector<17x17xf32>
    %231 = tpu.matmul %228, %229, %cst_68 {dimension_numbers = #tpu.dot_dimension_numbers<[1], [1], [0], [0], [0, 0, 1, 0], [], []>} : vector<17x8xf32>, vector<17x8xf32>, vector<17x17xf32> -> vector<17x17xf32>
    %232 = vector.extract_strided_slice %214 {offsets = [17, 0], sizes = [17, 96], strides = [1, 1]} : vector<34x96xf32> to vector<17x96xf32>
    %233 = vector.extract_strided_slice %232 {offsets = [0, 0], sizes = [17, 8], strides = [1, 1]} : vector<17x96xf32> to vector<17x8xf32>
    %234 = vector.extract_strided_slice %232 {offsets = [0, 32], sizes = [17, 8], strides = [1, 1]} : vector<17x96xf32> to vector<17x8xf32>
    %235 = vector.extract_strided_slice %232 {offsets = [0, 64], sizes = [17, 8], strides = [1, 1]} : vector<17x96xf32> to vector<17x8xf32>
    %cst_69 = arith.constant dense<0.000000e+00> : vector<17x17xf32>
    %236 = tpu.matmul %233, %234, %cst_69 {dimension_numbers = #tpu.dot_dimension_numbers<[1], [1], [0], [0], [0, 0, 1, 0], [], []>} : vector<17x8xf32>, vector<17x8xf32>, vector<17x17xf32> -> vector<17x17xf32>
    %237 = vector.extract_strided_slice %232 {offsets = [0, 8], sizes = [17, 8], strides = [1, 1]} : vector<17x96xf32> to vector<17x8xf32>
    %238 = vector.extract_strided_slice %232 {offsets = [0, 40], sizes = [17, 8], strides = [1, 1]} : vector<17x96xf32> to vector<17x8xf32>
    %239 = vector.extract_strided_slice %232 {offsets = [0, 72], sizes = [17, 8], strides = [1, 1]} : vector<17x96xf32> to vector<17x8xf32>
    %cst_70 = arith.constant dense<0.000000e+00> : vector<17x17xf32>
    %240 = tpu.matmul %237, %238, %cst_70 {dimension_numbers = #tpu.dot_dimension_numbers<[1], [1], [0], [0], [0, 0, 1, 0], [], []>} : vector<17x8xf32>, vector<17x8xf32>, vector<17x17xf32> -> vector<17x17xf32>
    %241 = vector.extract_strided_slice %232 {offsets = [0, 16], sizes = [17, 8], strides = [1, 1]} : vector<17x96xf32> to vector<17x8xf32>
    %242 = vector.extract_strided_slice %232 {offsets = [0, 48], sizes = [17, 8], strides = [1, 1]} : vector<17x96xf32> to vector<17x8xf32>
    %243 = vector.extract_strided_slice %232 {offsets = [0, 80], sizes = [17, 8], strides = [1, 1]} : vector<17x96xf32> to vector<17x8xf32>
    %cst_71 = arith.constant dense<0.000000e+00> : vector<17x17xf32>
    %244 = tpu.matmul %241, %242, %cst_71 {dimension_numbers = #tpu.dot_dimension_numbers<[1], [1], [0], [0], [0, 0, 1, 0], [], []>} : vector<17x8xf32>, vector<17x8xf32>, vector<17x17xf32> -> vector<17x17xf32>
    %245 = vector.extract_strided_slice %232 {offsets = [0, 24], sizes = [17, 8], strides = [1, 1]} : vector<17x96xf32> to vector<17x8xf32>
    %246 = vector.extract_strided_slice %232 {offsets = [0, 56], sizes = [17, 8], strides = [1, 1]} : vector<17x96xf32> to vector<17x8xf32>
    %247 = vector.extract_strided_slice %232 {offsets = [0, 88], sizes = [17, 8], strides = [1, 1]} : vector<17x96xf32> to vector<17x8xf32>
    %cst_72 = arith.constant dense<0.000000e+00> : vector<17x17xf32>
    %248 = tpu.matmul %245, %246, %cst_72 {dimension_numbers = #tpu.dot_dimension_numbers<[1], [1], [0], [0], [0, 0, 1, 0], [], []>} : vector<17x8xf32>, vector<17x8xf32>, vector<17x17xf32> -> vector<17x17xf32>
    %249 = vector.shape_cast %219 : vector<17x17xf32> to vector<1x17x17xf32>
    %250 = vector.shape_cast %223 : vector<17x17xf32> to vector<1x17x17xf32>
    %251 = vector.shape_cast %227 : vector<17x17xf32> to vector<1x17x17xf32>
    %252 = vector.shape_cast %231 : vector<17x17xf32> to vector<1x17x17xf32>
    %253 = vector.shape_cast %236 : vector<17x17xf32> to vector<1x17x17xf32>
    %254 = vector.shape_cast %240 : vector<17x17xf32> to vector<1x17x17xf32>
    %255 = vector.shape_cast %244 : vector<17x17xf32> to vector<1x17x17xf32>
    %256 = vector.shape_cast %248 : vector<17x17xf32> to vector<1x17x17xf32>
    %257 = tpu.concatenate %249, %250, %251, %252, %253, %254, %255, %256 in 0 : vector<1x17x17xf32>, vector<1x17x17xf32>, vector<1x17x17xf32>, vector<1x17x17xf32>, vector<1x17x17xf32>, vector<1x17x17xf32>, vector<1x17x17xf32>, vector<1x17x17xf32> -> vector<8x17x17xf32>
    %cst_73 = arith.constant 0.353553385 : f32
    %258 = vector.broadcast %cst_73 : f32 to vector<8x17x17xf32>
    %259 = arith.mulf %257, %258 : vector<8x17x17xf32>
    %cst_74 = arith.constant dense<0xFF800000> : vector<8x17xf32>
    %260 = vector.multi_reduction <maximumf>, %259, %cst_74 [2] : vector<8x17x17xf32> to vector<8x17xf32>
    %261 = vector.shape_cast %260 : vector<8x17xf32> to vector<8x17x1xf32>
    %262 = vector.broadcast %261 : vector<8x17x1xf32> to vector<8x17x17xf32>
    %263 = arith.subf %259, %262 : vector<8x17x17xf32>
    %264 = math.exp %263 : vector<8x17x17xf32>
    %cst_75 = arith.constant dense<0.000000e+00> : vector<8x17xf32>
    %265 = vector.multi_reduction <add>, %264, %cst_75 [2] : vector<8x17x17xf32> to vector<8x17xf32>
    %266 = vector.shape_cast %265 : vector<8x17xf32> to vector<8x17x1xf32>
    %267 = tpu.reciprocal %266 {approx = true} : vector<8x17x1xf32> -> vector<8x17x1xf32>
    %268 = vector.broadcast %267 : vector<8x17x1xf32> to vector<8x17x17xf32>
    %269 = arith.mulf %264, %268 : vector<8x17x17xf32>
    %c544 = arith.constant 544 : index
    %c0_76 = arith.constant 0 : index
    %270 = vector.load %arg1[%c544, %c0_76] : memref<640x128xf32, #tpu.memory_space<vmem>>, vector<32x32xf32>
    %271 = vector.extract_strided_slice %269 {offsets = [0, 0, 0], sizes = [1, 17, 17], strides = [1, 1, 1]} : vector<8x17x17xf32> to vector<1x17x17xf32>
    %272 = vector.shape_cast %271 : vector<1x17x17xf32> to vector<17x17xf32>
    %cst_77 = arith.constant dense<0.000000e+00> : vector<17x8xf32>
    %273 = tpu.matmul %272, %218, %cst_77 {dimension_numbers = #tpu.dot_dimension_numbers<[1], [0], [0], [1], [0, 0, 1, 1], [], []>} : vector<17x17xf32>, vector<17x8xf32>, vector<17x8xf32> -> vector<17x8xf32>
    %274 = vector.extract_strided_slice %269 {offsets = [1, 0, 0], sizes = [1, 17, 17], strides = [1, 1, 1]} : vector<8x17x17xf32> to vector<1x17x17xf32>
    %275 = vector.shape_cast %274 : vector<1x17x17xf32> to vector<17x17xf32>
    %cst_78 = arith.constant dense<0.000000e+00> : vector<17x8xf32>
    %276 = tpu.matmul %275, %222, %cst_78 {dimension_numbers = #tpu.dot_dimension_numbers<[1], [0], [0], [1], [0, 0, 1, 1], [], []>} : vector<17x17xf32>, vector<17x8xf32>, vector<17x8xf32> -> vector<17x8xf32>
    %277 = vector.extract_strided_slice %269 {offsets = [2, 0, 0], sizes = [1, 17, 17], strides = [1, 1, 1]} : vector<8x17x17xf32> to vector<1x17x17xf32>
    %278 = vector.shape_cast %277 : vector<1x17x17xf32> to vector<17x17xf32>
    %cst_79 = arith.constant dense<0.000000e+00> : vector<17x8xf32>
    %279 = tpu.matmul %278, %226, %cst_79 {dimension_numbers = #tpu.dot_dimension_numbers<[1], [0], [0], [1], [0, 0, 1, 1], [], []>} : vector<17x17xf32>, vector<17x8xf32>, vector<17x8xf32> -> vector<17x8xf32>
    %280 = vector.extract_strided_slice %269 {offsets = [3, 0, 0], sizes = [1, 17, 17], strides = [1, 1, 1]} : vector<8x17x17xf32> to vector<1x17x17xf32>
    %281 = vector.shape_cast %280 : vector<1x17x17xf32> to vector<17x17xf32>
    %cst_80 = arith.constant dense<0.000000e+00> : vector<17x8xf32>
    %282 = tpu.matmul %281, %230, %cst_80 {dimension_numbers = #tpu.dot_dimension_numbers<[1], [0], [0], [1], [0, 0, 1, 1], [], []>} : vector<17x17xf32>, vector<17x8xf32>, vector<17x8xf32> -> vector<17x8xf32>
    %283 = tpu.concatenate %273, %276, %279, %282 in 1 : vector<17x8xf32>, vector<17x8xf32>, vector<17x8xf32>, vector<17x8xf32> -> vector<17x32xf32>
    %cst_81 = arith.constant dense<0.000000e+00> : vector<17x32xf32>
    %284 = tpu.matmul %283, %270, %cst_81 {dimension_numbers = #tpu.dot_dimension_numbers<[1], [0], [0], [1], [0, 0, 1, 1], [], []>} : vector<17x32xf32>, vector<32x32xf32>, vector<17x32xf32> -> vector<17x32xf32>
    %285 = vector.extract_strided_slice %269 {offsets = [4, 0, 0], sizes = [1, 17, 17], strides = [1, 1, 1]} : vector<8x17x17xf32> to vector<1x17x17xf32>
    %286 = vector.shape_cast %285 : vector<1x17x17xf32> to vector<17x17xf32>
    %cst_82 = arith.constant dense<0.000000e+00> : vector<17x8xf32>
    %287 = tpu.matmul %286, %235, %cst_82 {dimension_numbers = #tpu.dot_dimension_numbers<[1], [0], [0], [1], [0, 0, 1, 1], [], []>} : vector<17x17xf32>, vector<17x8xf32>, vector<17x8xf32> -> vector<17x8xf32>
    %288 = vector.extract_strided_slice %269 {offsets = [5, 0, 0], sizes = [1, 17, 17], strides = [1, 1, 1]} : vector<8x17x17xf32> to vector<1x17x17xf32>
    %289 = vector.shape_cast %288 : vector<1x17x17xf32> to vector<17x17xf32>
    %cst_83 = arith.constant dense<0.000000e+00> : vector<17x8xf32>
    %290 = tpu.matmul %289, %239, %cst_83 {dimension_numbers = #tpu.dot_dimension_numbers<[1], [0], [0], [1], [0, 0, 1, 1], [], []>} : vector<17x17xf32>, vector<17x8xf32>, vector<17x8xf32> -> vector<17x8xf32>
    %291 = vector.extract_strided_slice %269 {offsets = [6, 0, 0], sizes = [1, 17, 17], strides = [1, 1, 1]} : vector<8x17x17xf32> to vector<1x17x17xf32>
    %292 = vector.shape_cast %291 : vector<1x17x17xf32> to vector<17x17xf32>
    %cst_84 = arith.constant dense<0.000000e+00> : vector<17x8xf32>
    %293 = tpu.matmul %292, %243, %cst_84 {dimension_numbers = #tpu.dot_dimension_numbers<[1], [0], [0], [1], [0, 0, 1, 1], [], []>} : vector<17x17xf32>, vector<17x8xf32>, vector<17x8xf32> -> vector<17x8xf32>
    %294 = vector.extract_strided_slice %269 {offsets = [7, 0, 0], sizes = [1, 17, 17], strides = [1, 1, 1]} : vector<8x17x17xf32> to vector<1x17x17xf32>
    %295 = vector.shape_cast %294 : vector<1x17x17xf32> to vector<17x17xf32>
    %cst_85 = arith.constant dense<0.000000e+00> : vector<17x8xf32>
    %296 = tpu.matmul %295, %247, %cst_85 {dimension_numbers = #tpu.dot_dimension_numbers<[1], [0], [0], [1], [0, 0, 1, 1], [], []>} : vector<17x17xf32>, vector<17x8xf32>, vector<17x8xf32> -> vector<17x8xf32>
    %297 = tpu.concatenate %287, %290, %293, %296 in 1 : vector<17x8xf32>, vector<17x8xf32>, vector<17x8xf32>, vector<17x8xf32> -> vector<17x32xf32>
    %cst_86 = arith.constant dense<0.000000e+00> : vector<17x32xf32>
    %298 = tpu.matmul %297, %270, %cst_86 {dimension_numbers = #tpu.dot_dimension_numbers<[1], [0], [0], [1], [0, 0, 1, 1], [], []>} : vector<17x32xf32>, vector<32x32xf32>, vector<17x32xf32> -> vector<17x32xf32>
    %299 = tpu.concatenate %284, %298 in 0 : vector<17x32xf32>, vector<17x32xf32> -> vector<34x32xf32>
    %300 = arith.addf %186, %299 : vector<34x32xf32>
    %c488 = arith.constant 488 : index
    %c0_87 = arith.constant 0 : index
    %301 = vector.load %arg1[%c488, %c0_87] : memref<640x128xf32, #tpu.memory_space<vmem>>, vector<1x32xf32>
    %302 = vector.broadcast %301 : vector<1x32xf32> to vector<34x32xf32>
    %303 = arith.addf %300, %302 : vector<34x32xf32>
    %c472 = arith.constant 472 : index
    %c0_88 = arith.constant 0 : index
    %304 = vector.load %arg1[%c472, %c0_88] : memref<640x128xf32, #tpu.memory_space<vmem>>, vector<2x32xf32>
    %cst_89 = arith.constant dense<0.000000e+00> : vector<34xf32>
    %305 = vector.multi_reduction <add>, %303, %cst_89 [1] : vector<34x32xf32> to vector<34xf32>
    %306 = vector.shape_cast %305 : vector<34xf32> to vector<34x1xf32>
    %cst_90 = arith.constant 3.200000e+01 : f32
    %307 = vector.broadcast %cst_90 : f32 to vector<34x1xf32>
    %308 = arith.divf %306, %307 : vector<34x1xf32>
    %309 = vector.broadcast %308 : vector<34x1xf32> to vector<34x32xf32>
    %310 = arith.subf %303, %309 : vector<34x32xf32>
    %311 = arith.mulf %310, %310 : vector<34x32xf32>
    %cst_91 = arith.constant dense<0.000000e+00> : vector<34xf32>
    %312 = vector.multi_reduction <add>, %311, %cst_91 [1] : vector<34x32xf32> to vector<34xf32>
    %313 = vector.shape_cast %312 : vector<34xf32> to vector<34x1xf32>
    %cst_92 = arith.constant 3.200000e+01 : f32
    %314 = vector.broadcast %cst_92 : f32 to vector<34x1xf32>
    %315 = arith.divf %313, %314 : vector<34x1xf32>
    %cst_93 = arith.constant 9.99999974E-6 : f32
    %316 = vector.broadcast %cst_93 : f32 to vector<34x1xf32>
    %317 = arith.addf %315, %316 : vector<34x1xf32>
    %318 = math.rsqrt %317 : vector<34x1xf32>
    %319 = vector.broadcast %318 : vector<34x1xf32> to vector<34x32xf32>
    %320 = arith.mulf %310, %319 : vector<34x32xf32>
    %321 = vector.extract_strided_slice %304 {offsets = [0, 0], sizes = [1, 32], strides = [1, 1]} : vector<2x32xf32> to vector<1x32xf32>
    %322 = vector.broadcast %321 : vector<1x32xf32> to vector<34x32xf32>
    %323 = arith.mulf %320, %322 : vector<34x32xf32>
    %324 = vector.extract_strided_slice %304 {offsets = [1, 0], sizes = [1, 32], strides = [1, 1]} : vector<2x32xf32> to vector<1x32xf32>
    %325 = vector.broadcast %324 : vector<1x32xf32> to vector<34x32xf32>
    %326 = arith.addf %323, %325 : vector<34x32xf32>
    %c576 = arith.constant 576 : index
    %c0_94 = arith.constant 0 : index
    %327 = vector.load %arg1[%c576, %c0_94] : memref<640x128xf32, #tpu.memory_space<vmem>>, vector<32x128xf32>
    %cst_95 = arith.constant dense<0.000000e+00> : vector<34x128xf32>
    %328 = tpu.matmul %326, %327, %cst_95 {dimension_numbers = #tpu.dot_dimension_numbers<[1], [0], [0], [1], [0, 0, 1, 1], [], []>} : vector<34x32xf32>, vector<32x128xf32>, vector<34x128xf32> -> vector<34x128xf32>
    %c496 = arith.constant 496 : index
    %c0_96 = arith.constant 0 : index
    %329 = vector.load %arg1[%c496, %c0_96] : memref<640x128xf32, #tpu.memory_space<vmem>>, vector<1x128xf32>
    %330 = vector.broadcast %329 : vector<1x128xf32> to vector<34x128xf32>
    %331 = arith.addf %328, %330 : vector<34x128xf32>
    %cst_97 = arith.constant 1.702000e+00 : f32
    %332 = vector.broadcast %cst_97 : f32 to vector<34x128xf32>
    %333 = arith.mulf %332, %331 : vector<34x128xf32>
    %334 = arith.negf %333 : vector<34x128xf32>
    %335 = math.exp %334 : vector<34x128xf32>
    %cst_98 = arith.constant 1.000000e+00 : f32
    %336 = vector.broadcast %cst_98 : f32 to vector<34x128xf32>
    %337 = arith.addf %336, %335 : vector<34x128xf32>
    %338 = arith.divf %336, %337 : vector<34x128xf32>
    %339 = arith.mulf %331, %338 : vector<34x128xf32>
    %c608 = arith.constant 608 : index
    %c0_99 = arith.constant 0 : index
    %340 = vector.load %arg1[%c608, %c0_99] : memref<640x128xf32, #tpu.memory_space<vmem>>, vector<32x128xf32>
    %cst_100 = arith.constant dense<0.000000e+00> : vector<34x32xf32>
    %341 = tpu.matmul %339, %340, %cst_100 {dimension_numbers = #tpu.dot_dimension_numbers<[1], [1], [0], [0], [0, 0, 1, 0], [], []>} : vector<34x128xf32>, vector<32x128xf32>, vector<34x32xf32> -> vector<34x32xf32>
    %c504 = arith.constant 504 : index
    %c0_101 = arith.constant 0 : index
    %342 = vector.load %arg1[%c504, %c0_101] : memref<640x128xf32, #tpu.memory_space<vmem>>, vector<1x32xf32>
    %343 = vector.broadcast %342 : vector<1x32xf32> to vector<34x32xf32>
    %344 = arith.addf %341, %343 : vector<34x32xf32>
    %345 = arith.addf %303, %344 : vector<34x32xf32>
    %346 = vector.extract_strided_slice %345 {offsets = [0, 0], sizes = [1, 32], strides = [1, 1]} : vector<34x32xf32> to vector<1x32xf32>
    %347 = vector.extract_strided_slice %345 {offsets = [17, 0], sizes = [1, 32], strides = [1, 1]} : vector<34x32xf32> to vector<1x32xf32>
    %348 = tpu.concatenate %346, %347 in 0 : vector<1x32xf32>, vector<1x32xf32> -> vector<2x32xf32>
    %c240 = arith.constant 240 : index
    %c0_102 = arith.constant 0 : index
    %349 = vector.load %arg1[%c240, %c0_102] : memref<640x128xf32, #tpu.memory_space<vmem>>, vector<2x32xf32>
    %cst_103 = arith.constant dense<0.000000e+00> : vector<2xf32>
    %350 = vector.multi_reduction <add>, %348, %cst_103 [1] : vector<2x32xf32> to vector<2xf32>
    %351 = vector.shape_cast %350 : vector<2xf32> to vector<2x1xf32>
    %cst_104 = arith.constant 3.200000e+01 : f32
    %352 = vector.broadcast %cst_104 : f32 to vector<2x1xf32>
    %353 = arith.divf %351, %352 : vector<2x1xf32>
    %354 = vector.broadcast %353 : vector<2x1xf32> to vector<2x32xf32>
    %355 = arith.subf %348, %354 : vector<2x32xf32>
    %356 = arith.mulf %355, %355 : vector<2x32xf32>
    %cst_105 = arith.constant dense<0.000000e+00> : vector<2xf32>
    %357 = vector.multi_reduction <add>, %356, %cst_105 [1] : vector<2x32xf32> to vector<2xf32>
    %358 = vector.shape_cast %357 : vector<2xf32> to vector<2x1xf32>
    %cst_106 = arith.constant 3.200000e+01 : f32
    %359 = vector.broadcast %cst_106 : f32 to vector<2x1xf32>
    %360 = arith.divf %358, %359 : vector<2x1xf32>
    %cst_107 = arith.constant 9.99999974E-6 : f32
    %361 = vector.broadcast %cst_107 : f32 to vector<2x1xf32>
    %362 = arith.addf %360, %361 : vector<2x1xf32>
    %363 = math.rsqrt %362 : vector<2x1xf32>
    %364 = vector.broadcast %363 : vector<2x1xf32> to vector<2x32xf32>
    %365 = arith.mulf %355, %364 : vector<2x32xf32>
    %366 = vector.extract_strided_slice %349 {offsets = [0, 0], sizes = [1, 32], strides = [1, 1]} : vector<2x32xf32> to vector<1x32xf32>
    %367 = vector.broadcast %366 : vector<1x32xf32> to vector<2x32xf32>
    %368 = arith.mulf %365, %367 : vector<2x32xf32>
    %369 = vector.extract_strided_slice %349 {offsets = [1, 0], sizes = [1, 32], strides = [1, 1]} : vector<2x32xf32> to vector<1x32xf32>
    %370 = vector.broadcast %369 : vector<1x32xf32> to vector<2x32xf32>
    %371 = arith.addf %368, %370 : vector<2x32xf32>
    %c248 = arith.constant 248 : index
    %c0_108 = arith.constant 0 : index
    %372 = vector.load %arg1[%c248, %c0_108] : memref<640x128xf32, #tpu.memory_space<vmem>>, vector<32x16xf32>
    %cst_109 = arith.constant dense<0.000000e+00> : vector<2x16xf32>
    %373 = tpu.matmul %371, %372, %cst_109 {dimension_numbers = #tpu.dot_dimension_numbers<[1], [0], [0], [1], [0, 0, 1, 1], [], []>} : vector<2x32xf32>, vector<32x16xf32>, vector<2x16xf32> -> vector<2x16xf32>
    %374 = arith.mulf %373, %373 : vector<2x16xf32>
    %cst_110 = arith.constant dense<0.000000e+00> : vector<2xf32>
    %375 = vector.multi_reduction <add>, %374, %cst_110 [1] : vector<2x16xf32> to vector<2xf32>
    %376 = vector.shape_cast %375 : vector<2xf32> to vector<2x1xf32>
    %377 = math.rsqrt %376 : vector<2x1xf32>
    %378 = vector.broadcast %377 : vector<2x1xf32> to vector<2x16xf32>
    %379 = arith.mulf %373, %378 : vector<2x16xf32>
    %c280 = arith.constant 280 : index
    %c0_111 = arith.constant 0 : index
    %380 = vector.load %arg1[%c280, %c0_111] : memref<640x128xf32, #tpu.memory_space<vmem>>, vector<1x16xf32>
    %381 = arith.mulf %380, %380 : vector<1x16xf32>
    %cst_112 = arith.constant dense<0.000000e+00> : vector<1xf32>
    %382 = vector.multi_reduction <add>, %381, %cst_112 [1] : vector<1x16xf32> to vector<1xf32>
    %383 = vector.shape_cast %382 : vector<1xf32> to vector<1x1xf32>
    %384 = math.rsqrt %383 : vector<1x1xf32>
    %385 = vector.broadcast %384 : vector<1x1xf32> to vector<1x16xf32>
    %386 = arith.mulf %380, %385 : vector<1x16xf32>
    %cst_113 = arith.constant dense<0.000000e+00> : vector<2x1xf32>
    %387 = tpu.matmul %379, %386, %cst_113 {dimension_numbers = #tpu.dot_dimension_numbers<[1], [1], [0], [0], [0, 0, 1, 0], [], []>} : vector<2x16xf32>, vector<1x16xf32>, vector<2x1xf32> -> vector<2x1xf32>
    %cst_114 = arith.constant 14.2848568 : f32
    %388 = vector.broadcast %cst_114 : f32 to vector<2x1xf32>
    %389 = arith.mulf %387, %388 : vector<2x1xf32>
    %cst_115 = arith.constant dense<0xFF800000> : vector<2xf32>
    %390 = vector.multi_reduction <maximumf>, %389, %cst_115 [1] : vector<2x1xf32> to vector<2xf32>
    %391 = vector.shape_cast %390 : vector<2xf32> to vector<2x1xf32>
    %392 = arith.subf %389, %391 : vector<2x1xf32>
    %393 = math.exp %392 : vector<2x1xf32>
    %cst_116 = arith.constant dense<0.000000e+00> : vector<2xf32>
    %394 = vector.multi_reduction <add>, %393, %cst_116 [1] : vector<2x1xf32> to vector<2xf32>
    %395 = vector.shape_cast %394 : vector<2xf32> to vector<2x1xf32>
    %396 = arith.divf %393, %395 : vector<2x1xf32>
    %397 = vector.shape_cast %396 : vector<2x1xf32> to vector<2x1xf32>
    %398 = vector.broadcast %397 : vector<2x1xf32> to vector<2x128xf32>
    %c0_117 = arith.constant 0 : index
    %c0_118 = arith.constant 0 : index
    %399 = vector.load %arg2[%c0_117, %c0_118] : memref<2x128xf32, #tpu.memory_space<vmem>>, vector<2x128xf32>
    tpu.vector_store %arg2[%c0_117, %c0_118], %398 {strides = array<i32>} : memref<2x128xf32, #tpu.memory_space<vmem>>, vector<2x128xf32>,
    %c0_119 = arith.constant 0 : index
    %c0_120 = arith.constant 0 : index
    %400 = vector.load %arg3[%c0_119, %c0_120] : memref<2x16xf32, #tpu.memory_space<vmem>>, vector<2x16xf32>
    tpu.vector_store %arg3[%c0_119, %c0_120], %379 {strides = array<i32>} : memref<2x16xf32, #tpu.memory_space<vmem>>, vector<2x16xf32>,
    return
  }
}

</mosaic_0001>

<llo_original>
// kernel: _forward_impl.1
$region0: #{_forward_impl.1}
  #allocation0 [shape = 'u32[]', space=smem, size = 0x4, offset = 0x4, fixed_abs, tag = 'smem constant byte address 0x4 - core index']
  #allocation1 [shape = 'u32[144,128]{1,0:T(1,128)}', space=vmem, size = 0x12000, scoped, tag = 'internal scratch']
  %s0 = inlined_call_operand.vmem [shape: f32[34,192], index: 0, kind: input, shape index: {}]
  %s1 = inlined_call_operand.vmem [shape: f32[640,128], index: 1, kind: input, shape index: {}]
  %s2 = inlined_call_operand.vmem [shape: f32[2,128], index: 2, kind: output, shape index: {0}]
  %s3 = inlined_call_operand.hbm [shape: f32[2,16], index: 3, kind: output, shape index: {1}]
  %4 = xla_tuple %s2, %s3
  %s5 = sld [smem:[#allocation0]]
  $region26: #{_forward_impl.1} parent=0
    _
  %s7 = ssub.s32 1, %s5
  %s8 = scalar_select 0, %s7, %s5
  $region1: #{_forward_impl.1} parent=0
    #allocation2 [shape = 'u8[1024]{0}', space=vmem, size = 0x400, scoped, tag = 'output window, operand 1, single buffered']
    #allocation3 [shape = 's32[1]{0}', space=sflag, size = 0x4, scoped, tag = 'scoped memory for _forward_impl.1']
    %9 = vsyncpa [#allocation3], 0
    // Predicated region
    $region2: #{_forward_impl.1} parent=1 // pred_check
      _
    $region3: #{_forward_impl.1} parent=1 // pred_check_branch
      %11 = sbr.rel (0) target = $region5
    $region4: #{_forward_impl.1} parent=1 // pred_region
      _
    $region5: #{_forward_impl.1} parent=1 // pred_fallthru
      _
    // Predicated region
    $region6: #{_forward_impl.1} parent=1 // pred_check
      _
    $region7: #{_forward_impl.1} parent=1 // pred_check_branch
      %13 = sbr.rel (0) target = $region9
    $region8: #{_forward_impl.1} parent=1 // pred_region
      _
    $region9: #{_forward_impl.1} parent=1 // pred_fallthru
      _
    %v14 = vld [vmem:[%s0] sm:$0xff]
    %v15 = vld [vmem:[%s0 + $0x8] sm:$0xff]
    %v16 = vld [vmem:[%s0 + $0x10] sm:$0xff]
    %v17 = vld [vmem:[%s0 + $0x18] sm:$0xff]
    %v18 = vld [vmem:[%s0 + $0x20] sm:$0xff]
    %v19 = vld [vmem:[%s0 + $0x28] sm:$0xff]
    %v20 = vld [vmem:[%s0 + $0x30] sm:$0xff]
    %v21 = vld [vmem:[%s0 + $0x38] sm:$0xff]
    %v22 = vld [vmem:[%s0 + $0x40] sm:$0x3]
    %v23 = vld [vmem:[%s0 + $0x48] sm:$0x3]
    %v24 = vld [vmem:[%s1] sm:$0xff]
    %v25 = vld [vmem:[%s1 + $0x8] sm:$0xff]
    %v26 = vld [vmem:[%s1 + $0x10] sm:$0xff]
    %v27 = vld [vmem:[%s1 + $0x18] sm:$0xff]
    %v28 = vld [vmem:[%s1 + $0x20] sm:$0xff]
    %v29 = vld [vmem:[%s1 + $0x28] sm:$0xff]
    %v30 = vld [vmem:[%s1 + $0x30] sm:$0xff]
    %v31 = vld [vmem:[%s1 + $0x38] sm:$0xff]
    %v32 = vld [vmem:[%s1 + $0x40] sm:$0xff]
    %v33 = vld [vmem:[%s1 + $0x48] sm:$0xff]
    %v34 = vld [vmem:[%s1 + $0x50] sm:$0xff]
    %v35 = vld [vmem:[%s1 + $0x58] sm:$0xff]
    %v36 = vld [vmem:[%s1 + $0x60] sm:$0xff]
    %v37 = vld [vmem:[%s1 + $0x68] sm:$0xff]
    %v38 = vld [vmem:[%s1 + $0x70] sm:$0xff]
    %v39 = vld [vmem:[%s1 + $0x78] sm:$0xff]
    %v40 = vld [vmem:[%s1 + $0x80] sm:$0xff]
    %v41 = vld [vmem:[%s1 + $0x88] sm:$0xff]
    %v42 = vld [vmem:[%s1 + $0x90] sm:$0xff]
    %v43 = vld [vmem:[%s1 + $0x98] sm:$0xff]
    %v44 = vld [vmem:[%s1 + $0xa0] sm:$0xff]
    %v45 = vld [vmem:[%s1 + $0xa8] sm:$0xff]
    %v46 = vld [vmem:[%s1 + $0xb0] sm:$0xff]
    %v47 = vld [vmem:[%s1 + $0xb8] sm:$0xff]
    %v48 = vld [vmem:[%s1 + $0xc0] sm:$0xff]
    %v49 = vld [vmem:[%s1 + $0xc8] sm:$0xff]
    %v50 = vld [vmem:[%s1 + $0xd0] sm:$0xff]
    %v51 = vld [vmem:[%s1 + $0xd8] sm:$0xff]
    %v52 = vld [vmem:[%s1 + $0xe0] sm:$0x3]
    %vm53 = vcmask 523264
    %v55 = vsel %vm53, %v15, 0
    %v58 = vsel %vm53, %v17, 0
    %v61 = vsel %vm53, %v19, 0
    %v64 = vsel %vm53, %v21, 0
    %v67 = vsel %vm53, %v23, 0
    %69 = vmatprep.subr.mxu0 0.0
    %70 = vmatpush1.msra.mxu0 %v39
    %71 = vmatprep.subr.mxu0 0.0
    %72 = vmatpush1.msra.mxu0 %v38
    %73 = vmatprep.subr.mxu0 0.0
    %74 = vmatpush1.msra.mxu0 %v37
    %75 = vmatprep.subr.mxu0 0.0
    %76 = vmatpush1.msra.mxu0 %v36
    %77 = vmatprep.subr.mxu0 0.0
    %78 = vmatpush1.msra.mxu0 %v35
    %79 = vmatprep.subr.mxu0 0.0
    %80 = vmatpush1.msra.mxu0 %v34
    %81 = vmatprep.subr.mxu0 0.0
    %82 = vmatpush1.msra.mxu0 %v33
    %83 = vmatprep.subr.mxu0 0.0
    %84 = vmatpush1.msra.mxu0 %v32
    %85 = vmatprep.subr.mxu0 0.0
    %86 = vmatpush1.msra.mxu0 %v31
    %87 = vmatprep.subr.mxu0 0.0
    %88 = vmatpush1.msra.mxu0 %v30
    %89 = vmatprep.subr.mxu0 0.0
    %90 = vmatpush1.msra.mxu0 %v29
    %91 = vmatprep.subr.mxu0 0.0
    %92 = vmatpush1.msra.mxu0 %v28
    %93 = vmatprep.subr.mxu0 0.0
    %94 = vmatpush1.msra.mxu0 %v27
    %95 = vmatprep.subr.mxu0 0.0
    %96 = vmatpush1.msra.mxu0 %v26
    %97 = vmatprep.subr.mxu0 0.0
    %98 = vmatpush1.msra.mxu0 %v25
    %99 = vmatprep.subr.mxu0 0.0
    %100 = vmatpush1.msra.mxu0 %v24
    %101 = vmatprep.subr.mxu0 0.0
    %102 = vmatpush2.msra.mxu0 0.0
    %103 = vmatprep.subr.mxu0 0.0
    %104 = vmatpush2.msra.mxu0 0.0
    %105 = vmatprep.subr.mxu0 0.0
    %106 = vmatpush2.msra.mxu0 0.0
    %107 = vmatprep.subr.mxu0 0.0
    %108 = vmatpush2.msra.mxu0 0.0
    %109 = vmatprep.subr.mxu0 0.0
    %110 = vmatpush2.msra.mxu0 0.0
    %111 = vmatprep.subr.mxu0 0.0
    %112 = vmatpush2.msra.mxu0 0.0
    %113 = vmatprep.subr.mxu0 0.0
    %114 = vmatpush2.msra.mxu0 0.0
    %115 = vmatprep.subr.mxu0 0.0
    %116 = vmatpush2.msra.mxu0 0.0
    %117 = vmatprep.subr.mxu0 0.0
    %118 = vmatpush2.msra.mxu0 %v47
    %119 = vmatprep.subr.mxu0 0.0
    %120 = vmatpush2.msra.mxu0 %v46
    %121 = vmatprep.subr.mxu0 0.0
    %122 = vmatpush2.msra.mxu0 %v45
    %123 = vmatprep.subr.mxu0 0.0
    %124 = vmatpush2.msra.mxu0 %v44
    %125 = vmatprep.subr.mxu0 0.0
    %126 = vmatpush2.msra.mxu0 %v43
    %127 = vmatprep.subr.mxu0 0.0
    %128 = vmatpush2.msra.mxu0 %v42
    %129 = vmatprep.subr.mxu0 0.0
    %130 = vmatpush2.msra.mxu0 %v41
    %131 = vmatprep.subr.mxu0 0.0
    %132 = vmatpush2.msra.mxu0 %v40
    %133 = vmatprep.mubr.f32.mxu0 %v55
    %134 = vmatmul.mubr.f32.gmra.mxu0 %v14
    %v135 = vpop.f32.mrf.mxu0
    %v136 = vadd.f32 %v48, %v135
    %v137 = vpop.f32.mrf.mxu0
    %138 = vmatprep.mubr.f32.mxu0 %v58
    %139 = vmatmul.mubr.f32.gmra.mxu0 %v16
    %v140 = vpop.f32.mrf.mxu0
    %v141 = vadd.f32 %v49, %v140
    %v142 = vpop.f32.mrf.mxu0
    %143 = vmatprep.mubr.f32.mxu0 %v61
    %144 = vmatmul.mubr.f32.gmra.mxu0 %v18
    %v145 = vpop.f32.mrf.mxu0
    %v146 = vadd.f32 %v50, %v145
    %v147 = vpop.f32.mrf.mxu0
    %148 = vmatprep.mubr.f32.mxu0 %v64
    %149 = vmatmul.mubr.f32.gmra.mxu0 %v20
    %v150 = vpop.f32.mrf.mxu0
    %v151 = vadd.f32 %v51, %v150
    %v152 = vpop.f32.mrf.mxu0
    %153 = vmatprep.mubr.f32.mxu0 %v67
    %154 = vmatmul.mubr.f32.gmra.mxu0 %v22
    %v155 = vpop.f32.mrf.mxu0
    %v156 = vadd.f32 %v52, %v155
    %v157 = vpop.f32.mrf.mxu0
    %158 = vdwg.mxu0
    %v159 = vld [vmem:[%s1 + $0xe8] sm:$0x3]
    %vm160 = vcmask 261120
    %v161 = vsel %vm160, %v136, 0.0
    %162 = vadd.xlane.f32.xlu0 %v161
    %v163 = vpop.xlane.xlu0 %162
    %v164 = vsel %vm160, %v141, 0.0
    %165 = vadd.xlane.f32.xlu0 %v164
    %v166 = vpop.xlane.xlu0 %165
    %v167 = vsel %vm160, %v146, 0.0
    %168 = vadd.xlane.f32.xlu0 %v167
    %v169 = vpop.xlane.xlu0 %168
    %v170 = vsel %vm160, %v151, 0.0
    %171 = vadd.xlane.f32.xlu0 %v170
    %v172 = vpop.xlane.xlu0 %171
    %vm173 = vcmask 254976
    %v174 = vsel %vm173, %v156, 0.0
    %175 = vadd.xlane.f32.xlu0 %v174
    %v176 = vpop.xlane.xlu0 %175
    %v177 = vrcp.pop 32.0
    %v178 = vmul.f32 %v163, %v177
    %v179 = vmul.f32 %v166, %v177
    %v180 = vmul.f32 %v169, %v177
    %v181 = vmul.f32 %v172, %v177
    %v182 = vmul.f32 %v176, %v177
    %v183 = vsub.f32 %v136, %v178
    %v184 = vsub.f32 %v141, %v179
    %v185 = vsub.f32 %v146, %v180
    %v186 = vsub.f32 %v151, %v181
    %v187 = vsub.f32 %v156, %v182
    %v188 = vmul.f32 %v183, %v183
    %v189 = vmul.f32 %v184, %v184
    %v190 = vmul.f32 %v185, %v185
    %v191 = vmul.f32 %v186, %v186
    %v192 = vmul.f32 %v187, %v187
    %v193 = vsel %vm160, %v188, 0.0
    %194 = vadd.xlane.f32.xlu0 %v193
    %v195 = vpop.xlane.xlu0 %194
    %v196 = vsel %vm160, %v189, 0.0
    %197 = vadd.xlane.f32.xlu0 %v196
    %v198 = vpop.xlane.xlu0 %197
    %v199 = vsel %vm160, %v190, 0.0
    %200 = vadd.xlane.f32.xlu0 %v199
    %v201 = vpop.xlane.xlu0 %200
    %v202 = vsel %vm160, %v191, 0.0
    %203 = vadd.xlane.f32.xlu0 %v202
    %v204 = vpop.xlane.xlu0 %203
    %v205 = vsel %vm173, %v192, 0.0
    %206 = vadd.xlane.f32.xlu0 %v205
    %v207 = vpop.xlane.xlu0 %206
    %v208 = vmul.f32 %v195, %v177
    %v209 = vmul.f32 %v198, %v177
    %v210 = vmul.f32 %v201, %v177
    %v211 = vmul.f32 %v204, %v177
    %v212 = vmul.f32 %v207, %v177
    %v213 = vadd.f32 %v208, 1e-05
    %v214 = vadd.f32 %v209, 1e-05
    %v215 = vadd.f32 %v210, 1e-05
    %v216 = vadd.f32 %v211, 1e-05
    %v217 = vadd.f32 %v212, 1e-05
    %v218 = vrsqrt.pop %v213
    %v219 = vrsqrt.pop %v214
    %v220 = vrsqrt.pop %v215
    %v221 = vrsqrt.pop %v216
    %v222 = vrsqrt.pop %v217
    %v223 = vmul.f32 %v183, %v218
    %v224 = vmul.f32 %v184, %v219
    %v225 = vmul.f32 %v185, %v220
    %v226 = vmul.f32 %v186, %v221
    %v227 = vmul.f32 %v187, %v222
    %v228 = vlaneseq
    %v229 = vshrl.u32 %v228, 7
    %v230 = vsub.s32 0, %v229
    %v231 = vrot.slane %v159, %v230
    %v232 = vmul.f32 %v223, %v231
    %v233 = vmul.f32 %v224, %v231
    %v234 = vmul.f32 %v225, %v231
    %v235 = vmul.f32 %v226, %v231
    %v236 = vmul.f32 %v227, %v231
    %v237 = vlaneseq
    %v238 = vshrl.u32 %v237, 7
    %v239 = vsub.s32 1, %v238
    %v240 = vrot.slane %v159, %v239
    %v241 = vadd.f32 %v232, %v240
    %v242 = vadd.f32 %v233, %v240
    %v243 = vadd.f32 %v234, %v240
    %v244 = vadd.f32 %v235, %v240
    %v245 = vadd.f32 %v236, %v240
    %v246 = vld [vmem:[%s1 + $0x120] sm:$0x3]
    %v247 = vsel %vm160, %v241, 0.0
    %248 = vadd.xlane.f32.xlu0 %v247
    %v249 = vpop.xlane.xlu0 %248
    %v250 = vsel %vm160, %v242, 0.0
    %251 = vadd.xlane.f32.xlu0 %v250
    %v252 = vpop.xlane.xlu0 %251
    %v253 = vsel %vm160, %v243, 0.0
    %254 = vadd.xlane.f32.xlu0 %v253
    %v255 = vpop.xlane.xlu0 %254
    %v256 = vsel %vm160, %v244, 0.0
    %257 = vadd.xlane.f32.xlu0 %v256
    %v258 = vpop.xlane.xlu0 %257
    %v259 = vsel %vm173, %v245, 0.0
    %260 = vadd.xlane.f32.xlu0 %v259
    %v261 = vpop.xlane.xlu0 %260
    %v262 = vmul.f32 %v249, %v177
    %v263 = vmul.f32 %v252, %v177
    %v264 = vmul.f32 %v255, %v177
    %v265 = vmul.f32 %v258, %v177
    %v266 = vmul.f32 %v261, %v177
    %v267 = vsub.f32 %v241, %v262
    %v268 = vsub.f32 %v242, %v263
    %v269 = vsub.f32 %v243, %v264
    %v270 = vsub.f32 %v244, %v265
    %v271 = vsub.f32 %v245, %v266
    %v272 = vmul.f32 %v267, %v267
    %v273 = vmul.f32 %v268, %v268
    %v274 = vmul.f32 %v269, %v269
    %v275 = vmul.f32 %v270, %v270
    %v276 = vmul.f32 %v271, %v271
    %v277 = vsel %vm160, %v272, 0.0
    %278 = vadd.xlane.f32.xlu0 %v277
    %v279 = vpop.xlane.xlu0 %278
    %v280 = vsel %vm160, %v273, 0.0
    %281 = vadd.xlane.f32.xlu0 %v280
    %v282 = vpop.xlane.xlu0 %281
    %v283 = vsel %vm160, %v274, 0.0
    %284 = vadd.xlane.f32.xlu0 %v283
    %v285 = vpop.xlane.xlu0 %284
    %v286 = vsel %vm160, %v275, 0.0
    %287 = vadd.xlane.f32.xlu0 %v286
    %v288 = vpop.xlane.xlu0 %287
    %v289 = vsel %vm173, %v276, 0.0
    %290 = vadd.xlane.f32.xlu0 %v289
    %v291 = vpop.xlane.xlu0 %290
    %v292 = vmul.f32 %v279, %v177
    %v293 = vmul.f32 %v282, %v177
    %v294 = vmul.f32 %v285, %v177
    %v295 = vmul.f32 %v288, %v177
    %v296 = vmul.f32 %v291, %v177
    %v297 = vadd.f32 %v292, 1e-05
    %v298 = vadd.f32 %v293, 1e-05
    %v299 = vadd.f32 %v294, 1e-05
    %v300 = vadd.f32 %v295, 1e-05
    %v301 = vadd.f32 %v296, 1e-05
    %v302 = vrsqrt.pop %v297
    %v303 = vrsqrt.pop %v298
    %v304 = vrsqrt.pop %v299
    %v305 = vrsqrt.pop %v300
    %v306 = vrsqrt.pop %v301
    %v307 = vmul.f32 %v267, %v302
    %v308 = vmul.f32 %v268, %v303
    %v309 = vmul.f32 %v269, %v304
    %v310 = vmul.f32 %v270, %v305
    %v311 = vmul.f32 %v271, %v306
    %v312 = vlaneseq
    %v313 = vshrl.u32 %v312, 7
    %v314 = vsub.s32 0, %v313
    %v315 = vrot.slane %v246, %v314
    %v316 = vmul.f32 %v307, %v315
    %v317 = vmul.f32 %v308, %v315
    %v318 = vmul.f32 %v309, %v315
    %v319 = vmul.f32 %v310, %v315
    %v320 = vmul.f32 %v311, %v315
    %v321 = vlaneseq
    %v322 = vshrl.u32 %v321, 7
    %v323 = vsub.s32 1, %v322
    %v324 = vrot.slane %v246, %v323
    %v325 = vadd.f32 %v316, %v324
    %v326 = vadd.f32 %v317, %v324
    %v327 = vadd.f32 %v318, %v324
    %v328 = vadd.f32 %v319, %v324
    %v329 = vadd.f32 %v320, %v324
    %v330 = vld [vmem:[%s1 + $0x150] sm:$0xff]
    %v331 = vld [vmem:[%s1 + $0x158] sm:$0xff]
    %v332 = vld [vmem:[%s1 + $0x160] sm:$0xff]
    %v333 = vld [vmem:[%s1 + $0x168] sm:$0xff]
    %v334 = vld [vmem:[%s1 + $0x130] sm:$0x1]
    %v335 = vlaneseq
    %v336 = vshrl.u32 %v335, 7
    %v337 = vsub.s32 0, %v336
    %v338 = vrot.slane %v334, %v337
    %v340 = vsel %vm160, %v325, 0
    %v343 = vsel %vm160, %v326, 0
    %v346 = vsel %vm160, %v327, 0
    %v349 = vsel %vm160, %v328, 0
    %v352 = vsel %vm160, %v329, 0
    %354 = vmatprep.subr.mxu0 0.0
    %355 = vmatpush1.msra.mxu0 0.0
    %356 = vmatprep.subr.mxu0 0.0
    %357 = vmatpush1.msra.mxu0 0.0
    %358 = vmatprep.subr.mxu0 0.0
    %359 = vmatpush1.msra.mxu0 0.0
    %360 = vmatprep.subr.mxu0 0.0
    %361 = vmatpush1.msra.mxu0 0.0
    %362 = vmatprep.subr.mxu0 0.0
    %363 = vmatpush1.msra.mxu0 0.0
    %364 = vmatprep.subr.mxu0 0.0
    %365 = vmatpush1.msra.mxu0 0.0
    %366 = vmatprep.subr.mxu0 0.0
    %367 = vmatpush1.msra.mxu0 0.0
    %368 = vmatprep.subr.mxu0 0.0
    %369 = vmatpush1.msra.mxu0 0.0
    %370 = vmatprep.subr.mxu0 0.0
    %371 = vmatpush1.msra.mxu0 0.0
    %372 = vmatprep.subr.mxu0 0.0
    %373 = vmatpush1.msra.mxu0 0.0
    %374 = vmatprep.subr.mxu0 0.0
    %375 = vmatpush1.msra.mxu0 0.0
    %376 = vmatprep.subr.mxu0 0.0
    %377 = vmatpush1.msra.mxu0 0.0
    %378 = vmatprep.subr.mxu0 0.0
    %379 = vmatpush1.msra.mxu0 %v333
    %380 = vmatprep.subr.mxu0 0.0
    %381 = vmatpush1.msra.mxu0 %v332
    %382 = vmatprep.subr.mxu0 0.0
    %383 = vmatpush1.msra.mxu0 %v331
    %384 = vmatprep.subr.mxu0 0.0
    %385 = vmatpush1.msra.mxu0 %v330
    %386 = vmatprep.subr.mxu0 0.0
    %387 = vmatpush2.msra.mxu0 0.0
    %388 = vmatprep.subr.mxu0 0.0
    %389 = vmatpush2.msra.mxu0 0.0
    %390 = vmatprep.subr.mxu0 0.0
    %391 = vmatpush2.msra.mxu0 0.0
    %392 = vmatprep.subr.mxu0 0.0
    %393 = vmatpush2.msra.mxu0 0.0
    %394 = vmatprep.subr.mxu0 0.0
    %395 = vmatpush2.msra.mxu0 0.0
    %396 = vmatprep.subr.mxu0 0.0
    %397 = vmatpush2.msra.mxu0 0.0
    %398 = vmatprep.subr.mxu0 0.0
    %399 = vmatpush2.msra.mxu0 0.0
    %400 = vmatprep.subr.mxu0 0.0
    %401 = vmatpush2.msra.mxu0 0.0
    %402 = vmatprep.subr.mxu0 0.0
    %403 = vmatpush2.msra.mxu0 0.0
    %404 = vmatprep.subr.mxu0 0.0
    %405 = vmatpush2.msra.mxu0 0.0
    %406 = vmatprep.subr.mxu0 0.0
    %407 = vmatpush2.msra.mxu0 0.0
    %408 = vmatprep.subr.mxu0 0.0
    %409 = vmatpush2.msra.mxu0 0.0
    %410 = vmatprep.subr.mxu0 0.0
    %411 = vmatpush2.msra.mxu0 0.0
    %412 = vmatprep.subr.mxu0 0.0
    %413 = vmatpush2.msra.mxu0 0.0
    %414 = vmatprep.subr.mxu0 0.0
    %415 = vmatpush2.msra.mxu0 0.0
    %416 = vmatprep.subr.mxu0 0.0
    %417 = vmatpush2.msra.mxu0 0.0
    %418 = vmatprep.mubr.f32.mxu0 0.0
    %419 = vmatmul.mubr.f32.gmra.mxu0 %v340
    %v420 = vpop.f32.mrf.mxu0
    %v421 = vadd.f32 %v338, %v420
    %v422 = vpop.f32.mrf.mxu0
    %423 = vmatprep.mubr.f32.mxu0 0.0
    %424 = vmatmul.mubr.f32.gmra.mxu0 %v343
    %v425 = vpop.f32.mrf.mxu0
    %v426 = vadd.f32 %v338, %v425
    %v427 = vpop.f32.mrf.mxu0
    %428 = vmatprep.mubr.f32.mxu0 0.0
    %429 = vmatmul.mubr.f32.gmra.mxu0 %v346
    %v430 = vpop.f32.mrf.mxu0
    %v431 = vadd.f32 %v338, %v430
    %v432 = vpop.f32.mrf.mxu0
    %433 = vmatprep.mubr.f32.mxu0 0.0
    %434 = vmatmul.mubr.f32.gmra.mxu0 %v349
    %v435 = vpop.f32.mrf.mxu0
    %v436 = vadd.f32 %v338, %v435
    %v437 = vpop.f32.mrf.mxu0
    %438 = vmatprep.mubr.f32.mxu0 0.0
    %439 = vmatmul.mubr.f32.gmra.mxu0 %v352
    %v440 = vpop.f32.mrf.mxu0
    %v441 = vadd.f32 %v338, %v440
    %v442 = vpop.f32.mrf.mxu0
    %443 = vdwg.mxu0
    %447 = vrot.lane.b32.xlu0 %v421, 96
    %v448 = vpop.permute.xlu0 %447
    %449 = vrot.lane.b32.xlu0 %v426, 96
    %v450 = vpop.permute.xlu0 %449
    %451 = vrot.lane.b32.xlu0 %v431, 96
    %v452 = vpop.permute.xlu0 %451
    %vm453 = vcmask 64512
    %v454 = vsel %vm453, %v421, 0
    %v456 = vsel %vm453, %v426, 0
    %v458 = vsel %vm453, %v431, 0
    %v460 = vsel %vm453, %v448, 0
    %v462 = vsel %vm453, %v450, 0
    %v464 = vsel %vm453, %v452, 0
    %466 = vmatprep.subr.mxu0 0.0
    %467 = vmatpush1.xpose.msra.mxu0 0.0
    %468 = vmatprep.subr.mxu0 0.0
    %469 = vmatpush1.xpose.msra.mxu0 0.0
    %470 = vmatprep.subr.mxu0 0.0
    %471 = vmatpush1.xpose.msra.mxu0 0.0
    %472 = vmatprep.subr.mxu0 0.0
    %473 = vmatpush1.xpose.msra.mxu0 0.0
    %474 = vmatprep.subr.mxu0 0.0
    %475 = vmatpush1.xpose.msra.mxu0 0.0
    %476 = vmatprep.subr.mxu0 0.0
    %477 = vmatpush1.xpose.msra.mxu0 0.0
    %478 = vmatprep.subr.mxu0 0.0
    %479 = vmatpush1.xpose.msra.mxu0 0.0
    %480 = vmatprep.subr.mxu0 0.0
    %481 = vmatpush1.xpose.msra.mxu0 0.0
    %482 = vmatprep.subr.mxu0 0.0
    %483 = vmatpush1.xpose.msra.mxu0 0.0
    %484 = vmatprep.subr.mxu0 0.0
    %485 = vmatpush1.xpose.msra.mxu0 0.0
    %486 = vmatprep.subr.mxu0 0.0
    %487 = vmatpush1.xpose.msra.mxu0 0.0
    %488 = vmatprep.subr.mxu0 0.0
    %489 = vmatpush1.xpose.msra.mxu0 0.0
    %490 = vmatprep.subr.mxu0 0.0
    %491 = vmatpush1.xpose.msra.mxu0 0.0
    %492 = vmatprep.subr.mxu0 0.0
    %493 = vmatpush1.xpose.msra.mxu0 %v464
    %494 = vmatprep.subr.mxu0 0.0
    %495 = vmatpush1.xpose.msra.mxu0 %v462
    %496 = vmatprep.subr.mxu0 0.0
    %497 = vmatpush1.xpose.msra.mxu0 %v460
    %498 = vmatprep.subr.mxu0 0.0
    %499 = vmatpush2.xpose.msra.mxu0 0.0
    %500 = vmatprep.subr.mxu0 0.0
    %501 = vmatpush2.xpose.msra.mxu0 0.0
    %502 = vmatprep.subr.mxu0 0.0
    %503 = vmatpush2.xpose.msra.mxu0 0.0
    %504 = vmatprep.subr.mxu0 0.0
    %505 = vmatpush2.xpose.msra.mxu0 0.0
    %506 = vmatprep.subr.mxu0 0.0
    %507 = vmatpush2.xpose.msra.mxu0 0.0
    %508 = vmatprep.subr.mxu0 0.0
    %509 = vmatpush2.xpose.msra.mxu0 0.0
    %510 = vmatprep.subr.mxu0 0.0
    %511 = vmatpush2.xpose.msra.mxu0 0.0
    %512 = vmatprep.subr.mxu0 0.0
    %513 = vmatpush2.xpose.msra.mxu0 0.0
    %514 = vmatprep.subr.mxu0 0.0
    %515 = vmatpush2.xpose.msra.mxu0 0.0
    %516 = vmatprep.subr.mxu0 0.0
    %517 = vmatpush2.xpose.msra.mxu0 0.0
    %518 = vmatprep.subr.mxu0 0.0
    %519 = vmatpush2.xpose.msra.mxu0 0.0
    %520 = vmatprep.subr.mxu0 0.0
    %521 = vmatpush2.xpose.msra.mxu0 0.0
    %522 = vmatprep.subr.mxu0 0.0
    %523 = vmatpush2.xpose.msra.mxu0 0.0
    %524 = vmatprep.subr.mxu0 0.0
    %525 = vmatpush2.xpose.msra.mxu0 0.0
    %526 = vmatprep.subr.mxu0 0.0
    %527 = vmatpush2.xpose.msra.mxu0 0.0
    %528 = vmatprep.subr.mxu0 0.0
    %529 = vmatpush2.xpose.msra.mxu0 0.0
    %530 = vmatprep.mubr.f32.mxu0 0.0
    %531 = vmatmul.mubr.f32.gmra.mxu0 %v454
    %v532 = vpop.f32.mrf.mxu0
    %v533 = vadd.f32 0.0, %v532
    %v534 = vpop.f32.mrf.mxu0
    %535 = vmatprep.mubr.f32.mxu0 0.0
    %536 = vmatmul.mubr.f32.gmra.mxu0 %v456
    %v537 = vpop.f32.mrf.mxu0
    %v538 = vadd.f32 0.0, %v537
    %v539 = vpop.f32.mrf.mxu0
    %540 = vmatprep.mubr.f32.mxu0 0.0
    %541 = vmatmul.mubr.f32.gmra.mxu0 %v458
    %v542 = vpop.f32.mrf.mxu0
    %v543 = vadd.f32 0.0, %v542
    %v544 = vpop.f32.mrf.mxu0
    %545 = vdwg.mxu0
    %546 = vrot.lane.b32.xlu0 %v421, 120
    %v547 = vpop.permute.xlu0 %546
    %548 = vrot.lane.b32.xlu0 %v426, 120
    %v549 = vpop.permute.xlu0 %548
    %550 = vrot.lane.b32.xlu0 %v431, 120
    %v551 = vpop.permute.xlu0 %550
    %552 = vrot.lane.b32.xlu0 %v421, 88
    %v553 = vpop.permute.xlu0 %552
    %554 = vrot.lane.b32.xlu0 %v426, 88
    %v555 = vpop.permute.xlu0 %554
    %556 = vrot.lane.b32.xlu0 %v431, 88
    %v557 = vpop.permute.xlu0 %556
    %v558 = vsel %vm453, %v547, 0
    %v560 = vsel %vm453, %v549, 0
    %v562 = vsel %vm453, %v551, 0
    %v564 = vsel %vm453, %v553, 0
    %v566 = vsel %vm453, %v555, 0
    %v568 = vsel %vm453, %v557, 0
    %570 = vmatprep.subr.mxu0 0.0
    %571 = vmatpush1.xpose.msra.mxu0 0.0
    %572 = vmatprep.subr.mxu0 0.0
    %573 = vmatpush1.xpose.msra.mxu0 0.0
    %574 = vmatprep.subr.mxu0 0.0
    %575 = vmatpush1.xpose.msra.mxu0 0.0
    %576 = vmatprep.subr.mxu0 0.0
    %577 = vmatpush1.xpose.msra.mxu0 0.0
    %578 = vmatprep.subr.mxu0 0.0
    %579 = vmatpush1.xpose.msra.mxu0 0.0
    %580 = vmatprep.subr.mxu0 0.0
    %581 = vmatpush1.xpose.msra.mxu0 0.0
    %582 = vmatprep.subr.mxu0 0.0
    %583 = vmatpush1.xpose.msra.mxu0 0.0
    %584 = vmatprep.subr.mxu0 0.0
    %585 = vmatpush1.xpose.msra.mxu0 0.0
    %586 = vmatprep.subr.mxu0 0.0
    %587 = vmatpush1.xpose.msra.mxu0 0.0
    %588 = vmatprep.subr.mxu0 0.0
    %589 = vmatpush1.xpose.msra.mxu0 0.0
    %590 = vmatprep.subr.mxu0 0.0
    %591 = vmatpush1.xpose.msra.mxu0 0.0
    %592 = vmatprep.subr.mxu0 0.0
    %593 = vmatpush1.xpose.msra.mxu0 0.0
    %594 = vmatprep.subr.mxu0 0.0
    %595 = vmatpush1.xpose.msra.mxu0 0.0
    %596 = vmatprep.subr.mxu0 0.0
    %597 = vmatpush1.xpose.msra.mxu0 %v568
    %598 = vmatprep.subr.mxu0 0.0
    %599 = vmatpush1.xpose.msra.mxu0 %v566
    %600 = vmatprep.subr.mxu0 0.0
    %601 = vmatpush1.xpose.msra.mxu0 %v564
    %602 = vmatprep.subr.mxu0 0.0
    %603 = vmatpush2.xpose.msra.mxu0 0.0
    %604 = vmatprep.subr.mxu0 0.0
    %605 = vmatpush2.xpose.msra.mxu0 0.0
    %606 = vmatprep.subr.mxu0 0.0
    %607 = vmatpush2.xpose.msra.mxu0 0.0
    %608 = vmatprep.subr.mxu0 0.0
    %609 = vmatpush2.xpose.msra.mxu0 0.0
    %610 = vmatprep.subr.mxu0 0.0
    %611 = vmatpush2.xpose.msra.mxu0 0.0
    %612 = vmatprep.subr.mxu0 0.0
    %613 = vmatpush2.xpose.msra.mxu0 0.0
    %614 = vmatprep.subr.mxu0 0.0
    %615 = vmatpush2.xpose.msra.mxu0 0.0
    %616 = vmatprep.subr.mxu0 0.0
    %617 = vmatpush2.xpose.msra.mxu0 0.0
    %618 = vmatprep.subr.mxu0 0.0
    %619 = vmatpush2.xpose.msra.mxu0 0.0
    %620 = vmatprep.subr.mxu0 0.0
    %621 = vmatpush2.xpose.msra.mxu0 0.0
    %622 = vmatprep.subr.mxu0 0.0
    %623 = vmatpush2.xpose.msra.mxu0 0.0
    %624 = vmatprep.subr.mxu0 0.0
    %625 = vmatpush2.xpose.msra.mxu0 0.0
    %626 = vmatprep.subr.mxu0 0.0
    %627 = vmatpush2.xpose.msra.mxu0 0.0
    %628 = vmatprep.subr.mxu0 0.0
    %629 = vmatpush2.xpose.msra.mxu0 0.0
    %630 = vmatprep.subr.mxu0 0.0
    %631 = vmatpush2.xpose.msra.mxu0 0.0
    %632 = vmatprep.subr.mxu0 0.0
    %633 = vmatpush2.xpose.msra.mxu0 0.0
    %634 = vmatprep.mubr.f32.mxu0 0.0
    %635 = vmatmul.mubr.f32.gmra.mxu0 %v558
    %v636 = vpop.f32.mrf.mxu0
    %v637 = vadd.f32 0.0, %v636
    %v638 = vpop.f32.mrf.mxu0
    %639 = vmatprep.mubr.f32.mxu0 0.0
    %640 = vmatmul.mubr.f32.gmra.mxu0 %v560
    %v641 = vpop.f32.mrf.mxu0
    %v642 = vadd.f32 0.0, %v641
    %v643 = vpop.f32.mrf.mxu0
    %644 = vmatprep.mubr.f32.mxu0 0.0
    %645 = vmatmul.mubr.f32.gmra.mxu0 %v562
    %v646 = vpop.f32.mrf.mxu0
    %v647 = vadd.f32 0.0, %v646
    %v648 = vpop.f32.mrf.mxu0
    %649 = vdwg.mxu0
    %650 = vrot.lane.b32.xlu0 %v421, 112
    %v651 = vpop.permute.xlu0 %650
    %652 = vrot.lane.b32.xlu0 %v426, 112
    %v653 = vpop.permute.xlu0 %652
    %654 = vrot.lane.b32.xlu0 %v431, 112
    %v655 = vpop.permute.xlu0 %654
    %656 = vrot.lane.b32.xlu0 %v421, 80
    %v657 = vpop.permute.xlu0 %656
    %658 = vrot.lane.b32.xlu0 %v426, 80
    %v659 = vpop.permute.xlu0 %658
    %660 = vrot.lane.b32.xlu0 %v431, 80
    %v661 = vpop.permute.xlu0 %660
    %v662 = vsel %vm453, %v651, 0
    %v664 = vsel %vm453, %v653, 0
    %v666 = vsel %vm453, %v655, 0
    %v668 = vsel %vm453, %v657, 0
    %v670 = vsel %vm453, %v659, 0
    %v672 = vsel %vm453, %v661, 0
    %674 = vmatprep.subr.mxu0 0.0
    %675 = vmatpush1.xpose.msra.mxu0 0.0
    %676 = vmatprep.subr.mxu0 0.0
    %677 = vmatpush1.xpose.msra.mxu0 0.0
    %678 = vmatprep.subr.mxu0 0.0
    %679 = vmatpush1.xpose.msra.mxu0 0.0
    %680 = vmatprep.subr.mxu0 0.0
    %681 = vmatpush1.xpose.msra.mxu0 0.0
    %682 = vmatprep.subr.mxu0 0.0
    %683 = vmatpush1.xpose.msra.mxu0 0.0
    %684 = vmatprep.subr.mxu0 0.0
    %685 = vmatpush1.xpose.msra.mxu0 0.0
    %686 = vmatprep.subr.mxu0 0.0
    %687 = vmatpush1.xpose.msra.mxu0 0.0
    %688 = vmatprep.subr.mxu0 0.0
    %689 = vmatpush1.xpose.msra.mxu0 0.0
    %690 = vmatprep.subr.mxu0 0.0
    %691 = vmatpush1.xpose.msra.mxu0 0.0
    %692 = vmatprep.subr.mxu0 0.0
    %693 = vmatpush1.xpose.msra.mxu0 0.0
    %694 = vmatprep.subr.mxu0 0.0
    %695 = vmatpush1.xpose.msra.mxu0 0.0
    %696 = vmatprep.subr.mxu0 0.0
    %697 = vmatpush1.xpose.msra.mxu0 0.0
    %698 = vmatprep.subr.mxu0 0.0
    %699 = vmatpush1.xpose.msra.mxu0 0.0
    %700 = vmatprep.subr.mxu0 0.0
    %701 = vmatpush1.xpose.msra.mxu0 %v672
    %702 = vmatprep.subr.mxu0 0.0
    %703 = vmatpush1.xpose.msra.mxu0 %v670
    %704 = vmatprep.subr.mxu0 0.0
    %705 = vmatpush1.xpose.msra.mxu0 %v668
    %706 = vmatprep.subr.mxu0 0.0
    %707 = vmatpush2.xpose.msra.mxu0 0.0
    %708 = vmatprep.subr.mxu0 0.0
    %709 = vmatpush2.xpose.msra.mxu0 0.0
    %710 = vmatprep.subr.mxu0 0.0
    %711 = vmatpush2.xpose.msra.mxu0 0.0
    %712 = vmatprep.subr.mxu0 0.0
    %713 = vmatpush2.xpose.msra.mxu0 0.0
    %714 = vmatprep.subr.mxu0 0.0
    %715 = vmatpush2.xpose.msra.mxu0 0.0
    %716 = vmatprep.subr.mxu0 0.0
    %717 = vmatpush2.xpose.msra.mxu0 0.0
    %718 = vmatprep.subr.mxu0 0.0
    %719 = vmatpush2.xpose.msra.mxu0 0.0
    %720 = vmatprep.subr.mxu0 0.0
    %721 = vmatpush2.xpose.msra.mxu0 0.0
    %722 = vmatprep.subr.mxu0 0.0
    %723 = vmatpush2.xpose.msra.mxu0 0.0
    %724 = vmatprep.subr.mxu0 0.0
    %725 = vmatpush2.xpose.msra.mxu0 0.0
    %726 = vmatprep.subr.mxu0 0.0
    %727 = vmatpush2.xpose.msra.mxu0 0.0
    %728 = vmatprep.subr.mxu0 0.0
    %729 = vmatpush2.xpose.msra.mxu0 0.0
    %730 = vmatprep.subr.mxu0 0.0
    %731 = vmatpush2.xpose.msra.mxu0 0.0
    %732 = vmatprep.subr.mxu0 0.0
    %733 = vmatpush2.xpose.msra.mxu0 0.0
    %734 = vmatprep.subr.mxu0 0.0
    %735 = vmatpush2.xpose.msra.mxu0 0.0
    %736 = vmatprep.subr.mxu0 0.0
    %737 = vmatpush2.xpose.msra.mxu0 0.0
    %738 = vmatprep.mubr.f32.mxu0 0.0
    %739 = vmatmul.mubr.f32.gmra.mxu0 %v662
    %v740 = vpop.f32.mrf.mxu0
    %v741 = vadd.f32 0.0, %v740
    %v742 = vpop.f32.mrf.mxu0
    %743 = vmatprep.mubr.f32.mxu0 0.0
    %744 = vmatmul.mubr.f32.gmra.mxu0 %v664
    %v745 = vpop.f32.mrf.mxu0
    %v746 = vadd.f32 0.0, %v745
    %v747 = vpop.f32.mrf.mxu0
    %748 = vmatprep.mubr.f32.mxu0 0.0
    %749 = vmatmul.mubr.f32.gmra.mxu0 %v666
    %v750 = vpop.f32.mrf.mxu0
    %v751 = vadd.f32 0.0, %v750
    %v752 = vpop.f32.mrf.mxu0
    %753 = vdwg.mxu0
    %754 = vrot.lane.b32.xlu0 %v421, 104
    %v755 = vpop.permute.xlu0 %754
    %756 = vrot.lane.b32.xlu0 %v426, 104
    %v757 = vpop.permute.xlu0 %756
    %758 = vrot.lane.b32.xlu0 %v431, 104
    %v759 = vpop.permute.xlu0 %758
    %760 = vrot.lane.b32.xlu0 %v421, 72
    %v761 = vpop.permute.xlu0 %760
    %762 = vrot.lane.b32.xlu0 %v426, 72
    %v763 = vpop.permute.xlu0 %762
    %764 = vrot.lane.b32.xlu0 %v431, 72
    %v765 = vpop.permute.xlu0 %764
    %v766 = vsel %vm453, %v755, 0
    %v768 = vsel %vm453, %v757, 0
    %v770 = vsel %vm453, %v759, 0
    %v772 = vsel %vm453, %v761, 0
    %v774 = vsel %vm453, %v763, 0
    %v776 = vsel %vm453, %v765, 0
    %778 = vmatprep.subr.mxu0 0.0
    %779 = vmatpush1.xpose.msra.mxu0 0.0
    %780 = vmatprep.subr.mxu0 0.0
    %781 = vmatpush1.xpose.msra.mxu0 0.0
    %782 = vmatprep.subr.mxu0 0.0
    %783 = vmatpush1.xpose.msra.mxu0 0.0
    %784 = vmatprep.subr.mxu0 0.0
    %785 = vmatpush1.xpose.msra.mxu0 0.0
    %786 = vmatprep.subr.mxu0 0.0
    %787 = vmatpush1.xpose.msra.mxu0 0.0
    %788 = vmatprep.subr.mxu0 0.0
    %789 = vmatpush1.xpose.msra.mxu0 0.0
    %790 = vmatprep.subr.mxu0 0.0
    %791 = vmatpush1.xpose.msra.mxu0 0.0
    %792 = vmatprep.subr.mxu0 0.0
    %793 = vmatpush1.xpose.msra.mxu0 0.0
    %794 = vmatprep.subr.mxu0 0.0
    %795 = vmatpush1.xpose.msra.mxu0 0.0
    %796 = vmatprep.subr.mxu0 0.0
    %797 = vmatpush1.xpose.msra.mxu0 0.0
    %798 = vmatprep.subr.mxu0 0.0
    %799 = vmatpush1.xpose.msra.mxu0 0.0
    %800 = vmatprep.subr.mxu0 0.0
    %801 = vmatpush1.xpose.msra.mxu0 0.0
    %802 = vmatprep.subr.mxu0 0.0
    %803 = vmatpush1.xpose.msra.mxu0 0.0
    %804 = vmatprep.subr.mxu0 0.0
    %805 = vmatpush1.xpose.msra.mxu0 %v776
    %806 = vmatprep.subr.mxu0 0.0
    %807 = vmatpush1.xpose.msra.mxu0 %v774
    %808 = vmatprep.subr.mxu0 0.0
    %809 = vmatpush1.xpose.msra.mxu0 %v772
    %810 = vmatprep.subr.mxu0 0.0
    %811 = vmatpush2.xpose.msra.mxu0 0.0
    %812 = vmatprep.subr.mxu0 0.0
    %813 = vmatpush2.xpose.msra.mxu0 0.0
    %814 = vmatprep.subr.mxu0 0.0
    %815 = vmatpush2.xpose.msra.mxu0 0.0
    %816 = vmatprep.subr.mxu0 0.0
    %817 = vmatpush2.xpose.msra.mxu0 0.0
    %818 = vmatprep.subr.mxu0 0.0
    %819 = vmatpush2.xpose.msra.mxu0 0.0
    %820 = vmatprep.subr.mxu0 0.0
    %821 = vmatpush2.xpose.msra.mxu0 0.0
    %822 = vmatprep.subr.mxu0 0.0
    %823 = vmatpush2.xpose.msra.mxu0 0.0
    %824 = vmatprep.subr.mxu0 0.0
    %825 = vmatpush2.xpose.msra.mxu0 0.0
    %826 = vmatprep.subr.mxu0 0.0
    %827 = vmatpush2.xpose.msra.mxu0 0.0
    %828 = vmatprep.subr.mxu0 0.0
    %829 = vmatpush2.xpose.msra.mxu0 0.0
    %830 = vmatprep.subr.mxu0 0.0
    %831 = vmatpush2.xpose.msra.mxu0 0.0
    %832 = vmatprep.subr.mxu0 0.0
    %833 = vmatpush2.xpose.msra.mxu0 0.0
    %834 = vmatprep.subr.mxu0 0.0
    %835 = vmatpush2.xpose.msra.mxu0 0.0
    %836 = vmatprep.subr.mxu0 0.0
    %837 = vmatpush2.xpose.msra.mxu0 0.0
    %838 = vmatprep.subr.mxu0 0.0
    %839 = vmatpush2.xpose.msra.mxu0 0.0
    %840 = vmatprep.subr.mxu0 0.0
    %841 = vmatpush2.xpose.msra.mxu0 0.0
    %842 = vmatprep.mubr.f32.mxu0 0.0
    %843 = vmatmul.mubr.f32.gmra.mxu0 %v766
    %v844 = vpop.f32.mrf.mxu0
    %v845 = vadd.f32 0.0, %v844
    %v846 = vpop.f32.mrf.mxu0
    %847 = vmatprep.mubr.f32.mxu0 0.0
    %848 = vmatmul.mubr.f32.gmra.mxu0 %v768
    %v849 = vpop.f32.mrf.mxu0
    %v850 = vadd.f32 0.0, %v849
    %v851 = vpop.f32.mrf.mxu0
    %852 = vmatprep.mubr.f32.mxu0 0.0
    %853 = vmatmul.mubr.f32.gmra.mxu0 %v770
    %v854 = vpop.f32.mrf.mxu0
    %v855 = vadd.f32 0.0, %v854
    %v856 = vpop.f32.mrf.mxu0
    %857 = vdwg.mxu0
    %vm860 = vcmask 1046528
    %v861 = vrot.slane %v431, 1
    %v862 = vrot.slane %v436, 1
    %v863 = vsel %vm860, %v861, %v862
    %v864 = vrot.slane %v441, 1
    %v865 = vsel %vm860, %v862, %v864
    %866 = vrot.lane.b32.xlu0 %v863, 96
    %v867 = vpop.permute.xlu0 %866
    %868 = vrot.lane.b32.xlu0 %v865, 96
    %v869 = vpop.permute.xlu0 %868
    %870 = vrot.lane.b32.xlu0 %v864, 96
    %v871 = vpop.permute.xlu0 %870
    %v872 = vsel %vm453, %v863, 0
    %v874 = vsel %vm453, %v865, 0
    %v876 = vsel %vm453, %v864, 0
    %v878 = vsel %vm453, %v867, 0
    %v880 = vsel %vm453, %v869, 0
    %v882 = vsel %vm453, %v871, 0
    %884 = vmatprep.subr.mxu0 0.0
    %885 = vmatpush1.xpose.msra.mxu0 0.0
    %886 = vmatprep.subr.mxu0 0.0
    %887 = vmatpush1.xpose.msra.mxu0 0.0
    %888 = vmatprep.subr.mxu0 0.0
    %889 = vmatpush1.xpose.msra.mxu0 0.0
    %890 = vmatprep.subr.mxu0 0.0
    %891 = vmatpush1.xpose.msra.mxu0 0.0
    %892 = vmatprep.subr.mxu0 0.0
    %893 = vmatpush1.xpose.msra.mxu0 0.0
    %894 = vmatprep.subr.mxu0 0.0
    %895 = vmatpush1.xpose.msra.mxu0 0.0
    %896 = vmatprep.subr.mxu0 0.0
    %897 = vmatpush1.xpose.msra.mxu0 0.0
    %898 = vmatprep.subr.mxu0 0.0
    %899 = vmatpush1.xpose.msra.mxu0 0.0
    %900 = vmatprep.subr.mxu0 0.0
    %901 = vmatpush1.xpose.msra.mxu0 0.0
    %902 = vmatprep.subr.mxu0 0.0
    %903 = vmatpush1.xpose.msra.mxu0 0.0
    %904 = vmatprep.subr.mxu0 0.0
    %905 = vmatpush1.xpose.msra.mxu0 0.0
    %906 = vmatprep.subr.mxu0 0.0
    %907 = vmatpush1.xpose.msra.mxu0 0.0
    %908 = vmatprep.subr.mxu0 0.0
    %909 = vmatpush1.xpose.msra.mxu0 0.0
    %910 = vmatprep.subr.mxu0 0.0
    %911 = vmatpush1.xpose.msra.mxu0 %v882
    %912 = vmatprep.subr.mxu0 0.0
    %913 = vmatpush1.xpose.msra.mxu0 %v880
    %914 = vmatprep.subr.mxu0 0.0
    %915 = vmatpush1.xpose.msra.mxu0 %v878
    %916 = vmatprep.subr.mxu0 0.0
    %917 = vmatpush2.xpose.msra.mxu0 0.0
    %918 = vmatprep.subr.mxu0 0.0
    %919 = vmatpush2.xpose.msra.mxu0 0.0
    %920 = vmatprep.subr.mxu0 0.0
    %921 = vmatpush2.xpose.msra.mxu0 0.0
    %922 = vmatprep.subr.mxu0 0.0
    %923 = vmatpush2.xpose.msra.mxu0 0.0
    %924 = vmatprep.subr.mxu0 0.0
    %925 = vmatpush2.xpose.msra.mxu0 0.0
    %926 = vmatprep.subr.mxu0 0.0
    %927 = vmatpush2.xpose.msra.mxu0 0.0
    %928 = vmatprep.subr.mxu0 0.0
    %929 = vmatpush2.xpose.msra.mxu0 0.0
    %930 = vmatprep.subr.mxu0 0.0
    %931 = vmatpush2.xpose.msra.mxu0 0.0
    %932 = vmatprep.subr.mxu0 0.0
    %933 = vmatpush2.xpose.msra.mxu0 0.0
    %934 = vmatprep.subr.mxu0 0.0
    %935 = vmatpush2.xpose.msra.mxu0 0.0
    %936 = vmatprep.subr.mxu0 0.0
    %937 = vmatpush2.xpose.msra.mxu0 0.0
    %938 = vmatprep.subr.mxu0 0.0
    %939 = vmatpush2.xpose.msra.mxu0 0.0
    %940 = vmatprep.subr.mxu0 0.0
    %941 = vmatpush2.xpose.msra.mxu0 0.0
    %942 = vmatprep.subr.mxu0 0.0
    %943 = vmatpush2.xpose.msra.mxu0 0.0
    %944 = vmatprep.subr.mxu0 0.0
    %945 = vmatpush2.xpose.msra.mxu0 0.0
    %946 = vmatprep.subr.mxu0 0.0
    %947 = vmatpush2.xpose.msra.mxu0 0.0
    %948 = vmatprep.mubr.f32.mxu0 0.0
    %949 = vmatmul.mubr.f32.gmra.mxu0 %v872
    %v950 = vpop.f32.mrf.mxu0
    %v951 = vadd.f32 0.0, %v950
    %v952 = vpop.f32.mrf.mxu0
    %953 = vmatprep.mubr.f32.mxu0 0.0
    %954 = vmatmul.mubr.f32.gmra.mxu0 %v874
    %v955 = vpop.f32.mrf.mxu0
    %v956 = vadd.f32 0.0, %v955
    %v957 = vpop.f32.mrf.mxu0
    %958 = vmatprep.mubr.f32.mxu0 0.0
    %959 = vmatmul.mubr.f32.gmra.mxu0 %v876
    %v960 = vpop.f32.mrf.mxu0
    %v961 = vadd.f32 0.0, %v960
    %v962 = vpop.f32.mrf.mxu0
    %963 = vdwg.mxu0
    %964 = vrot.lane.b32.xlu0 %v863, 120
    %v965 = vpop.permute.xlu0 %964
    %966 = vrot.lane.b32.xlu0 %v865, 120
    %v967 = vpop.permute.xlu0 %966
    %968 = vrot.lane.b32.xlu0 %v864, 120
    %v969 = vpop.permute.xlu0 %968
    %970 = vrot.lane.b32.xlu0 %v863, 88
    %v971 = vpop.permute.xlu0 %970
    %972 = vrot.lane.b32.xlu0 %v865, 88
    %v973 = vpop.permute.xlu0 %972
    %974 = vrot.lane.b32.xlu0 %v864, 88
    %v975 = vpop.permute.xlu0 %974
    %v976 = vsel %vm453, %v965, 0
    %v978 = vsel %vm453, %v967, 0
    %v980 = vsel %vm453, %v969, 0
    %v982 = vsel %vm453, %v971, 0
    %v984 = vsel %vm453, %v973, 0
    %v986 = vsel %vm453, %v975, 0
    %988 = vmatprep.subr.mxu0 0.0
    %989 = vmatpush1.xpose.msra.mxu0 0.0
    %990 = vmatprep.subr.mxu0 0.0
    %991 = vmatpush1.xpose.msra.mxu0 0.0
    %992 = vmatprep.subr.mxu0 0.0
    %993 = vmatpush1.xpose.msra.mxu0 0.0
    %994 = vmatprep.subr.mxu0 0.0
    %995 = vmatpush1.xpose.msra.mxu0 0.0
    %996 = vmatprep.subr.mxu0 0.0
    %997 = vmatpush1.xpose.msra.mxu0 0.0
    %998 = vmatprep.subr.mxu0 0.0
    %999 = vmatpush1.xpose.msra.mxu0 0.0
    %1000 = vmatprep.subr.mxu0 0.0
    %1001 = vmatpush1.xpose.msra.mxu0 0.0
    %1002 = vmatprep.subr.mxu0 0.0
    %1003 = vmatpush1.xpose.msra.mxu0 0.0
    %1004 = vmatprep.subr.mxu0 0.0
    %1005 = vmatpush1.xpose.msra.mxu0 0.0
    %1006 = vmatprep.subr.mxu0 0.0
    %1007 = vmatpush1.xpose.msra.mxu0 0.0
    %1008 = vmatprep.subr.mxu0 0.0
    %1009 = vmatpush1.xpose.msra.mxu0 0.0
    %1010 = vmatprep.subr.mxu0 0.0
    %1011 = vmatpush1.xpose.msra.mxu0 0.0
    %1012 = vmatprep.subr.mxu0 0.0
    %1013 = vmatpush1.xpose.msra.mxu0 0.0
    %1014 = vmatprep.subr.mxu0 0.0
    %1015 = vmatpush1.xpose.msra.mxu0 %v986
    %1016 = vmatprep.subr.mxu0 0.0
    %1017 = vmatpush1.xpose.msra.mxu0 %v984
    %1018 = vmatprep.subr.mxu0 0.0
    %1019 = vmatpush1.xpose.msra.mxu0 %v982
    %1020 = vmatprep.subr.mxu0 0.0
    %1021 = vmatpush2.xpose.msra.mxu0 0.0
    %1022 = vmatprep.subr.mxu0 0.0
    %1023 = vmatpush2.xpose.msra.mxu0 0.0
    %1024 = vmatprep.subr.mxu0 0.0
    %1025 = vmatpush2.xpose.msra.mxu0 0.0
    %1026 = vmatprep.subr.mxu0 0.0
    %1027 = vmatpush2.xpose.msra.mxu0 0.0
    %1028 = vmatprep.subr.mxu0 0.0
    %1029 = vmatpush2.xpose.msra.mxu0 0.0
    %1030 = vmatprep.subr.mxu0 0.0
    %1031 = vmatpush2.xpose.msra.mxu0 0.0
    %1032 = vmatprep.subr.mxu0 0.0
    %1033 = vmatpush2.xpose.msra.mxu0 0.0
    %1034 = vmatprep.subr.mxu0 0.0
    %1035 = vmatpush2.xpose.msra.mxu0 0.0
    %1036 = vmatprep.subr.mxu0 0.0
    %1037 = vmatpush2.xpose.msra.mxu0 0.0
    %1038 = vmatprep.subr.mxu0 0.0
    %1039 = vmatpush2.xpose.msra.mxu0 0.0
    %1040 = vmatprep.subr.mxu0 0.0
    %1041 = vmatpush2.xpose.msra.mxu0 0.0
    %1042 = vmatprep.subr.mxu0 0.0
    %1043 = vmatpush2.xpose.msra.mxu0 0.0
    %1044 = vmatprep.subr.mxu0 0.0
    %1045 = vmatpush2.xpose.msra.mxu0 0.0
    %1046 = vmatprep.subr.mxu0 0.0
    %1047 = vmatpush2.xpose.msra.mxu0 0.0
    %1048 = vmatprep.subr.mxu0 0.0
    %1049 = vmatpush2.xpose.msra.mxu0 0.0
    %1050 = vmatprep.subr.mxu0 0.0
    %1051 = vmatpush2.xpose.msra.mxu0 0.0
    %1052 = vmatprep.mubr.f32.mxu0 0.0
    %1053 = vmatmul.mubr.f32.gmra.mxu0 %v976
    %v1054 = vpop.f32.mrf.mxu0
    %v1055 = vadd.f32 0.0, %v1054
    %v1056 = vpop.f32.mrf.mxu0
    %1057 = vmatprep.mubr.f32.mxu0 0.0
    %1058 = vmatmul.mubr.f32.gmra.mxu0 %v978
    %v1059 = vpop.f32.mrf.mxu0
    %v1060 = vadd.f32 0.0, %v1059
    %v1061 = vpop.f32.mrf.mxu0
    %1062 = vmatprep.mubr.f32.mxu0 0.0
    %1063 = vmatmul.mubr.f32.gmra.mxu0 %v980
    %v1064 = vpop.f32.mrf.mxu0
    %v1065 = vadd.f32 0.0, %v1064
    %v1066 = vpop.f32.mrf.mxu0
    %1067 = vdwg.mxu0
    %1068 = vrot.lane.b32.xlu0 %v863, 112
    %v1069 = vpop.permute.xlu0 %1068
    %1070 = vrot.lane.b32.xlu0 %v865, 112
    %v1071 = vpop.permute.xlu0 %1070
    %1072 = vrot.lane.b32.xlu0 %v864, 112
    %v1073 = vpop.permute.xlu0 %1072
    %1074 = vrot.lane.b32.xlu0 %v863, 80
    %v1075 = vpop.permute.xlu0 %1074
    %1076 = vrot.lane.b32.xlu0 %v865, 80
    %v1077 = vpop.permute.xlu0 %1076
    %1078 = vrot.lane.b32.xlu0 %v864, 80
    %v1079 = vpop.permute.xlu0 %1078
    %v1080 = vsel %vm453, %v1069, 0
    %v1082 = vsel %vm453, %v1071, 0
    %v1084 = vsel %vm453, %v1073, 0
    %v1086 = vsel %vm453, %v1075, 0
    %v1088 = vsel %vm453, %v1077, 0
    %v1090 = vsel %vm453, %v1079, 0
    %1092 = vmatprep.subr.mxu0 0.0
    %1093 = vmatpush1.xpose.msra.mxu0 0.0
    %1094 = vmatprep.subr.mxu0 0.0
    %1095 = vmatpush1.xpose.msra.mxu0 0.0
    %1096 = vmatprep.subr.mxu0 0.0
    %1097 = vmatpush1.xpose.msra.mxu0 0.0
    %1098 = vmatprep.subr.mxu0 0.0
    %1099 = vmatpush1.xpose.msra.mxu0 0.0
    %1100 = vmatprep.subr.mxu0 0.0
    %1101 = vmatpush1.xpose.msra.mxu0 0.0
    %1102 = vmatprep.subr.mxu0 0.0
    %1103 = vmatpush1.xpose.msra.mxu0 0.0
    %1104 = vmatprep.subr.mxu0 0.0
    %1105 = vmatpush1.xpose.msra.mxu0 0.0
    %1106 = vmatprep.subr.mxu0 0.0
    %1107 = vmatpush1.xpose.msra.mxu0 0.0
    %1108 = vmatprep.subr.mxu0 0.0
    %1109 = vmatpush1.xpose.msra.mxu0 0.0
    %1110 = vmatprep.subr.mxu0 0.0
    %1111 = vmatpush1.xpose.msra.mxu0 0.0
    %1112 = vmatprep.subr.mxu0 0.0
    %1113 = vmatpush1.xpose.msra.mxu0 0.0
    %1114 = vmatprep.subr.mxu0 0.0
    %1115 = vmatpush1.xpose.msra.mxu0 0.0
    %1116 = vmatprep.subr.mxu0 0.0
    %1117 = vmatpush1.xpose.msra.mxu0 0.0
    %1118 = vmatprep.subr.mxu0 0.0
    %1119 = vmatpush1.xpose.msra.mxu0 %v1090
    %1120 = vmatprep.subr.mxu0 0.0
    %1121 = vmatpush1.xpose.msra.mxu0 %v1088
    %1122 = vmatprep.subr.mxu0 0.0
    %1123 = vmatpush1.xpose.msra.mxu0 %v1086
    %1124 = vmatprep.subr.mxu0 0.0
    %1125 = vmatpush2.xpose.msra.mxu0 0.0
    %1126 = vmatprep.subr.mxu0 0.0
    %1127 = vmatpush2.xpose.msra.mxu0 0.0
    %1128 = vmatprep.subr.mxu0 0.0
    %1129 = vmatpush2.xpose.msra.mxu0 0.0
    %1130 = vmatprep.subr.mxu0 0.0
    %1131 = vmatpush2.xpose.msra.mxu0 0.0
    %1132 = vmatprep.subr.mxu0 0.0
    %1133 = vmatpush2.xpose.msra.mxu0 0.0
    %1134 = vmatprep.subr.mxu0 0.0
    %1135 = vmatpush2.xpose.msra.mxu0 0.0
    %1136 = vmatprep.subr.mxu0 0.0
    %1137 = vmatpush2.xpose.msra.mxu0 0.0
    %1138 = vmatprep.subr.mxu0 0.0
    %1139 = vmatpush2.xpose.msra.mxu0 0.0
    %1140 = vmatprep.subr.mxu0 0.0
    %1141 = vmatpush2.xpose.msra.mxu0 0.0
    %1142 = vmatprep.subr.mxu0 0.0
    %1143 = vmatpush2.xpose.msra.mxu0 0.0
    %1144 = vmatprep.subr.mxu0 0.0
    %1145 = vmatpush2.xpose.msra.mxu0 0.0
    %1146 = vmatprep.subr.mxu0 0.0
    %1147 = vmatpush2.xpose.msra.mxu0 0.0
    %1148 = vmatprep.subr.mxu0 0.0
    %1149 = vmatpush2.xpose.msra.mxu0 0.0
    %1150 = vmatprep.subr.mxu0 0.0
    %1151 = vmatpush2.xpose.msra.mxu0 0.0
    %1152 = vmatprep.subr.mxu0 0.0
    %1153 = vmatpush2.xpose.msra.mxu0 0.0
    %1154 = vmatprep.subr.mxu0 0.0
    %1155 = vmatpush2.xpose.msra.mxu0 0.0
    %1156 = vmatprep.mubr.f32.mxu0 0.0
    %1157 = vmatmul.mubr.f32.gmra.mxu0 %v1080
    %v1158 = vpop.f32.mrf.mxu0
    %v1159 = vadd.f32 0.0, %v1158
    %v1160 = vpop.f32.mrf.mxu0
    %1161 = vmatprep.mubr.f32.mxu0 0.0
    %1162 = vmatmul.mubr.f32.gmra.mxu0 %v1082
    %v1163 = vpop.f32.mrf.mxu0
    %v1164 = vadd.f32 0.0, %v1163
    %v1165 = vpop.f32.mrf.mxu0
    %1166 = vmatprep.mubr.f32.mxu0 0.0
    %1167 = vmatmul.mubr.f32.gmra.mxu0 %v1084
    %v1168 = vpop.f32.mrf.mxu0
    %v1169 = vadd.f32 0.0, %v1168
    %v1170 = vpop.f32.mrf.mxu0
    %1171 = vdwg.mxu0
    %1172 = vrot.lane.b32.xlu0 %v863, 104
    %v1173 = vpop.permute.xlu0 %1172
    %1174 = vrot.lane.b32.xlu0 %v865, 104
    %v1175 = vpop.permute.xlu0 %1174
    %1176 = vrot.lane.b32.xlu0 %v864, 104
    %v1177 = vpop.permute.xlu0 %1176
    %1178 = vrot.lane.b32.xlu0 %v863, 72
    %v1179 = vpop.permute.xlu0 %1178
    %1180 = vrot.lane.b32.xlu0 %v865, 72
    %v1181 = vpop.permute.xlu0 %1180
    %1182 = vrot.lane.b32.xlu0 %v864, 72
    %v1183 = vpop.permute.xlu0 %1182
    %v1184 = vsel %vm453, %v1173, 0
    %v1186 = vsel %vm453, %v1175, 0
    %v1188 = vsel %vm453, %v1177, 0
    %v1190 = vsel %vm453, %v1179, 0
    %v1192 = vsel %vm453, %v1181, 0
    %v1194 = vsel %vm453, %v1183, 0
    %1196 = vmatprep.subr.mxu0 0.0
    %1197 = vmatpush1.xpose.msra.mxu0 0.0
    %1198 = vmatprep.subr.mxu0 0.0
    %1199 = vmatpush1.xpose.msra.mxu0 0.0
    %1200 = vmatprep.subr.mxu0 0.0
    %1201 = vmatpush1.xpose.msra.mxu0 0.0
    %1202 = vmatprep.subr.mxu0 0.0
    %1203 = vmatpush1.xpose.msra.mxu0 0.0
    %1204 = vmatprep.subr.mxu0 0.0
    %1205 = vmatpush1.xpose.msra.mxu0 0.0
    %1206 = vmatprep.subr.mxu0 0.0
    %1207 = vmatpush1.xpose.msra.mxu0 0.0
    %1208 = vmatprep.subr.mxu0 0.0
    %1209 = vmatpush1.xpose.msra.mxu0 0.0
    %1210 = vmatprep.subr.mxu0 0.0
    %1211 = vmatpush1.xpose.msra.mxu0 0.0
    %1212 = vmatprep.subr.mxu0 0.0
    %1213 = vmatpush1.xpose.msra.mxu0 0.0
    %1214 = vmatprep.subr.mxu0 0.0
    %1215 = vmatpush1.xpose.msra.mxu0 0.0
    %1216 = vmatprep.subr.mxu0 0.0
    %1217 = vmatpush1.xpose.msra.mxu0 0.0
    %1218 = vmatprep.subr.mxu0 0.0
    %1219 = vmatpush1.xpose.msra.mxu0 0.0
    %1220 = vmatprep.subr.mxu0 0.0
    %1221 = vmatpush1.xpose.msra.mxu0 0.0
    %1222 = vmatprep.subr.mxu0 0.0
    %1223 = vmatpush1.xpose.msra.mxu0 %v1194
    %1224 = vmatprep.subr.mxu0 0.0
    %1225 = vmatpush1.xpose.msra.mxu0 %v1192
    %1226 = vmatprep.subr.mxu0 0.0
    %1227 = vmatpush1.xpose.msra.mxu0 %v1190
    %1228 = vmatprep.subr.mxu0 0.0
    %1229 = vmatpush2.xpose.msra.mxu0 0.0
    %1230 = vmatprep.subr.mxu0 0.0
    %1231 = vmatpush2.xpose.msra.mxu0 0.0
    %1232 = vmatprep.subr.mxu0 0.0
    %1233 = vmatpush2.xpose.msra.mxu0 0.0
    %1234 = vmatprep.subr.mxu0 0.0
    %1235 = vmatpush2.xpose.msra.mxu0 0.0
    %1236 = vmatprep.subr.mxu0 0.0
    %1237 = vmatpush2.xpose.msra.mxu0 0.0
    %1238 = vmatprep.subr.mxu0 0.0
    %1239 = vmatpush2.xpose.msra.mxu0 0.0
    %1240 = vmatprep.subr.mxu0 0.0
    %1241 = vmatpush2.xpose.msra.mxu0 0.0
    %1242 = vmatprep.subr.mxu0 0.0
    %1243 = vmatpush2.xpose.msra.mxu0 0.0
    %1244 = vmatprep.subr.mxu0 0.0
    %1245 = vmatpush2.xpose.msra.mxu0 0.0
    %1246 = vmatprep.subr.mxu0 0.0
    %1247 = vmatpush2.xpose.msra.mxu0 0.0
    %1248 = vmatprep.subr.mxu0 0.0
    %1249 = vmatpush2.xpose.msra.mxu0 0.0
    %1250 = vmatprep.subr.mxu0 0.0
    %1251 = vmatpush2.xpose.msra.mxu0 0.0
    %1252 = vmatprep.subr.mxu0 0.0
    %1253 = vmatpush2.xpose.msra.mxu0 0.0
    %1254 = vmatprep.subr.mxu0 0.0
    %1255 = vmatpush2.xpose.msra.mxu0 0.0
    %1256 = vmatprep.subr.mxu0 0.0
    %1257 = vmatpush2.xpose.msra.mxu0 0.0
    %1258 = vmatprep.subr.mxu0 0.0
    %1259 = vmatpush2.xpose.msra.mxu0 0.0
    %1260 = vmatprep.mubr.f32.mxu0 0.0
    %1261 = vmatmul.mubr.f32.gmra.mxu0 %v1184
    %v1262 = vpop.f32.mrf.mxu0
    %v1263 = vadd.f32 0.0, %v1262
    %v1264 = vpop.f32.mrf.mxu0
    %1265 = vmatprep.mubr.f32.mxu0 0.0
    %1266 = vmatmul.mubr.f32.gmra.mxu0 %v1186
    %v1267 = vpop.f32.mrf.mxu0
    %v1268 = vadd.f32 0.0, %v1267
    %v1269 = vpop.f32.mrf.mxu0
    %1270 = vmatprep.mubr.f32.mxu0 0.0
    %1271 = vmatmul.mubr.f32.gmra.mxu0 %v1188
    %v1272 = vpop.f32.mrf.mxu0
    %v1273 = vadd.f32 0.0, %v1272
    %v1274 = vpop.f32.mrf.mxu0
    %1275 = vdwg.mxu0
    %v1276 = vmul.f32 %v533, 0.35355338
    %v1277 = vmul.f32 %v538, 0.35355338
    %v1278 = vmul.f32 %v543, 0.35355338
    %v1279 = vmul.f32 %v637, 0.35355338
    %v1280 = vmul.f32 %v642, 0.35355338
    %v1281 = vmul.f32 %v647, 0.35355338
    %v1282 = vmul.f32 %v741, 0.35355338
    %v1283 = vmul.f32 %v746, 0.35355338
    %v1284 = vmul.f32 %v751, 0.35355338
    %v1285 = vmul.f32 %v845, 0.35355338
    %v1286 = vmul.f32 %v850, 0.35355338
    %v1287 = vmul.f32 %v855, 0.35355338
    %v1288 = vmul.f32 %v951, 0.35355338
    %v1289 = vmul.f32 %v956, 0.35355338
    %v1290 = vmul.f32 %v961, 0.35355338
    %v1291 = vmul.f32 %v1055, 0.35355338
    %v1292 = vmul.f32 %v1060, 0.35355338
    %v1293 = vmul.f32 %v1065, 0.35355338
    %v1294 = vmul.f32 %v1159, 0.35355338
    %v1295 = vmul.f32 %v1164, 0.35355338
    %v1296 = vmul.f32 %v1169, 0.35355338
    %v1297 = vmul.f32 %v1263, 0.35355338
    %v1298 = vmul.f32 %v1268, 0.35355338
    %v1299 = vmul.f32 %v1273, 0.35355338
    %vm1300 = vcmask 138240
    %v1301 = vsel %vm1300, %v1276, -inf
    %1302 = vmax.xlane.f32.xlu0 %v1301
    %v1303 = vpop.xlane.xlu0 %1302
    %v1304 = vsel %vm1300, %v1277, -inf
    %1305 = vmax.xlane.f32.xlu0 %v1304
    %v1306 = vpop.xlane.xlu0 %1305
    %vm1307 = vcmask 131072
    %v1308 = vsel %vm1307, %v1278, -inf
    %1309 = vmax.xlane.f32.xlu0 %v1308
    %v1310 = vpop.xlane.xlu0 %1309
    %v1311 = vsel %vm1300, %v1279, -inf
    %1312 = vmax.xlane.f32.xlu0 %v1311
    %v1313 = vpop.xlane.xlu0 %1312
    %v1314 = vsel %vm1300, %v1280, -inf
    %1315 = vmax.xlane.f32.xlu0 %v1314
    %v1316 = vpop.xlane.xlu0 %1315
    %v1317 = vsel %vm1307, %v1281, -inf
    %1318 = vmax.xlane.f32.xlu0 %v1317
    %v1319 = vpop.xlane.xlu0 %1318
    %v1320 = vsel %vm1300, %v1282, -inf
    %1321 = vmax.xlane.f32.xlu0 %v1320
    %v1322 = vpop.xlane.xlu0 %1321
    %v1323 = vsel %vm1300, %v1283, -inf
    %1324 = vmax.xlane.f32.xlu0 %v1323
    %v1325 = vpop.xlane.xlu0 %1324
    %v1326 = vsel %vm1307, %v1284, -inf
    %1327 = vmax.xlane.f32.xlu0 %v1326
    %v1328 = vpop.xlane.xlu0 %1327
    %v1329 = vsel %vm1300, %v1285, -inf
    %1330 = vmax.xlane.f32.xlu0 %v1329
    %v1331 = vpop.xlane.xlu0 %1330
    %v1332 = vsel %vm1300, %v1286, -inf
    %1333 = vmax.xlane.f32.xlu0 %v1332
    %v1334 = vpop.xlane.xlu0 %1333
    %v1335 = vsel %vm1307, %v1287, -inf
    %1336 = vmax.xlane.f32.xlu0 %v1335
    %v1337 = vpop.xlane.xlu0 %1336
    %v1338 = vsel %vm1300, %v1288, -inf
    %1339 = vmax.xlane.f32.xlu0 %v1338
    %v1340 = vpop.xlane.xlu0 %1339
    %v1341 = vsel %vm1300, %v1289, -inf
    %1342 = vmax.xlane.f32.xlu0 %v1341
    %v1343 = vpop.xlane.xlu0 %1342
    %v1344 = vsel %vm1307, %v1290, -inf
    %1345 = vmax.xlane.f32.xlu0 %v1344
    %v1346 = vpop.xlane.xlu0 %1345
    %v1347 = vsel %vm1300, %v1291, -inf
    %1348 = vmax.xlane.f32.xlu0 %v1347
    %v1349 = vpop.xlane.xlu0 %1348
    %v1350 = vsel %vm1300, %v1292, -inf
    %1351 = vmax.xlane.f32.xlu0 %v1350
    %v1352 = vpop.xlane.xlu0 %1351
    %v1353 = vsel %vm1307, %v1293, -inf
    %1354 = vmax.xlane.f32.xlu0 %v1353
    %v1355 = vpop.xlane.xlu0 %1354
    %v1356 = vsel %vm1300, %v1294, -inf
    %1357 = vmax.xlane.f32.xlu0 %v1356
    %v1358 = vpop.xlane.xlu0 %1357
    %v1359 = vsel %vm1300, %v1295, -inf
    %1360 = vmax.xlane.f32.xlu0 %v1359
    %v1361 = vpop.xlane.xlu0 %1360
    %v1362 = vsel %vm1307, %v1296, -inf
    %1363 = vmax.xlane.f32.xlu0 %v1362
    %v1364 = vpop.xlane.xlu0 %1363
    %v1365 = vsel %vm1300, %v1297, -inf
    %1366 = vmax.xlane.f32.xlu0 %v1365
    %v1367 = vpop.xlane.xlu0 %1366
    %v1368 = vsel %vm1300, %v1298, -inf
    %1369 = vmax.xlane.f32.xlu0 %v1368
    %v1370 = vpop.xlane.xlu0 %1369
    %v1371 = vsel %vm1307, %v1299, -inf
    %1372 = vmax.xlane.f32.xlu0 %v1371
    %v1373 = vpop.xlane.xlu0 %1372
    %v1374 = vsub.f32 %v1276, %v1303
    %v1375 = vsub.f32 %v1277, %v1306
    %v1376 = vsub.f32 %v1278, %v1310
    %v1377 = vsub.f32 %v1279, %v1313
    %v1378 = vsub.f32 %v1280, %v1316
    %v1379 = vsub.f32 %v1281, %v1319
    %v1380 = vsub.f32 %v1282, %v1322
    %v1381 = vsub.f32 %v1283, %v1325
    %v1382 = vsub.f32 %v1284, %v1328
    %v1383 = vsub.f32 %v1285, %v1331
    %v1384 = vsub.f32 %v1286, %v1334
    %v1385 = vsub.f32 %v1287, %v1337
    %v1386 = vsub.f32 %v1288, %v1340
    %v1387 = vsub.f32 %v1289, %v1343
    %v1388 = vsub.f32 %v1290, %v1346
    %v1389 = vsub.f32 %v1291, %v1349
    %v1390 = vsub.f32 %v1292, %v1352
    %v1391 = vsub.f32 %v1293, %v1355
    %v1392 = vsub.f32 %v1294, %v1358
    %v1393 = vsub.f32 %v1295, %v1361
    %v1394 = vsub.f32 %v1296, %v1364
    %v1395 = vsub.f32 %v1297, %v1367
    %v1396 = vsub.f32 %v1298, %v1370
    %v1397 = vsub.f32 %v1299, %v1373
    %v1398 = vmul.f32 %v1374, 1.442695
    %v1399 = vpow.pop %v1398
    %v1400 = vmul.f32 %v1375, 1.442695
    %v1401 = vpow.pop %v1400
    %v1402 = vmul.f32 %v1376, 1.442695
    %v1403 = vpow.pop %v1402
    %v1404 = vmul.f32 %v1377, 1.442695
    %v1405 = vpow.pop %v1404
    %v1406 = vmul.f32 %v1378, 1.442695
    %v1407 = vpow.pop %v1406
    %v1408 = vmul.f32 %v1379, 1.442695
    %v1409 = vpow.pop %v1408
    %v1410 = vmul.f32 %v1380, 1.442695
    %v1411 = vpow.pop %v1410
    %v1412 = vmul.f32 %v1381, 1.442695
    %v1413 = vpow.pop %v1412
    %v1414 = vmul.f32 %v1382, 1.442695
    %v1415 = vpow.pop %v1414
    %v1416 = vmul.f32 %v1383, 1.442695
    %v1417 = vpow.pop %v1416
    %v1418 = vmul.f32 %v1384, 1.442695
    %v1419 = vpow.pop %v1418
    %v1420 = vmul.f32 %v1385, 1.442695
    %v1421 = vpow.pop %v1420
    %v1422 = vmul.f32 %v1386, 1.442695
    %v1423 = vpow.pop %v1422
    %v1424 = vmul.f32 %v1387, 1.442695
    %v1425 = vpow.pop %v1424
    %v1426 = vmul.f32 %v1388, 1.442695
    %v1427 = vpow.pop %v1426
    %v1428 = vmul.f32 %v1389, 1.442695
    %v1429 = vpow.pop %v1428
    %v1430 = vmul.f32 %v1390, 1.442695
    %v1431 = vpow.pop %v1430
    %v1432 = vmul.f32 %v1391, 1.442695
    %v1433 = vpow.pop %v1432
    %v1434 = vmul.f32 %v1392, 1.442695
    %v1435 = vpow.pop %v1434
    %v1436 = vmul.f32 %v1393, 1.442695
    %v1437 = vpow.pop %v1436
    %v1438 = vmul.f32 %v1394, 1.442695
    %v1439 = vpow.pop %v1438
    %v1440 = vmul.f32 %v1395, 1.442695
    %v1441 = vpow.pop %v1440
    %v1442 = vmul.f32 %v1396, 1.442695
    %v1443 = vpow.pop %v1442
    %v1444 = vmul.f32 %v1397, 1.442695
    %v1445 = vpow.pop %v1444
    %v1446 = vsel %vm1300, %v1399, 0.0
    %1447 = vadd.xlane.f32.xlu0 %v1446
    %v1448 = vpop.xlane.xlu0 %1447
    %v1449 = vsel %vm1300, %v1401, 0.0
    %1450 = vadd.xlane.f32.xlu0 %v1449
    %v1451 = vpop.xlane.xlu0 %1450
    %v1452 = vsel %vm1307, %v1403, 0.0
    %1453 = vadd.xlane.f32.xlu0 %v1452
    %v1454 = vpop.xlane.xlu0 %1453
    %v1455 = vsel %vm1300, %v1405, 0.0
    %1456 = vadd.xlane.f32.xlu0 %v1455
    %v1457 = vpop.xlane.xlu0 %1456
    %v1458 = vsel %vm1300, %v1407, 0.0
    %1459 = vadd.xlane.f32.xlu0 %v1458
    %v1460 = vpop.xlane.xlu0 %1459
    %v1461 = vsel %vm1307, %v1409, 0.0
    %1462 = vadd.xlane.f32.xlu0 %v1461
    %v1463 = vpop.xlane.xlu0 %1462
    %v1464 = vsel %vm1300, %v1411, 0.0
    %1465 = vadd.xlane.f32.xlu0 %v1464
    %v1466 = vpop.xlane.xlu0 %1465
    %v1467 = vsel %vm1300, %v1413, 0.0
    %1468 = vadd.xlane.f32.xlu0 %v1467
    %v1469 = vpop.xlane.xlu0 %1468
    %v1470 = vsel %vm1307, %v1415, 0.0
    %1471 = vadd.xlane.f32.xlu0 %v1470
    %v1472 = vpop.xlane.xlu0 %1471
    %v1473 = vsel %vm1300, %v1417, 0.0
    %1474 = vadd.xlane.f32.xlu0 %v1473
    %v1475 = vpop.xlane.xlu0 %1474
    %v1476 = vsel %vm1300, %v1419, 0.0
    %1477 = vadd.xlane.f32.xlu0 %v1476
    %v1478 = vpop.xlane.xlu0 %1477
    %v1479 = vsel %vm1307, %v1421, 0.0
    %1480 = vadd.xlane.f32.xlu0 %v1479
    %v1481 = vpop.xlane.xlu0 %1480
    %v1482 = vsel %vm1300, %v1423, 0.0
    %1483 = vadd.xlane.f32.xlu0 %v1482
    %v1484 = vpop.xlane.xlu0 %1483
    %v1485 = vsel %vm1300, %v1425, 0.0
    %1486 = vadd.xlane.f32.xlu0 %v1485
    %v1487 = vpop.xlane.xlu0 %1486
    %v1488 = vsel %vm1307, %v1427, 0.0
    %1489 = vadd.xlane.f32.xlu0 %v1488
    %v1490 = vpop.xlane.xlu0 %1489
    %v1491 = vsel %vm1300, %v1429, 0.0
    %1492 = vadd.xlane.f32.xlu0 %v1491
    %v1493 = vpop.xlane.xlu0 %1492
    %v1494 = vsel %vm1300, %v1431, 0.0
    %1495 = vadd.xlane.f32.xlu0 %v1494
    %v1496 = vpop.xlane.xlu0 %1495
    %v1497 = vsel %vm1307, %v1433, 0.0
    %1498 = vadd.xlane.f32.xlu0 %v1497
    %v1499 = vpop.xlane.xlu0 %1498
    %v1500 = vsel %vm1300, %v1435, 0.0
    %1501 = vadd.xlane.f32.xlu0 %v1500
    %v1502 = vpop.xlane.xlu0 %1501
    %v1503 = vsel %vm1300, %v1437, 0.0
    %1504 = vadd.xlane.f32.xlu0 %v1503
    %v1505 = vpop.xlane.xlu0 %1504
    %v1506 = vsel %vm1307, %v1439, 0.0
    %1507 = vadd.xlane.f32.xlu0 %v1506
    %v1508 = vpop.xlane.xlu0 %1507
    %v1509 = vsel %vm1300, %v1441, 0.0
    %1510 = vadd.xlane.f32.xlu0 %v1509
    %v1511 = vpop.xlane.xlu0 %1510
    %v1512 = vsel %vm1300, %v1443, 0.0
    %1513 = vadd.xlane.f32.xlu0 %v1512
    %v1514 = vpop.xlane.xlu0 %1513
    %v1515 = vsel %vm1307, %v1445, 0.0
    %1516 = vadd.xlane.f32.xlu0 %v1515
    %v1517 = vpop.xlane.xlu0 %1516
    %v1518 = vrcp.pop %v1448
    %v1519 = vrcp.pop %v1451
    %v1520 = vrcp.pop %v1454
    %v1521 = vrcp.pop %v1457
    %v1522 = vrcp.pop %v1460
    %v1523 = vrcp.pop %v1463
    %v1524 = vrcp.pop %v1466
    %v1525 = vrcp.pop %v1469
    %v1526 = vrcp.pop %v1472
    %v1527 = vrcp.pop %v1475
    %v1528 = vrcp.pop %v1478
    %v1529 = vrcp.pop %v1481
    %v1530 = vrcp.pop %v1484
    %v1531 = vrcp.pop %v1487
    %v1532 = vrcp.pop %v1490
    %v1533 = vrcp.pop %v1493
    %v1534 = vrcp.pop %v1496
    %v1535 = vrcp.pop %v1499
    %v1536 = vrcp.pop %v1502
    %v1537 = vrcp.pop %v1505
    %v1538 = vrcp.pop %v1508
    %v1539 = vrcp.pop %v1511
    %v1540 = vrcp.pop %v1514
    %v1541 = vrcp.pop %v1517
    %v1542 = vmul.f32 %v1399, %v1518
    %v1543 = vmul.f32 %v1401, %v1519
    %v1544 = vmul.f32 %v1403, %v1520
    %v1545 = vmul.f32 %v1405, %v1521
    %v1546 = vmul.f32 %v1407, %v1522
    %v1547 = vmul.f32 %v1409, %v1523
    %v1548 = vmul.f32 %v1411, %v1524
    %v1549 = vmul.f32 %v1413, %v1525
    %v1550 = vmul.f32 %v1415, %v1526
    %v1551 = vmul.f32 %v1417, %v1527
    %v1552 = vmul.f32 %v1419, %v1528
    %v1553 = vmul.f32 %v1421, %v1529
    %v1554 = vmul.f32 %v1423, %v1530
    %v1555 = vmul.f32 %v1425, %v1531
    %v1556 = vmul.f32 %v1427, %v1532
    %v1557 = vmul.f32 %v1429, %v1533
    %v1558 = vmul.f32 %v1431, %v1534
    %v1559 = vmul.f32 %v1433, %v1535
    %v1560 = vmul.f32 %v1435, %v1536
    %v1561 = vmul.f32 %v1437, %v1537
    %v1562 = vmul.f32 %v1439, %v1538
    %v1563 = vmul.f32 %v1441, %v1539
    %v1564 = vmul.f32 %v1443, %v1540
    %v1565 = vmul.f32 %v1445, %v1541
    %v1566 = vld [vmem:[%s1 + $0x170] sm:$0xff]
    %v1567 = vld [vmem:[%s1 + $0x178] sm:$0xff]
    %v1568 = vld [vmem:[%s1 + $0x180] sm:$0xff]
    %v1569 = vld [vmem:[%s1 + $0x188] sm:$0xff]
    %1570 = vrot.lane.b32.xlu0 %v421, 64
    %v1571 = vpop.permute.xlu0 %1570
    %1572 = vrot.lane.b32.xlu0 %v426, 64
    %v1573 = vpop.permute.xlu0 %1572
    %1574 = vrot.lane.b32.xlu0 %v431, 64
    %v1575 = vpop.permute.xlu0 %1574
    %v1579 = vsel %vm1300, %v1542, 0
    %v1582 = vsel %vm1300, %v1543, 0
    %v1585 = vsel %vm1300, %v1544, 0
    %vm1587 = vcmask 1040384
    %v1588 = vsel %vm1587, %v1575, 0
    %1590 = vmatprep.subr.mxu0 0.0
    %1591 = vmatpush1.msra.mxu0 0.0
    %1592 = vmatprep.subr.mxu0 0.0
    %1593 = vmatpush1.msra.mxu0 0.0
    %1594 = vmatprep.subr.mxu0 0.0
    %1595 = vmatpush1.msra.mxu0 0.0
    %1596 = vmatprep.subr.mxu0 0.0
    %1597 = vmatpush1.msra.mxu0 0.0
    %1598 = vmatprep.subr.mxu0 0.0
    %1599 = vmatpush1.msra.mxu0 0.0
    %1600 = vmatprep.subr.mxu0 0.0
    %1601 = vmatpush1.msra.mxu0 0.0
    %1602 = vmatprep.subr.mxu0 0.0
    %1603 = vmatpush1.msra.mxu0 0.0
    %1604 = vmatprep.subr.mxu0 0.0
    %1605 = vmatpush1.msra.mxu0 0.0
    %1606 = vmatprep.subr.mxu0 0.0
    %1607 = vmatpush1.msra.mxu0 0.0
    %1608 = vmatprep.subr.mxu0 0.0
    %1609 = vmatpush1.msra.mxu0 0.0
    %1610 = vmatprep.subr.mxu0 0.0
    %1611 = vmatpush1.msra.mxu0 0.0
    %1612 = vmatprep.subr.mxu0 0.0
    %1613 = vmatpush1.msra.mxu0 0.0
    %1614 = vmatprep.subr.mxu0 0.0
    %1615 = vmatpush1.msra.mxu0 0.0
    %1616 = vmatprep.subr.mxu0 0.0
    %1617 = vmatpush1.msra.mxu0 %v1588
    %1618 = vmatprep.subr.mxu0 0.0
    %1619 = vmatpush1.msra.mxu0 %v1573
    %1620 = vmatprep.subr.mxu0 0.0
    %1621 = vmatpush1.msra.mxu0 %v1571
    %1622 = vmatprep.subr.mxu0 0.0
    %1623 = vmatpush2.msra.mxu0 0.0
    %1624 = vmatprep.subr.mxu0 0.0
    %1625 = vmatpush2.msra.mxu0 0.0
    %1626 = vmatprep.subr.mxu0 0.0
    %1627 = vmatpush2.msra.mxu0 0.0
    %1628 = vmatprep.subr.mxu0 0.0
    %1629 = vmatpush2.msra.mxu0 0.0
    %1630 = vmatprep.subr.mxu0 0.0
    %1631 = vmatpush2.msra.mxu0 0.0
    %1632 = vmatprep.subr.mxu0 0.0
    %1633 = vmatpush2.msra.mxu0 0.0
    %1634 = vmatprep.subr.mxu0 0.0
    %1635 = vmatpush2.msra.mxu0 0.0
    %1636 = vmatprep.subr.mxu0 0.0
    %1637 = vmatpush2.msra.mxu0 0.0
    %1638 = vmatprep.subr.mxu0 0.0
    %1639 = vmatpush2.msra.mxu0 0.0
    %1640 = vmatprep.subr.mxu0 0.0
    %1641 = vmatpush2.msra.mxu0 0.0
    %1642 = vmatprep.subr.mxu0 0.0
    %1643 = vmatpush2.msra.mxu0 0.0
    %1644 = vmatprep.subr.mxu0 0.0
    %1645 = vmatpush2.msra.mxu0 0.0
    %1646 = vmatprep.subr.mxu0 0.0
    %1647 = vmatpush2.msra.mxu0 0.0
    %1648 = vmatprep.subr.mxu0 0.0
    %1649 = vmatpush2.msra.mxu0 0.0
    %1650 = vmatprep.subr.mxu0 0.0
    %1651 = vmatpush2.msra.mxu0 0.0
    %1652 = vmatprep.subr.mxu0 0.0
    %1653 = vmatpush2.msra.mxu0 0.0
    %1654 = vmatprep.mubr.f32.mxu0 0.0
    %1655 = vmatmul.mubr.f32.gmra.mxu0 %v1579
    %v1656 = vpop.f32.mrf.mxu0
    %v1657 = vadd.f32 0.0, %v1656
    %v1658 = vpop.f32.mrf.mxu0
    %1659 = vmatprep.mubr.f32.mxu0 0.0
    %1660 = vmatmul.mubr.f32.gmra.mxu0 %v1582
    %v1661 = vpop.f32.mrf.mxu0
    %v1662 = vadd.f32 0.0, %v1661
    %v1663 = vpop.f32.mrf.mxu0
    %1664 = vmatprep.mubr.f32.mxu0 0.0
    %1665 = vmatmul.mubr.f32.gmra.mxu0 %v1585
    %v1666 = vpop.f32.mrf.mxu0
    %v1667 = vadd.f32 0.0, %v1666
    %v1668 = vpop.f32.mrf.mxu0
    %1669 = vdwg.mxu0
    %1670 = vrot.lane.b32.xlu0 %v421, 56
    %v1671 = vpop.permute.xlu0 %1670
    %1672 = vrot.lane.b32.xlu0 %v426, 56
    %v1673 = vpop.permute.xlu0 %1672
    %1674 = vrot.lane.b32.xlu0 %v431, 56
    %v1675 = vpop.permute.xlu0 %1674
    %v1679 = vsel %vm1300, %v1545, 0
    %v1682 = vsel %vm1300, %v1546, 0
    %v1685 = vsel %vm1300, %v1547, 0
    %v1687 = vsel %vm1587, %v1675, 0
    %1689 = vmatprep.subr.mxu0 0.0
    %1690 = vmatpush1.msra.mxu0 0.0
    %1691 = vmatprep.subr.mxu0 0.0
    %1692 = vmatpush1.msra.mxu0 0.0
    %1693 = vmatprep.subr.mxu0 0.0
    %1694 = vmatpush1.msra.mxu0 0.0
    %1695 = vmatprep.subr.mxu0 0.0
    %1696 = vmatpush1.msra.mxu0 0.0
    %1697 = vmatprep.subr.mxu0 0.0
    %1698 = vmatpush1.msra.mxu0 0.0
    %1699 = vmatprep.subr.mxu0 0.0
    %1700 = vmatpush1.msra.mxu0 0.0
    %1701 = vmatprep.subr.mxu0 0.0
    %1702 = vmatpush1.msra.mxu0 0.0
    %1703 = vmatprep.subr.mxu0 0.0
    %1704 = vmatpush1.msra.mxu0 0.0
    %1705 = vmatprep.subr.mxu0 0.0
    %1706 = vmatpush1.msra.mxu0 0.0
    %1707 = vmatprep.subr.mxu0 0.0
    %1708 = vmatpush1.msra.mxu0 0.0
    %1709 = vmatprep.subr.mxu0 0.0
    %1710 = vmatpush1.msra.mxu0 0.0
    %1711 = vmatprep.subr.mxu0 0.0
    %1712 = vmatpush1.msra.mxu0 0.0
    %1713 = vmatprep.subr.mxu0 0.0
    %1714 = vmatpush1.msra.mxu0 0.0
    %1715 = vmatprep.subr.mxu0 0.0
    %1716 = vmatpush1.msra.mxu0 %v1687
    %1717 = vmatprep.subr.mxu0 0.0
    %1718 = vmatpush1.msra.mxu0 %v1673
    %1719 = vmatprep.subr.mxu0 0.0
    %1720 = vmatpush1.msra.mxu0 %v1671
    %1721 = vmatprep.subr.mxu0 0.0
    %1722 = vmatpush2.msra.mxu0 0.0
    %1723 = vmatprep.subr.mxu0 0.0
    %1724 = vmatpush2.msra.mxu0 0.0
    %1725 = vmatprep.subr.mxu0 0.0
    %1726 = vmatpush2.msra.mxu0 0.0
    %1727 = vmatprep.subr.mxu0 0.0
    %1728 = vmatpush2.msra.mxu0 0.0
    %1729 = vmatprep.subr.mxu0 0.0
    %1730 = vmatpush2.msra.mxu0 0.0
    %1731 = vmatprep.subr.mxu0 0.0
    %1732 = vmatpush2.msra.mxu0 0.0
    %1733 = vmatprep.subr.mxu0 0.0
    %1734 = vmatpush2.msra.mxu0 0.0
    %1735 = vmatprep.subr.mxu0 0.0
    %1736 = vmatpush2.msra.mxu0 0.0
    %1737 = vmatprep.subr.mxu0 0.0
    %1738 = vmatpush2.msra.mxu0 0.0
    %1739 = vmatprep.subr.mxu0 0.0
    %1740 = vmatpush2.msra.mxu0 0.0
    %1741 = vmatprep.subr.mxu0 0.0
    %1742 = vmatpush2.msra.mxu0 0.0
    %1743 = vmatprep.subr.mxu0 0.0
    %1744 = vmatpush2.msra.mxu0 0.0
    %1745 = vmatprep.subr.mxu0 0.0
    %1746 = vmatpush2.msra.mxu0 0.0
    %1747 = vmatprep.subr.mxu0 0.0
    %1748 = vmatpush2.msra.mxu0 0.0
    %1749 = vmatprep.subr.mxu0 0.0
    %1750 = vmatpush2.msra.mxu0 0.0
    %1751 = vmatprep.subr.mxu0 0.0
    %1752 = vmatpush2.msra.mxu0 0.0
    %1753 = vmatprep.mubr.f32.mxu0 0.0
    %1754 = vmatmul.mubr.f32.gmra.mxu0 %v1679
    %v1755 = vpop.f32.mrf.mxu0
    %v1756 = vadd.f32 0.0, %v1755
    %v1757 = vpop.f32.mrf.mxu0
    %1758 = vmatprep.mubr.f32.mxu0 0.0
    %1759 = vmatmul.mubr.f32.gmra.mxu0 %v1682
    %v1760 = vpop.f32.mrf.mxu0
    %v1761 = vadd.f32 0.0, %v1760
    %v1762 = vpop.f32.mrf.mxu0
    %1763 = vmatprep.mubr.f32.mxu0 0.0
    %1764 = vmatmul.mubr.f32.gmra.mxu0 %v1685
    %v1765 = vpop.f32.mrf.mxu0
    %v1766 = vadd.f32 0.0, %v1765
    %v1767 = vpop.f32.mrf.mxu0
    %1768 = vdwg.mxu0
    %1769 = vrot.lane.b32.xlu0 %v421, 48
    %v1770 = vpop.permute.xlu0 %1769
    %1771 = vrot.lane.b32.xlu0 %v426, 48
    %v1772 = vpop.permute.xlu0 %1771
    %1773 = vrot.lane.b32.xlu0 %v431, 48
    %v1774 = vpop.permute.xlu0 %1773
    %v1778 = vsel %vm1300, %v1548, 0
    %v1781 = vsel %vm1300, %v1549, 0
    %v1784 = vsel %vm1300, %v1550, 0
    %v1786 = vsel %vm1587, %v1774, 0
    %1788 = vmatprep.subr.mxu0 0.0
    %1789 = vmatpush1.msra.mxu0 0.0
    %1790 = vmatprep.subr.mxu0 0.0
    %1791 = vmatpush1.msra.mxu0 0.0
    %1792 = vmatprep.subr.mxu0 0.0
    %1793 = vmatpush1.msra.mxu0 0.0
    %1794 = vmatprep.subr.mxu0 0.0
    %1795 = vmatpush1.msra.mxu0 0.0
    %1796 = vmatprep.subr.mxu0 0.0
    %1797 = vmatpush1.msra.mxu0 0.0
    %1798 = vmatprep.subr.mxu0 0.0
    %1799 = vmatpush1.msra.mxu0 0.0
    %1800 = vmatprep.subr.mxu0 0.0
    %1801 = vmatpush1.msra.mxu0 0.0
    %1802 = vmatprep.subr.mxu0 0.0
    %1803 = vmatpush1.msra.mxu0 0.0
    %1804 = vmatprep.subr.mxu0 0.0
    %1805 = vmatpush1.msra.mxu0 0.0
    %1806 = vmatprep.subr.mxu0 0.0
    %1807 = vmatpush1.msra.mxu0 0.0
    %1808 = vmatprep.subr.mxu0 0.0
    %1809 = vmatpush1.msra.mxu0 0.0
    %1810 = vmatprep.subr.mxu0 0.0
    %1811 = vmatpush1.msra.mxu0 0.0
    %1812 = vmatprep.subr.mxu0 0.0
    %1813 = vmatpush1.msra.mxu0 0.0
    %1814 = vmatprep.subr.mxu0 0.0
    %1815 = vmatpush1.msra.mxu0 %v1786
    %1816 = vmatprep.subr.mxu0 0.0
    %1817 = vmatpush1.msra.mxu0 %v1772
    %1818 = vmatprep.subr.mxu0 0.0
    %1819 = vmatpush1.msra.mxu0 %v1770
    %1820 = vmatprep.subr.mxu0 0.0
    %1821 = vmatpush2.msra.mxu0 0.0
    %1822 = vmatprep.subr.mxu0 0.0
    %1823 = vmatpush2.msra.mxu0 0.0
    %1824 = vmatprep.subr.mxu0 0.0
    %1825 = vmatpush2.msra.mxu0 0.0
    %1826 = vmatprep.subr.mxu0 0.0
    %1827 = vmatpush2.msra.mxu0 0.0
    %1828 = vmatprep.subr.mxu0 0.0
    %1829 = vmatpush2.msra.mxu0 0.0
    %1830 = vmatprep.subr.mxu0 0.0
    %1831 = vmatpush2.msra.mxu0 0.0
    %1832 = vmatprep.subr.mxu0 0.0
    %1833 = vmatpush2.msra.mxu0 0.0
    %1834 = vmatprep.subr.mxu0 0.0
    %1835 = vmatpush2.msra.mxu0 0.0
    %1836 = vmatprep.subr.mxu0 0.0
    %1837 = vmatpush2.msra.mxu0 0.0
    %1838 = vmatprep.subr.mxu0 0.0
    %1839 = vmatpush2.msra.mxu0 0.0
    %1840 = vmatprep.subr.mxu0 0.0
    %1841 = vmatpush2.msra.mxu0 0.0
    %1842 = vmatprep.subr.mxu0 0.0
    %1843 = vmatpush2.msra.mxu0 0.0
    %1844 = vmatprep.subr.mxu0 0.0
    %1845 = vmatpush2.msra.mxu0 0.0
    %1846 = vmatprep.subr.mxu0 0.0
    %1847 = vmatpush2.msra.mxu0 0.0
    %1848 = vmatprep.subr.mxu0 0.0
    %1849 = vmatpush2.msra.mxu0 0.0
    %1850 = vmatprep.subr.mxu0 0.0
    %1851 = vmatpush2.msra.mxu0 0.0
    %1852 = vmatprep.mubr.f32.mxu0 0.0
    %1853 = vmatmul.mubr.f32.gmra.mxu0 %v1778
    %v1854 = vpop.f32.mrf.mxu0
    %v1855 = vadd.f32 0.0, %v1854
    %v1856 = vpop.f32.mrf.mxu0
    %1857 = vmatprep.mubr.f32.mxu0 0.0
    %1858 = vmatmul.mubr.f32.gmra.mxu0 %v1781
    %v1859 = vpop.f32.mrf.mxu0
    %v1860 = vadd.f32 0.0, %v1859
    %v1861 = vpop.f32.mrf.mxu0
    %1862 = vmatprep.mubr.f32.mxu0 0.0
    %1863 = vmatmul.mubr.f32.gmra.mxu0 %v1784
    %v1864 = vpop.f32.mrf.mxu0
    %v1865 = vadd.f32 0.0, %v1864
    %v1866 = vpop.f32.mrf.mxu0
    %1867 = vdwg.mxu0
    %1868 = vrot.lane.b32.xlu0 %v421, 40
    %v1869 = vpop.permute.xlu0 %1868
    %1870 = vrot.lane.b32.xlu0 %v426, 40
    %v1871 = vpop.permute.xlu0 %1870
    %1872 = vrot.lane.b32.xlu0 %v431, 40
    %v1873 = vpop.permute.xlu0 %1872
    %v1877 = vsel %vm1300, %v1551, 0
    %v1880 = vsel %vm1300, %v1552, 0
    %v1883 = vsel %vm1300, %v1553, 0
    %v1885 = vsel %vm1587, %v1873, 0
    %1887 = vmatprep.subr.mxu0 0.0
    %1888 = vmatpush1.msra.mxu0 0.0
    %1889 = vmatprep.subr.mxu0 0.0
    %1890 = vmatpush1.msra.mxu0 0.0
    %1891 = vmatprep.subr.mxu0 0.0
    %1892 = vmatpush1.msra.mxu0 0.0
    %1893 = vmatprep.subr.mxu0 0.0
    %1894 = vmatpush1.msra.mxu0 0.0
    %1895 = vmatprep.subr.mxu0 0.0
    %1896 = vmatpush1.msra.mxu0 0.0
    %1897 = vmatprep.subr.mxu0 0.0
    %1898 = vmatpush1.msra.mxu0 0.0
    %1899 = vmatprep.subr.mxu0 0.0
    %1900 = vmatpush1.msra.mxu0 0.0
    %1901 = vmatprep.subr.mxu0 0.0
    %1902 = vmatpush1.msra.mxu0 0.0
    %1903 = vmatprep.subr.mxu0 0.0
    %1904 = vmatpush1.msra.mxu0 0.0
    %1905 = vmatprep.subr.mxu0 0.0
    %1906 = vmatpush1.msra.mxu0 0.0
    %1907 = vmatprep.subr.mxu0 0.0
    %1908 = vmatpush1.msra.mxu0 0.0
    %1909 = vmatprep.subr.mxu0 0.0
    %1910 = vmatpush1.msra.mxu0 0.0
    %1911 = vmatprep.subr.mxu0 0.0
    %1912 = vmatpush1.msra.mxu0 0.0
    %1913 = vmatprep.subr.mxu0 0.0
    %1914 = vmatpush1.msra.mxu0 %v1885
    %1915 = vmatprep.subr.mxu0 0.0
    %1916 = vmatpush1.msra.mxu0 %v1871
    %1917 = vmatprep.subr.mxu0 0.0
    %1918 = vmatpush1.msra.mxu0 %v1869
    %1919 = vmatprep.subr.mxu0 0.0
    %1920 = vmatpush2.msra.mxu0 0.0
    %1921 = vmatprep.subr.mxu0 0.0
    %1922 = vmatpush2.msra.mxu0 0.0
    %1923 = vmatprep.subr.mxu0 0.0
    %1924 = vmatpush2.msra.mxu0 0.0
    %1925 = vmatprep.subr.mxu0 0.0
    %1926 = vmatpush2.msra.mxu0 0.0
    %1927 = vmatprep.subr.mxu0 0.0
    %1928 = vmatpush2.msra.mxu0 0.0
    %1929 = vmatprep.subr.mxu0 0.0
    %1930 = vmatpush2.msra.mxu0 0.0
    %1931 = vmatprep.subr.mxu0 0.0
    %1932 = vmatpush2.msra.mxu0 0.0
    %1933 = vmatprep.subr.mxu0 0.0
    %1934 = vmatpush2.msra.mxu0 0.0
    %1935 = vmatprep.subr.mxu0 0.0
    %1936 = vmatpush2.msra.mxu0 0.0
    %1937 = vmatprep.subr.mxu0 0.0
    %1938 = vmatpush2.msra.mxu0 0.0
    %1939 = vmatprep.subr.mxu0 0.0
    %1940 = vmatpush2.msra.mxu0 0.0
    %1941 = vmatprep.subr.mxu0 0.0
    %1942 = vmatpush2.msra.mxu0 0.0
    %1943 = vmatprep.subr.mxu0 0.0
    %1944 = vmatpush2.msra.mxu0 0.0
    %1945 = vmatprep.subr.mxu0 0.0
    %1946 = vmatpush2.msra.mxu0 0.0
    %1947 = vmatprep.subr.mxu0 0.0
    %1948 = vmatpush2.msra.mxu0 0.0
    %1949 = vmatprep.subr.mxu0 0.0
    %1950 = vmatpush2.msra.mxu0 0.0
    %1951 = vmatprep.mubr.f32.mxu0 0.0
    %1952 = vmatmul.mubr.f32.gmra.mxu0 %v1877
    %v1953 = vpop.f32.mrf.mxu0
    %v1954 = vadd.f32 0.0, %v1953
    %v1955 = vpop.f32.mrf.mxu0
    %1956 = vmatprep.mubr.f32.mxu0 0.0
    %1957 = vmatmul.mubr.f32.gmra.mxu0 %v1880
    %v1958 = vpop.f32.mrf.mxu0
    %v1959 = vadd.f32 0.0, %v1958
    %v1960 = vpop.f32.mrf.mxu0
    %1961 = vmatprep.mubr.f32.mxu0 0.0
    %1962 = vmatmul.mubr.f32.gmra.mxu0 %v1883
    %v1963 = vpop.f32.mrf.mxu0
    %v1964 = vadd.f32 0.0, %v1963
    %v1965 = vpop.f32.mrf.mxu0
    %1966 = vdwg.mxu0
    %1970 = vrot.lane.b32.xlu0 %v1756, 8
    %v1971 = vpop.permute.xlu0 %1970
    %1972 = vrot.lane.b32.xlu0 %v1761, 8
    %v1973 = vpop.permute.xlu0 %1972
    %1974 = vrot.lane.b32.xlu0 %v1766, 8
    %v1975 = vpop.permute.xlu0 %1974
    %1982 = vrot.lane.b32.xlu0 %v1855, 16
    %v1983 = vpop.permute.xlu0 %1982
    %1984 = vrot.lane.b32.xlu0 %v1860, 16
    %v1985 = vpop.permute.xlu0 %1984
    %1986 = vrot.lane.b32.xlu0 %v1865, 16
    %v1987 = vpop.permute.xlu0 %1986
    %1994 = vrot.lane.b32.xlu0 %v1954, 24
    %v1995 = vpop.permute.xlu0 %1994
    %1996 = vrot.lane.b32.xlu0 %v1959, 24
    %v1997 = vpop.permute.xlu0 %1996
    %1998 = vrot.lane.b32.xlu0 %v1964, 24
    %v1999 = vpop.permute.xlu0 %1998
    %v2003 = vsel %vm453, %v1657, %v1971
    %v2004 = vsel %vm453, %v1662, %v1973
    %v2005 = vsel %vm453, %v1667, %v1975
    %vm2006 = vcmask 130048
    %v2007 = vsel %vm2006, %v2003, %v1983
    %v2008 = vsel %vm2006, %v2004, %v1985
    %v2009 = vsel %vm2006, %v2005, %v1987
    %vm2010 = vcmask 195584
    %v2011 = vsel %vm2010, %v2007, %v1995
    %v2012 = vsel %vm2010, %v2008, %v1997
    %v2013 = vsel %vm2010, %v2009, %v1999
    %v2015 = vsel %vm160, %v2011, 0
    %v2018 = vsel %vm160, %v2012, 0
    %v2021 = vsel %vm160, %v2013, 0
    %2023 = vmatprep.subr.mxu0 0.0
    %2024 = vmatpush1.msra.mxu0 0.0
    %2025 = vmatprep.subr.mxu0 0.0
    %2026 = vmatpush1.msra.mxu0 0.0
    %2027 = vmatprep.subr.mxu0 0.0
    %2028 = vmatpush1.msra.mxu0 0.0
    %2029 = vmatprep.subr.mxu0 0.0
    %2030 = vmatpush1.msra.mxu0 0.0
    %2031 = vmatprep.subr.mxu0 0.0
    %2032 = vmatpush1.msra.mxu0 0.0
    %2033 = vmatprep.subr.mxu0 0.0
    %2034 = vmatpush1.msra.mxu0 0.0
    %2035 = vmatprep.subr.mxu0 0.0
    %2036 = vmatpush1.msra.mxu0 0.0
    %2037 = vmatprep.subr.mxu0 0.0
    %2038 = vmatpush1.msra.mxu0 0.0
    %2039 = vmatprep.subr.mxu0 0.0
    %2040 = vmatpush1.msra.mxu0 0.0
    %2041 = vmatprep.subr.mxu0 0.0
    %2042 = vmatpush1.msra.mxu0 0.0
    %2043 = vmatprep.subr.mxu0 0.0
    %2044 = vmatpush1.msra.mxu0 0.0
    %2045 = vmatprep.subr.mxu0 0.0
    %2046 = vmatpush1.msra.mxu0 0.0
    %2047 = vmatprep.subr.mxu0 0.0
    %2048 = vmatpush1.msra.mxu0 %v1569
    %2049 = vmatprep.subr.mxu0 0.0
    %2050 = vmatpush1.msra.mxu0 %v1568
    %2051 = vmatprep.subr.mxu0 0.0
    %2052 = vmatpush1.msra.mxu0 %v1567
    %2053 = vmatprep.subr.mxu0 0.0
    %2054 = vmatpush1.msra.mxu0 %v1566
    %2055 = vmatprep.subr.mxu0 0.0
    %2056 = vmatpush2.msra.mxu0 0.0
    %2057 = vmatprep.subr.mxu0 0.0
    %2058 = vmatpush2.msra.mxu0 0.0
    %2059 = vmatprep.subr.mxu0 0.0
    %2060 = vmatpush2.msra.mxu0 0.0
    %2061 = vmatprep.subr.mxu0 0.0
    %2062 = vmatpush2.msra.mxu0 0.0
    %2063 = vmatprep.subr.mxu0 0.0
    %2064 = vmatpush2.msra.mxu0 0.0
    %2065 = vmatprep.subr.mxu0 0.0
    %2066 = vmatpush2.msra.mxu0 0.0
    %2067 = vmatprep.subr.mxu0 0.0
    %2068 = vmatpush2.msra.mxu0 0.0
    %2069 = vmatprep.subr.mxu0 0.0
    %2070 = vmatpush2.msra.mxu0 0.0
    %2071 = vmatprep.subr.mxu0 0.0
    %2072 = vmatpush2.msra.mxu0 0.0
    %2073 = vmatprep.subr.mxu0 0.0
    %2074 = vmatpush2.msra.mxu0 0.0
    %2075 = vmatprep.subr.mxu0 0.0
    %2076 = vmatpush2.msra.mxu0 0.0
    %2077 = vmatprep.subr.mxu0 0.0
    %2078 = vmatpush2.msra.mxu0 0.0
    %2079 = vmatprep.subr.mxu0 0.0
    %2080 = vmatpush2.msra.mxu0 0.0
    %2081 = vmatprep.subr.mxu0 0.0
    %2082 = vmatpush2.msra.mxu0 0.0
    %2083 = vmatprep.subr.mxu0 0.0
    %2084 = vmatpush2.msra.mxu0 0.0
    %2085 = vmatprep.subr.mxu0 0.0
    %2086 = vmatpush2.msra.mxu0 0.0
    %2087 = vmatprep.mubr.f32.mxu0 0.0
    %2088 = vmatmul.mubr.f32.gmra.mxu0 %v2015
    %v2089 = vpop.f32.mrf.mxu0
    %v2090 = vadd.f32 0.0, %v2089
    %v2091 = vpop.f32.mrf.mxu0
    %2092 = vmatprep.mubr.f32.mxu0 0.0
    %2093 = vmatmul.mubr.f32.gmra.mxu0 %v2018
    %v2094 = vpop.f32.mrf.mxu0
    %v2095 = vadd.f32 0.0, %v2094
    %v2096 = vpop.f32.mrf.mxu0
    %2097 = vmatprep.mubr.f32.mxu0 0.0
    %2098 = vmatmul.mubr.f32.gmra.mxu0 %v2021
    %v2099 = vpop.f32.mrf.mxu0
    %v2100 = vadd.f32 0.0, %v2099
    %v2101 = vpop.f32.mrf.mxu0
    %2102 = vdwg.mxu0
    %2103 = vrot.lane.b32.xlu0 %v863, 64
    %v2104 = vpop.permute.xlu0 %2103
    %2105 = vrot.lane.b32.xlu0 %v865, 64
    %v2106 = vpop.permute.xlu0 %2105
    %2107 = vrot.lane.b32.xlu0 %v864, 64
    %v2108 = vpop.permute.xlu0 %2107
    %v2112 = vsel %vm1300, %v1554, 0
    %v2115 = vsel %vm1300, %v1555, 0
    %v2118 = vsel %vm1300, %v1556, 0
    %v2120 = vsel %vm1587, %v2108, 0
    %2122 = vmatprep.subr.mxu0 0.0
    %2123 = vmatpush1.msra.mxu0 0.0
    %2124 = vmatprep.subr.mxu0 0.0
    %2125 = vmatpush1.msra.mxu0 0.0
    %2126 = vmatprep.subr.mxu0 0.0
    %2127 = vmatpush1.msra.mxu0 0.0
    %2128 = vmatprep.subr.mxu0 0.0
    %2129 = vmatpush1.msra.mxu0 0.0
    %2130 = vmatprep.subr.mxu0 0.0
    %2131 = vmatpush1.msra.mxu0 0.0
    %2132 = vmatprep.subr.mxu0 0.0
    %2133 = vmatpush1.msra.mxu0 0.0
    %2134 = vmatprep.subr.mxu0 0.0
    %2135 = vmatpush1.msra.mxu0 0.0
    %2136 = vmatprep.subr.mxu0 0.0
    %2137 = vmatpush1.msra.mxu0 0.0
    %2138 = vmatprep.subr.mxu0 0.0
    %2139 = vmatpush1.msra.mxu0 0.0
    %2140 = vmatprep.subr.mxu0 0.0
    %2141 = vmatpush1.msra.mxu0 0.0
    %2142 = vmatprep.subr.mxu0 0.0
    %2143 = vmatpush1.msra.mxu0 0.0
    %2144 = vmatprep.subr.mxu0 0.0
    %2145 = vmatpush1.msra.mxu0 0.0
    %2146 = vmatprep.subr.mxu0 0.0
    %2147 = vmatpush1.msra.mxu0 0.0
    %2148 = vmatprep.subr.mxu0 0.0
    %2149 = vmatpush1.msra.mxu0 %v2120
    %2150 = vmatprep.subr.mxu0 0.0
    %2151 = vmatpush1.msra.mxu0 %v2106
    %2152 = vmatprep.subr.mxu0 0.0
    %2153 = vmatpush1.msra.mxu0 %v2104
    %2154 = vmatprep.subr.mxu0 0.0
    %2155 = vmatpush2.msra.mxu0 0.0
    %2156 = vmatprep.subr.mxu0 0.0
    %2157 = vmatpush2.msra.mxu0 0.0
    %2158 = vmatprep.subr.mxu0 0.0
    %2159 = vmatpush2.msra.mxu0 0.0
    %2160 = vmatprep.subr.mxu0 0.0
    %2161 = vmatpush2.msra.mxu0 0.0
    %2162 = vmatprep.subr.mxu0 0.0
    %2163 = vmatpush2.msra.mxu0 0.0
    %2164 = vmatprep.subr.mxu0 0.0
    %2165 = vmatpush2.msra.mxu0 0.0
    %2166 = vmatprep.subr.mxu0 0.0
    %2167 = vmatpush2.msra.mxu0 0.0
    %2168 = vmatprep.subr.mxu0 0.0
    %2169 = vmatpush2.msra.mxu0 0.0
    %2170 = vmatprep.subr.mxu0 0.0
    %2171 = vmatpush2.msra.mxu0 0.0
    %2172 = vmatprep.subr.mxu0 0.0
    %2173 = vmatpush2.msra.mxu0 0.0
    %2174 = vmatprep.subr.mxu0 0.0
    %2175 = vmatpush2.msra.mxu0 0.0
    %2176 = vmatprep.subr.mxu0 0.0
    %2177 = vmatpush2.msra.mxu0 0.0
    %2178 = vmatprep.subr.mxu0 0.0
    %2179 = vmatpush2.msra.mxu0 0.0
    %2180 = vmatprep.subr.mxu0 0.0
    %2181 = vmatpush2.msra.mxu0 0.0
    %2182 = vmatprep.subr.mxu0 0.0
    %2183 = vmatpush2.msra.mxu0 0.0
    %2184 = vmatprep.subr.mxu0 0.0
    %2185 = vmatpush2.msra.mxu0 0.0
    %2186 = vmatprep.mubr.f32.mxu0 0.0
    %2187 = vmatmul.mubr.f32.gmra.mxu0 %v2112
    %v2188 = vpop.f32.mrf.mxu0
    %v2189 = vadd.f32 0.0, %v2188
    %v2190 = vpop.f32.mrf.mxu0
    %2191 = vmatprep.mubr.f32.mxu0 0.0
    %2192 = vmatmul.mubr.f32.gmra.mxu0 %v2115
    %v2193 = vpop.f32.mrf.mxu0
    %v2194 = vadd.f32 0.0, %v2193
    %v2195 = vpop.f32.mrf.mxu0
    %2196 = vmatprep.mubr.f32.mxu0 0.0
    %2197 = vmatmul.mubr.f32.gmra.mxu0 %v2118
    %v2198 = vpop.f32.mrf.mxu0
    %v2199 = vadd.f32 0.0, %v2198
    %v2200 = vpop.f32.mrf.mxu0
    %2201 = vdwg.mxu0
    %2202 = vrot.lane.b32.xlu0 %v863, 56
    %v2203 = vpop.permute.xlu0 %2202
    %2204 = vrot.lane.b32.xlu0 %v865, 56
    %v2205 = vpop.permute.xlu0 %2204
    %2206 = vrot.lane.b32.xlu0 %v864, 56
    %v2207 = vpop.permute.xlu0 %2206
    %v2211 = vsel %vm1300, %v1557, 0
    %v2214 = vsel %vm1300, %v1558, 0
    %v2217 = vsel %vm1300, %v1559, 0
    %v2219 = vsel %vm1587, %v2207, 0
    %2221 = vmatprep.subr.mxu0 0.0
    %2222 = vmatpush1.msra.mxu0 0.0
    %2223 = vmatprep.subr.mxu0 0.0
    %2224 = vmatpush1.msra.mxu0 0.0
    %2225 = vmatprep.subr.mxu0 0.0
    %2226 = vmatpush1.msra.mxu0 0.0
    %2227 = vmatprep.subr.mxu0 0.0
    %2228 = vmatpush1.msra.mxu0 0.0
    %2229 = vmatprep.subr.mxu0 0.0
    %2230 = vmatpush1.msra.mxu0 0.0
    %2231 = vmatprep.subr.mxu0 0.0
    %2232 = vmatpush1.msra.mxu0 0.0
    %2233 = vmatprep.subr.mxu0 0.0
    %2234 = vmatpush1.msra.mxu0 0.0
    %2235 = vmatprep.subr.mxu0 0.0
    %2236 = vmatpush1.msra.mxu0 0.0
    %2237 = vmatprep.subr.mxu0 0.0
    %2238 = vmatpush1.msra.mxu0 0.0
    %2239 = vmatprep.subr.mxu0 0.0
    %2240 = vmatpush1.msra.mxu0 0.0
    %2241 = vmatprep.subr.mxu0 0.0
    %2242 = vmatpush1.msra.mxu0 0.0
    %2243 = vmatprep.subr.mxu0 0.0
    %2244 = vmatpush1.msra.mxu0 0.0
    %2245 = vmatprep.subr.mxu0 0.0
    %2246 = vmatpush1.msra.mxu0 0.0
    %2247 = vmatprep.subr.mxu0 0.0
    %2248 = vmatpush1.msra.mxu0 %v2219
    %2249 = vmatprep.subr.mxu0 0.0
    %2250 = vmatpush1.msra.mxu0 %v2205
    %2251 = vmatprep.subr.mxu0 0.0
    %2252 = vmatpush1.msra.mxu0 %v2203
    %2253 = vmatprep.subr.mxu0 0.0
    %2254 = vmatpush2.msra.mxu0 0.0
    %2255 = vmatprep.subr.mxu0 0.0
    %2256 = vmatpush2.msra.mxu0 0.0
    %2257 = vmatprep.subr.mxu0 0.0
    %2258 = vmatpush2.msra.mxu0 0.0
    %2259 = vmatprep.subr.mxu0 0.0
    %2260 = vmatpush2.msra.mxu0 0.0
    %2261 = vmatprep.subr.mxu0 0.0
    %2262 = vmatpush2.msra.mxu0 0.0
    %2263 = vmatprep.subr.mxu0 0.0
    %2264 = vmatpush2.msra.mxu0 0.0
    %2265 = vmatprep.subr.mxu0 0.0
    %2266 = vmatpush2.msra.mxu0 0.0
    %2267 = vmatprep.subr.mxu0 0.0
    %2268 = vmatpush2.msra.mxu0 0.0
    %2269 = vmatprep.subr.mxu0 0.0
    %2270 = vmatpush2.msra.mxu0 0.0
    %2271 = vmatprep.subr.mxu0 0.0
    %2272 = vmatpush2.msra.mxu0 0.0
    %2273 = vmatprep.subr.mxu0 0.0
    %2274 = vmatpush2.msra.mxu0 0.0
    %2275 = vmatprep.subr.mxu0 0.0
    %2276 = vmatpush2.msra.mxu0 0.0
    %2277 = vmatprep.subr.mxu0 0.0
    %2278 = vmatpush2.msra.mxu0 0.0
    %2279 = vmatprep.subr.mxu0 0.0
    %2280 = vmatpush2.msra.mxu0 0.0
    %2281 = vmatprep.subr.mxu0 0.0
    %2282 = vmatpush2.msra.mxu0 0.0
    %2283 = vmatprep.subr.mxu0 0.0
    %2284 = vmatpush2.msra.mxu0 0.0
    %2285 = vmatprep.mubr.f32.mxu0 0.0
    %2286 = vmatmul.mubr.f32.gmra.mxu0 %v2211
    %v2287 = vpop.f32.mrf.mxu0
    %v2288 = vadd.f32 0.0, %v2287
    %v2289 = vpop.f32.mrf.mxu0
    %2290 = vmatprep.mubr.f32.mxu0 0.0
    %2291 = vmatmul.mubr.f32.gmra.mxu0 %v2214
    %v2292 = vpop.f32.mrf.mxu0
    %v2293 = vadd.f32 0.0, %v2292
    %v2294 = vpop.f32.mrf.mxu0
    %2295 = vmatprep.mubr.f32.mxu0 0.0
    %2296 = vmatmul.mubr.f32.gmra.mxu0 %v2217
    %v2297 = vpop.f32.mrf.mxu0
    %v2298 = vadd.f32 0.0, %v2297
    %v2299 = vpop.f32.mrf.mxu0
    %2300 = vdwg.mxu0
    %2301 = vrot.lane.b32.xlu0 %v863, 48
    %v2302 = vpop.permute.xlu0 %2301
    %2303 = vrot.lane.b32.xlu0 %v865, 48
    %v2304 = vpop.permute.xlu0 %2303
    %2305 = vrot.lane.b32.xlu0 %v864, 48
    %v2306 = vpop.permute.xlu0 %2305
    %v2310 = vsel %vm1300, %v1560, 0
    %v2313 = vsel %vm1300, %v1561, 0
    %v2316 = vsel %vm1300, %v1562, 0
    %v2318 = vsel %vm1587, %v2306, 0
    %2320 = vmatprep.subr.mxu0 0.0
    %2321 = vmatpush1.msra.mxu0 0.0
    %2322 = vmatprep.subr.mxu0 0.0
    %2323 = vmatpush1.msra.mxu0 0.0
    %2324 = vmatprep.subr.mxu0 0.0
    %2325 = vmatpush1.msra.mxu0 0.0
    %2326 = vmatprep.subr.mxu0 0.0
    %2327 = vmatpush1.msra.mxu0 0.0
    %2328 = vmatprep.subr.mxu0 0.0
    %2329 = vmatpush1.msra.mxu0 0.0
    %2330 = vmatprep.subr.mxu0 0.0
    %2331 = vmatpush1.msra.mxu0 0.0
    %2332 = vmatprep.subr.mxu0 0.0
    %2333 = vmatpush1.msra.mxu0 0.0
    %2334 = vmatprep.subr.mxu0 0.0
    %2335 = vmatpush1.msra.mxu0 0.0
    %2336 = vmatprep.subr.mxu0 0.0
    %2337 = vmatpush1.msra.mxu0 0.0
    %2338 = vmatprep.subr.mxu0 0.0
    %2339 = vmatpush1.msra.mxu0 0.0
    %2340 = vmatprep.subr.mxu0 0.0
    %2341 = vmatpush1.msra.mxu0 0.0
    %2342 = vmatprep.subr.mxu0 0.0
    %2343 = vmatpush1.msra.mxu0 0.0
    %2344 = vmatprep.subr.mxu0 0.0
    %2345 = vmatpush1.msra.mxu0 0.0
    %2346 = vmatprep.subr.mxu0 0.0
    %2347 = vmatpush1.msra.mxu0 %v2318
    %2348 = vmatprep.subr.mxu0 0.0
    %2349 = vmatpush1.msra.mxu0 %v2304
    %2350 = vmatprep.subr.mxu0 0.0
    %2351 = vmatpush1.msra.mxu0 %v2302
    %2352 = vmatprep.subr.mxu0 0.0
    %2353 = vmatpush2.msra.mxu0 0.0
    %2354 = vmatprep.subr.mxu0 0.0
    %2355 = vmatpush2.msra.mxu0 0.0
    %2356 = vmatprep.subr.mxu0 0.0
    %2357 = vmatpush2.msra.mxu0 0.0
    %2358 = vmatprep.subr.mxu0 0.0
    %2359 = vmatpush2.msra.mxu0 0.0
    %2360 = vmatprep.subr.mxu0 0.0
    %2361 = vmatpush2.msra.mxu0 0.0
    %2362 = vmatprep.subr.mxu0 0.0
    %2363 = vmatpush2.msra.mxu0 0.0
    %2364 = vmatprep.subr.mxu0 0.0
    %2365 = vmatpush2.msra.mxu0 0.0
    %2366 = vmatprep.subr.mxu0 0.0
    %2367 = vmatpush2.msra.mxu0 0.0
    %2368 = vmatprep.subr.mxu0 0.0
    %2369 = vmatpush2.msra.mxu0 0.0
    %2370 = vmatprep.subr.mxu0 0.0
    %2371 = vmatpush2.msra.mxu0 0.0
    %2372 = vmatprep.subr.mxu0 0.0
    %2373 = vmatpush2.msra.mxu0 0.0
    %2374 = vmatprep.subr.mxu0 0.0
    %2375 = vmatpush2.msra.mxu0 0.0
    %2376 = vmatprep.subr.mxu0 0.0
    %2377 = vmatpush2.msra.mxu0 0.0
    %2378 = vmatprep.subr.mxu0 0.0
    %2379 = vmatpush2.msra.mxu0 0.0
    %2380 = vmatprep.subr.mxu0 0.0
    %2381 = vmatpush2.msra.mxu0 0.0
    %2382 = vmatprep.subr.mxu0 0.0
    %2383 = vmatpush2.msra.mxu0 0.0
    %2384 = vmatprep.mubr.f32.mxu0 0.0
    %2385 = vmatmul.mubr.f32.gmra.mxu0 %v2310
    %v2386 = vpop.f32.mrf.mxu0
    %v2387 = vadd.f32 0.0, %v2386
    %v2388 = vpop.f32.mrf.mxu0
    %2389 = vmatprep.mubr.f32.mxu0 0.0
    %2390 = vmatmul.mubr.f32.gmra.mxu0 %v2313
    %v2391 = vpop.f32.mrf.mxu0
    %v2392 = vadd.f32 0.0, %v2391
    %v2393 = vpop.f32.mrf.mxu0
    %2394 = vmatprep.mubr.f32.mxu0 0.0
    %2395 = vmatmul.mubr.f32.gmra.mxu0 %v2316
    %v2396 = vpop.f32.mrf.mxu0
    %v2397 = vadd.f32 0.0, %v2396
    %v2398 = vpop.f32.mrf.mxu0
    %2399 = vdwg.mxu0
    %2400 = vrot.lane.b32.xlu0 %v863, 40
    %v2401 = vpop.permute.xlu0 %2400
    %2402 = vrot.lane.b32.xlu0 %v865, 40
    %v2403 = vpop.permute.xlu0 %2402
    %2404 = vrot.lane.b32.xlu0 %v864, 40
    %v2405 = vpop.permute.xlu0 %2404
    %v2409 = vsel %vm1300, %v1563, 0
    %v2412 = vsel %vm1300, %v1564, 0
    %v2415 = vsel %vm1300, %v1565, 0
    %v2417 = vsel %vm1587, %v2405, 0
    %2419 = vmatprep.subr.mxu0 0.0
    %2420 = vmatpush1.msra.mxu0 0.0
    %2421 = vmatprep.subr.mxu0 0.0
    %2422 = vmatpush1.msra.mxu0 0.0
    %2423 = vmatprep.subr.mxu0 0.0
    %2424 = vmatpush1.msra.mxu0 0.0
    %2425 = vmatprep.subr.mxu0 0.0
    %2426 = vmatpush1.msra.mxu0 0.0
    %2427 = vmatprep.subr.mxu0 0.0
    %2428 = vmatpush1.msra.mxu0 0.0
    %2429 = vmatprep.subr.mxu0 0.0
    %2430 = vmatpush1.msra.mxu0 0.0
    %2431 = vmatprep.subr.mxu0 0.0
    %2432 = vmatpush1.msra.mxu0 0.0
    %2433 = vmatprep.subr.mxu0 0.0
    %2434 = vmatpush1.msra.mxu0 0.0
    %2435 = vmatprep.subr.mxu0 0.0
    %2436 = vmatpush1.msra.mxu0 0.0
    %2437 = vmatprep.subr.mxu0 0.0
    %2438 = vmatpush1.msra.mxu0 0.0
    %2439 = vmatprep.subr.mxu0 0.0
    %2440 = vmatpush1.msra.mxu0 0.0
    %2441 = vmatprep.subr.mxu0 0.0
    %2442 = vmatpush1.msra.mxu0 0.0
    %2443 = vmatprep.subr.mxu0 0.0
    %2444 = vmatpush1.msra.mxu0 0.0
    %2445 = vmatprep.subr.mxu0 0.0
    %2446 = vmatpush1.msra.mxu0 %v2417
    %2447 = vmatprep.subr.mxu0 0.0
    %2448 = vmatpush1.msra.mxu0 %v2403
    %2449 = vmatprep.subr.mxu0 0.0
    %2450 = vmatpush1.msra.mxu0 %v2401
    %2451 = vmatprep.subr.mxu0 0.0
    %2452 = vmatpush2.msra.mxu0 0.0
    %2453 = vmatprep.subr.mxu0 0.0
    %2454 = vmatpush2.msra.mxu0 0.0
    %2455 = vmatprep.subr.mxu0 0.0
    %2456 = vmatpush2.msra.mxu0 0.0
    %2457 = vmatprep.subr.mxu0 0.0
    %2458 = vmatpush2.msra.mxu0 0.0
    %2459 = vmatprep.subr.mxu0 0.0
    %2460 = vmatpush2.msra.mxu0 0.0
    %2461 = vmatprep.subr.mxu0 0.0
    %2462 = vmatpush2.msra.mxu0 0.0
    %2463 = vmatprep.subr.mxu0 0.0
    %2464 = vmatpush2.msra.mxu0 0.0
    %2465 = vmatprep.subr.mxu0 0.0
    %2466 = vmatpush2.msra.mxu0 0.0
    %2467 = vmatprep.subr.mxu0 0.0
    %2468 = vmatpush2.msra.mxu0 0.0
    %2469 = vmatprep.subr.mxu0 0.0
    %2470 = vmatpush2.msra.mxu0 0.0
    %2471 = vmatprep.subr.mxu0 0.0
    %2472 = vmatpush2.msra.mxu0 0.0
    %2473 = vmatprep.subr.mxu0 0.0
    %2474 = vmatpush2.msra.mxu0 0.0
    %2475 = vmatprep.subr.mxu0 0.0
    %2476 = vmatpush2.msra.mxu0 0.0
    %2477 = vmatprep.subr.mxu0 0.0
    %2478 = vmatpush2.msra.mxu0 0.0
    %2479 = vmatprep.subr.mxu0 0.0
    %2480 = vmatpush2.msra.mxu0 0.0
    %2481 = vmatprep.subr.mxu0 0.0
    %2482 = vmatpush2.msra.mxu0 0.0
    %2483 = vmatprep.mubr.f32.mxu0 0.0
    %2484 = vmatmul.mubr.f32.gmra.mxu0 %v2409
    %v2485 = vpop.f32.mrf.mxu0
    %v2486 = vadd.f32 0.0, %v2485
    %v2487 = vpop.f32.mrf.mxu0
    %2488 = vmatprep.mubr.f32.mxu0 0.0
    %2489 = vmatmul.mubr.f32.gmra.mxu0 %v2412
    %v2490 = vpop.f32.mrf.mxu0
    %v2491 = vadd.f32 0.0, %v2490
    %v2492 = vpop.f32.mrf.mxu0
    %2493 = vmatprep.mubr.f32.mxu0 0.0
    %2494 = vmatmul.mubr.f32.gmra.mxu0 %v2415
    %v2495 = vpop.f32.mrf.mxu0
    %v2496 = vadd.f32 0.0, %v2495
    %v2497 = vpop.f32.mrf.mxu0
    %2498 = vdwg.mxu0
    %2502 = vrot.lane.b32.xlu0 %v2288, 8
    %v2503 = vpop.permute.xlu0 %2502
    %2504 = vrot.lane.b32.xlu0 %v2293, 8
    %v2505 = vpop.permute.xlu0 %2504
    %2506 = vrot.lane.b32.xlu0 %v2298, 8
    %v2507 = vpop.permute.xlu0 %2506
    %2514 = vrot.lane.b32.xlu0 %v2387, 16
    %v2515 = vpop.permute.xlu0 %2514
    %2516 = vrot.lane.b32.xlu0 %v2392, 16
    %v2517 = vpop.permute.xlu0 %2516
    %2518 = vrot.lane.b32.xlu0 %v2397, 16
    %v2519 = vpop.permute.xlu0 %2518
    %2526 = vrot.lane.b32.xlu0 %v2486, 24
    %v2527 = vpop.permute.xlu0 %2526
    %2528 = vrot.lane.b32.xlu0 %v2491, 24
    %v2529 = vpop.permute.xlu0 %2528
    %2530 = vrot.lane.b32.xlu0 %v2496, 24
    %v2531 = vpop.permute.xlu0 %2530
    %v2535 = vsel %vm453, %v2189, %v2503
    %v2536 = vsel %vm453, %v2194, %v2505
    %v2537 = vsel %vm453, %v2199, %v2507
    %v2538 = vsel %vm2006, %v2535, %v2515
    %v2539 = vsel %vm2006, %v2536, %v2517
    %v2540 = vsel %vm2006, %v2537, %v2519
    %v2541 = vsel %vm2010, %v2538, %v2527
    %v2542 = vsel %vm2010, %v2539, %v2529
    %v2543 = vsel %vm2010, %v2540, %v2531
    %v2545 = vsel %vm160, %v2541, 0
    %v2548 = vsel %vm160, %v2542, 0
    %v2551 = vsel %vm160, %v2543, 0
    %2553 = vmatprep.subr.mxu0 0.0
    %2554 = vmatpush1.msra.mxu0 0.0
    %2555 = vmatprep.subr.mxu0 0.0
    %2556 = vmatpush1.msra.mxu0 0.0
    %2557 = vmatprep.subr.mxu0 0.0
    %2558 = vmatpush1.msra.mxu0 0.0
    %2559 = vmatprep.subr.mxu0 0.0
    %2560 = vmatpush1.msra.mxu0 0.0
    %2561 = vmatprep.subr.mxu0 0.0
    %2562 = vmatpush1.msra.mxu0 0.0
    %2563 = vmatprep.subr.mxu0 0.0
    %2564 = vmatpush1.msra.mxu0 0.0
    %2565 = vmatprep.subr.mxu0 0.0
    %2566 = vmatpush1.msra.mxu0 0.0
    %2567 = vmatprep.subr.mxu0 0.0
    %2568 = vmatpush1.msra.mxu0 0.0
    %2569 = vmatprep.subr.mxu0 0.0
    %2570 = vmatpush1.msra.mxu0 0.0
    %2571 = vmatprep.subr.mxu0 0.0
    %2572 = vmatpush1.msra.mxu0 0.0
    %2573 = vmatprep.subr.mxu0 0.0
    %2574 = vmatpush1.msra.mxu0 0.0
    %2575 = vmatprep.subr.mxu0 0.0
    %2576 = vmatpush1.msra.mxu0 0.0
    %2577 = vmatprep.subr.mxu0 0.0
    %2578 = vmatpush1.msra.mxu0 %v1569
    %2579 = vmatprep.subr.mxu0 0.0
    %2580 = vmatpush1.msra.mxu0 %v1568
    %2581 = vmatprep.subr.mxu0 0.0
    %2582 = vmatpush1.msra.mxu0 %v1567
    %2583 = vmatprep.subr.mxu0 0.0
    %2584 = vmatpush1.msra.mxu0 %v1566
    %2585 = vmatprep.subr.mxu0 0.0
    %2586 = vmatpush2.msra.mxu0 0.0
    %2587 = vmatprep.subr.mxu0 0.0
    %2588 = vmatpush2.msra.mxu0 0.0
    %2589 = vmatprep.subr.mxu0 0.0
    %2590 = vmatpush2.msra.mxu0 0.0
    %2591 = vmatprep.subr.mxu0 0.0
    %2592 = vmatpush2.msra.mxu0 0.0
    %2593 = vmatprep.subr.mxu0 0.0
    %2594 = vmatpush2.msra.mxu0 0.0
    %2595 = vmatprep.subr.mxu0 0.0
    %2596 = vmatpush2.msra.mxu0 0.0
    %2597 = vmatprep.subr.mxu0 0.0
    %2598 = vmatpush2.msra.mxu0 0.0
    %2599 = vmatprep.subr.mxu0 0.0
    %2600 = vmatpush2.msra.mxu0 0.0
    %2601 = vmatprep.subr.mxu0 0.0
    %2602 = vmatpush2.msra.mxu0 0.0
    %2603 = vmatprep.subr.mxu0 0.0
    %2604 = vmatpush2.msra.mxu0 0.0
    %2605 = vmatprep.subr.mxu0 0.0
    %2606 = vmatpush2.msra.mxu0 0.0
    %2607 = vmatprep.subr.mxu0 0.0
    %2608 = vmatpush2.msra.mxu0 0.0
    %2609 = vmatprep.subr.mxu0 0.0
    %2610 = vmatpush2.msra.mxu0 0.0
    %2611 = vmatprep.subr.mxu0 0.0
    %2612 = vmatpush2.msra.mxu0 0.0
    %2613 = vmatprep.subr.mxu0 0.0
    %2614 = vmatpush2.msra.mxu0 0.0
    %2615 = vmatprep.subr.mxu0 0.0
    %2616 = vmatpush2.msra.mxu0 0.0
    %2617 = vmatprep.mubr.f32.mxu0 0.0
    %2618 = vmatmul.mubr.f32.gmra.mxu0 %v2545
    %v2619 = vpop.f32.mrf.mxu0
    %v2620 = vadd.f32 0.0, %v2619
    %v2621 = vpop.f32.mrf.mxu0
    %2622 = vmatprep.mubr.f32.mxu0 0.0
    %2623 = vmatmul.mubr.f32.gmra.mxu0 %v2548
    %v2624 = vpop.f32.mrf.mxu0
    %v2625 = vadd.f32 0.0, %v2624
    %v2626 = vpop.f32.mrf.mxu0
    %2627 = vmatprep.mubr.f32.mxu0 0.0
    %2628 = vmatmul.mubr.f32.gmra.mxu0 %v2551
    %v2629 = vpop.f32.mrf.mxu0
    %v2630 = vadd.f32 0.0, %v2629
    %v2631 = vpop.f32.mrf.mxu0
    %2632 = vdwg.mxu0
    %v2636 = vrot.slane %v2620, 7
    %v2637 = vrot.slane %v2625, 7
    %v2638 = vsel %vm1587, %v2636, %v2637
    %v2639 = vrot.slane %v2630, 7
    %v2640 = vsel %vm1587, %v2637, %v2639
    %v2644 = vsel %vm1587, %v2100, %v2636
    %v2645 = vadd.f32 %v241, %v2090
    %v2646 = vadd.f32 %v242, %v2095
    %v2647 = vadd.f32 %v243, %v2644
    %v2648 = vadd.f32 %v244, %v2638
    %v2649 = vadd.f32 %v245, %v2640
    %v2650 = vld [vmem:[%s1 + $0x138] sm:$0x1]
    %v2651 = vlaneseq
    %v2652 = vshrl.u32 %v2651, 7
    %v2653 = vsub.s32 0, %v2652
    %v2654 = vrot.slane %v2650, %v2653
    %v2655 = vadd.f32 %v2645, %v2654
    %v2656 = vadd.f32 %v2646, %v2654
    %v2657 = vadd.f32 %v2647, %v2654
    %v2658 = vadd.f32 %v2648, %v2654
    %v2659 = vadd.f32 %v2649, %v2654
    %v2660 = vld [vmem:[%s1 + $0x128] sm:$0x3]
    %v2661 = vsel %vm160, %v2655, 0.0
    %2662 = vadd.xlane.f32.xlu0 %v2661
    %v2663 = vpop.xlane.xlu0 %2662
    %v2664 = vsel %vm160, %v2656, 0.0
    %2665 = vadd.xlane.f32.xlu0 %v2664
    %v2666 = vpop.xlane.xlu0 %2665
    %v2667 = vsel %vm160, %v2657, 0.0
    %2668 = vadd.xlane.f32.xlu0 %v2667
    %v2669 = vpop.xlane.xlu0 %2668
    %v2670 = vsel %vm160, %v2658, 0.0
    %2671 = vadd.xlane.f32.xlu0 %v2670
    %v2672 = vpop.xlane.xlu0 %2671
    %v2673 = vsel %vm173, %v2659, 0.0
    %2674 = vadd.xlane.f32.xlu0 %v2673
    %v2675 = vpop.xlane.xlu0 %2674
    %v2676 = vmul.f32 %v2663, %v177
    %v2677 = vmul.f32 %v2666, %v177
    %v2678 = vmul.f32 %v2669, %v177
    %v2679 = vmul.f32 %v2672, %v177
    %v2680 = vmul.f32 %v2675, %v177
    %v2681 = vsub.f32 %v2655, %v2676
    %v2682 = vsub.f32 %v2656, %v2677
    %v2683 = vsub.f32 %v2657, %v2678
    %v2684 = vsub.f32 %v2658, %v2679
    %v2685 = vsub.f32 %v2659, %v2680
    %v2686 = vmul.f32 %v2681, %v2681
    %v2687 = vmul.f32 %v2682, %v2682
    %v2688 = vmul.f32 %v2683, %v2683
    %v2689 = vmul.f32 %v2684, %v2684
    %v2690 = vmul.f32 %v2685, %v2685
    %v2691 = vsel %vm160, %v2686, 0.0
    %2692 = vadd.xlane.f32.xlu0 %v2691
    %v2693 = vpop.xlane.xlu0 %2692
    %v2694 = vsel %vm160, %v2687, 0.0
    %2695 = vadd.xlane.f32.xlu0 %v2694
    %v2696 = vpop.xlane.xlu0 %2695
    %v2697 = vsel %vm160, %v2688, 0.0
    %2698 = vadd.xlane.f32.xlu0 %v2697
    %v2699 = vpop.xlane.xlu0 %2698
    %v2700 = vsel %vm160, %v2689, 0.0
    %2701 = vadd.xlane.f32.xlu0 %v2700
    %v2702 = vpop.xlane.xlu0 %2701
    %v2703 = vsel %vm173, %v2690, 0.0
    %2704 = vadd.xlane.f32.xlu0 %v2703
    %v2705 = vpop.xlane.xlu0 %2704
    %v2706 = vmul.f32 %v2693, %v177
    %v2707 = vmul.f32 %v2696, %v177
    %v2708 = vmul.f32 %v2699, %v177
    %v2709 = vmul.f32 %v2702, %v177
    %v2710 = vmul.f32 %v2705, %v177
    %v2711 = vadd.f32 %v2706, 1e-05
    %v2712 = vadd.f32 %v2707, 1e-05
    %v2713 = vadd.f32 %v2708, 1e-05
    %v2714 = vadd.f32 %v2709, 1e-05
    %v2715 = vadd.f32 %v2710, 1e-05
    %v2716 = vrsqrt.pop %v2711
    %v2717 = vrsqrt.pop %v2712
    %v2718 = vrsqrt.pop %v2713
    %v2719 = vrsqrt.pop %v2714
    %v2720 = vrsqrt.pop %v2715
    %v2721 = vmul.f32 %v2681, %v2716
    %v2722 = vmul.f32 %v2682, %v2717
    %v2723 = vmul.f32 %v2683, %v2718
    %v2724 = vmul.f32 %v2684, %v2719
    %v2725 = vmul.f32 %v2685, %v2720
    %v2726 = vlaneseq
    %v2727 = vshrl.u32 %v2726, 7
    %v2728 = vsub.s32 0, %v2727
    %v2729 = vrot.slane %v2660, %v2728
    %v2730 = vmul.f32 %v2721, %v2729
    %v2731 = vmul.f32 %v2722, %v2729
    %v2732 = vmul.f32 %v2723, %v2729
    %v2733 = vmul.f32 %v2724, %v2729
    %v2734 = vmul.f32 %v2725, %v2729
    %v2735 = vlaneseq
    %v2736 = vshrl.u32 %v2735, 7
    %v2737 = vsub.s32 1, %v2736
    %v2738 = vrot.slane %v2660, %v2737
    %v2739 = vadd.f32 %v2730, %v2738
    %v2740 = vadd.f32 %v2731, %v2738
    %v2741 = vadd.f32 %v2732, %v2738
    %v2742 = vadd.f32 %v2733, %v2738
    %v2743 = vadd.f32 %v2734, %v2738
    %v2744 = vld [vmem:[%s1 + $0x190] sm:$0xff]
    %v2745 = vld [vmem:[%s1 + $0x198] sm:$0xff]
    %v2746 = vld [vmem:[%s1 + $0x1a0] sm:$0xff]
    %v2747 = vld [vmem:[%s1 + $0x1a8] sm:$0xff]
    %v2748 = vld [vmem:[%s1 + $0x140] sm:$0x1]
    %v2749 = vlaneseq
    %v2750 = vshrl.u32 %v2749, 7
    %v2751 = vsub.s32 0, %v2750
    %v2752 = vrot.slane %v2748, %v2751
    %v2754 = vsel %vm160, %v2739, 0
    %v2757 = vsel %vm160, %v2740, 0
    %v2760 = vsel %vm160, %v2741, 0
    %v2763 = vsel %vm160, %v2742, 0
    %v2766 = vsel %vm160, %v2743, 0
    %2768 = vmatprep.subr.mxu0 0.0
    %2769 = vmatpush1.msra.mxu0 0.0
    %2770 = vmatprep.subr.mxu0 0.0
    %2771 = vmatpush1.msra.mxu0 0.0
    %2772 = vmatprep.subr.mxu0 0.0
    %2773 = vmatpush1.msra.mxu0 0.0
    %2774 = vmatprep.subr.mxu0 0.0
    %2775 = vmatpush1.msra.mxu0 0.0
    %2776 = vmatprep.subr.mxu0 0.0
    %2777 = vmatpush1.msra.mxu0 0.0
    %2778 = vmatprep.subr.mxu0 0.0
    %2779 = vmatpush1.msra.mxu0 0.0
    %2780 = vmatprep.subr.mxu0 0.0
    %2781 = vmatpush1.msra.mxu0 0.0
    %2782 = vmatprep.subr.mxu0 0.0
    %2783 = vmatpush1.msra.mxu0 0.0
    %2784 = vmatprep.subr.mxu0 0.0
    %2785 = vmatpush1.msra.mxu0 0.0
    %2786 = vmatprep.subr.mxu0 0.0
    %2787 = vmatpush1.msra.mxu0 0.0
    %2788 = vmatprep.subr.mxu0 0.0
    %2789 = vmatpush1.msra.mxu0 0.0
    %2790 = vmatprep.subr.mxu0 0.0
    %2791 = vmatpush1.msra.mxu0 0.0
    %2792 = vmatprep.subr.mxu0 0.0
    %2793 = vmatpush1.msra.mxu0 %v2747
    %2794 = vmatprep.subr.mxu0 0.0
    %2795 = vmatpush1.msra.mxu0 %v2746
    %2796 = vmatprep.subr.mxu0 0.0
    %2797 = vmatpush1.msra.mxu0 %v2745
    %2798 = vmatprep.subr.mxu0 0.0
    %2799 = vmatpush1.msra.mxu0 %v2744
    %2800 = vmatprep.subr.mxu0 0.0
    %2801 = vmatpush2.msra.mxu0 0.0
    %2802 = vmatprep.subr.mxu0 0.0
    %2803 = vmatpush2.msra.mxu0 0.0
    %2804 = vmatprep.subr.mxu0 0.0
    %2805 = vmatpush2.msra.mxu0 0.0
    %2806 = vmatprep.subr.mxu0 0.0
    %2807 = vmatpush2.msra.mxu0 0.0
    %2808 = vmatprep.subr.mxu0 0.0
    %2809 = vmatpush2.msra.mxu0 0.0
    %2810 = vmatprep.subr.mxu0 0.0
    %2811 = vmatpush2.msra.mxu0 0.0
    %2812 = vmatprep.subr.mxu0 0.0
    %2813 = vmatpush2.msra.mxu0 0.0
    %2814 = vmatprep.subr.mxu0 0.0
    %2815 = vmatpush2.msra.mxu0 0.0
    %2816 = vmatprep.subr.mxu0 0.0
    %2817 = vmatpush2.msra.mxu0 0.0
    %2818 = vmatprep.subr.mxu0 0.0
    %2819 = vmatpush2.msra.mxu0 0.0
    %2820 = vmatprep.subr.mxu0 0.0
    %2821 = vmatpush2.msra.mxu0 0.0
    %2822 = vmatprep.subr.mxu0 0.0
    %2823 = vmatpush2.msra.mxu0 0.0
    %2824 = vmatprep.subr.mxu0 0.0
    %2825 = vmatpush2.msra.mxu0 0.0
    %2826 = vmatprep.subr.mxu0 0.0
    %2827 = vmatpush2.msra.mxu0 0.0
    %2828 = vmatprep.subr.mxu0 0.0
    %2829 = vmatpush2.msra.mxu0 0.0
    %2830 = vmatprep.subr.mxu0 0.0
    %2831 = vmatpush2.msra.mxu0 0.0
    %2832 = vmatprep.mubr.f32.mxu0 0.0
    %2833 = vmatmul.mubr.f32.gmra.mxu0 %v2754
    %v2834 = vpop.f32.mrf.mxu0
    %v2835 = vadd.f32 %v2752, %v2834
    %v2836 = vpop.f32.mrf.mxu0
    %2837 = vmatprep.mubr.f32.mxu0 0.0
    %2838 = vmatmul.mubr.f32.gmra.mxu0 %v2757
    %v2839 = vpop.f32.mrf.mxu0
    %v2840 = vadd.f32 %v2752, %v2839
    %v2841 = vpop.f32.mrf.mxu0
    %2842 = vmatprep.mubr.f32.mxu0 0.0
    %2843 = vmatmul.mubr.f32.gmra.mxu0 %v2760
    %v2844 = vpop.f32.mrf.mxu0
    %v2845 = vadd.f32 %v2752, %v2844
    %v2846 = vpop.f32.mrf.mxu0
    %2847 = vmatprep.mubr.f32.mxu0 0.0
    %2848 = vmatmul.mubr.f32.gmra.mxu0 %v2763
    %v2849 = vpop.f32.mrf.mxu0
    %v2850 = vadd.f32 %v2752, %v2849
    %v2851 = vpop.f32.mrf.mxu0
    %2852 = vmatprep.mubr.f32.mxu0 0.0
    %2853 = vmatmul.mubr.f32.gmra.mxu0 %v2766
    %v2854 = vpop.f32.mrf.mxu0
    %v2855 = vadd.f32 %v2752, %v2854
    %v2856 = vpop.f32.mrf.mxu0
    %2857 = vdwg.mxu0
    %v2858 = vmul.f32 %v2835, 1.702
    %v2859 = vmul.f32 %v2840, 1.702
    %v2860 = vmul.f32 %v2845, 1.702
    %v2861 = vmul.f32 %v2850, 1.702
    %v2862 = vmul.f32 %v2855, 1.702
    %v2863 = vxor.u32 %v2858, 2147483648
    %v2864 = vxor.u32 %v2859, 2147483648
    %v2865 = vxor.u32 %v2860, 2147483648
    %v2866 = vxor.u32 %v2861, 2147483648
    %v2867 = vxor.u32 %v2862, 2147483648
    %v2868 = vmul.f32 %v2863, 1.442695
    %v2869 = vpow.pop %v2868
    %v2870 = vmul.f32 %v2864, 1.442695
    %v2871 = vpow.pop %v2870
    %v2872 = vmul.f32 %v2865, 1.442695
    %v2873 = vpow.pop %v2872
    %v2874 = vmul.f32 %v2866, 1.442695
    %v2875 = vpow.pop %v2874
    %v2876 = vmul.f32 %v2867, 1.442695
    %v2877 = vpow.pop %v2876
    %v2878 = vadd.f32 %v2869, 1.0
    %v2879 = vadd.f32 %v2871, 1.0
    %v2880 = vadd.f32 %v2873, 1.0
    %v2881 = vadd.f32 %v2875, 1.0
    %v2882 = vadd.f32 %v2877, 1.0
    %v2883 = vrcp.pop %v2878
    %v2884 = vmul.f32 1.0, %v2883
    %v2885 = vrcp.pop %v2879
    %v2886 = vmul.f32 1.0, %v2885
    %v2887 = vrcp.pop %v2880
    %v2888 = vmul.f32 1.0, %v2887
    %v2889 = vrcp.pop %v2881
    %v2890 = vmul.f32 1.0, %v2889
    %v2891 = vrcp.pop %v2882
    %v2892 = vmul.f32 1.0, %v2891
    %v2893 = vmul.f32 %v2835, %v2884
    %v2894 = vmul.f32 %v2840, %v2886
    %v2895 = vmul.f32 %v2845, %v2888
    %v2896 = vmul.f32 %v2850, %v2890
    %v2897 = vmul.f32 %v2855, %v2892
    %v2898 = vld [vmem:[%s1 + $0x1b0] sm:$0xff]
    %v2899 = vld [vmem:[%s1 + $0x1b8] sm:$0xff]
    %v2900 = vld [vmem:[%s1 + $0x1c0] sm:$0xff]
    %v2901 = vld [vmem:[%s1 + $0x1c8] sm:$0xff]
    %v2902 = vld [vmem:[%s1 + $0x148] sm:$0x1]
    %v2903 = vlaneseq
    %v2904 = vshrl.u32 %v2903, 7
    %v2905 = vsub.s32 0, %v2904
    %v2906 = vrot.slane %v2902, %v2905
    %2907 = vmatprep.subr.mxu0 0.0
    %2908 = vmatpush1.xpose.msra.mxu0 0.0
    %2909 = vmatprep.subr.mxu0 0.0
    %2910 = vmatpush1.xpose.msra.mxu0 0.0
    %2911 = vmatprep.subr.mxu0 0.0
    %2912 = vmatpush1.xpose.msra.mxu0 0.0
    %2913 = vmatprep.subr.mxu0 0.0
    %2914 = vmatpush1.xpose.msra.mxu0 0.0
    %2915 = vmatprep.subr.mxu0 0.0
    %2916 = vmatpush1.xpose.msra.mxu0 0.0
    %2917 = vmatprep.subr.mxu0 0.0
    %2918 = vmatpush1.xpose.msra.mxu0 0.0
    %2919 = vmatprep.subr.mxu0 0.0
    %2920 = vmatpush1.xpose.msra.mxu0 0.0
    %2921 = vmatprep.subr.mxu0 0.0
    %2922 = vmatpush1.xpose.msra.mxu0 0.0
    %2923 = vmatprep.subr.mxu0 0.0
    %2924 = vmatpush1.xpose.msra.mxu0 0.0
    %2925 = vmatprep.subr.mxu0 0.0
    %2926 = vmatpush1.xpose.msra.mxu0 0.0
    %2927 = vmatprep.subr.mxu0 0.0
    %2928 = vmatpush1.xpose.msra.mxu0 0.0
    %2929 = vmatprep.subr.mxu0 0.0
    %2930 = vmatpush1.xpose.msra.mxu0 0.0
    %2931 = vmatprep.subr.mxu0 0.0
    %2932 = vmatpush1.xpose.msra.mxu0 %v2901
    %2933 = vmatprep.subr.mxu0 0.0
    %2934 = vmatpush1.xpose.msra.mxu0 %v2900
    %2935 = vmatprep.subr.mxu0 0.0
    %2936 = vmatpush1.xpose.msra.mxu0 %v2899
    %2937 = vmatprep.subr.mxu0 0.0
    %2938 = vmatpush1.xpose.msra.mxu0 %v2898
    %2939 = vmatprep.subr.mxu0 0.0
    %2940 = vmatpush2.xpose.msra.mxu0 0.0
    %2941 = vmatprep.subr.mxu0 0.0
    %2942 = vmatpush2.xpose.msra.mxu0 0.0
    %2943 = vmatprep.subr.mxu0 0.0
    %2944 = vmatpush2.xpose.msra.mxu0 0.0
    %2945 = vmatprep.subr.mxu0 0.0
    %2946 = vmatpush2.xpose.msra.mxu0 0.0
    %2947 = vmatprep.subr.mxu0 0.0
    %2948 = vmatpush2.xpose.msra.mxu0 0.0
    %2949 = vmatprep.subr.mxu0 0.0
    %2950 = vmatpush2.xpose.msra.mxu0 0.0
    %2951 = vmatprep.subr.mxu0 0.0
    %2952 = vmatpush2.xpose.msra.mxu0 0.0
    %2953 = vmatprep.subr.mxu0 0.0
    %2954 = vmatpush2.xpose.msra.mxu0 0.0
    %2955 = vmatprep.subr.mxu0 0.0
    %2956 = vmatpush2.xpose.msra.mxu0 0.0
    %2957 = vmatprep.subr.mxu0 0.0
    %2958 = vmatpush2.xpose.msra.mxu0 0.0
    %2959 = vmatprep.subr.mxu0 0.0
    %2960 = vmatpush2.xpose.msra.mxu0 0.0
    %2961 = vmatprep.subr.mxu0 0.0
    %2962 = vmatpush2.xpose.msra.mxu0 0.0
    %2963 = vmatprep.subr.mxu0 0.0
    %2964 = vmatpush2.xpose.msra.mxu0 0.0
    %2965 = vmatprep.subr.mxu0 0.0
    %2966 = vmatpush2.xpose.msra.mxu0 0.0
    %2967 = vmatprep.subr.mxu0 0.0
    %2968 = vmatpush2.xpose.msra.mxu0 0.0
    %2969 = vmatprep.subr.mxu0 0.0
    %2970 = vmatpush2.xpose.msra.mxu0 0.0
    %2971 = vmatprep.mubr.f32.mxu0 0.0
    %2972 = vmatmul.mubr.f32.gmra.mxu0 %v2893
    %v2973 = vpop.f32.mrf.mxu0
    %v2974 = vadd.f32 %v2906, %v2973
    %v2975 = vpop.f32.mrf.mxu0
    %2976 = vmatprep.mubr.f32.mxu0 0.0
    %2977 = vmatmul.mubr.f32.gmra.mxu0 %v2894
    %v2978 = vpop.f32.mrf.mxu0
    %v2979 = vadd.f32 %v2906, %v2978
    %v2980 = vpop.f32.mrf.mxu0
    %2981 = vmatprep.mubr.f32.mxu0 0.0
    %2982 = vmatmul.mubr.f32.gmra.mxu0 %v2895
    %v2983 = vpop.f32.mrf.mxu0
    %v2984 = vadd.f32 %v2906, %v2983
    %v2985 = vpop.f32.mrf.mxu0
    %2986 = vmatprep.mubr.f32.mxu0 0.0
    %2987 = vmatmul.mubr.f32.gmra.mxu0 %v2896
    %v2988 = vpop.f32.mrf.mxu0
    %v2989 = vadd.f32 %v2906, %v2988
    %v2990 = vpop.f32.mrf.mxu0
    %2991 = vmatprep.mubr.f32.mxu0 0.0
    %2992 = vmatmul.mubr.f32.gmra.mxu0 %v2897
    %v2993 = vpop.f32.mrf.mxu0
    %v2994 = vadd.f32 %v2906, %v2993
    %v2995 = vpop.f32.mrf.mxu0
    %2996 = vdwg.mxu0
    %v2997 = vadd.f32 %v2655, %v2974
    %v2998 = vadd.f32 %v2656, %v2979
    %v2999 = vadd.f32 %v2657, %v2984
    %v3000 = vadd.f32 %v2658, %v2989
    %v3001 = vadd.f32 %v2659, %v2994
    %v3002 = vld [vmem:[%s1 + $0x1d0] sm:$0x3]
    %v3003 = vsel %vm160, %v2997, 0.0
    %3004 = vadd.xlane.f32.xlu0 %v3003
    %v3005 = vpop.xlane.xlu0 %3004
    %v3006 = vsel %vm160, %v2998, 0.0
    %3007 = vadd.xlane.f32.xlu0 %v3006
    %v3008 = vpop.xlane.xlu0 %3007
    %v3009 = vsel %vm160, %v2999, 0.0
    %3010 = vadd.xlane.f32.xlu0 %v3009
    %v3011 = vpop.xlane.xlu0 %3010
    %v3012 = vsel %vm160, %v3000, 0.0
    %3013 = vadd.xlane.f32.xlu0 %v3012
    %v3014 = vpop.xlane.xlu0 %3013
    %v3015 = vsel %vm173, %v3001, 0.0
    %3016 = vadd.xlane.f32.xlu0 %v3015
    %v3017 = vpop.xlane.xlu0 %3016
    %v3018 = vmul.f32 %v3005, %v177
    %v3019 = vmul.f32 %v3008, %v177
    %v3020 = vmul.f32 %v3011, %v177
    %v3021 = vmul.f32 %v3014, %v177
    %v3022 = vmul.f32 %v3017, %v177
    %v3023 = vsub.f32 %v2997, %v3018
    %v3024 = vsub.f32 %v2998, %v3019
    %v3025 = vsub.f32 %v2999, %v3020
    %v3026 = vsub.f32 %v3000, %v3021
    %v3027 = vsub.f32 %v3001, %v3022
    %v3028 = vmul.f32 %v3023, %v3023
    %v3029 = vmul.f32 %v3024, %v3024
    %v3030 = vmul.f32 %v3025, %v3025
    %v3031 = vmul.f32 %v3026, %v3026
    %v3032 = vmul.f32 %v3027, %v3027
    %v3033 = vsel %vm160, %v3028, 0.0
    %3034 = vadd.xlane.f32.xlu0 %v3033
    %v3035 = vpop.xlane.xlu0 %3034
    %v3036 = vsel %vm160, %v3029, 0.0
    %3037 = vadd.xlane.f32.xlu0 %v3036
    %v3038 = vpop.xlane.xlu0 %3037
    %v3039 = vsel %vm160, %v3030, 0.0
    %3040 = vadd.xlane.f32.xlu0 %v3039
    %v3041 = vpop.xlane.xlu0 %3040
    %v3042 = vsel %vm160, %v3031, 0.0
    %3043 = vadd.xlane.f32.xlu0 %v3042
    %v3044 = vpop.xlane.xlu0 %3043
    %v3045 = vsel %vm173, %v3032, 0.0
    %3046 = vadd.xlane.f32.xlu0 %v3045
    %v3047 = vpop.xlane.xlu0 %3046
    %v3048 = vmul.f32 %v3035, %v177
    %v3049 = vmul.f32 %v3038, %v177
    %v3050 = vmul.f32 %v3041, %v177
    %v3051 = vmul.f32 %v3044, %v177
    %v3052 = vmul.f32 %v3047, %v177
    %v3053 = vadd.f32 %v3048, 1e-05
    %v3054 = vadd.f32 %v3049, 1e-05
    %v3055 = vadd.f32 %v3050, 1e-05
    %v3056 = vadd.f32 %v3051, 1e-05
    %v3057 = vadd.f32 %v3052, 1e-05
    %v3058 = vrsqrt.pop %v3053
    %v3059 = vrsqrt.pop %v3054
    %v3060 = vrsqrt.pop %v3055
    %v3061 = vrsqrt.pop %v3056
    %v3062 = vrsqrt.pop %v3057
    %v3063 = vmul.f32 %v3023, %v3058
    %v3064 = vmul.f32 %v3024, %v3059
    %v3065 = vmul.f32 %v3025, %v3060
    %v3066 = vmul.f32 %v3026, %v3061
    %v3067 = vmul.f32 %v3027, %v3062
    %v3068 = vlaneseq
    %v3069 = vshrl.u32 %v3068, 7
    %v3070 = vsub.s32 0, %v3069
    %v3071 = vrot.slane %v3002, %v3070
    %v3072 = vmul.f32 %v3063, %v3071
    %v3073 = vmul.f32 %v3064, %v3071
    %v3074 = vmul.f32 %v3065, %v3071
    %v3075 = vmul.f32 %v3066, %v3071
    %v3076 = vmul.f32 %v3067, %v3071
    %v3077 = vlaneseq
    %v3078 = vshrl.u32 %v3077, 7
    %v3079 = vsub.s32 1, %v3078
    %v3080 = vrot.slane %v3002, %v3079
    %v3081 = vadd.f32 %v3072, %v3080
    %v3082 = vadd.f32 %v3073, %v3080
    %v3083 = vadd.f32 %v3074, %v3080
    %v3084 = vadd.f32 %v3075, %v3080
    %v3085 = vadd.f32 %v3076, %v3080
    %v3086 = vld [vmem:[%s1 + $0x200] sm:$0xff]
    %v3087 = vld [vmem:[%s1 + $0x208] sm:$0xff]
    %v3088 = vld [vmem:[%s1 + $0x210] sm:$0xff]
    %v3089 = vld [vmem:[%s1 + $0x218] sm:$0xff]
    %v3090 = vld [vmem:[%s1 + $0x1e0] sm:$0x1]
    %v3091 = vlaneseq
    %v3092 = vshrl.u32 %v3091, 7
    %v3093 = vsub.s32 0, %v3092
    %v3094 = vrot.slane %v3090, %v3093
    %v3096 = vsel %vm160, %v3081, 0
    %v3099 = vsel %vm160, %v3082, 0
    %v3102 = vsel %vm160, %v3083, 0
    %v3105 = vsel %vm160, %v3084, 0
    %v3108 = vsel %vm160, %v3085, 0
    %3110 = vmatprep.subr.mxu0 0.0
    %3111 = vmatpush1.msra.mxu0 0.0
    %3112 = vmatprep.subr.mxu0 0.0
    %3113 = vmatpush1.msra.mxu0 0.0
    %3114 = vmatprep.subr.mxu0 0.0
    %3115 = vmatpush1.msra.mxu0 0.0
    %3116 = vmatprep.subr.mxu0 0.0
    %3117 = vmatpush1.msra.mxu0 0.0
    %3118 = vmatprep.subr.mxu0 0.0
    %3119 = vmatpush1.msra.mxu0 0.0
    %3120 = vmatprep.subr.mxu0 0.0
    %3121 = vmatpush1.msra.mxu0 0.0
    %3122 = vmatprep.subr.mxu0 0.0
    %3123 = vmatpush1.msra.mxu0 0.0
    %3124 = vmatprep.subr.mxu0 0.0
    %3125 = vmatpush1.msra.mxu0 0.0
    %3126 = vmatprep.subr.mxu0 0.0
    %3127 = vmatpush1.msra.mxu0 0.0
    %3128 = vmatprep.subr.mxu0 0.0
    %3129 = vmatpush1.msra.mxu0 0.0
    %3130 = vmatprep.subr.mxu0 0.0
    %3131 = vmatpush1.msra.mxu0 0.0
    %3132 = vmatprep.subr.mxu0 0.0
    %3133 = vmatpush1.msra.mxu0 0.0
    %3134 = vmatprep.subr.mxu0 0.0
    %3135 = vmatpush1.msra.mxu0 %v3089
    %3136 = vmatprep.subr.mxu0 0.0
    %3137 = vmatpush1.msra.mxu0 %v3088
    %3138 = vmatprep.subr.mxu0 0.0
    %3139 = vmatpush1.msra.mxu0 %v3087
    %3140 = vmatprep.subr.mxu0 0.0
    %3141 = vmatpush1.msra.mxu0 %v3086
    %3142 = vmatprep.subr.mxu0 0.0
    %3143 = vmatpush2.msra.mxu0 0.0
    %3144 = vmatprep.subr.mxu0 0.0
    %3145 = vmatpush2.msra.mxu0 0.0
    %3146 = vmatprep.subr.mxu0 0.0
    %3147 = vmatpush2.msra.mxu0 0.0
    %3148 = vmatprep.subr.mxu0 0.0
    %3149 = vmatpush2.msra.mxu0 0.0
    %3150 = vmatprep.subr.mxu0 0.0
    %3151 = vmatpush2.msra.mxu0 0.0
    %3152 = vmatprep.subr.mxu0 0.0
    %3153 = vmatpush2.msra.mxu0 0.0
    %3154 = vmatprep.subr.mxu0 0.0
    %3155 = vmatpush2.msra.mxu0 0.0
    %3156 = vmatprep.subr.mxu0 0.0
    %3157 = vmatpush2.msra.mxu0 0.0
    %3158 = vmatprep.subr.mxu0 0.0
    %3159 = vmatpush2.msra.mxu0 0.0
    %3160 = vmatprep.subr.mxu0 0.0
    %3161 = vmatpush2.msra.mxu0 0.0
    %3162 = vmatprep.subr.mxu0 0.0
    %3163 = vmatpush2.msra.mxu0 0.0
    %3164 = vmatprep.subr.mxu0 0.0
    %3165 = vmatpush2.msra.mxu0 0.0
    %3166 = vmatprep.subr.mxu0 0.0
    %3167 = vmatpush2.msra.mxu0 0.0
    %3168 = vmatprep.subr.mxu0 0.0
    %3169 = vmatpush2.msra.mxu0 0.0
    %3170 = vmatprep.subr.mxu0 0.0
    %3171 = vmatpush2.msra.mxu0 0.0
    %3172 = vmatprep.subr.mxu0 0.0
    %3173 = vmatpush2.msra.mxu0 0.0
    %3174 = vmatprep.mubr.f32.mxu0 0.0
    %3175 = vmatmul.mubr.f32.gmra.mxu0 %v3096
    %v3176 = vpop.f32.mrf.mxu0
    %v3177 = vadd.f32 %v3094, %v3176
    %v3178 = vpop.f32.mrf.mxu0
    %3179 = vmatprep.mubr.f32.mxu0 0.0
    %3180 = vmatmul.mubr.f32.gmra.mxu0 %v3099
    %v3181 = vpop.f32.mrf.mxu0
    %v3182 = vadd.f32 %v3094, %v3181
    %v3183 = vpop.f32.mrf.mxu0
    %3184 = vmatprep.mubr.f32.mxu0 0.0
    %3185 = vmatmul.mubr.f32.gmra.mxu0 %v3102
    %v3186 = vpop.f32.mrf.mxu0
    %v3187 = vadd.f32 %v3094, %v3186
    %v3188 = vpop.f32.mrf.mxu0
    %3189 = vmatprep.mubr.f32.mxu0 0.0
    %3190 = vmatmul.mubr.f32.gmra.mxu0 %v3105
    %v3191 = vpop.f32.mrf.mxu0
    %v3192 = vadd.f32 %v3094, %v3191
    %v3193 = vpop.f32.mrf.mxu0
    %3194 = vmatprep.mubr.f32.mxu0 0.0
    %3195 = vmatmul.mubr.f32.gmra.mxu0 %v3108
    %v3196 = vpop.f32.mrf.mxu0
    %v3197 = vadd.f32 %v3094, %v3196
    %v3198 = vpop.f32.mrf.mxu0
    %3199 = vdwg.mxu0
    %3203 = vrot.lane.b32.xlu0 %v3177, 96
    %v3204 = vpop.permute.xlu0 %3203
    %3205 = vrot.lane.b32.xlu0 %v3182, 96
    %v3206 = vpop.permute.xlu0 %3205
    %3207 = vrot.lane.b32.xlu0 %v3187, 96
    %v3208 = vpop.permute.xlu0 %3207
    %v3209 = vsel %vm453, %v3177, 0
    %v3211 = vsel %vm453, %v3182, 0
    %v3213 = vsel %vm453, %v3187, 0
    %v3215 = vsel %vm453, %v3204, 0
    %v3217 = vsel %vm453, %v3206, 0
    %v3219 = vsel %vm453, %v3208, 0
    %3221 = vmatprep.subr.mxu0 0.0
    %3222 = vmatpush1.xpose.msra.mxu0 0.0
    %3223 = vmatprep.subr.mxu0 0.0
    %3224 = vmatpush1.xpose.msra.mxu0 0.0
    %3225 = vmatprep.subr.mxu0 0.0
    %3226 = vmatpush1.xpose.msra.mxu0 0.0
    %3227 = vmatprep.subr.mxu0 0.0
    %3228 = vmatpush1.xpose.msra.mxu0 0.0
    %3229 = vmatprep.subr.mxu0 0.0
    %3230 = vmatpush1.xpose.msra.mxu0 0.0
    %3231 = vmatprep.subr.mxu0 0.0
    %3232 = vmatpush1.xpose.msra.mxu0 0.0
    %3233 = vmatprep.subr.mxu0 0.0
    %3234 = vmatpush1.xpose.msra.mxu0 0.0
    %3235 = vmatprep.subr.mxu0 0.0
    %3236 = vmatpush1.xpose.msra.mxu0 0.0
    %3237 = vmatprep.subr.mxu0 0.0
    %3238 = vmatpush1.xpose.msra.mxu0 0.0
    %3239 = vmatprep.subr.mxu0 0.0
    %3240 = vmatpush1.xpose.msra.mxu0 0.0
    %3241 = vmatprep.subr.mxu0 0.0
    %3242 = vmatpush1.xpose.msra.mxu0 0.0
    %3243 = vmatprep.subr.mxu0 0.0
    %3244 = vmatpush1.xpose.msra.mxu0 0.0
    %3245 = vmatprep.subr.mxu0 0.0
    %3246 = vmatpush1.xpose.msra.mxu0 0.0
    %3247 = vmatprep.subr.mxu0 0.0
    %3248 = vmatpush1.xpose.msra.mxu0 %v3219
    %3249 = vmatprep.subr.mxu0 0.0
    %3250 = vmatpush1.xpose.msra.mxu0 %v3217
    %3251 = vmatprep.subr.mxu0 0.0
    %3252 = vmatpush1.xpose.msra.mxu0 %v3215
    %3253 = vmatprep.subr.mxu0 0.0
    %3254 = vmatpush2.xpose.msra.mxu0 0.0
    %3255 = vmatprep.subr.mxu0 0.0
    %3256 = vmatpush2.xpose.msra.mxu0 0.0
    %3257 = vmatprep.subr.mxu0 0.0
    %3258 = vmatpush2.xpose.msra.mxu0 0.0
    %3259 = vmatprep.subr.mxu0 0.0
    %3260 = vmatpush2.xpose.msra.mxu0 0.0
    %3261 = vmatprep.subr.mxu0 0.0
    %3262 = vmatpush2.xpose.msra.mxu0 0.0
    %3263 = vmatprep.subr.mxu0 0.0
    %3264 = vmatpush2.xpose.msra.mxu0 0.0
    %3265 = vmatprep.subr.mxu0 0.0
    %3266 = vmatpush2.xpose.msra.mxu0 0.0
    %3267 = vmatprep.subr.mxu0 0.0
    %3268 = vmatpush2.xpose.msra.mxu0 0.0
    %3269 = vmatprep.subr.mxu0 0.0
    %3270 = vmatpush2.xpose.msra.mxu0 0.0
    %3271 = vmatprep.subr.mxu0 0.0
    %3272 = vmatpush2.xpose.msra.mxu0 0.0
    %3273 = vmatprep.subr.mxu0 0.0
    %3274 = vmatpush2.xpose.msra.mxu0 0.0
    %3275 = vmatprep.subr.mxu0 0.0
    %3276 = vmatpush2.xpose.msra.mxu0 0.0
    %3277 = vmatprep.subr.mxu0 0.0
    %3278 = vmatpush2.xpose.msra.mxu0 0.0
    %3279 = vmatprep.subr.mxu0 0.0
    %3280 = vmatpush2.xpose.msra.mxu0 0.0
    %3281 = vmatprep.subr.mxu0 0.0
    %3282 = vmatpush2.xpose.msra.mxu0 0.0
    %3283 = vmatprep.subr.mxu0 0.0
    %3284 = vmatpush2.xpose.msra.mxu0 0.0
    %3285 = vmatprep.mubr.f32.mxu0 0.0
    %3286 = vmatmul.mubr.f32.gmra.mxu0 %v3209
    %v3287 = vpop.f32.mrf.mxu0
    %v3288 = vadd.f32 0.0, %v3287
    %v3289 = vpop.f32.mrf.mxu0
    %3290 = vmatprep.mubr.f32.mxu0 0.0
    %3291 = vmatmul.mubr.f32.gmra.mxu0 %v3211
    %v3292 = vpop.f32.mrf.mxu0
    %v3293 = vadd.f32 0.0, %v3292
    %v3294 = vpop.f32.mrf.mxu0
    %3295 = vmatprep.mubr.f32.mxu0 0.0
    %3296 = vmatmul.mubr.f32.gmra.mxu0 %v3213
    %v3297 = vpop.f32.mrf.mxu0
    %v3298 = vadd.f32 0.0, %v3297
    %v3299 = vpop.f32.mrf.mxu0
    %3300 = vdwg.mxu0
    %3301 = vrot.lane.b32.xlu0 %v3177, 120
    %v3302 = vpop.permute.xlu0 %3301
    %3303 = vrot.lane.b32.xlu0 %v3182, 120
    %v3304 = vpop.permute.xlu0 %3303
    %3305 = vrot.lane.b32.xlu0 %v3187, 120
    %v3306 = vpop.permute.xlu0 %3305
    %3307 = vrot.lane.b32.xlu0 %v3177, 88
    %v3308 = vpop.permute.xlu0 %3307
    %3309 = vrot.lane.b32.xlu0 %v3182, 88
    %v3310 = vpop.permute.xlu0 %3309
    %3311 = vrot.lane.b32.xlu0 %v3187, 88
    %v3312 = vpop.permute.xlu0 %3311
    %v3313 = vsel %vm453, %v3302, 0
    %v3315 = vsel %vm453, %v3304, 0
    %v3317 = vsel %vm453, %v3306, 0
    %v3319 = vsel %vm453, %v3308, 0
    %v3321 = vsel %vm453, %v3310, 0
    %v3323 = vsel %vm453, %v3312, 0
    %3325 = vmatprep.subr.mxu0 0.0
    %3326 = vmatpush1.xpose.msra.mxu0 0.0
    %3327 = vmatprep.subr.mxu0 0.0
    %3328 = vmatpush1.xpose.msra.mxu0 0.0
    %3329 = vmatprep.subr.mxu0 0.0
    %3330 = vmatpush1.xpose.msra.mxu0 0.0
    %3331 = vmatprep.subr.mxu0 0.0
    %3332 = vmatpush1.xpose.msra.mxu0 0.0
    %3333 = vmatprep.subr.mxu0 0.0
    %3334 = vmatpush1.xpose.msra.mxu0 0.0
    %3335 = vmatprep.subr.mxu0 0.0
    %3336 = vmatpush1.xpose.msra.mxu0 0.0
    %3337 = vmatprep.subr.mxu0 0.0
    %3338 = vmatpush1.xpose.msra.mxu0 0.0
    %3339 = vmatprep.subr.mxu0 0.0
    %3340 = vmatpush1.xpose.msra.mxu0 0.0
    %3341 = vmatprep.subr.mxu0 0.0
    %3342 = vmatpush1.xpose.msra.mxu0 0.0
    %3343 = vmatprep.subr.mxu0 0.0
    %3344 = vmatpush1.xpose.msra.mxu0 0.0
    %3345 = vmatprep.subr.mxu0 0.0
    %3346 = vmatpush1.xpose.msra.mxu0 0.0
    %3347 = vmatprep.subr.mxu0 0.0
    %3348 = vmatpush1.xpose.msra.mxu0 0.0
    %3349 = vmatprep.subr.mxu0 0.0
    %3350 = vmatpush1.xpose.msra.mxu0 0.0
    %3351 = vmatprep.subr.mxu0 0.0
    %3352 = vmatpush1.xpose.msra.mxu0 %v3323
    %3353 = vmatprep.subr.mxu0 0.0
    %3354 = vmatpush1.xpose.msra.mxu0 %v3321
    %3355 = vmatprep.subr.mxu0 0.0
    %3356 = vmatpush1.xpose.msra.mxu0 %v3319
    %3357 = vmatprep.subr.mxu0 0.0
    %3358 = vmatpush2.xpose.msra.mxu0 0.0
    %3359 = vmatprep.subr.mxu0 0.0
    %3360 = vmatpush2.xpose.msra.mxu0 0.0
    %3361 = vmatprep.subr.mxu0 0.0
    %3362 = vmatpush2.xpose.msra.mxu0 0.0
    %3363 = vmatprep.subr.mxu0 0.0
    %3364 = vmatpush2.xpose.msra.mxu0 0.0
    %3365 = vmatprep.subr.mxu0 0.0
    %3366 = vmatpush2.xpose.msra.mxu0 0.0
    %3367 = vmatprep.subr.mxu0 0.0
    %3368 = vmatpush2.xpose.msra.mxu0 0.0
    %3369 = vmatprep.subr.mxu0 0.0
    %3370 = vmatpush2.xpose.msra.mxu0 0.0
    %3371 = vmatprep.subr.mxu0 0.0
    %3372 = vmatpush2.xpose.msra.mxu0 0.0
    %3373 = vmatprep.subr.mxu0 0.0
    %3374 = vmatpush2.xpose.msra.mxu0 0.0
    %3375 = vmatprep.subr.mxu0 0.0
    %3376 = vmatpush2.xpose.msra.mxu0 0.0
    %3377 = vmatprep.subr.mxu0 0.0
    %3378 = vmatpush2.xpose.msra.mxu0 0.0
    %3379 = vmatprep.subr.mxu0 0.0
    %3380 = vmatpush2.xpose.msra.mxu0 0.0
    %3381 = vmatprep.subr.mxu0 0.0
    %3382 = vmatpush2.xpose.msra.mxu0 0.0
    %3383 = vmatprep.subr.mxu0 0.0
    %3384 = vmatpush2.xpose.msra.mxu0 0.0
    %3385 = vmatprep.subr.mxu0 0.0
    %3386 = vmatpush2.xpose.msra.mxu0 0.0
    %3387 = vmatprep.subr.mxu0 0.0
    %3388 = vmatpush2.xpose.msra.mxu0 0.0
    %3389 = vmatprep.mubr.f32.mxu0 0.0
    %3390 = vmatmul.mubr.f32.gmra.mxu0 %v3313
    %v3391 = vpop.f32.mrf.mxu0
    %v3392 = vadd.f32 0.0, %v3391
    %v3393 = vpop.f32.mrf.mxu0
    %3394 = vmatprep.mubr.f32.mxu0 0.0
    %3395 = vmatmul.mubr.f32.gmra.mxu0 %v3315
    %v3396 = vpop.f32.mrf.mxu0
    %v3397 = vadd.f32 0.0, %v3396
    %v3398 = vpop.f32.mrf.mxu0
    %3399 = vmatprep.mubr.f32.mxu0 0.0
    %3400 = vmatmul.mubr.f32.gmra.mxu0 %v3317
    %v3401 = vpop.f32.mrf.mxu0
    %v3402 = vadd.f32 0.0, %v3401
    %v3403 = vpop.f32.mrf.mxu0
    %3404 = vdwg.mxu0
    %3405 = vrot.lane.b32.xlu0 %v3177, 112
    %v3406 = vpop.permute.xlu0 %3405
    %3407 = vrot.lane.b32.xlu0 %v3182, 112
    %v3408 = vpop.permute.xlu0 %3407
    %3409 = vrot.lane.b32.xlu0 %v3187, 112
    %v3410 = vpop.permute.xlu0 %3409
    %3411 = vrot.lane.b32.xlu0 %v3177, 80
    %v3412 = vpop.permute.xlu0 %3411
    %3413 = vrot.lane.b32.xlu0 %v3182, 80
    %v3414 = vpop.permute.xlu0 %3413
    %3415 = vrot.lane.b32.xlu0 %v3187, 80
    %v3416 = vpop.permute.xlu0 %3415
    %v3417 = vsel %vm453, %v3406, 0
    %v3419 = vsel %vm453, %v3408, 0
    %v3421 = vsel %vm453, %v3410, 0
    %v3423 = vsel %vm453, %v3412, 0
    %v3425 = vsel %vm453, %v3414, 0
    %v3427 = vsel %vm453, %v3416, 0
    %3429 = vmatprep.subr.mxu0 0.0
    %3430 = vmatpush1.xpose.msra.mxu0 0.0
    %3431 = vmatprep.subr.mxu0 0.0
    %3432 = vmatpush1.xpose.msra.mxu0 0.0
    %3433 = vmatprep.subr.mxu0 0.0
    %3434 = vmatpush1.xpose.msra.mxu0 0.0
    %3435 = vmatprep.subr.mxu0 0.0
    %3436 = vmatpush1.xpose.msra.mxu0 0.0
    %3437 = vmatprep.subr.mxu0 0.0
    %3438 = vmatpush1.xpose.msra.mxu0 0.0
    %3439 = vmatprep.subr.mxu0 0.0
    %3440 = vmatpush1.xpose.msra.mxu0 0.0
    %3441 = vmatprep.subr.mxu0 0.0
    %3442 = vmatpush1.xpose.msra.mxu0 0.0
    %3443 = vmatprep.subr.mxu0 0.0
    %3444 = vmatpush1.xpose.msra.mxu0 0.0
    %3445 = vmatprep.subr.mxu0 0.0
    %3446 = vmatpush1.xpose.msra.mxu0 0.0
    %3447 = vmatprep.subr.mxu0 0.0
    %3448 = vmatpush1.xpose.msra.mxu0 0.0
    %3449 = vmatprep.subr.mxu0 0.0
    %3450 = vmatpush1.xpose.msra.mxu0 0.0
    %3451 = vmatprep.subr.mxu0 0.0
    %3452 = vmatpush1.xpose.msra.mxu0 0.0
    %3453 = vmatprep.subr.mxu0 0.0
    %3454 = vmatpush1.xpose.msra.mxu0 0.0
    %3455 = vmatprep.subr.mxu0 0.0
    %3456 = vmatpush1.xpose.msra.mxu0 %v3427
    %3457 = vmatprep.subr.mxu0 0.0
    %3458 = vmatpush1.xpose.msra.mxu0 %v3425
    %3459 = vmatprep.subr.mxu0 0.0
    %3460 = vmatpush1.xpose.msra.mxu0 %v3423
    %3461 = vmatprep.subr.mxu0 0.0
    %3462 = vmatpush2.xpose.msra.mxu0 0.0
    %3463 = vmatprep.subr.mxu0 0.0
    %3464 = vmatpush2.xpose.msra.mxu0 0.0
    %3465 = vmatprep.subr.mxu0 0.0
    %3466 = vmatpush2.xpose.msra.mxu0 0.0
    %3467 = vmatprep.subr.mxu0 0.0
    %3468 = vmatpush2.xpose.msra.mxu0 0.0
    %3469 = vmatprep.subr.mxu0 0.0
    %3470 = vmatpush2.xpose.msra.mxu0 0.0
    %3471 = vmatprep.subr.mxu0 0.0
    %3472 = vmatpush2.xpose.msra.mxu0 0.0
    %3473 = vmatprep.subr.mxu0 0.0
    %3474 = vmatpush2.xpose.msra.mxu0 0.0
    %3475 = vmatprep.subr.mxu0 0.0
    %3476 = vmatpush2.xpose.msra.mxu0 0.0
    %3477 = vmatprep.subr.mxu0 0.0
    %3478 = vmatpush2.xpose.msra.mxu0 0.0
    %3479 = vmatprep.subr.mxu0 0.0
    %3480 = vmatpush2.xpose.msra.mxu0 0.0
    %3481 = vmatprep.subr.mxu0 0.0
    %3482 = vmatpush2.xpose.msra.mxu0 0.0
    %3483 = vmatprep.subr.mxu0 0.0
    %3484 = vmatpush2.xpose.msra.mxu0 0.0
    %3485 = vmatprep.subr.mxu0 0.0
    %3486 = vmatpush2.xpose.msra.mxu0 0.0
    %3487 = vmatprep.subr.mxu0 0.0
    %3488 = vmatpush2.xpose.msra.mxu0 0.0
    %3489 = vmatprep.subr.mxu0 0.0
    %3490 = vmatpush2.xpose.msra.mxu0 0.0
    %3491 = vmatprep.subr.mxu0 0.0
    %3492 = vmatpush2.xpose.msra.mxu0 0.0
    %3493 = vmatprep.mubr.f32.mxu0 0.0
    %3494 = vmatmul.mubr.f32.gmra.mxu0 %v3417
    %v3495 = vpop.f32.mrf.mxu0
    %v3496 = vadd.f32 0.0, %v3495
    %v3497 = vpop.f32.mrf.mxu0
    %3498 = vmatprep.mubr.f32.mxu0 0.0
    %3499 = vmatmul.mubr.f32.gmra.mxu0 %v3419
    %v3500 = vpop.f32.mrf.mxu0
    %v3501 = vadd.f32 0.0, %v3500
    %v3502 = vpop.f32.mrf.mxu0
    %3503 = vmatprep.mubr.f32.mxu0 0.0
    %3504 = vmatmul.mubr.f32.gmra.mxu0 %v3421
    %v3505 = vpop.f32.mrf.mxu0
    %v3506 = vadd.f32 0.0, %v3505
    %v3507 = vpop.f32.mrf.mxu0
    %3508 = vdwg.mxu0
    %3509 = vrot.lane.b32.xlu0 %v3177, 104
    %v3510 = vpop.permute.xlu0 %3509
    %3511 = vrot.lane.b32.xlu0 %v3182, 104
    %v3512 = vpop.permute.xlu0 %3511
    %3513 = vrot.lane.b32.xlu0 %v3187, 104
    %v3514 = vpop.permute.xlu0 %3513
    %3515 = vrot.lane.b32.xlu0 %v3177, 72
    %v3516 = vpop.permute.xlu0 %3515
    %3517 = vrot.lane.b32.xlu0 %v3182, 72
    %v3518 = vpop.permute.xlu0 %3517
    %3519 = vrot.lane.b32.xlu0 %v3187, 72
    %v3520 = vpop.permute.xlu0 %3519
    %v3521 = vsel %vm453, %v3510, 0
    %v3523 = vsel %vm453, %v3512, 0
    %v3525 = vsel %vm453, %v3514, 0
    %v3527 = vsel %vm453, %v3516, 0
    %v3529 = vsel %vm453, %v3518, 0
    %v3531 = vsel %vm453, %v3520, 0
    %3533 = vmatprep.subr.mxu0 0.0
    %3534 = vmatpush1.xpose.msra.mxu0 0.0
    %3535 = vmatprep.subr.mxu0 0.0
    %3536 = vmatpush1.xpose.msra.mxu0 0.0
    %3537 = vmatprep.subr.mxu0 0.0
    %3538 = vmatpush1.xpose.msra.mxu0 0.0
    %3539 = vmatprep.subr.mxu0 0.0
    %3540 = vmatpush1.xpose.msra.mxu0 0.0
    %3541 = vmatprep.subr.mxu0 0.0
    %3542 = vmatpush1.xpose.msra.mxu0 0.0
    %3543 = vmatprep.subr.mxu0 0.0
    %3544 = vmatpush1.xpose.msra.mxu0 0.0
    %3545 = vmatprep.subr.mxu0 0.0
    %3546 = vmatpush1.xpose.msra.mxu0 0.0
    %3547 = vmatprep.subr.mxu0 0.0
    %3548 = vmatpush1.xpose.msra.mxu0 0.0
    %3549 = vmatprep.subr.mxu0 0.0
    %3550 = vmatpush1.xpose.msra.mxu0 0.0
    %3551 = vmatprep.subr.mxu0 0.0
    %3552 = vmatpush1.xpose.msra.mxu0 0.0
    %3553 = vmatprep.subr.mxu0 0.0
    %3554 = vmatpush1.xpose.msra.mxu0 0.0
    %3555 = vmatprep.subr.mxu0 0.0
    %3556 = vmatpush1.xpose.msra.mxu0 0.0
    %3557 = vmatprep.subr.mxu0 0.0
    %3558 = vmatpush1.xpose.msra.mxu0 0.0
    %3559 = vmatprep.subr.mxu0 0.0
    %3560 = vmatpush1.xpose.msra.mxu0 %v3531
    %3561 = vmatprep.subr.mxu0 0.0
    %3562 = vmatpush1.xpose.msra.mxu0 %v3529
    %3563 = vmatprep.subr.mxu0 0.0
    %3564 = vmatpush1.xpose.msra.mxu0 %v3527
    %3565 = vmatprep.subr.mxu0 0.0
    %3566 = vmatpush2.xpose.msra.mxu0 0.0
    %3567 = vmatprep.subr.mxu0 0.0
    %3568 = vmatpush2.xpose.msra.mxu0 0.0
    %3569 = vmatprep.subr.mxu0 0.0
    %3570 = vmatpush2.xpose.msra.mxu0 0.0
    %3571 = vmatprep.subr.mxu0 0.0
    %3572 = vmatpush2.xpose.msra.mxu0 0.0
    %3573 = vmatprep.subr.mxu0 0.0
    %3574 = vmatpush2.xpose.msra.mxu0 0.0
    %3575 = vmatprep.subr.mxu0 0.0
    %3576 = vmatpush2.xpose.msra.mxu0 0.0
    %3577 = vmatprep.subr.mxu0 0.0
    %3578 = vmatpush2.xpose.msra.mxu0 0.0
    %3579 = vmatprep.subr.mxu0 0.0
    %3580 = vmatpush2.xpose.msra.mxu0 0.0
    %3581 = vmatprep.subr.mxu0 0.0
    %3582 = vmatpush2.xpose.msra.mxu0 0.0
    %3583 = vmatprep.subr.mxu0 0.0
    %3584 = vmatpush2.xpose.msra.mxu0 0.0
    %3585 = vmatprep.subr.mxu0 0.0
    %3586 = vmatpush2.xpose.msra.mxu0 0.0
    %3587 = vmatprep.subr.mxu0 0.0
    %3588 = vmatpush2.xpose.msra.mxu0 0.0
    %3589 = vmatprep.subr.mxu0 0.0
    %3590 = vmatpush2.xpose.msra.mxu0 0.0
    %3591 = vmatprep.subr.mxu0 0.0
    %3592 = vmatpush2.xpose.msra.mxu0 0.0
    %3593 = vmatprep.subr.mxu0 0.0
    %3594 = vmatpush2.xpose.msra.mxu0 0.0
    %3595 = vmatprep.subr.mxu0 0.0
    %3596 = vmatpush2.xpose.msra.mxu0 0.0
    %3597 = vmatprep.mubr.f32.mxu0 0.0
    %3598 = vmatmul.mubr.f32.gmra.mxu0 %v3521
    %v3599 = vpop.f32.mrf.mxu0
    %v3600 = vadd.f32 0.0, %v3599
    %v3601 = vpop.f32.mrf.mxu0
    %3602 = vmatprep.mubr.f32.mxu0 0.0
    %3603 = vmatmul.mubr.f32.gmra.mxu0 %v3523
    %v3604 = vpop.f32.mrf.mxu0
    %v3605 = vadd.f32 0.0, %v3604
    %v3606 = vpop.f32.mrf.mxu0
    %3607 = vmatprep.mubr.f32.mxu0 0.0
    %3608 = vmatmul.mubr.f32.gmra.mxu0 %v3525
    %v3609 = vpop.f32.mrf.mxu0
    %v3610 = vadd.f32 0.0, %v3609
    %v3611 = vpop.f32.mrf.mxu0
    %3612 = vdwg.mxu0
    %v3615 = vrot.slane %v3187, 1
    %v3616 = vrot.slane %v3192, 1
    %v3617 = vsel %vm860, %v3615, %v3616
    %v3618 = vrot.slane %v3197, 1
    %v3619 = vsel %vm860, %v3616, %v3618
    %3620 = vrot.lane.b32.xlu0 %v3617, 96
    %v3621 = vpop.permute.xlu0 %3620
    %3622 = vrot.lane.b32.xlu0 %v3619, 96
    %v3623 = vpop.permute.xlu0 %3622
    %3624 = vrot.lane.b32.xlu0 %v3618, 96
    %v3625 = vpop.permute.xlu0 %3624
    %v3626 = vsel %vm453, %v3617, 0
    %v3628 = vsel %vm453, %v3619, 0
    %v3630 = vsel %vm453, %v3618, 0
    %v3632 = vsel %vm453, %v3621, 0
    %v3634 = vsel %vm453, %v3623, 0
    %v3636 = vsel %vm453, %v3625, 0
    %3638 = vmatprep.subr.mxu0 0.0
    %3639 = vmatpush1.xpose.msra.mxu0 0.0
    %3640 = vmatprep.subr.mxu0 0.0
    %3641 = vmatpush1.xpose.msra.mxu0 0.0
    %3642 = vmatprep.subr.mxu0 0.0
    %3643 = vmatpush1.xpose.msra.mxu0 0.0
    %3644 = vmatprep.subr.mxu0 0.0
    %3645 = vmatpush1.xpose.msra.mxu0 0.0
    %3646 = vmatprep.subr.mxu0 0.0
    %3647 = vmatpush1.xpose.msra.mxu0 0.0
    %3648 = vmatprep.subr.mxu0 0.0
    %3649 = vmatpush1.xpose.msra.mxu0 0.0
    %3650 = vmatprep.subr.mxu0 0.0
    %3651 = vmatpush1.xpose.msra.mxu0 0.0
    %3652 = vmatprep.subr.mxu0 0.0
    %3653 = vmatpush1.xpose.msra.mxu0 0.0
    %3654 = vmatprep.subr.mxu0 0.0
    %3655 = vmatpush1.xpose.msra.mxu0 0.0
    %3656 = vmatprep.subr.mxu0 0.0
    %3657 = vmatpush1.xpose.msra.mxu0 0.0
    %3658 = vmatprep.subr.mxu0 0.0
    %3659 = vmatpush1.xpose.msra.mxu0 0.0
    %3660 = vmatprep.subr.mxu0 0.0
    %3661 = vmatpush1.xpose.msra.mxu0 0.0
    %3662 = vmatprep.subr.mxu0 0.0
    %3663 = vmatpush1.xpose.msra.mxu0 0.0
    %3664 = vmatprep.subr.mxu0 0.0
    %3665 = vmatpush1.xpose.msra.mxu0 %v3636
    %3666 = vmatprep.subr.mxu0 0.0
    %3667 = vmatpush1.xpose.msra.mxu0 %v3634
    %3668 = vmatprep.subr.mxu0 0.0
    %3669 = vmatpush1.xpose.msra.mxu0 %v3632
    %3670 = vmatprep.subr.mxu0 0.0
    %3671 = vmatpush2.xpose.msra.mxu0 0.0
    %3672 = vmatprep.subr.mxu0 0.0
    %3673 = vmatpush2.xpose.msra.mxu0 0.0
    %3674 = vmatprep.subr.mxu0 0.0
    %3675 = vmatpush2.xpose.msra.mxu0 0.0
    %3676 = vmatprep.subr.mxu0 0.0
    %3677 = vmatpush2.xpose.msra.mxu0 0.0
    %3678 = vmatprep.subr.mxu0 0.0
    %3679 = vmatpush2.xpose.msra.mxu0 0.0
    %3680 = vmatprep.subr.mxu0 0.0
    %3681 = vmatpush2.xpose.msra.mxu0 0.0
    %3682 = vmatprep.subr.mxu0 0.0
    %3683 = vmatpush2.xpose.msra.mxu0 0.0
    %3684 = vmatprep.subr.mxu0 0.0
    %3685 = vmatpush2.xpose.msra.mxu0 0.0
    %3686 = vmatprep.subr.mxu0 0.0
    %3687 = vmatpush2.xpose.msra.mxu0 0.0
    %3688 = vmatprep.subr.mxu0 0.0
    %3689 = vmatpush2.xpose.msra.mxu0 0.0
    %3690 = vmatprep.subr.mxu0 0.0
    %3691 = vmatpush2.xpose.msra.mxu0 0.0
    %3692 = vmatprep.subr.mxu0 0.0
    %3693 = vmatpush2.xpose.msra.mxu0 0.0
    %3694 = vmatprep.subr.mxu0 0.0
    %3695 = vmatpush2.xpose.msra.mxu0 0.0
    %3696 = vmatprep.subr.mxu0 0.0
    %3697 = vmatpush2.xpose.msra.mxu0 0.0
    %3698 = vmatprep.subr.mxu0 0.0
    %3699 = vmatpush2.xpose.msra.mxu0 0.0
    %3700 = vmatprep.subr.mxu0 0.0
    %3701 = vmatpush2.xpose.msra.mxu0 0.0
    %3702 = vmatprep.mubr.f32.mxu0 0.0
    %3703 = vmatmul.mubr.f32.gmra.mxu0 %v3626
    %v3704 = vpop.f32.mrf.mxu0
    %v3705 = vadd.f32 0.0, %v3704
    %v3706 = vpop.f32.mrf.mxu0
    %3707 = vmatprep.mubr.f32.mxu0 0.0
    %3708 = vmatmul.mubr.f32.gmra.mxu0 %v3628
    %v3709 = vpop.f32.mrf.mxu0
    %v3710 = vadd.f32 0.0, %v3709
    %v3711 = vpop.f32.mrf.mxu0
    %3712 = vmatprep.mubr.f32.mxu0 0.0
    %3713 = vmatmul.mubr.f32.gmra.mxu0 %v3630
    %v3714 = vpop.f32.mrf.mxu0
    %v3715 = vadd.f32 0.0, %v3714
    %v3716 = vpop.f32.mrf.mxu0
    %3717 = vdwg.mxu0
    %3718 = vrot.lane.b32.xlu0 %v3617, 120
    %v3719 = vpop.permute.xlu0 %3718
    %3720 = vrot.lane.b32.xlu0 %v3619, 120
    %v3721 = vpop.permute.xlu0 %3720
    %3722 = vrot.lane.b32.xlu0 %v3618, 120
    %v3723 = vpop.permute.xlu0 %3722
    %3724 = vrot.lane.b32.xlu0 %v3617, 88
    %v3725 = vpop.permute.xlu0 %3724
    %3726 = vrot.lane.b32.xlu0 %v3619, 88
    %v3727 = vpop.permute.xlu0 %3726
    %3728 = vrot.lane.b32.xlu0 %v3618, 88
    %v3729 = vpop.permute.xlu0 %3728
    %v3730 = vsel %vm453, %v3719, 0
    %v3732 = vsel %vm453, %v3721, 0
    %v3734 = vsel %vm453, %v3723, 0
    %v3736 = vsel %vm453, %v3725, 0
    %v3738 = vsel %vm453, %v3727, 0
    %v3740 = vsel %vm453, %v3729, 0
    %3742 = vmatprep.subr.mxu0 0.0
    %3743 = vmatpush1.xpose.msra.mxu0 0.0
    %3744 = vmatprep.subr.mxu0 0.0
    %3745 = vmatpush1.xpose.msra.mxu0 0.0
    %3746 = vmatprep.subr.mxu0 0.0
    %3747 = vmatpush1.xpose.msra.mxu0 0.0
    %3748 = vmatprep.subr.mxu0 0.0
    %3749 = vmatpush1.xpose.msra.mxu0 0.0
    %3750 = vmatprep.subr.mxu0 0.0
    %3751 = vmatpush1.xpose.msra.mxu0 0.0
    %3752 = vmatprep.subr.mxu0 0.0
    %3753 = vmatpush1.xpose.msra.mxu0 0.0
    %3754 = vmatprep.subr.mxu0 0.0
    %3755 = vmatpush1.xpose.msra.mxu0 0.0
    %3756 = vmatprep.subr.mxu0 0.0
    %3757 = vmatpush1.xpose.msra.mxu0 0.0
    %3758 = vmatprep.subr.mxu0 0.0
    %3759 = vmatpush1.xpose.msra.mxu0 0.0
    %3760 = vmatprep.subr.mxu0 0.0
    %3761 = vmatpush1.xpose.msra.mxu0 0.0
    %3762 = vmatprep.subr.mxu0 0.0
    %3763 = vmatpush1.xpose.msra.mxu0 0.0
    %3764 = vmatprep.subr.mxu0 0.0
    %3765 = vmatpush1.xpose.msra.mxu0 0.0
    %3766 = vmatprep.subr.mxu0 0.0
    %3767 = vmatpush1.xpose.msra.mxu0 0.0
    %3768 = vmatprep.subr.mxu0 0.0
    %3769 = vmatpush1.xpose.msra.mxu0 %v3740
    %3770 = vmatprep.subr.mxu0 0.0
    %3771 = vmatpush1.xpose.msra.mxu0 %v3738
    %3772 = vmatprep.subr.mxu0 0.0
    %3773 = vmatpush1.xpose.msra.mxu0 %v3736
    %3774 = vmatprep.subr.mxu0 0.0
    %3775 = vmatpush2.xpose.msra.mxu0 0.0
    %3776 = vmatprep.subr.mxu0 0.0
    %3777 = vmatpush2.xpose.msra.mxu0 0.0
    %3778 = vmatprep.subr.mxu0 0.0
    %3779 = vmatpush2.xpose.msra.mxu0 0.0
    %3780 = vmatprep.subr.mxu0 0.0
    %3781 = vmatpush2.xpose.msra.mxu0 0.0
    %3782 = vmatprep.subr.mxu0 0.0
    %3783 = vmatpush2.xpose.msra.mxu0 0.0
    %3784 = vmatprep.subr.mxu0 0.0
    %3785 = vmatpush2.xpose.msra.mxu0 0.0
    %3786 = vmatprep.subr.mxu0 0.0
    %3787 = vmatpush2.xpose.msra.mxu0 0.0
    %3788 = vmatprep.subr.mxu0 0.0
    %3789 = vmatpush2.xpose.msra.mxu0 0.0
    %3790 = vmatprep.subr.mxu0 0.0
    %3791 = vmatpush2.xpose.msra.mxu0 0.0
    %3792 = vmatprep.subr.mxu0 0.0
    %3793 = vmatpush2.xpose.msra.mxu0 0.0
    %3794 = vmatprep.subr.mxu0 0.0
    %3795 = vmatpush2.xpose.msra.mxu0 0.0
    %3796 = vmatprep.subr.mxu0 0.0
    %3797 = vmatpush2.xpose.msra.mxu0 0.0
    %3798 = vmatprep.subr.mxu0 0.0
    %3799 = vmatpush2.xpose.msra.mxu0 0.0
    %3800 = vmatprep.subr.mxu0 0.0
    %3801 = vmatpush2.xpose.msra.mxu0 0.0
    %3802 = vmatprep.subr.mxu0 0.0
    %3803 = vmatpush2.xpose.msra.mxu0 0.0
    %3804 = vmatprep.subr.mxu0 0.0
    %3805 = vmatpush2.xpose.msra.mxu0 0.0
    %3806 = vmatprep.mubr.f32.mxu0 0.0
    %3807 = vmatmul.mubr.f32.gmra.mxu0 %v3730
    %v3808 = vpop.f32.mrf.mxu0
    %v3809 = vadd.f32 0.0, %v3808
    %v3810 = vpop.f32.mrf.mxu0
    %3811 = vmatprep.mubr.f32.mxu0 0.0
    %3812 = vmatmul.mubr.f32.gmra.mxu0 %v3732
    %v3813 = vpop.f32.mrf.mxu0
    %v3814 = vadd.f32 0.0, %v3813
    %v3815 = vpop.f32.mrf.mxu0
    %3816 = vmatprep.mubr.f32.mxu0 0.0
    %3817 = vmatmul.mubr.f32.gmra.mxu0 %v3734
    %v3818 = vpop.f32.mrf.mxu0
    %v3819 = vadd.f32 0.0, %v3818
    %v3820 = vpop.f32.mrf.mxu0
    %3821 = vdwg.mxu0
    %3822 = vrot.lane.b32.xlu0 %v3617, 112
    %v3823 = vpop.permute.xlu0 %3822
    %3824 = vrot.lane.b32.xlu0 %v3619, 112
    %v3825 = vpop.permute.xlu0 %3824
    %3826 = vrot.lane.b32.xlu0 %v3618, 112
    %v3827 = vpop.permute.xlu0 %3826
    %3828 = vrot.lane.b32.xlu0 %v3617, 80
    %v3829 = vpop.permute.xlu0 %3828
    %3830 = vrot.lane.b32.xlu0 %v3619, 80
    %v3831 = vpop.permute.xlu0 %3830
    %3832 = vrot.lane.b32.xlu0 %v3618, 80
    %v3833 = vpop.permute.xlu0 %3832
    %v3834 = vsel %vm453, %v3823, 0
    %v3836 = vsel %vm453, %v3825, 0
    %v3838 = vsel %vm453, %v3827, 0
    %v3840 = vsel %vm453, %v3829, 0
    %v3842 = vsel %vm453, %v3831, 0
    %v3844 = vsel %vm453, %v3833, 0
    %3846 = vmatprep.subr.mxu0 0.0
    %3847 = vmatpush1.xpose.msra.mxu0 0.0
    %3848 = vmatprep.subr.mxu0 0.0
    %3849 = vmatpush1.xpose.msra.mxu0 0.0
    %3850 = vmatprep.subr.mxu0 0.0
    %3851 = vmatpush1.xpose.msra.mxu0 0.0
    %3852 = vmatprep.subr.mxu0 0.0
    %3853 = vmatpush1.xpose.msra.mxu0 0.0
    %3854 = vmatprep.subr.mxu0 0.0
    %3855 = vmatpush1.xpose.msra.mxu0 0.0
    %3856 = vmatprep.subr.mxu0 0.0
    %3857 = vmatpush1.xpose.msra.mxu0 0.0
    %3858 = vmatprep.subr.mxu0 0.0
    %3859 = vmatpush1.xpose.msra.mxu0 0.0
    %3860 = vmatprep.subr.mxu0 0.0
    %3861 = vmatpush1.xpose.msra.mxu0 0.0
    %3862 = vmatprep.subr.mxu0 0.0
    %3863 = vmatpush1.xpose.msra.mxu0 0.0
    %3864 = vmatprep.subr.mxu0 0.0
    %3865 = vmatpush1.xpose.msra.mxu0 0.0
    %3866 = vmatprep.subr.mxu0 0.0
    %3867 = vmatpush1.xpose.msra.mxu0 0.0
    %3868 = vmatprep.subr.mxu0 0.0
    %3869 = vmatpush1.xpose.msra.mxu0 0.0
    %3870 = vmatprep.subr.mxu0 0.0
    %3871 = vmatpush1.xpose.msra.mxu0 0.0
    %3872 = vmatprep.subr.mxu0 0.0
    %3873 = vmatpush1.xpose.msra.mxu0 %v3844
    %3874 = vmatprep.subr.mxu0 0.0
    %3875 = vmatpush1.xpose.msra.mxu0 %v3842
    %3876 = vmatprep.subr.mxu0 0.0
    %3877 = vmatpush1.xpose.msra.mxu0 %v3840
    %3878 = vmatprep.subr.mxu0 0.0
    %3879 = vmatpush2.xpose.msra.mxu0 0.0
    %3880 = vmatprep.subr.mxu0 0.0
    %3881 = vmatpush2.xpose.msra.mxu0 0.0
    %3882 = vmatprep.subr.mxu0 0.0
    %3883 = vmatpush2.xpose.msra.mxu0 0.0
    %3884 = vmatprep.subr.mxu0 0.0
    %3885 = vmatpush2.xpose.msra.mxu0 0.0
    %3886 = vmatprep.subr.mxu0 0.0
    %3887 = vmatpush2.xpose.msra.mxu0 0.0
    %3888 = vmatprep.subr.mxu0 0.0
    %3889 = vmatpush2.xpose.msra.mxu0 0.0
    %3890 = vmatprep.subr.mxu0 0.0
    %3891 = vmatpush2.xpose.msra.mxu0 0.0
    %3892 = vmatprep.subr.mxu0 0.0
    %3893 = vmatpush2.xpose.msra.mxu0 0.0
    %3894 = vmatprep.subr.mxu0 0.0
    %3895 = vmatpush2.xpose.msra.mxu0 0.0
    %3896 = vmatprep.subr.mxu0 0.0
    %3897 = vmatpush2.xpose.msra.mxu0 0.0
    %3898 = vmatprep.subr.mxu0 0.0
    %3899 = vmatpush2.xpose.msra.mxu0 0.0
    %3900 = vmatprep.subr.mxu0 0.0
    %3901 = vmatpush2.xpose.msra.mxu0 0.0
    %3902 = vmatprep.subr.mxu0 0.0
    %3903 = vmatpush2.xpose.msra.mxu0 0.0
    %3904 = vmatprep.subr.mxu0 0.0
    %3905 = vmatpush2.xpose.msra.mxu0 0.0
    %3906 = vmatprep.subr.mxu0 0.0
    %3907 = vmatpush2.xpose.msra.mxu0 0.0
    %3908 = vmatprep.subr.mxu0 0.0
    %3909 = vmatpush2.xpose.msra.mxu0 0.0
    %3910 = vmatprep.mubr.f32.mxu0 0.0
    %3911 = vmatmul.mubr.f32.gmra.mxu0 %v3834
    %v3912 = vpop.f32.mrf.mxu0
    %v3913 = vadd.f32 0.0, %v3912
    %v3914 = vpop.f32.mrf.mxu0
    %3915 = vmatprep.mubr.f32.mxu0 0.0
    %3916 = vmatmul.mubr.f32.gmra.mxu0 %v3836
    %v3917 = vpop.f32.mrf.mxu0
    %v3918 = vadd.f32 0.0, %v3917
    %v3919 = vpop.f32.mrf.mxu0
    %3920 = vmatprep.mubr.f32.mxu0 0.0
    %3921 = vmatmul.mubr.f32.gmra.mxu0 %v3838
    %v3922 = vpop.f32.mrf.mxu0
    %v3923 = vadd.f32 0.0, %v3922
    %v3924 = vpop.f32.mrf.mxu0
    %3925 = vdwg.mxu0
    %3926 = vrot.lane.b32.xlu0 %v3617, 104
    %v3927 = vpop.permute.xlu0 %3926
    %3928 = vrot.lane.b32.xlu0 %v3619, 104
    %v3929 = vpop.permute.xlu0 %3928
    %3930 = vrot.lane.b32.xlu0 %v3618, 104
    %v3931 = vpop.permute.xlu0 %3930
    %3932 = vrot.lane.b32.xlu0 %v3617, 72
    %v3933 = vpop.permute.xlu0 %3932
    %3934 = vrot.lane.b32.xlu0 %v3619, 72
    %v3935 = vpop.permute.xlu0 %3934
    %3936 = vrot.lane.b32.xlu0 %v3618, 72
    %v3937 = vpop.permute.xlu0 %3936
    %v3938 = vsel %vm453, %v3927, 0
    %v3940 = vsel %vm453, %v3929, 0
    %v3942 = vsel %vm453, %v3931, 0
    %v3944 = vsel %vm453, %v3933, 0
    %v3946 = vsel %vm453, %v3935, 0
    %v3948 = vsel %vm453, %v3937, 0
    %3950 = vmatprep.subr.mxu0 0.0
    %3951 = vmatpush1.xpose.msra.mxu0 0.0
    %3952 = vmatprep.subr.mxu0 0.0
    %3953 = vmatpush1.xpose.msra.mxu0 0.0
    %3954 = vmatprep.subr.mxu0 0.0
    %3955 = vmatpush1.xpose.msra.mxu0 0.0
    %3956 = vmatprep.subr.mxu0 0.0
    %3957 = vmatpush1.xpose.msra.mxu0 0.0
    %3958 = vmatprep.subr.mxu0 0.0
    %3959 = vmatpush1.xpose.msra.mxu0 0.0
    %3960 = vmatprep.subr.mxu0 0.0
    %3961 = vmatpush1.xpose.msra.mxu0 0.0
    %3962 = vmatprep.subr.mxu0 0.0
    %3963 = vmatpush1.xpose.msra.mxu0 0.0
    %3964 = vmatprep.subr.mxu0 0.0
    %3965 = vmatpush1.xpose.msra.mxu0 0.0
    %3966 = vmatprep.subr.mxu0 0.0
    %3967 = vmatpush1.xpose.msra.mxu0 0.0
    %3968 = vmatprep.subr.mxu0 0.0
    %3969 = vmatpush1.xpose.msra.mxu0 0.0
    %3970 = vmatprep.subr.mxu0 0.0
    %3971 = vmatpush1.xpose.msra.mxu0 0.0
    %3972 = vmatprep.subr.mxu0 0.0
    %3973 = vmatpush1.xpose.msra.mxu0 0.0
    %3974 = vmatprep.subr.mxu0 0.0
    %3975 = vmatpush1.xpose.msra.mxu0 0.0
    %3976 = vmatprep.subr.mxu0 0.0
    %3977 = vmatpush1.xpose.msra.mxu0 %v3948
    %3978 = vmatprep.subr.mxu0 0.0
    %3979 = vmatpush1.xpose.msra.mxu0 %v3946
    %3980 = vmatprep.subr.mxu0 0.0
    %3981 = vmatpush1.xpose.msra.mxu0 %v3944
    %3982 = vmatprep.subr.mxu0 0.0
    %3983 = vmatpush2.xpose.msra.mxu0 0.0
    %3984 = vmatprep.subr.mxu0 0.0
    %3985 = vmatpush2.xpose.msra.mxu0 0.0
    %3986 = vmatprep.subr.mxu0 0.0
    %3987 = vmatpush2.xpose.msra.mxu0 0.0
    %3988 = vmatprep.subr.mxu0 0.0
    %3989 = vmatpush2.xpose.msra.mxu0 0.0
    %3990 = vmatprep.subr.mxu0 0.0
    %3991 = vmatpush2.xpose.msra.mxu0 0.0
    %3992 = vmatprep.subr.mxu0 0.0
    %3993 = vmatpush2.xpose.msra.mxu0 0.0
    %3994 = vmatprep.subr.mxu0 0.0
    %3995 = vmatpush2.xpose.msra.mxu0 0.0
    %3996 = vmatprep.subr.mxu0 0.0
    %3997 = vmatpush2.xpose.msra.mxu0 0.0
    %3998 = vmatprep.subr.mxu0 0.0
    %3999 = vmatpush2.xpose.msra.mxu0 0.0
    %4000 = vmatprep.subr.mxu0 0.0
    %4001 = vmatpush2.xpose.msra.mxu0 0.0
    %4002 = vmatprep.subr.mxu0 0.0
    %4003 = vmatpush2.xpose.msra.mxu0 0.0
    %4004 = vmatprep.subr.mxu0 0.0
    %4005 = vmatpush2.xpose.msra.mxu0 0.0
    %4006 = vmatprep.subr.mxu0 0.0
    %4007 = vmatpush2.xpose.msra.mxu0 0.0
    %4008 = vmatprep.subr.mxu0 0.0
    %4009 = vmatpush2.xpose.msra.mxu0 0.0
    %4010 = vmatprep.subr.mxu0 0.0
    %4011 = vmatpush2.xpose.msra.mxu0 0.0
    %4012 = vmatprep.subr.mxu0 0.0
    %4013 = vmatpush2.xpose.msra.mxu0 0.0
    %4014 = vmatprep.mubr.f32.mxu0 0.0
    %4015 = vmatmul.mubr.f32.gmra.mxu0 %v3938
    %v4016 = vpop.f32.mrf.mxu0
    %v4017 = vadd.f32 0.0, %v4016
    %v4018 = vpop.f32.mrf.mxu0
    %4019 = vmatprep.mubr.f32.mxu0 0.0
    %4020 = vmatmul.mubr.f32.gmra.mxu0 %v3940
    %v4021 = vpop.f32.mrf.mxu0
    %v4022 = vadd.f32 0.0, %v4021
    %v4023 = vpop.f32.mrf.mxu0
    %4024 = vmatprep.mubr.f32.mxu0 0.0
    %4025 = vmatmul.mubr.f32.gmra.mxu0 %v3942
    %v4026 = vpop.f32.mrf.mxu0
    %v4027 = vadd.f32 0.0, %v4026
    %v4028 = vpop.f32.mrf.mxu0
    %4029 = vdwg.mxu0
    %v4030 = vmul.f32 %v3288, 0.35355338
    %v4031 = vmul.f32 %v3293, 0.35355338
    %v4032 = vmul.f32 %v3298, 0.35355338
    %v4033 = vmul.f32 %v3392, 0.35355338
    %v4034 = vmul.f32 %v3397, 0.35355338
    %v4035 = vmul.f32 %v3402, 0.35355338
    %v4036 = vmul.f32 %v3496, 0.35355338
    %v4037 = vmul.f32 %v3501, 0.35355338
    %v4038 = vmul.f32 %v3506, 0.35355338
    %v4039 = vmul.f32 %v3600, 0.35355338
    %v4040 = vmul.f32 %v3605, 0.35355338
    %v4041 = vmul.f32 %v3610, 0.35355338
    %v4042 = vmul.f32 %v3705, 0.35355338
    %v4043 = vmul.f32 %v3710, 0.35355338
    %v4044 = vmul.f32 %v3715, 0.35355338
    %v4045 = vmul.f32 %v3809, 0.35355338
    %v4046 = vmul.f32 %v3814, 0.35355338
    %v4047 = vmul.f32 %v3819, 0.35355338
    %v4048 = vmul.f32 %v3913, 0.35355338
    %v4049 = vmul.f32 %v3918, 0.35355338
    %v4050 = vmul.f32 %v3923, 0.35355338
    %v4051 = vmul.f32 %v4017, 0.35355338
    %v4052 = vmul.f32 %v4022, 0.35355338
    %v4053 = vmul.f32 %v4027, 0.35355338
    %v4054 = vsel %vm1300, %v4030, -inf
    %4055 = vmax.xlane.f32.xlu0 %v4054
    %v4056 = vpop.xlane.xlu0 %4055
    %v4057 = vsel %vm1300, %v4031, -inf
    %4058 = vmax.xlane.f32.xlu0 %v4057
    %v4059 = vpop.xlane.xlu0 %4058
    %v4060 = vsel %vm1307, %v4032, -inf
    %4061 = vmax.xlane.f32.xlu0 %v4060
    %v4062 = vpop.xlane.xlu0 %4061
    %v4063 = vsel %vm1300, %v4033, -inf
    %4064 = vmax.xlane.f32.xlu0 %v4063
    %v4065 = vpop.xlane.xlu0 %4064
    %v4066 = vsel %vm1300, %v4034, -inf
    %4067 = vmax.xlane.f32.xlu0 %v4066
    %v4068 = vpop.xlane.xlu0 %4067
    %v4069 = vsel %vm1307, %v4035, -inf
    %4070 = vmax.xlane.f32.xlu0 %v4069
    %v4071 = vpop.xlane.xlu0 %4070
    %v4072 = vsel %vm1300, %v4036, -inf
    %4073 = vmax.xlane.f32.xlu0 %v4072
    %v4074 = vpop.xlane.xlu0 %4073
    %v4075 = vsel %vm1300, %v4037, -inf
    %4076 = vmax.xlane.f32.xlu0 %v4075
    %v4077 = vpop.xlane.xlu0 %4076
    %v4078 = vsel %vm1307, %v4038, -inf
    %4079 = vmax.xlane.f32.xlu0 %v4078
    %v4080 = vpop.xlane.xlu0 %4079
    %v4081 = vsel %vm1300, %v4039, -inf
    %4082 = vmax.xlane.f32.xlu0 %v4081
    %v4083 = vpop.xlane.xlu0 %4082
    %v4084 = vsel %vm1300, %v4040, -inf
    %4085 = vmax.xlane.f32.xlu0 %v4084
    %v4086 = vpop.xlane.xlu0 %4085
    %v4087 = vsel %vm1307, %v4041, -inf
    %4088 = vmax.xlane.f32.xlu0 %v4087
    %v4089 = vpop.xlane.xlu0 %4088
    %v4090 = vsel %vm1300, %v4042, -inf
    %4091 = vmax.xlane.f32.xlu0 %v4090
    %v4092 = vpop.xlane.xlu0 %4091
    %v4093 = vsel %vm1300, %v4043, -inf
    %4094 = vmax.xlane.f32.xlu0 %v4093
    %v4095 = vpop.xlane.xlu0 %4094
    %v4096 = vsel %vm1307, %v4044, -inf
    %4097 = vmax.xlane.f32.xlu0 %v4096
    %v4098 = vpop.xlane.xlu0 %4097
    %v4099 = vsel %vm1300, %v4045, -inf
    %4100 = vmax.xlane.f32.xlu0 %v4099
    %v4101 = vpop.xlane.xlu0 %4100
    %v4102 = vsel %vm1300, %v4046, -inf
    %4103 = vmax.xlane.f32.xlu0 %v4102
    %v4104 = vpop.xlane.xlu0 %4103
    %v4105 = vsel %vm1307, %v4047, -inf
    %4106 = vmax.xlane.f32.xlu0 %v4105
    %v4107 = vpop.xlane.xlu0 %4106
    %v4108 = vsel %vm1300, %v4048, -inf
    %4109 = vmax.xlane.f32.xlu0 %v4108
    %v4110 = vpop.xlane.xlu0 %4109
    %v4111 = vsel %vm1300, %v4049, -inf
    %4112 = vmax.xlane.f32.xlu0 %v4111
    %v4113 = vpop.xlane.xlu0 %4112
    %v4114 = vsel %vm1307, %v4050, -inf
    %4115 = vmax.xlane.f32.xlu0 %v4114
    %v4116 = vpop.xlane.xlu0 %4115
    %v4117 = vsel %vm1300, %v4051, -inf
    %4118 = vmax.xlane.f32.xlu0 %v4117
    %v4119 = vpop.xlane.xlu0 %4118
    %v4120 = vsel %vm1300, %v4052, -inf
    %4121 = vmax.xlane.f32.xlu0 %v4120
    %v4122 = vpop.xlane.xlu0 %4121
    %v4123 = vsel %vm1307, %v4053, -inf
    %4124 = vmax.xlane.f32.xlu0 %v4123
    %v4125 = vpop.xlane.xlu0 %4124
    %v4126 = vsub.f32 %v4030, %v4056
    %v4127 = vsub.f32 %v4031, %v4059
    %v4128 = vsub.f32 %v4032, %v4062
    %v4129 = vsub.f32 %v4033, %v4065
    %v4130 = vsub.f32 %v4034, %v4068
    %v4131 = vsub.f32 %v4035, %v4071
    %v4132 = vsub.f32 %v4036, %v4074
    %v4133 = vsub.f32 %v4037, %v4077
    %v4134 = vsub.f32 %v4038, %v4080
    %v4135 = vsub.f32 %v4039, %v4083
    %v4136 = vsub.f32 %v4040, %v4086
    %v4137 = vsub.f32 %v4041, %v4089
    %v4138 = vsub.f32 %v4042, %v4092
    %v4139 = vsub.f32 %v4043, %v4095
    %v4140 = vsub.f32 %v4044, %v4098
    %v4141 = vsub.f32 %v4045, %v4101
    %v4142 = vsub.f32 %v4046, %v4104
    %v4143 = vsub.f32 %v4047, %v4107
    %v4144 = vsub.f32 %v4048, %v4110
    %v4145 = vsub.f32 %v4049, %v4113
    %v4146 = vsub.f32 %v4050, %v4116
    %v4147 = vsub.f32 %v4051, %v4119
    %v4148 = vsub.f32 %v4052, %v4122
    %v4149 = vsub.f32 %v4053, %v4125
    %v4150 = vmul.f32 %v4126, 1.442695
    %v4151 = vpow.pop %v4150
    %v4152 = vmul.f32 %v4127, 1.442695
    %v4153 = vpow.pop %v4152
    %v4154 = vmul.f32 %v4128, 1.442695
    %v4155 = vpow.pop %v4154
    %v4156 = vmul.f32 %v4129, 1.442695
    %v4157 = vpow.pop %v4156
    %v4158 = vmul.f32 %v4130, 1.442695
    %v4159 = vpow.pop %v4158
    %v4160 = vmul.f32 %v4131, 1.442695
    %v4161 = vpow.pop %v4160
    %v4162 = vmul.f32 %v4132, 1.442695
    %v4163 = vpow.pop %v4162
    %v4164 = vmul.f32 %v4133, 1.442695
    %v4165 = vpow.pop %v4164
    %v4166 = vmul.f32 %v4134, 1.442695
    %v4167 = vpow.pop %v4166
    %v4168 = vmul.f32 %v4135, 1.442695
    %v4169 = vpow.pop %v4168
    %v4170 = vmul.f32 %v4136, 1.442695
    %v4171 = vpow.pop %v4170
    %v4172 = vmul.f32 %v4137, 1.442695
    %v4173 = vpow.pop %v4172
    %v4174 = vmul.f32 %v4138, 1.442695
    %v4175 = vpow.pop %v4174
    %v4176 = vmul.f32 %v4139, 1.442695
    %v4177 = vpow.pop %v4176
    %v4178 = vmul.f32 %v4140, 1.442695
    %v4179 = vpow.pop %v4178
    %v4180 = vmul.f32 %v4141, 1.442695
    %v4181 = vpow.pop %v4180
    %v4182 = vmul.f32 %v4142, 1.442695
    %v4183 = vpow.pop %v4182
    %v4184 = vmul.f32 %v4143, 1.442695
    %v4185 = vpow.pop %v4184
    %v4186 = vmul.f32 %v4144, 1.442695
    %v4187 = vpow.pop %v4186
    %v4188 = vmul.f32 %v4145, 1.442695
    %v4189 = vpow.pop %v4188
    %v4190 = vmul.f32 %v4146, 1.442695
    %v4191 = vpow.pop %v4190
    %v4192 = vmul.f32 %v4147, 1.442695
    %v4193 = vpow.pop %v4192
    %v4194 = vmul.f32 %v4148, 1.442695
    %v4195 = vpow.pop %v4194
    %v4196 = vmul.f32 %v4149, 1.442695
    %v4197 = vpow.pop %v4196
    %v4198 = vsel %vm1300, %v4151, 0.0
    %4199 = vadd.xlane.f32.xlu0 %v4198
    %v4200 = vpop.xlane.xlu0 %4199
    %v4201 = vsel %vm1300, %v4153, 0.0
    %4202 = vadd.xlane.f32.xlu0 %v4201
    %v4203 = vpop.xlane.xlu0 %4202
    %v4204 = vsel %vm1307, %v4155, 0.0
    %4205 = vadd.xlane.f32.xlu0 %v4204
    %v4206 = vpop.xlane.xlu0 %4205
    %v4207 = vsel %vm1300, %v4157, 0.0
    %4208 = vadd.xlane.f32.xlu0 %v4207
    %v4209 = vpop.xlane.xlu0 %4208
    %v4210 = vsel %vm1300, %v4159, 0.0
    %4211 = vadd.xlane.f32.xlu0 %v4210
    %v4212 = vpop.xlane.xlu0 %4211
    %v4213 = vsel %vm1307, %v4161, 0.0
    %4214 = vadd.xlane.f32.xlu0 %v4213
    %v4215 = vpop.xlane.xlu0 %4214
    %v4216 = vsel %vm1300, %v4163, 0.0
    %4217 = vadd.xlane.f32.xlu0 %v4216
    %v4218 = vpop.xlane.xlu0 %4217
    %v4219 = vsel %vm1300, %v4165, 0.0
    %4220 = vadd.xlane.f32.xlu0 %v4219
    %v4221 = vpop.xlane.xlu0 %4220
    %v4222 = vsel %vm1307, %v4167, 0.0
    %4223 = vadd.xlane.f32.xlu0 %v4222
    %v4224 = vpop.xlane.xlu0 %4223
    %v4225 = vsel %vm1300, %v4169, 0.0
    %4226 = vadd.xlane.f32.xlu0 %v4225
    %v4227 = vpop.xlane.xlu0 %4226
    %v4228 = vsel %vm1300, %v4171, 0.0
    %4229 = vadd.xlane.f32.xlu0 %v4228
    %v4230 = vpop.xlane.xlu0 %4229
    %v4231 = vsel %vm1307, %v4173, 0.0
    %4232 = vadd.xlane.f32.xlu0 %v4231
    %v4233 = vpop.xlane.xlu0 %4232
    %v4234 = vsel %vm1300, %v4175, 0.0
    %4235 = vadd.xlane.f32.xlu0 %v4234
    %v4236 = vpop.xlane.xlu0 %4235
    %v4237 = vsel %vm1300, %v4177, 0.0
    %4238 = vadd.xlane.f32.xlu0 %v4237
    %v4239 = vpop.xlane.xlu0 %4238
    %v4240 = vsel %vm1307, %v4179, 0.0
    %4241 = vadd.xlane.f32.xlu0 %v4240
    %v4242 = vpop.xlane.xlu0 %4241
    %v4243 = vsel %vm1300, %v4181, 0.0
    %4244 = vadd.xlane.f32.xlu0 %v4243
    %v4245 = vpop.xlane.xlu0 %4244
    %v4246 = vsel %vm1300, %v4183, 0.0
    %4247 = vadd.xlane.f32.xlu0 %v4246
    %v4248 = vpop.xlane.xlu0 %4247
    %v4249 = vsel %vm1307, %v4185, 0.0
    %4250 = vadd.xlane.f32.xlu0 %v4249
    %v4251 = vpop.xlane.xlu0 %4250
    %v4252 = vsel %vm1300, %v4187, 0.0
    %4253 = vadd.xlane.f32.xlu0 %v4252
    %v4254 = vpop.xlane.xlu0 %4253
    %v4255 = vsel %vm1300, %v4189, 0.0
    %4256 = vadd.xlane.f32.xlu0 %v4255
    %v4257 = vpop.xlane.xlu0 %4256
    %v4258 = vsel %vm1307, %v4191, 0.0
    %4259 = vadd.xlane.f32.xlu0 %v4258
    %v4260 = vpop.xlane.xlu0 %4259
    %v4261 = vsel %vm1300, %v4193, 0.0
    %4262 = vadd.xlane.f32.xlu0 %v4261
    %v4263 = vpop.xlane.xlu0 %4262
    %v4264 = vsel %vm1300, %v4195, 0.0
    %4265 = vadd.xlane.f32.xlu0 %v4264
    %v4266 = vpop.xlane.xlu0 %4265
    %v4267 = vsel %vm1307, %v4197, 0.0
    %4268 = vadd.xlane.f32.xlu0 %v4267
    %v4269 = vpop.xlane.xlu0 %4268
    %v4270 = vrcp.pop %v4200
    %v4271 = vrcp.pop %v4203
    %v4272 = vrcp.pop %v4206
    %v4273 = vrcp.pop %v4209
    %v4274 = vrcp.pop %v4212
    %v4275 = vrcp.pop %v4215
    %v4276 = vrcp.pop %v4218
    %v4277 = vrcp.pop %v4221
    %v4278 = vrcp.pop %v4224
    %v4279 = vrcp.pop %v4227
    %v4280 = vrcp.pop %v4230
    %v4281 = vrcp.pop %v4233
    %v4282 = vrcp.pop %v4236
    %v4283 = vrcp.pop %v4239
    %v4284 = vrcp.pop %v4242
    %v4285 = vrcp.pop %v4245
    %v4286 = vrcp.pop %v4248
    %v4287 = vrcp.pop %v4251
    %v4288 = vrcp.pop %v4254
    %v4289 = vrcp.pop %v4257
    %v4290 = vrcp.pop %v4260
    %v4291 = vrcp.pop %v4263
    %v4292 = vrcp.pop %v4266
    %v4293 = vrcp.pop %v4269
    %v4294 = vmul.f32 %v4151, %v4270
    %v4295 = vmul.f32 %v4153, %v4271
    %v4296 = vmul.f32 %v4155, %v4272
    %v4297 = vmul.f32 %v4157, %v4273
    %v4298 = vmul.f32 %v4159, %v4274
    %v4299 = vmul.f32 %v4161, %v4275
    %v4300 = vmul.f32 %v4163, %v4276
    %v4301 = vmul.f32 %v4165, %v4277
    %v4302 = vmul.f32 %v4167, %v4278
    %v4303 = vmul.f32 %v4169, %v4279
    %v4304 = vmul.f32 %v4171, %v4280
    %v4305 = vmul.f32 %v4173, %v4281
    %v4306 = vmul.f32 %v4175, %v4282
    %v4307 = vmul.f32 %v4177, %v4283
    %v4308 = vmul.f32 %v4179, %v4284
    %v4309 = vmul.f32 %v4181, %v4285
    %v4310 = vmul.f32 %v4183, %v4286
    %v4311 = vmul.f32 %v4185, %v4287
    %v4312 = vmul.f32 %v4187, %v4288
    %v4313 = vmul.f32 %v4189, %v4289
    %v4314 = vmul.f32 %v4191, %v4290
    %v4315 = vmul.f32 %v4193, %v4291
    %v4316 = vmul.f32 %v4195, %v4292
    %v4317 = vmul.f32 %v4197, %v4293
    %v4318 = vld [vmem:[%s1 + $0x220] sm:$0xff]
    %v4319 = vld [vmem:[%s1 + $0x228] sm:$0xff]
    %v4320 = vld [vmem:[%s1 + $0x230] sm:$0xff]
    %v4321 = vld [vmem:[%s1 + $0x238] sm:$0xff]
    %4322 = vrot.lane.b32.xlu0 %v3177, 64
    %v4323 = vpop.permute.xlu0 %4322
    %4324 = vrot.lane.b32.xlu0 %v3182, 64
    %v4325 = vpop.permute.xlu0 %4324
    %4326 = vrot.lane.b32.xlu0 %v3187, 64
    %v4327 = vpop.permute.xlu0 %4326
    %v4331 = vsel %vm1300, %v4294, 0
    %v4334 = vsel %vm1300, %v4295, 0
    %v4337 = vsel %vm1300, %v4296, 0
    %v4339 = vsel %vm1587, %v4327, 0
    %4341 = vmatprep.subr.mxu0 0.0
    %4342 = vmatpush1.msra.mxu0 0.0
    %4343 = vmatprep.subr.mxu0 0.0
    %4344 = vmatpush1.msra.mxu0 0.0
    %4345 = vmatprep.subr.mxu0 0.0
    %4346 = vmatpush1.msra.mxu0 0.0
    %4347 = vmatprep.subr.mxu0 0.0
    %4348 = vmatpush1.msra.mxu0 0.0
    %4349 = vmatprep.subr.mxu0 0.0
    %4350 = vmatpush1.msra.mxu0 0.0
    %4351 = vmatprep.subr.mxu0 0.0
    %4352 = vmatpush1.msra.mxu0 0.0
    %4353 = vmatprep.subr.mxu0 0.0
    %4354 = vmatpush1.msra.mxu0 0.0
    %4355 = vmatprep.subr.mxu0 0.0
    %4356 = vmatpush1.msra.mxu0 0.0
    %4357 = vmatprep.subr.mxu0 0.0
    %4358 = vmatpush1.msra.mxu0 0.0
    %4359 = vmatprep.subr.mxu0 0.0
    %4360 = vmatpush1.msra.mxu0 0.0
    %4361 = vmatprep.subr.mxu0 0.0
    %4362 = vmatpush1.msra.mxu0 0.0
    %4363 = vmatprep.subr.mxu0 0.0
    %4364 = vmatpush1.msra.mxu0 0.0
    %4365 = vmatprep.subr.mxu0 0.0
    %4366 = vmatpush1.msra.mxu0 0.0
    %4367 = vmatprep.subr.mxu0 0.0
    %4368 = vmatpush1.msra.mxu0 %v4339
    %4369 = vmatprep.subr.mxu0 0.0
    %4370 = vmatpush1.msra.mxu0 %v4325
    %4371 = vmatprep.subr.mxu0 0.0
    %4372 = vmatpush1.msra.mxu0 %v4323
    %4373 = vmatprep.subr.mxu0 0.0
    %4374 = vmatpush2.msra.mxu0 0.0
    %4375 = vmatprep.subr.mxu0 0.0
    %4376 = vmatpush2.msra.mxu0 0.0
    %4377 = vmatprep.subr.mxu0 0.0
    %4378 = vmatpush2.msra.mxu0 0.0
    %4379 = vmatprep.subr.mxu0 0.0
    %4380 = vmatpush2.msra.mxu0 0.0
    %4381 = vmatprep.subr.mxu0 0.0
    %4382 = vmatpush2.msra.mxu0 0.0
    %4383 = vmatprep.subr.mxu0 0.0
    %4384 = vmatpush2.msra.mxu0 0.0
    %4385 = vmatprep.subr.mxu0 0.0
    %4386 = vmatpush2.msra.mxu0 0.0
    %4387 = vmatprep.subr.mxu0 0.0
    %4388 = vmatpush2.msra.mxu0 0.0
    %4389 = vmatprep.subr.mxu0 0.0
    %4390 = vmatpush2.msra.mxu0 0.0
    %4391 = vmatprep.subr.mxu0 0.0
    %4392 = vmatpush2.msra.mxu0 0.0
    %4393 = vmatprep.subr.mxu0 0.0
    %4394 = vmatpush2.msra.mxu0 0.0
    %4395 = vmatprep.subr.mxu0 0.0
    %4396 = vmatpush2.msra.mxu0 0.0
    %4397 = vmatprep.subr.mxu0 0.0
    %4398 = vmatpush2.msra.mxu0 0.0
    %4399 = vmatprep.subr.mxu0 0.0
    %4400 = vmatpush2.msra.mxu0 0.0
    %4401 = vmatprep.subr.mxu0 0.0
    %4402 = vmatpush2.msra.mxu0 0.0
    %4403 = vmatprep.subr.mxu0 0.0
    %4404 = vmatpush2.msra.mxu0 0.0
    %4405 = vmatprep.mubr.f32.mxu0 0.0
    %4406 = vmatmul.mubr.f32.gmra.mxu0 %v4331
    %v4407 = vpop.f32.mrf.mxu0
    %v4408 = vadd.f32 0.0, %v4407
    %v4409 = vpop.f32.mrf.mxu0
    %4410 = vmatprep.mubr.f32.mxu0 0.0
    %4411 = vmatmul.mubr.f32.gmra.mxu0 %v4334
    %v4412 = vpop.f32.mrf.mxu0
    %v4413 = vadd.f32 0.0, %v4412
    %v4414 = vpop.f32.mrf.mxu0
    %4415 = vmatprep.mubr.f32.mxu0 0.0
    %4416 = vmatmul.mubr.f32.gmra.mxu0 %v4337
    %v4417 = vpop.f32.mrf.mxu0
    %v4418 = vadd.f32 0.0, %v4417
    %v4419 = vpop.f32.mrf.mxu0
    %4420 = vdwg.mxu0
    %4421 = vrot.lane.b32.xlu0 %v3177, 56
    %v4422 = vpop.permute.xlu0 %4421
    %4423 = vrot.lane.b32.xlu0 %v3182, 56
    %v4424 = vpop.permute.xlu0 %4423
    %4425 = vrot.lane.b32.xlu0 %v3187, 56
    %v4426 = vpop.permute.xlu0 %4425
    %v4430 = vsel %vm1300, %v4297, 0
    %v4433 = vsel %vm1300, %v4298, 0
    %v4436 = vsel %vm1300, %v4299, 0
    %v4438 = vsel %vm1587, %v4426, 0
    %4440 = vmatprep.subr.mxu0 0.0
    %4441 = vmatpush1.msra.mxu0 0.0
    %4442 = vmatprep.subr.mxu0 0.0
    %4443 = vmatpush1.msra.mxu0 0.0
    %4444 = vmatprep.subr.mxu0 0.0
    %4445 = vmatpush1.msra.mxu0 0.0
    %4446 = vmatprep.subr.mxu0 0.0
    %4447 = vmatpush1.msra.mxu0 0.0
    %4448 = vmatprep.subr.mxu0 0.0
    %4449 = vmatpush1.msra.mxu0 0.0
    %4450 = vmatprep.subr.mxu0 0.0
    %4451 = vmatpush1.msra.mxu0 0.0
    %4452 = vmatprep.subr.mxu0 0.0
    %4453 = vmatpush1.msra.mxu0 0.0
    %4454 = vmatprep.subr.mxu0 0.0
    %4455 = vmatpush1.msra.mxu0 0.0
    %4456 = vmatprep.subr.mxu0 0.0
    %4457 = vmatpush1.msra.mxu0 0.0
    %4458 = vmatprep.subr.mxu0 0.0
    %4459 = vmatpush1.msra.mxu0 0.0
    %4460 = vmatprep.subr.mxu0 0.0
    %4461 = vmatpush1.msra.mxu0 0.0
    %4462 = vmatprep.subr.mxu0 0.0
    %4463 = vmatpush1.msra.mxu0 0.0
    %4464 = vmatprep.subr.mxu0 0.0
    %4465 = vmatpush1.msra.mxu0 0.0
    %4466 = vmatprep.subr.mxu0 0.0
    %4467 = vmatpush1.msra.mxu0 %v4438
    %4468 = vmatprep.subr.mxu0 0.0
    %4469 = vmatpush1.msra.mxu0 %v4424
    %4470 = vmatprep.subr.mxu0 0.0
    %4471 = vmatpush1.msra.mxu0 %v4422
    %4472 = vmatprep.subr.mxu0 0.0
    %4473 = vmatpush2.msra.mxu0 0.0
    %4474 = vmatprep.subr.mxu0 0.0
    %4475 = vmatpush2.msra.mxu0 0.0
    %4476 = vmatprep.subr.mxu0 0.0
    %4477 = vmatpush2.msra.mxu0 0.0
    %4478 = vmatprep.subr.mxu0 0.0
    %4479 = vmatpush2.msra.mxu0 0.0
    %4480 = vmatprep.subr.mxu0 0.0
    %4481 = vmatpush2.msra.mxu0 0.0
    %4482 = vmatprep.subr.mxu0 0.0
    %4483 = vmatpush2.msra.mxu0 0.0
    %4484 = vmatprep.subr.mxu0 0.0
    %4485 = vmatpush2.msra.mxu0 0.0
    %4486 = vmatprep.subr.mxu0 0.0
    %4487 = vmatpush2.msra.mxu0 0.0
    %4488 = vmatprep.subr.mxu0 0.0
    %4489 = vmatpush2.msra.mxu0 0.0
    %4490 = vmatprep.subr.mxu0 0.0
    %4491 = vmatpush2.msra.mxu0 0.0
    %4492 = vmatprep.subr.mxu0 0.0
    %4493 = vmatpush2.msra.mxu0 0.0
    %4494 = vmatprep.subr.mxu0 0.0
    %4495 = vmatpush2.msra.mxu0 0.0
    %4496 = vmatprep.subr.mxu0 0.0
    %4497 = vmatpush2.msra.mxu0 0.0
    %4498 = vmatprep.subr.mxu0 0.0
    %4499 = vmatpush2.msra.mxu0 0.0
    %4500 = vmatprep.subr.mxu0 0.0
    %4501 = vmatpush2.msra.mxu0 0.0
    %4502 = vmatprep.subr.mxu0 0.0
    %4503 = vmatpush2.msra.mxu0 0.0
    %4504 = vmatprep.mubr.f32.mxu0 0.0
    %4505 = vmatmul.mubr.f32.gmra.mxu0 %v4430
    %v4506 = vpop.f32.mrf.mxu0
    %v4507 = vadd.f32 0.0, %v4506
    %v4508 = vpop.f32.mrf.mxu0
    %4509 = vmatprep.mubr.f32.mxu0 0.0
    %4510 = vmatmul.mubr.f32.gmra.mxu0 %v4433
    %v4511 = vpop.f32.mrf.mxu0
    %v4512 = vadd.f32 0.0, %v4511
    %v4513 = vpop.f32.mrf.mxu0
    %4514 = vmatprep.mubr.f32.mxu0 0.0
    %4515 = vmatmul.mubr.f32.gmra.mxu0 %v4436
    %v4516 = vpop.f32.mrf.mxu0
    %v4517 = vadd.f32 0.0, %v4516
    %v4518 = vpop.f32.mrf.mxu0
    %4519 = vdwg.mxu0
    %4520 = vrot.lane.b32.xlu0 %v3177, 48
    %v4521 = vpop.permute.xlu0 %4520
    %4522 = vrot.lane.b32.xlu0 %v3182, 48
    %v4523 = vpop.permute.xlu0 %4522
    %4524 = vrot.lane.b32.xlu0 %v3187, 48
    %v4525 = vpop.permute.xlu0 %4524
    %v4529 = vsel %vm1300, %v4300, 0
    %v4532 = vsel %vm1300, %v4301, 0
    %v4535 = vsel %vm1300, %v4302, 0
    %v4537 = vsel %vm1587, %v4525, 0
    %4539 = vmatprep.subr.mxu0 0.0
    %4540 = vmatpush1.msra.mxu0 0.0
    %4541 = vmatprep.subr.mxu0 0.0
    %4542 = vmatpush1.msra.mxu0 0.0
    %4543 = vmatprep.subr.mxu0 0.0
    %4544 = vmatpush1.msra.mxu0 0.0
    %4545 = vmatprep.subr.mxu0 0.0
    %4546 = vmatpush1.msra.mxu0 0.0
    %4547 = vmatprep.subr.mxu0 0.0
    %4548 = vmatpush1.msra.mxu0 0.0
    %4549 = vmatprep.subr.mxu0 0.0
    %4550 = vmatpush1.msra.mxu0 0.0
    %4551 = vmatprep.subr.mxu0 0.0
    %4552 = vmatpush1.msra.mxu0 0.0
    %4553 = vmatprep.subr.mxu0 0.0
    %4554 = vmatpush1.msra.mxu0 0.0
    %4555 = vmatprep.subr.mxu0 0.0
    %4556 = vmatpush1.msra.mxu0 0.0
    %4557 = vmatprep.subr.mxu0 0.0
    %4558 = vmatpush1.msra.mxu0 0.0
    %4559 = vmatprep.subr.mxu0 0.0
    %4560 = vmatpush1.msra.mxu0 0.0
    %4561 = vmatprep.subr.mxu0 0.0
    %4562 = vmatpush1.msra.mxu0 0.0
    %4563 = vmatprep.subr.mxu0 0.0
    %4564 = vmatpush1.msra.mxu0 0.0
    %4565 = vmatprep.subr.mxu0 0.0
    %4566 = vmatpush1.msra.mxu0 %v4537
    %4567 = vmatprep.subr.mxu0 0.0
    %4568 = vmatpush1.msra.mxu0 %v4523
    %4569 = vmatprep.subr.mxu0 0.0
    %4570 = vmatpush1.msra.mxu0 %v4521
    %4571 = vmatprep.subr.mxu0 0.0
    %4572 = vmatpush2.msra.mxu0 0.0
    %4573 = vmatprep.subr.mxu0 0.0
    %4574 = vmatpush2.msra.mxu0 0.0
    %4575 = vmatprep.subr.mxu0 0.0
    %4576 = vmatpush2.msra.mxu0 0.0
    %4577 = vmatprep.subr.mxu0 0.0
    %4578 = vmatpush2.msra.mxu0 0.0
    %4579 = vmatprep.subr.mxu0 0.0
    %4580 = vmatpush2.msra.mxu0 0.0
    %4581 = vmatprep.subr.mxu0 0.0
    %4582 = vmatpush2.msra.mxu0 0.0
    %4583 = vmatprep.subr.mxu0 0.0
    %4584 = vmatpush2.msra.mxu0 0.0
    %4585 = vmatprep.subr.mxu0 0.0
    %4586 = vmatpush2.msra.mxu0 0.0
    %4587 = vmatprep.subr.mxu0 0.0
    %4588 = vmatpush2.msra.mxu0 0.0
    %4589 = vmatprep.subr.mxu0 0.0
    %4590 = vmatpush2.msra.mxu0 0.0
    %4591 = vmatprep.subr.mxu0 0.0
    %4592 = vmatpush2.msra.mxu0 0.0
    %4593 = vmatprep.subr.mxu0 0.0
    %4594 = vmatpush2.msra.mxu0 0.0
    %4595 = vmatprep.subr.mxu0 0.0
    %4596 = vmatpush2.msra.mxu0 0.0
    %4597 = vmatprep.subr.mxu0 0.0
    %4598 = vmatpush2.msra.mxu0 0.0
    %4599 = vmatprep.subr.mxu0 0.0
    %4600 = vmatpush2.msra.mxu0 0.0
    %4601 = vmatprep.subr.mxu0 0.0
    %4602 = vmatpush2.msra.mxu0 0.0
    %4603 = vmatprep.mubr.f32.mxu0 0.0
    %4604 = vmatmul.mubr.f32.gmra.mxu0 %v4529
    %v4605 = vpop.f32.mrf.mxu0
    %v4606 = vadd.f32 0.0, %v4605
    %v4607 = vpop.f32.mrf.mxu0
    %4608 = vmatprep.mubr.f32.mxu0 0.0
    %4609 = vmatmul.mubr.f32.gmra.mxu0 %v4532
    %v4610 = vpop.f32.mrf.mxu0
    %v4611 = vadd.f32 0.0, %v4610
    %v4612 = vpop.f32.mrf.mxu0
    %4613 = vmatprep.mubr.f32.mxu0 0.0
    %4614 = vmatmul.mubr.f32.gmra.mxu0 %v4535
    %v4615 = vpop.f32.mrf.mxu0
    %v4616 = vadd.f32 0.0, %v4615
    %v4617 = vpop.f32.mrf.mxu0
    %4618 = vdwg.mxu0
    %4619 = vrot.lane.b32.xlu0 %v3177, 40
    %v4620 = vpop.permute.xlu0 %4619
    %4621 = vrot.lane.b32.xlu0 %v3182, 40
    %v4622 = vpop.permute.xlu0 %4621
    %4623 = vrot.lane.b32.xlu0 %v3187, 40
    %v4624 = vpop.permute.xlu0 %4623
    %v4628 = vsel %vm1300, %v4303, 0
    %v4631 = vsel %vm1300, %v4304, 0
    %v4634 = vsel %vm1300, %v4305, 0
    %v4636 = vsel %vm1587, %v4624, 0
    %4638 = vmatprep.subr.mxu0 0.0
    %4639 = vmatpush1.msra.mxu0 0.0
    %4640 = vmatprep.subr.mxu0 0.0
    %4641 = vmatpush1.msra.mxu0 0.0
    %4642 = vmatprep.subr.mxu0 0.0
    %4643 = vmatpush1.msra.mxu0 0.0
    %4644 = vmatprep.subr.mxu0 0.0
    %4645 = vmatpush1.msra.mxu0 0.0
    %4646 = vmatprep.subr.mxu0 0.0
    %4647 = vmatpush1.msra.mxu0 0.0
    %4648 = vmatprep.subr.mxu0 0.0
    %4649 = vmatpush1.msra.mxu0 0.0
    %4650 = vmatprep.subr.mxu0 0.0
    %4651 = vmatpush1.msra.mxu0 0.0
    %4652 = vmatprep.subr.mxu0 0.0
    %4653 = vmatpush1.msra.mxu0 0.0
    %4654 = vmatprep.subr.mxu0 0.0
    %4655 = vmatpush1.msra.mxu0 0.0
    %4656 = vmatprep.subr.mxu0 0.0
    %4657 = vmatpush1.msra.mxu0 0.0
    %4658 = vmatprep.subr.mxu0 0.0
    %4659 = vmatpush1.msra.mxu0 0.0
    %4660 = vmatprep.subr.mxu0 0.0
    %4661 = vmatpush1.msra.mxu0 0.0
    %4662 = vmatprep.subr.mxu0 0.0
    %4663 = vmatpush1.msra.mxu0 0.0
    %4664 = vmatprep.subr.mxu0 0.0
    %4665 = vmatpush1.msra.mxu0 %v4636
    %4666 = vmatprep.subr.mxu0 0.0
    %4667 = vmatpush1.msra.mxu0 %v4622
    %4668 = vmatprep.subr.mxu0 0.0
    %4669 = vmatpush1.msra.mxu0 %v4620
    %4670 = vmatprep.subr.mxu0 0.0
    %4671 = vmatpush2.msra.mxu0 0.0
    %4672 = vmatprep.subr.mxu0 0.0
    %4673 = vmatpush2.msra.mxu0 0.0
    %4674 = vmatprep.subr.mxu0 0.0
    %4675 = vmatpush2.msra.mxu0 0.0
    %4676 = vmatprep.subr.mxu0 0.0
    %4677 = vmatpush2.msra.mxu0 0.0
    %4678 = vmatprep.subr.mxu0 0.0
    %4679 = vmatpush2.msra.mxu0 0.0
    %4680 = vmatprep.subr.mxu0 0.0
    %4681 = vmatpush2.msra.mxu0 0.0
    %4682 = vmatprep.subr.mxu0 0.0
    %4683 = vmatpush2.msra.mxu0 0.0
    %4684 = vmatprep.subr.mxu0 0.0
    %4685 = vmatpush2.msra.mxu0 0.0
    %4686 = vmatprep.subr.mxu0 0.0
    %4687 = vmatpush2.msra.mxu0 0.0
    %4688 = vmatprep.subr.mxu0 0.0
    %4689 = vmatpush2.msra.mxu0 0.0
    %4690 = vmatprep.subr.mxu0 0.0
    %4691 = vmatpush2.msra.mxu0 0.0
    %4692 = vmatprep.subr.mxu0 0.0
    %4693 = vmatpush2.msra.mxu0 0.0
    %4694 = vmatprep.subr.mxu0 0.0
    %4695 = vmatpush2.msra.mxu0 0.0
    %4696 = vmatprep.subr.mxu0 0.0
    %4697 = vmatpush2.msra.mxu0 0.0
    %4698 = vmatprep.subr.mxu0 0.0
    %4699 = vmatpush2.msra.mxu0 0.0
    %4700 = vmatprep.subr.mxu0 0.0
    %4701 = vmatpush2.msra.mxu0 0.0
    %4702 = vmatprep.mubr.f32.mxu0 0.0
    %4703 = vmatmul.mubr.f32.gmra.mxu0 %v4628
    %v4704 = vpop.f32.mrf.mxu0
    %v4705 = vadd.f32 0.0, %v4704
    %v4706 = vpop.f32.mrf.mxu0
    %4707 = vmatprep.mubr.f32.mxu0 0.0
    %4708 = vmatmul.mubr.f32.gmra.mxu0 %v4631
    %v4709 = vpop.f32.mrf.mxu0
    %v4710 = vadd.f32 0.0, %v4709
    %v4711 = vpop.f32.mrf.mxu0
    %4712 = vmatprep.mubr.f32.mxu0 0.0
    %4713 = vmatmul.mubr.f32.gmra.mxu0 %v4634
    %v4714 = vpop.f32.mrf.mxu0
    %v4715 = vadd.f32 0.0, %v4714
    %v4716 = vpop.f32.mrf.mxu0
    %4717 = vdwg.mxu0
    %4721 = vrot.lane.b32.xlu0 %v4507, 8
    %v4722 = vpop.permute.xlu0 %4721
    %4723 = vrot.lane.b32.xlu0 %v4512, 8
    %v4724 = vpop.permute.xlu0 %4723
    %4725 = vrot.lane.b32.xlu0 %v4517, 8
    %v4726 = vpop.permute.xlu0 %4725
    %4733 = vrot.lane.b32.xlu0 %v4606, 16
    %v4734 = vpop.permute.xlu0 %4733
    %4735 = vrot.lane.b32.xlu0 %v4611, 16
    %v4736 = vpop.permute.xlu0 %4735
    %4737 = vrot.lane.b32.xlu0 %v4616, 16
    %v4738 = vpop.permute.xlu0 %4737
    %4745 = vrot.lane.b32.xlu0 %v4705, 24
    %v4746 = vpop.permute.xlu0 %4745
    %4747 = vrot.lane.b32.xlu0 %v4710, 24
    %v4748 = vpop.permute.xlu0 %4747
    %4749 = vrot.lane.b32.xlu0 %v4715, 24
    %v4750 = vpop.permute.xlu0 %4749
    %v4754 = vsel %vm453, %v4408, %v4722
    %v4755 = vsel %vm453, %v4413, %v4724
    %v4756 = vsel %vm453, %v4418, %v4726
    %v4757 = vsel %vm2006, %v4754, %v4734
    %v4758 = vsel %vm2006, %v4755, %v4736
    %v4759 = vsel %vm2006, %v4756, %v4738
    %v4760 = vsel %vm2010, %v4757, %v4746
    %v4761 = vsel %vm2010, %v4758, %v4748
    %v4762 = vsel %vm2010, %v4759, %v4750
    %v4764 = vsel %vm160, %v4760, 0
    %v4767 = vsel %vm160, %v4761, 0
    %v4770 = vsel %vm160, %v4762, 0
    %4772 = vmatprep.subr.mxu0 0.0
    %4773 = vmatpush1.msra.mxu0 0.0
    %4774 = vmatprep.subr.mxu0 0.0
    %4775 = vmatpush1.msra.mxu0 0.0
    %4776 = vmatprep.subr.mxu0 0.0
    %4777 = vmatpush1.msra.mxu0 0.0
    %4778 = vmatprep.subr.mxu0 0.0
    %4779 = vmatpush1.msra.mxu0 0.0
    %4780 = vmatprep.subr.mxu0 0.0
    %4781 = vmatpush1.msra.mxu0 0.0
    %4782 = vmatprep.subr.mxu0 0.0
    %4783 = vmatpush1.msra.mxu0 0.0
    %4784 = vmatprep.subr.mxu0 0.0
    %4785 = vmatpush1.msra.mxu0 0.0
    %4786 = vmatprep.subr.mxu0 0.0
    %4787 = vmatpush1.msra.mxu0 0.0
    %4788 = vmatprep.subr.mxu0 0.0
    %4789 = vmatpush1.msra.mxu0 0.0
    %4790 = vmatprep.subr.mxu0 0.0
    %4791 = vmatpush1.msra.mxu0 0.0
    %4792 = vmatprep.subr.mxu0 0.0
    %4793 = vmatpush1.msra.mxu0 0.0
    %4794 = vmatprep.subr.mxu0 0.0
    %4795 = vmatpush1.msra.mxu0 0.0
    %4796 = vmatprep.subr.mxu0 0.0
    %4797 = vmatpush1.msra.mxu0 %v4321
    %4798 = vmatprep.subr.mxu0 0.0
    %4799 = vmatpush1.msra.mxu0 %v4320
    %4800 = vmatprep.subr.mxu0 0.0
    %4801 = vmatpush1.msra.mxu0 %v4319
    %4802 = vmatprep.subr.mxu0 0.0
    %4803 = vmatpush1.msra.mxu0 %v4318
    %4804 = vmatprep.subr.mxu0 0.0
    %4805 = vmatpush2.msra.mxu0 0.0
    %4806 = vmatprep.subr.mxu0 0.0
    %4807 = vmatpush2.msra.mxu0 0.0
    %4808 = vmatprep.subr.mxu0 0.0
    %4809 = vmatpush2.msra.mxu0 0.0
    %4810 = vmatprep.subr.mxu0 0.0
    %4811 = vmatpush2.msra.mxu0 0.0
    %4812 = vmatprep.subr.mxu0 0.0
    %4813 = vmatpush2.msra.mxu0 0.0
    %4814 = vmatprep.subr.mxu0 0.0
    %4815 = vmatpush2.msra.mxu0 0.0
    %4816 = vmatprep.subr.mxu0 0.0
    %4817 = vmatpush2.msra.mxu0 0.0
    %4818 = vmatprep.subr.mxu0 0.0
    %4819 = vmatpush2.msra.mxu0 0.0
    %4820 = vmatprep.subr.mxu0 0.0
    %4821 = vmatpush2.msra.mxu0 0.0
    %4822 = vmatprep.subr.mxu0 0.0
    %4823 = vmatpush2.msra.mxu0 0.0
    %4824 = vmatprep.subr.mxu0 0.0
    %4825 = vmatpush2.msra.mxu0 0.0
    %4826 = vmatprep.subr.mxu0 0.0
    %4827 = vmatpush2.msra.mxu0 0.0
    %4828 = vmatprep.subr.mxu0 0.0
    %4829 = vmatpush2.msra.mxu0 0.0
    %4830 = vmatprep.subr.mxu0 0.0
    %4831 = vmatpush2.msra.mxu0 0.0
    %4832 = vmatprep.subr.mxu0 0.0
    %4833 = vmatpush2.msra.mxu0 0.0
    %4834 = vmatprep.subr.mxu0 0.0
    %4835 = vmatpush2.msra.mxu0 0.0
    %4836 = vmatprep.mubr.f32.mxu0 0.0
    %4837 = vmatmul.mubr.f32.gmra.mxu0 %v4764
    %v4838 = vpop.f32.mrf.mxu0
    %v4839 = vadd.f32 0.0, %v4838
    %v4840 = vpop.f32.mrf.mxu0
    %4841 = vmatprep.mubr.f32.mxu0 0.0
    %4842 = vmatmul.mubr.f32.gmra.mxu0 %v4767
    %v4843 = vpop.f32.mrf.mxu0
    %v4844 = vadd.f32 0.0, %v4843
    %v4845 = vpop.f32.mrf.mxu0
    %4846 = vmatprep.mubr.f32.mxu0 0.0
    %4847 = vmatmul.mubr.f32.gmra.mxu0 %v4770
    %v4848 = vpop.f32.mrf.mxu0
    %v4849 = vadd.f32 0.0, %v4848
    %v4850 = vpop.f32.mrf.mxu0
    %4851 = vdwg.mxu0
    %4852 = vrot.lane.b32.xlu0 %v3617, 64
    %v4853 = vpop.permute.xlu0 %4852
    %4854 = vrot.lane.b32.xlu0 %v3619, 64
    %v4855 = vpop.permute.xlu0 %4854
    %4856 = vrot.lane.b32.xlu0 %v3618, 64
    %v4857 = vpop.permute.xlu0 %4856
    %v4861 = vsel %vm1300, %v4306, 0
    %v4864 = vsel %vm1300, %v4307, 0
    %v4867 = vsel %vm1300, %v4308, 0
    %v4869 = vsel %vm1587, %v4857, 0
    %4871 = vmatprep.subr.mxu0 0.0
    %4872 = vmatpush1.msra.mxu0 0.0
    %4873 = vmatprep.subr.mxu0 0.0
    %4874 = vmatpush1.msra.mxu0 0.0
    %4875 = vmatprep.subr.mxu0 0.0
    %4876 = vmatpush1.msra.mxu0 0.0
    %4877 = vmatprep.subr.mxu0 0.0
    %4878 = vmatpush1.msra.mxu0 0.0
    %4879 = vmatprep.subr.mxu0 0.0
    %4880 = vmatpush1.msra.mxu0 0.0
    %4881 = vmatprep.subr.mxu0 0.0
    %4882 = vmatpush1.msra.mxu0 0.0
    %4883 = vmatprep.subr.mxu0 0.0
    %4884 = vmatpush1.msra.mxu0 0.0
    %4885 = vmatprep.subr.mxu0 0.0
    %4886 = vmatpush1.msra.mxu0 0.0
    %4887 = vmatprep.subr.mxu0 0.0
    %4888 = vmatpush1.msra.mxu0 0.0
    %4889 = vmatprep.subr.mxu0 0.0
    %4890 = vmatpush1.msra.mxu0 0.0
    %4891 = vmatprep.subr.mxu0 0.0
    %4892 = vmatpush1.msra.mxu0 0.0
    %4893 = vmatprep.subr.mxu0 0.0
    %4894 = vmatpush1.msra.mxu0 0.0
    %4895 = vmatprep.subr.mxu0 0.0
    %4896 = vmatpush1.msra.mxu0 0.0
    %4897 = vmatprep.subr.mxu0 0.0
    %4898 = vmatpush1.msra.mxu0 %v4869
    %4899 = vmatprep.subr.mxu0 0.0
    %4900 = vmatpush1.msra.mxu0 %v4855
    %4901 = vmatprep.subr.mxu0 0.0
    %4902 = vmatpush1.msra.mxu0 %v4853
    %4903 = vmatprep.subr.mxu0 0.0
    %4904 = vmatpush2.msra.mxu0 0.0
    %4905 = vmatprep.subr.mxu0 0.0
    %4906 = vmatpush2.msra.mxu0 0.0
    %4907 = vmatprep.subr.mxu0 0.0
    %4908 = vmatpush2.msra.mxu0 0.0
    %4909 = vmatprep.subr.mxu0 0.0
    %4910 = vmatpush2.msra.mxu0 0.0
    %4911 = vmatprep.subr.mxu0 0.0
    %4912 = vmatpush2.msra.mxu0 0.0
    %4913 = vmatprep.subr.mxu0 0.0
    %4914 = vmatpush2.msra.mxu0 0.0
    %4915 = vmatprep.subr.mxu0 0.0
    %4916 = vmatpush2.msra.mxu0 0.0
    %4917 = vmatprep.subr.mxu0 0.0
    %4918 = vmatpush2.msra.mxu0 0.0
    %4919 = vmatprep.subr.mxu0 0.0
    %4920 = vmatpush2.msra.mxu0 0.0
    %4921 = vmatprep.subr.mxu0 0.0
    %4922 = vmatpush2.msra.mxu0 0.0
    %4923 = vmatprep.subr.mxu0 0.0
    %4924 = vmatpush2.msra.mxu0 0.0
    %4925 = vmatprep.subr.mxu0 0.0
    %4926 = vmatpush2.msra.mxu0 0.0
    %4927 = vmatprep.subr.mxu0 0.0
    %4928 = vmatpush2.msra.mxu0 0.0
    %4929 = vmatprep.subr.mxu0 0.0
    %4930 = vmatpush2.msra.mxu0 0.0
    %4931 = vmatprep.subr.mxu0 0.0
    %4932 = vmatpush2.msra.mxu0 0.0
    %4933 = vmatprep.subr.mxu0 0.0
    %4934 = vmatpush2.msra.mxu0 0.0
    %4935 = vmatprep.mubr.f32.mxu0 0.0
    %4936 = vmatmul.mubr.f32.gmra.mxu0 %v4861
    %v4937 = vpop.f32.mrf.mxu0
    %v4938 = vadd.f32 0.0, %v4937
    %v4939 = vpop.f32.mrf.mxu0
    %4940 = vmatprep.mubr.f32.mxu0 0.0
    %4941 = vmatmul.mubr.f32.gmra.mxu0 %v4864
    %v4942 = vpop.f32.mrf.mxu0
    %v4943 = vadd.f32 0.0, %v4942
    %v4944 = vpop.f32.mrf.mxu0
    %4945 = vmatprep.mubr.f32.mxu0 0.0
    %4946 = vmatmul.mubr.f32.gmra.mxu0 %v4867
    %v4947 = vpop.f32.mrf.mxu0
    %v4948 = vadd.f32 0.0, %v4947
    %v4949 = vpop.f32.mrf.mxu0
    %4950 = vdwg.mxu0
    %4951 = vrot.lane.b32.xlu0 %v3617, 56
    %v4952 = vpop.permute.xlu0 %4951
    %4953 = vrot.lane.b32.xlu0 %v3619, 56
    %v4954 = vpop.permute.xlu0 %4953
    %4955 = vrot.lane.b32.xlu0 %v3618, 56
    %v4956 = vpop.permute.xlu0 %4955
    %v4960 = vsel %vm1300, %v4309, 0
    %v4963 = vsel %vm1300, %v4310, 0
    %v4966 = vsel %vm1300, %v4311, 0
    %v4968 = vsel %vm1587, %v4956, 0
    %4970 = vmatprep.subr.mxu0 0.0
    %4971 = vmatpush1.msra.mxu0 0.0
    %4972 = vmatprep.subr.mxu0 0.0
    %4973 = vmatpush1.msra.mxu0 0.0
    %4974 = vmatprep.subr.mxu0 0.0
    %4975 = vmatpush1.msra.mxu0 0.0
    %4976 = vmatprep.subr.mxu0 0.0
    %4977 = vmatpush1.msra.mxu0 0.0
    %4978 = vmatprep.subr.mxu0 0.0
    %4979 = vmatpush1.msra.mxu0 0.0
    %4980 = vmatprep.subr.mxu0 0.0
    %4981 = vmatpush1.msra.mxu0 0.0
    %4982 = vmatprep.subr.mxu0 0.0
    %4983 = vmatpush1.msra.mxu0 0.0
    %4984 = vmatprep.subr.mxu0 0.0
    %4985 = vmatpush1.msra.mxu0 0.0
    %4986 = vmatprep.subr.mxu0 0.0
    %4987 = vmatpush1.msra.mxu0 0.0
    %4988 = vmatprep.subr.mxu0 0.0
    %4989 = vmatpush1.msra.mxu0 0.0
    %4990 = vmatprep.subr.mxu0 0.0
    %4991 = vmatpush1.msra.mxu0 0.0
    %4992 = vmatprep.subr.mxu0 0.0
    %4993 = vmatpush1.msra.mxu0 0.0
    %4994 = vmatprep.subr.mxu0 0.0
    %4995 = vmatpush1.msra.mxu0 0.0
    %4996 = vmatprep.subr.mxu0 0.0
    %4997 = vmatpush1.msra.mxu0 %v4968
    %4998 = vmatprep.subr.mxu0 0.0
    %4999 = vmatpush1.msra.mxu0 %v4954
    %5000 = vmatprep.subr.mxu0 0.0
    %5001 = vmatpush1.msra.mxu0 %v4952
    %5002 = vmatprep.subr.mxu0 0.0
    %5003 = vmatpush2.msra.mxu0 0.0
    %5004 = vmatprep.subr.mxu0 0.0
    %5005 = vmatpush2.msra.mxu0 0.0
    %5006 = vmatprep.subr.mxu0 0.0
    %5007 = vmatpush2.msra.mxu0 0.0
    %5008 = vmatprep.subr.mxu0 0.0
    %5009 = vmatpush2.msra.mxu0 0.0
    %5010 = vmatprep.subr.mxu0 0.0
    %5011 = vmatpush2.msra.mxu0 0.0
    %5012 = vmatprep.subr.mxu0 0.0
    %5013 = vmatpush2.msra.mxu0 0.0
    %5014 = vmatprep.subr.mxu0 0.0
    %5015 = vmatpush2.msra.mxu0 0.0
    %5016 = vmatprep.subr.mxu0 0.0
    %5017 = vmatpush2.msra.mxu0 0.0
    %5018 = vmatprep.subr.mxu0 0.0
    %5019 = vmatpush2.msra.mxu0 0.0
    %5020 = vmatprep.subr.mxu0 0.0
    %5021 = vmatpush2.msra.mxu0 0.0
    %5022 = vmatprep.subr.mxu0 0.0
    %5023 = vmatpush2.msra.mxu0 0.0
    %5024 = vmatprep.subr.mxu0 0.0
    %5025 = vmatpush2.msra.mxu0 0.0
    %5026 = vmatprep.subr.mxu0 0.0
    %5027 = vmatpush2.msra.mxu0 0.0
    %5028 = vmatprep.subr.mxu0 0.0
    %5029 = vmatpush2.msra.mxu0 0.0
    %5030 = vmatprep.subr.mxu0 0.0
    %5031 = vmatpush2.msra.mxu0 0.0
    %5032 = vmatprep.subr.mxu0 0.0
    %5033 = vmatpush2.msra.mxu0 0.0
    %5034 = vmatprep.mubr.f32.mxu0 0.0
    %5035 = vmatmul.mubr.f32.gmra.mxu0 %v4960
    %v5036 = vpop.f32.mrf.mxu0
    %v5037 = vadd.f32 0.0, %v5036
    %v5038 = vpop.f32.mrf.mxu0
    %5039 = vmatprep.mubr.f32.mxu0 0.0
    %5040 = vmatmul.mubr.f32.gmra.mxu0 %v4963
    %v5041 = vpop.f32.mrf.mxu0
    %v5042 = vadd.f32 0.0, %v5041
    %v5043 = vpop.f32.mrf.mxu0
    %5044 = vmatprep.mubr.f32.mxu0 0.0
    %5045 = vmatmul.mubr.f32.gmra.mxu0 %v4966
    %v5046 = vpop.f32.mrf.mxu0
    %v5047 = vadd.f32 0.0, %v5046
    %v5048 = vpop.f32.mrf.mxu0
    %5049 = vdwg.mxu0
    %5050 = vrot.lane.b32.xlu0 %v3617, 48
    %v5051 = vpop.permute.xlu0 %5050
    %5052 = vrot.lane.b32.xlu0 %v3619, 48
    %v5053 = vpop.permute.xlu0 %5052
    %5054 = vrot.lane.b32.xlu0 %v3618, 48
    %v5055 = vpop.permute.xlu0 %5054
    %v5059 = vsel %vm1300, %v4312, 0
    %v5062 = vsel %vm1300, %v4313, 0
    %v5065 = vsel %vm1300, %v4314, 0
    %v5067 = vsel %vm1587, %v5055, 0
    %5069 = vmatprep.subr.mxu0 0.0
    %5070 = vmatpush1.msra.mxu0 0.0
    %5071 = vmatprep.subr.mxu0 0.0
    %5072 = vmatpush1.msra.mxu0 0.0
    %5073 = vmatprep.subr.mxu0 0.0
    %5074 = vmatpush1.msra.mxu0 0.0
    %5075 = vmatprep.subr.mxu0 0.0
    %5076 = vmatpush1.msra.mxu0 0.0
    %5077 = vmatprep.subr.mxu0 0.0
    %5078 = vmatpush1.msra.mxu0 0.0
    %5079 = vmatprep.subr.mxu0 0.0
    %5080 = vmatpush1.msra.mxu0 0.0
    %5081 = vmatprep.subr.mxu0 0.0
    %5082 = vmatpush1.msra.mxu0 0.0
    %5083 = vmatprep.subr.mxu0 0.0
    %5084 = vmatpush1.msra.mxu0 0.0
    %5085 = vmatprep.subr.mxu0 0.0
    %5086 = vmatpush1.msra.mxu0 0.0
    %5087 = vmatprep.subr.mxu0 0.0
    %5088 = vmatpush1.msra.mxu0 0.0
    %5089 = vmatprep.subr.mxu0 0.0
    %5090 = vmatpush1.msra.mxu0 0.0
    %5091 = vmatprep.subr.mxu0 0.0
    %5092 = vmatpush1.msra.mxu0 0.0
    %5093 = vmatprep.subr.mxu0 0.0
    %5094 = vmatpush1.msra.mxu0 0.0
    %5095 = vmatprep.subr.mxu0 0.0
    %5096 = vmatpush1.msra.mxu0 %v5067
    %5097 = vmatprep.subr.mxu0 0.0
    %5098 = vmatpush1.msra.mxu0 %v5053
    %5099 = vmatprep.subr.mxu0 0.0
    %5100 = vmatpush1.msra.mxu0 %v5051
    %5101 = vmatprep.subr.mxu0 0.0
    %5102 = vmatpush2.msra.mxu0 0.0
    %5103 = vmatprep.subr.mxu0 0.0
    %5104 = vmatpush2.msra.mxu0 0.0
    %5105 = vmatprep.subr.mxu0 0.0
    %5106 = vmatpush2.msra.mxu0 0.0
    %5107 = vmatprep.subr.mxu0 0.0
    %5108 = vmatpush2.msra.mxu0 0.0
    %5109 = vmatprep.subr.mxu0 0.0
    %5110 = vmatpush2.msra.mxu0 0.0
    %5111 = vmatprep.subr.mxu0 0.0
    %5112 = vmatpush2.msra.mxu0 0.0
    %5113 = vmatprep.subr.mxu0 0.0
    %5114 = vmatpush2.msra.mxu0 0.0
    %5115 = vmatprep.subr.mxu0 0.0
    %5116 = vmatpush2.msra.mxu0 0.0
    %5117 = vmatprep.subr.mxu0 0.0
    %5118 = vmatpush2.msra.mxu0 0.0
    %5119 = vmatprep.subr.mxu0 0.0
    %5120 = vmatpush2.msra.mxu0 0.0
    %5121 = vmatprep.subr.mxu0 0.0
    %5122 = vmatpush2.msra.mxu0 0.0
    %5123 = vmatprep.subr.mxu0 0.0
    %5124 = vmatpush2.msra.mxu0 0.0
    %5125 = vmatprep.subr.mxu0 0.0
    %5126 = vmatpush2.msra.mxu0 0.0
    %5127 = vmatprep.subr.mxu0 0.0
    %5128 = vmatpush2.msra.mxu0 0.0
    %5129 = vmatprep.subr.mxu0 0.0
    %5130 = vmatpush2.msra.mxu0 0.0
    %5131 = vmatprep.subr.mxu0 0.0
    %5132 = vmatpush2.msra.mxu0 0.0
    %5133 = vmatprep.mubr.f32.mxu0 0.0
    %5134 = vmatmul.mubr.f32.gmra.mxu0 %v5059
    %v5135 = vpop.f32.mrf.mxu0
    %v5136 = vadd.f32 0.0, %v5135
    %v5137 = vpop.f32.mrf.mxu0
    %5138 = vmatprep.mubr.f32.mxu0 0.0
    %5139 = vmatmul.mubr.f32.gmra.mxu0 %v5062
    %v5140 = vpop.f32.mrf.mxu0
    %v5141 = vadd.f32 0.0, %v5140
    %v5142 = vpop.f32.mrf.mxu0
    %5143 = vmatprep.mubr.f32.mxu0 0.0
    %5144 = vmatmul.mubr.f32.gmra.mxu0 %v5065
    %v5145 = vpop.f32.mrf.mxu0
    %v5146 = vadd.f32 0.0, %v5145
    %v5147 = vpop.f32.mrf.mxu0
    %5148 = vdwg.mxu0
    %5149 = vrot.lane.b32.xlu0 %v3617, 40
    %v5150 = vpop.permute.xlu0 %5149
    %5151 = vrot.lane.b32.xlu0 %v3619, 40
    %v5152 = vpop.permute.xlu0 %5151
    %5153 = vrot.lane.b32.xlu0 %v3618, 40
    %v5154 = vpop.permute.xlu0 %5153
    %v5158 = vsel %vm1300, %v4315, 0
    %v5161 = vsel %vm1300, %v4316, 0
    %v5164 = vsel %vm1300, %v4317, 0
    %v5166 = vsel %vm1587, %v5154, 0
    %5168 = vmatprep.subr.mxu0 0.0
    %5169 = vmatpush1.msra.mxu0 0.0
    %5170 = vmatprep.subr.mxu0 0.0
    %5171 = vmatpush1.msra.mxu0 0.0
    %5172 = vmatprep.subr.mxu0 0.0
    %5173 = vmatpush1.msra.mxu0 0.0
    %5174 = vmatprep.subr.mxu0 0.0
    %5175 = vmatpush1.msra.mxu0 0.0
    %5176 = vmatprep.subr.mxu0 0.0
    %5177 = vmatpush1.msra.mxu0 0.0
    %5178 = vmatprep.subr.mxu0 0.0
    %5179 = vmatpush1.msra.mxu0 0.0
    %5180 = vmatprep.subr.mxu0 0.0
    %5181 = vmatpush1.msra.mxu0 0.0
    %5182 = vmatprep.subr.mxu0 0.0
    %5183 = vmatpush1.msra.mxu0 0.0
    %5184 = vmatprep.subr.mxu0 0.0
    %5185 = vmatpush1.msra.mxu0 0.0
    %5186 = vmatprep.subr.mxu0 0.0
    %5187 = vmatpush1.msra.mxu0 0.0
    %5188 = vmatprep.subr.mxu0 0.0
    %5189 = vmatpush1.msra.mxu0 0.0
    %5190 = vmatprep.subr.mxu0 0.0
    %5191 = vmatpush1.msra.mxu0 0.0
    %5192 = vmatprep.subr.mxu0 0.0
    %5193 = vmatpush1.msra.mxu0 0.0
    %5194 = vmatprep.subr.mxu0 0.0
    %5195 = vmatpush1.msra.mxu0 %v5166
    %5196 = vmatprep.subr.mxu0 0.0
    %5197 = vmatpush1.msra.mxu0 %v5152
    %5198 = vmatprep.subr.mxu0 0.0
    %5199 = vmatpush1.msra.mxu0 %v5150
    %5200 = vmatprep.subr.mxu0 0.0
    %5201 = vmatpush2.msra.mxu0 0.0
    %5202 = vmatprep.subr.mxu0 0.0
    %5203 = vmatpush2.msra.mxu0 0.0
    %5204 = vmatprep.subr.mxu0 0.0
    %5205 = vmatpush2.msra.mxu0 0.0
    %5206 = vmatprep.subr.mxu0 0.0
    %5207 = vmatpush2.msra.mxu0 0.0
    %5208 = vmatprep.subr.mxu0 0.0
    %5209 = vmatpush2.msra.mxu0 0.0
    %5210 = vmatprep.subr.mxu0 0.0
    %5211 = vmatpush2.msra.mxu0 0.0
    %5212 = vmatprep.subr.mxu0 0.0
    %5213 = vmatpush2.msra.mxu0 0.0
    %5214 = vmatprep.subr.mxu0 0.0
    %5215 = vmatpush2.msra.mxu0 0.0
    %5216 = vmatprep.subr.mxu0 0.0
    %5217 = vmatpush2.msra.mxu0 0.0
    %5218 = vmatprep.subr.mxu0 0.0
    %5219 = vmatpush2.msra.mxu0 0.0
    %5220 = vmatprep.subr.mxu0 0.0
    %5221 = vmatpush2.msra.mxu0 0.0
    %5222 = vmatprep.subr.mxu0 0.0
    %5223 = vmatpush2.msra.mxu0 0.0
    %5224 = vmatprep.subr.mxu0 0.0
    %5225 = vmatpush2.msra.mxu0 0.0
    %5226 = vmatprep.subr.mxu0 0.0
    %5227 = vmatpush2.msra.mxu0 0.0
    %5228 = vmatprep.subr.mxu0 0.0
    %5229 = vmatpush2.msra.mxu0 0.0
    %5230 = vmatprep.subr.mxu0 0.0
    %5231 = vmatpush2.msra.mxu0 0.0
    %5232 = vmatprep.mubr.f32.mxu0 0.0
    %5233 = vmatmul.mubr.f32.gmra.mxu0 %v5158
    %v5234 = vpop.f32.mrf.mxu0
    %v5235 = vadd.f32 0.0, %v5234
    %v5236 = vpop.f32.mrf.mxu0
    %5237 = vmatprep.mubr.f32.mxu0 0.0
    %5238 = vmatmul.mubr.f32.gmra.mxu0 %v5161
    %v5239 = vpop.f32.mrf.mxu0
    %v5240 = vadd.f32 0.0, %v5239
    %v5241 = vpop.f32.mrf.mxu0
    %5242 = vmatprep.mubr.f32.mxu0 0.0
    %5243 = vmatmul.mubr.f32.gmra.mxu0 %v5164
    %v5244 = vpop.f32.mrf.mxu0
    %v5245 = vadd.f32 0.0, %v5244
    %v5246 = vpop.f32.mrf.mxu0
    %5247 = vdwg.mxu0
    %5251 = vrot.lane.b32.xlu0 %v5037, 8
    %v5252 = vpop.permute.xlu0 %5251
    %5253 = vrot.lane.b32.xlu0 %v5042, 8
    %v5254 = vpop.permute.xlu0 %5253
    %5255 = vrot.lane.b32.xlu0 %v5047, 8
    %v5256 = vpop.permute.xlu0 %5255
    %5263 = vrot.lane.b32.xlu0 %v5136, 16
    %v5264 = vpop.permute.xlu0 %5263
    %5265 = vrot.lane.b32.xlu0 %v5141, 16
    %v5266 = vpop.permute.xlu0 %5265
    %5267 = vrot.lane.b32.xlu0 %v5146, 16
    %v5268 = vpop.permute.xlu0 %5267
    %5275 = vrot.lane.b32.xlu0 %v5235, 24
    %v5276 = vpop.permute.xlu0 %5275
    %5277 = vrot.lane.b32.xlu0 %v5240, 24
    %v5278 = vpop.permute.xlu0 %5277
    %5279 = vrot.lane.b32.xlu0 %v5245, 24
    %v5280 = vpop.permute.xlu0 %5279
    %v5284 = vsel %vm453, %v4938, %v5252
    %v5285 = vsel %vm453, %v4943, %v5254
    %v5286 = vsel %vm453, %v4948, %v5256
    %v5287 = vsel %vm2006, %v5284, %v5264
    %v5288 = vsel %vm2006, %v5285, %v5266
    %v5289 = vsel %vm2006, %v5286, %v5268
    %v5290 = vsel %vm2010, %v5287, %v5276
    %v5291 = vsel %vm2010, %v5288, %v5278
    %v5292 = vsel %vm2010, %v5289, %v5280
    %v5294 = vsel %vm160, %v5290, 0
    %v5297 = vsel %vm160, %v5291, 0
    %v5300 = vsel %vm160, %v5292, 0
    %5302 = vmatprep.subr.mxu0 0.0
    %5303 = vmatpush1.msra.mxu0 0.0
    %5304 = vmatprep.subr.mxu0 0.0
    %5305 = vmatpush1.msra.mxu0 0.0
    %5306 = vmatprep.subr.mxu0 0.0
    %5307 = vmatpush1.msra.mxu0 0.0
    %5308 = vmatprep.subr.mxu0 0.0
    %5309 = vmatpush1.msra.mxu0 0.0
    %5310 = vmatprep.subr.mxu0 0.0
    %5311 = vmatpush1.msra.mxu0 0.0
    %5312 = vmatprep.subr.mxu0 0.0
    %5313 = vmatpush1.msra.mxu0 0.0
    %5314 = vmatprep.subr.mxu0 0.0
    %5315 = vmatpush1.msra.mxu0 0.0
    %5316 = vmatprep.subr.mxu0 0.0
    %5317 = vmatpush1.msra.mxu0 0.0
    %5318 = vmatprep.subr.mxu0 0.0
    %5319 = vmatpush1.msra.mxu0 0.0
    %5320 = vmatprep.subr.mxu0 0.0
    %5321 = vmatpush1.msra.mxu0 0.0
    %5322 = vmatprep.subr.mxu0 0.0
    %5323 = vmatpush1.msra.mxu0 0.0
    %5324 = vmatprep.subr.mxu0 0.0
    %5325 = vmatpush1.msra.mxu0 0.0
    %5326 = vmatprep.subr.mxu0 0.0
    %5327 = vmatpush1.msra.mxu0 %v4321
    %5328 = vmatprep.subr.mxu0 0.0
    %5329 = vmatpush1.msra.mxu0 %v4320
    %5330 = vmatprep.subr.mxu0 0.0
    %5331 = vmatpush1.msra.mxu0 %v4319
    %5332 = vmatprep.subr.mxu0 0.0
    %5333 = vmatpush1.msra.mxu0 %v4318
    %5334 = vmatprep.subr.mxu0 0.0
    %5335 = vmatpush2.msra.mxu0 0.0
    %5336 = vmatprep.subr.mxu0 0.0
    %5337 = vmatpush2.msra.mxu0 0.0
    %5338 = vmatprep.subr.mxu0 0.0
    %5339 = vmatpush2.msra.mxu0 0.0
    %5340 = vmatprep.subr.mxu0 0.0
    %5341 = vmatpush2.msra.mxu0 0.0
    %5342 = vmatprep.subr.mxu0 0.0
    %5343 = vmatpush2.msra.mxu0 0.0
    %5344 = vmatprep.subr.mxu0 0.0
    %5345 = vmatpush2.msra.mxu0 0.0
    %5346 = vmatprep.subr.mxu0 0.0
    %5347 = vmatpush2.msra.mxu0 0.0
    %5348 = vmatprep.subr.mxu0 0.0
    %5349 = vmatpush2.msra.mxu0 0.0
    %5350 = vmatprep.subr.mxu0 0.0
    %5351 = vmatpush2.msra.mxu0 0.0
    %5352 = vmatprep.subr.mxu0 0.0
    %5353 = vmatpush2.msra.mxu0 0.0
    %5354 = vmatprep.subr.mxu0 0.0
    %5355 = vmatpush2.msra.mxu0 0.0
    %5356 = vmatprep.subr.mxu0 0.0
    %5357 = vmatpush2.msra.mxu0 0.0
    %5358 = vmatprep.subr.mxu0 0.0
    %5359 = vmatpush2.msra.mxu0 0.0
    %5360 = vmatprep.subr.mxu0 0.0
    %5361 = vmatpush2.msra.mxu0 0.0
    %5362 = vmatprep.subr.mxu0 0.0
    %5363 = vmatpush2.msra.mxu0 0.0
    %5364 = vmatprep.subr.mxu0 0.0
    %5365 = vmatpush2.msra.mxu0 0.0
    %5366 = vmatprep.mubr.f32.mxu0 0.0
    %5367 = vmatmul.mubr.f32.gmra.mxu0 %v5294
    %v5368 = vpop.f32.mrf.mxu0
    %v5369 = vadd.f32 0.0, %v5368
    %v5370 = vpop.f32.mrf.mxu0
    %5371 = vmatprep.mubr.f32.mxu0 0.0
    %5372 = vmatmul.mubr.f32.gmra.mxu0 %v5297
    %v5373 = vpop.f32.mrf.mxu0
    %v5374 = vadd.f32 0.0, %v5373
    %v5375 = vpop.f32.mrf.mxu0
    %5376 = vmatprep.mubr.f32.mxu0 0.0
    %5377 = vmatmul.mubr.f32.gmra.mxu0 %v5300
    %v5378 = vpop.f32.mrf.mxu0
    %v5379 = vadd.f32 0.0, %v5378
    %v5380 = vpop.f32.mrf.mxu0
    %5381 = vdwg.mxu0
    %v5385 = vrot.slane %v5369, 7
    %v5386 = vrot.slane %v5374, 7
    %v5387 = vsel %vm1587, %v5385, %v5386
    %v5388 = vrot.slane %v5379, 7
    %v5389 = vsel %vm1587, %v5386, %v5388
    %v5393 = vsel %vm1587, %v4849, %v5385
    %v5394 = vadd.f32 %v2997, %v4839
    %v5395 = vadd.f32 %v2998, %v4844
    %v5396 = vadd.f32 %v2999, %v5393
    %v5397 = vadd.f32 %v3000, %v5387
    %v5398 = vadd.f32 %v3001, %v5389
    %v5399 = vld [vmem:[%s1 + $0x1e8] sm:$0x1]
    %v5400 = vlaneseq
    %v5401 = vshrl.u32 %v5400, 7
    %v5402 = vsub.s32 0, %v5401
    %v5403 = vrot.slane %v5399, %v5402
    %v5404 = vadd.f32 %v5394, %v5403
    %v5405 = vadd.f32 %v5395, %v5403
    %v5406 = vadd.f32 %v5396, %v5403
    %v5407 = vadd.f32 %v5397, %v5403
    %v5408 = vadd.f32 %v5398, %v5403
    %v5409 = vld [vmem:[%s1 + $0x1d8] sm:$0x3]
    %v5410 = vsel %vm160, %v5404, 0.0
    %5411 = vadd.xlane.f32.xlu0 %v5410
    %v5412 = vpop.xlane.xlu0 %5411
    %v5413 = vsel %vm160, %v5405, 0.0
    %5414 = vadd.xlane.f32.xlu0 %v5413
    %v5415 = vpop.xlane.xlu0 %5414
    %v5416 = vsel %vm160, %v5406, 0.0
    %5417 = vadd.xlane.f32.xlu0 %v5416
    %v5418 = vpop.xlane.xlu0 %5417
    %v5419 = vsel %vm160, %v5407, 0.0
    %5420 = vadd.xlane.f32.xlu0 %v5419
    %v5421 = vpop.xlane.xlu0 %5420
    %v5422 = vsel %vm173, %v5408, 0.0
    %5423 = vadd.xlane.f32.xlu0 %v5422
    %v5424 = vpop.xlane.xlu0 %5423
    %v5425 = vmul.f32 %v5412, %v177
    %v5426 = vmul.f32 %v5415, %v177
    %v5427 = vmul.f32 %v5418, %v177
    %v5428 = vmul.f32 %v5421, %v177
    %v5429 = vmul.f32 %v5424, %v177
    %v5430 = vsub.f32 %v5404, %v5425
    %v5431 = vsub.f32 %v5405, %v5426
    %v5432 = vsub.f32 %v5406, %v5427
    %v5433 = vsub.f32 %v5407, %v5428
    %v5434 = vsub.f32 %v5408, %v5429
    %v5435 = vmul.f32 %v5430, %v5430
    %v5436 = vmul.f32 %v5431, %v5431
    %v5437 = vmul.f32 %v5432, %v5432
    %v5438 = vmul.f32 %v5433, %v5433
    %v5439 = vmul.f32 %v5434, %v5434
    %v5440 = vsel %vm160, %v5435, 0.0
    %5441 = vadd.xlane.f32.xlu0 %v5440
    %v5442 = vpop.xlane.xlu0 %5441
    %v5443 = vsel %vm160, %v5436, 0.0
    %5444 = vadd.xlane.f32.xlu0 %v5443
    %v5445 = vpop.xlane.xlu0 %5444
    %v5446 = vsel %vm160, %v5437, 0.0
    %5447 = vadd.xlane.f32.xlu0 %v5446
    %v5448 = vpop.xlane.xlu0 %5447
    %v5449 = vsel %vm160, %v5438, 0.0
    %5450 = vadd.xlane.f32.xlu0 %v5449
    %v5451 = vpop.xlane.xlu0 %5450
    %v5452 = vsel %vm173, %v5439, 0.0
    %5453 = vadd.xlane.f32.xlu0 %v5452
    %v5454 = vpop.xlane.xlu0 %5453
    %v5455 = vmul.f32 %v5442, %v177
    %v5456 = vmul.f32 %v5445, %v177
    %v5457 = vmul.f32 %v5448, %v177
    %v5458 = vmul.f32 %v5451, %v177
    %v5459 = vmul.f32 %v5454, %v177
    %v5460 = vadd.f32 %v5455, 1e-05
    %v5461 = vadd.f32 %v5456, 1e-05
    %v5462 = vadd.f32 %v5457, 1e-05
    %v5463 = vadd.f32 %v5458, 1e-05
    %v5464 = vadd.f32 %v5459, 1e-05
    %v5465 = vrsqrt.pop %v5460
    %v5466 = vrsqrt.pop %v5461
    %v5467 = vrsqrt.pop %v5462
    %v5468 = vrsqrt.pop %v5463
    %v5469 = vrsqrt.pop %v5464
    %v5470 = vmul.f32 %v5430, %v5465
    %v5471 = vmul.f32 %v5431, %v5466
    %v5472 = vmul.f32 %v5432, %v5467
    %v5473 = vmul.f32 %v5433, %v5468
    %v5474 = vmul.f32 %v5434, %v5469
    %v5475 = vlaneseq
    %v5476 = vshrl.u32 %v5475, 7
    %v5477 = vsub.s32 0, %v5476
    %v5478 = vrot.slane %v5409, %v5477
    %v5479 = vmul.f32 %v5470, %v5478
    %v5480 = vmul.f32 %v5471, %v5478
    %v5481 = vmul.f32 %v5472, %v5478
    %v5482 = vmul.f32 %v5473, %v5478
    %v5483 = vmul.f32 %v5474, %v5478
    %v5484 = vlaneseq
    %v5485 = vshrl.u32 %v5484, 7
    %v5486 = vsub.s32 1, %v5485
    %v5487 = vrot.slane %v5409, %v5486
    %v5488 = vadd.f32 %v5479, %v5487
    %v5489 = vadd.f32 %v5480, %v5487
    %v5490 = vadd.f32 %v5481, %v5487
    %v5491 = vadd.f32 %v5482, %v5487
    %v5492 = vadd.f32 %v5483, %v5487
    %v5493 = vld [vmem:[%s1 + $0x240] sm:$0xff]
    %v5494 = vld [vmem:[%s1 + $0x248] sm:$0xff]
    %v5495 = vld [vmem:[%s1 + $0x250] sm:$0xff]
    %v5496 = vld [vmem:[%s1 + $0x258] sm:$0xff]
    %v5497 = vld [vmem:[%s1 + $0x1f0] sm:$0x1]
    %v5498 = vlaneseq
    %v5499 = vshrl.u32 %v5498, 7
    %v5500 = vsub.s32 0, %v5499
    %v5501 = vrot.slane %v5497, %v5500
    %v5503 = vsel %vm160, %v5488, 0
    %v5506 = vsel %vm160, %v5489, 0
    %v5509 = vsel %vm160, %v5490, 0
    %v5512 = vsel %vm160, %v5491, 0
    %v5515 = vsel %vm160, %v5492, 0
    %5517 = vmatprep.subr.mxu0 0.0
    %5518 = vmatpush1.msra.mxu0 0.0
    %5519 = vmatprep.subr.mxu0 0.0
    %5520 = vmatpush1.msra.mxu0 0.0
    %5521 = vmatprep.subr.mxu0 0.0
    %5522 = vmatpush1.msra.mxu0 0.0
    %5523 = vmatprep.subr.mxu0 0.0
    %5524 = vmatpush1.msra.mxu0 0.0
    %5525 = vmatprep.subr.mxu0 0.0
    %5526 = vmatpush1.msra.mxu0 0.0
    %5527 = vmatprep.subr.mxu0 0.0
    %5528 = vmatpush1.msra.mxu0 0.0
    %5529 = vmatprep.subr.mxu0 0.0
    %5530 = vmatpush1.msra.mxu0 0.0
    %5531 = vmatprep.subr.mxu0 0.0
    %5532 = vmatpush1.msra.mxu0 0.0
    %5533 = vmatprep.subr.mxu0 0.0
    %5534 = vmatpush1.msra.mxu0 0.0
    %5535 = vmatprep.subr.mxu0 0.0
    %5536 = vmatpush1.msra.mxu0 0.0
    %5537 = vmatprep.subr.mxu0 0.0
    %5538 = vmatpush1.msra.mxu0 0.0
    %5539 = vmatprep.subr.mxu0 0.0
    %5540 = vmatpush1.msra.mxu0 0.0
    %5541 = vmatprep.subr.mxu0 0.0
    %5542 = vmatpush1.msra.mxu0 %v5496
    %5543 = vmatprep.subr.mxu0 0.0
    %5544 = vmatpush1.msra.mxu0 %v5495
    %5545 = vmatprep.subr.mxu0 0.0
    %5546 = vmatpush1.msra.mxu0 %v5494
    %5547 = vmatprep.subr.mxu0 0.0
    %5548 = vmatpush1.msra.mxu0 %v5493
    %5549 = vmatprep.subr.mxu0 0.0
    %5550 = vmatpush2.msra.mxu0 0.0
    %5551 = vmatprep.subr.mxu0 0.0
    %5552 = vmatpush2.msra.mxu0 0.0
    %5553 = vmatprep.subr.mxu0 0.0
    %5554 = vmatpush2.msra.mxu0 0.0
    %5555 = vmatprep.subr.mxu0 0.0
    %5556 = vmatpush2.msra.mxu0 0.0
    %5557 = vmatprep.subr.mxu0 0.0
    %5558 = vmatpush2.msra.mxu0 0.0
    %5559 = vmatprep.subr.mxu0 0.0
    %5560 = vmatpush2.msra.mxu0 0.0
    %5561 = vmatprep.subr.mxu0 0.0
    %5562 = vmatpush2.msra.mxu0 0.0
    %5563 = vmatprep.subr.mxu0 0.0
    %5564 = vmatpush2.msra.mxu0 0.0
    %5565 = vmatprep.subr.mxu0 0.0
    %5566 = vmatpush2.msra.mxu0 0.0
    %5567 = vmatprep.subr.mxu0 0.0
    %5568 = vmatpush2.msra.mxu0 0.0
    %5569 = vmatprep.subr.mxu0 0.0
    %5570 = vmatpush2.msra.mxu0 0.0
    %5571 = vmatprep.subr.mxu0 0.0
    %5572 = vmatpush2.msra.mxu0 0.0
    %5573 = vmatprep.subr.mxu0 0.0
    %5574 = vmatpush2.msra.mxu0 0.0
    %5575 = vmatprep.subr.mxu0 0.0
    %5576 = vmatpush2.msra.mxu0 0.0
    %5577 = vmatprep.subr.mxu0 0.0
    %5578 = vmatpush2.msra.mxu0 0.0
    %5579 = vmatprep.subr.mxu0 0.0
    %5580 = vmatpush2.msra.mxu0 0.0
    %5581 = vmatprep.mubr.f32.mxu0 0.0
    %5582 = vmatmul.mubr.f32.gmra.mxu0 %v5503
    %v5583 = vpop.f32.mrf.mxu0
    %v5584 = vadd.f32 %v5501, %v5583
    %v5585 = vpop.f32.mrf.mxu0
    %5586 = vmatprep.mubr.f32.mxu0 0.0
    %5587 = vmatmul.mubr.f32.gmra.mxu0 %v5506
    %v5588 = vpop.f32.mrf.mxu0
    %v5589 = vadd.f32 %v5501, %v5588
    %v5590 = vpop.f32.mrf.mxu0
    %5591 = vmatprep.mubr.f32.mxu0 0.0
    %5592 = vmatmul.mubr.f32.gmra.mxu0 %v5509
    %v5593 = vpop.f32.mrf.mxu0
    %v5594 = vadd.f32 %v5501, %v5593
    %v5595 = vpop.f32.mrf.mxu0
    %5596 = vmatprep.mubr.f32.mxu0 0.0
    %5597 = vmatmul.mubr.f32.gmra.mxu0 %v5512
    %v5598 = vpop.f32.mrf.mxu0
    %v5599 = vadd.f32 %v5501, %v5598
    %v5600 = vpop.f32.mrf.mxu0
    %5601 = vmatprep.mubr.f32.mxu0 0.0
    %5602 = vmatmul.mubr.f32.gmra.mxu0 %v5515
    %v5603 = vpop.f32.mrf.mxu0
    %v5604 = vadd.f32 %v5501, %v5603
    %v5605 = vpop.f32.mrf.mxu0
    %5606 = vdwg.mxu0
    %v5607 = vmul.f32 %v5584, 1.702
    %v5608 = vmul.f32 %v5589, 1.702
    %v5609 = vmul.f32 %v5594, 1.702
    %v5610 = vmul.f32 %v5599, 1.702
    %v5611 = vmul.f32 %v5604, 1.702
    %v5612 = vxor.u32 %v5607, 2147483648
    %v5613 = vxor.u32 %v5608, 2147483648
    %v5614 = vxor.u32 %v5609, 2147483648
    %v5615 = vxor.u32 %v5610, 2147483648
    %v5616 = vxor.u32 %v5611, 2147483648
    %v5617 = vmul.f32 %v5612, 1.442695
    %v5618 = vpow.pop %v5617
    %v5619 = vmul.f32 %v5613, 1.442695
    %v5620 = vpow.pop %v5619
    %v5621 = vmul.f32 %v5614, 1.442695
    %v5622 = vpow.pop %v5621
    %v5623 = vmul.f32 %v5615, 1.442695
    %v5624 = vpow.pop %v5623
    %v5625 = vmul.f32 %v5616, 1.442695
    %v5626 = vpow.pop %v5625
    %v5627 = vadd.f32 %v5618, 1.0
    %v5628 = vadd.f32 %v5620, 1.0
    %v5629 = vadd.f32 %v5622, 1.0
    %v5630 = vadd.f32 %v5624, 1.0
    %v5631 = vadd.f32 %v5626, 1.0
    %v5632 = vrcp.pop %v5627
    %v5633 = vmul.f32 1.0, %v5632
    %v5634 = vrcp.pop %v5628
    %v5635 = vmul.f32 1.0, %v5634
    %v5636 = vrcp.pop %v5629
    %v5637 = vmul.f32 1.0, %v5636
    %v5638 = vrcp.pop %v5630
    %v5639 = vmul.f32 1.0, %v5638
    %v5640 = vrcp.pop %v5631
    %v5641 = vmul.f32 1.0, %v5640
    %v5642 = vmul.f32 %v5584, %v5633
    %v5643 = vmul.f32 %v5589, %v5635
    %v5644 = vmul.f32 %v5594, %v5637
    %v5645 = vmul.f32 %v5599, %v5639
    %v5646 = vmul.f32 %v5604, %v5641
    %v5647 = vld [vmem:[%s1 + $0x260] sm:$0xff]
    %v5648 = vld [vmem:[%s1 + $0x268] sm:$0xff]
    %v5649 = vld [vmem:[%s1 + $0x270] sm:$0xff]
    %v5650 = vld [vmem:[%s1 + $0x278] sm:$0xff]
    %v5651 = vld [vmem:[%s1 + $0x1f8] sm:$0x1]
    %v5652 = vlaneseq
    %v5653 = vshrl.u32 %v5652, 7
    %v5654 = vsub.s32 0, %v5653
    %v5655 = vrot.slane %v5651, %v5654
    %5656 = vmatprep.subr.mxu0 0.0
    %5657 = vmatpush1.xpose.msra.mxu0 0.0
    %5658 = vmatprep.subr.mxu0 0.0
    %5659 = vmatpush1.xpose.msra.mxu0 0.0
    %5660 = vmatprep.subr.mxu0 0.0
    %5661 = vmatpush1.xpose.msra.mxu0 0.0
    %5662 = vmatprep.subr.mxu0 0.0
    %5663 = vmatpush1.xpose.msra.mxu0 0.0
    %5664 = vmatprep.subr.mxu0 0.0
    %5665 = vmatpush1.xpose.msra.mxu0 0.0
    %5666 = vmatprep.subr.mxu0 0.0
    %5667 = vmatpush1.xpose.msra.mxu0 0.0
    %5668 = vmatprep.subr.mxu0 0.0
    %5669 = vmatpush1.xpose.msra.mxu0 0.0
    %5670 = vmatprep.subr.mxu0 0.0
    %5671 = vmatpush1.xpose.msra.mxu0 0.0
    %5672 = vmatprep.subr.mxu0 0.0
    %5673 = vmatpush1.xpose.msra.mxu0 0.0
    %5674 = vmatprep.subr.mxu0 0.0
    %5675 = vmatpush1.xpose.msra.mxu0 0.0
    %5676 = vmatprep.subr.mxu0 0.0
    %5677 = vmatpush1.xpose.msra.mxu0 0.0
    %5678 = vmatprep.subr.mxu0 0.0
    %5679 = vmatpush1.xpose.msra.mxu0 0.0
    %5680 = vmatprep.subr.mxu0 0.0
    %5681 = vmatpush1.xpose.msra.mxu0 %v5650
    %5682 = vmatprep.subr.mxu0 0.0
    %5683 = vmatpush1.xpose.msra.mxu0 %v5649
    %5684 = vmatprep.subr.mxu0 0.0
    %5685 = vmatpush1.xpose.msra.mxu0 %v5648
    %5686 = vmatprep.subr.mxu0 0.0
    %5687 = vmatpush1.xpose.msra.mxu0 %v5647
    %5688 = vmatprep.subr.mxu0 0.0
    %5689 = vmatpush2.xpose.msra.mxu0 0.0
    %5690 = vmatprep.subr.mxu0 0.0
    %5691 = vmatpush2.xpose.msra.mxu0 0.0
    %5692 = vmatprep.subr.mxu0 0.0
    %5693 = vmatpush2.xpose.msra.mxu0 0.0
    %5694 = vmatprep.subr.mxu0 0.0
    %5695 = vmatpush2.xpose.msra.mxu0 0.0
    %5696 = vmatprep.subr.mxu0 0.0
    %5697 = vmatpush2.xpose.msra.mxu0 0.0
    %5698 = vmatprep.subr.mxu0 0.0
    %5699 = vmatpush2.xpose.msra.mxu0 0.0
    %5700 = vmatprep.subr.mxu0 0.0
    %5701 = vmatpush2.xpose.msra.mxu0 0.0
    %5702 = vmatprep.subr.mxu0 0.0
    %5703 = vmatpush2.xpose.msra.mxu0 0.0
    %5704 = vmatprep.subr.mxu0 0.0
    %5705 = vmatpush2.xpose.msra.mxu0 0.0
    %5706 = vmatprep.subr.mxu0 0.0
    %5707 = vmatpush2.xpose.msra.mxu0 0.0
    %5708 = vmatprep.subr.mxu0 0.0
    %5709 = vmatpush2.xpose.msra.mxu0 0.0
    %5710 = vmatprep.subr.mxu0 0.0
    %5711 = vmatpush2.xpose.msra.mxu0 0.0
    %5712 = vmatprep.subr.mxu0 0.0
    %5713 = vmatpush2.xpose.msra.mxu0 0.0
    %5714 = vmatprep.subr.mxu0 0.0
    %5715 = vmatpush2.xpose.msra.mxu0 0.0
    %5716 = vmatprep.subr.mxu0 0.0
    %5717 = vmatpush2.xpose.msra.mxu0 0.0
    %5718 = vmatprep.subr.mxu0 0.0
    %5719 = vmatpush2.xpose.msra.mxu0 0.0
    %5720 = vmatprep.mubr.f32.mxu0 0.0
    %5721 = vmatmul.mubr.f32.gmra.mxu0 %v5642
    %v5722 = vpop.f32.mrf.mxu0
    %v5723 = vadd.f32 %v5655, %v5722
    %v5724 = vpop.f32.mrf.mxu0
    %5725 = vmatprep.mubr.f32.mxu0 0.0
    %5726 = vmatmul.mubr.f32.gmra.mxu0 %v5643
    %v5727 = vpop.f32.mrf.mxu0
    %v5728 = vpop.f32.mrf.mxu0
    %5729 = vmatprep.mubr.f32.mxu0 0.0
    %5730 = vmatmul.mubr.f32.gmra.mxu0 %v5644
    %v5731 = vpop.f32.mrf.mxu0
    %v5732 = vadd.f32 %v5655, %v5731
    %v5733 = vpop.f32.mrf.mxu0
    %5734 = vmatprep.mubr.f32.mxu0 0.0
    %5735 = vmatmul.mubr.f32.gmra.mxu0 %v5645
    %v5736 = vpop.f32.mrf.mxu0
    %v5737 = vpop.f32.mrf.mxu0
    %5738 = vmatprep.mubr.f32.mxu0 0.0
    %5739 = vmatmul.mubr.f32.gmra.mxu0 %v5646
    %v5740 = vpop.f32.mrf.mxu0
    %v5741 = vpop.f32.mrf.mxu0
    %5742 = vdwg.mxu0
    %v5743 = vadd.f32 %v5404, %v5723
    %v5744 = vadd.f32 %v5406, %v5732
    %v5745 = vsel %vm1587, %v5743, %v5744
    %v5746 = vld [vmem:[%s1 + $0xf0] sm:$0x3]
    %v5747 = vsel %vm173, %v5745, 0.0
    %5748 = vadd.xlane.f32.xlu0 %v5747
    %v5749 = vpop.xlane.xlu0 %5748
    %v5750 = vmul.f32 %v5749, %v177
    %v5751 = vsub.f32 %v5745, %v5750
    %v5752 = vmul.f32 %v5751, %v5751
    %v5753 = vsel %vm173, %v5752, 0.0
    %5754 = vadd.xlane.f32.xlu0 %v5753
    %v5755 = vpop.xlane.xlu0 %5754
    %v5756 = vmul.f32 %v5755, %v177
    %v5757 = vadd.f32 %v5756, 1e-05
    %v5758 = vrsqrt.pop %v5757
    %v5759 = vmul.f32 %v5751, %v5758
    %v5760 = vlaneseq
    %v5761 = vshrl.u32 %v5760, 7
    %v5762 = vsub.s32 0, %v5761
    %v5763 = vrot.slane %v5746, %v5762
    %v5764 = vmul.f32 %v5759, %v5763
    %v5765 = vlaneseq
    %v5766 = vshrl.u32 %v5765, 7
    %v5767 = vsub.s32 1, %v5766
    %v5768 = vrot.slane %v5746, %v5767
    %v5769 = vadd.f32 %v5764, %v5768
    %v5770 = vld [vmem:[%s1 + $0xf8] sm:$0xff]
    %v5771 = vld [vmem:[%s1 + $0x100] sm:$0xff]
    %v5772 = vld [vmem:[%s1 + $0x108] sm:$0xff]
    %v5773 = vld [vmem:[%s1 + $0x110] sm:$0xff]
    %v5775 = vsel %vm160, %v5769, 0
    %5777 = vmatprep.subr.mxu0 0.0
    %5778 = vmatpush1.msra.mxu0 0.0
    %5779 = vmatprep.subr.mxu0 0.0
    %5780 = vmatpush1.msra.mxu0 0.0
    %5781 = vmatprep.subr.mxu0 0.0
    %5782 = vmatpush1.msra.mxu0 0.0
    %5783 = vmatprep.subr.mxu0 0.0
    %5784 = vmatpush1.msra.mxu0 0.0
    %5785 = vmatprep.subr.mxu0 0.0
    %5786 = vmatpush1.msra.mxu0 0.0
    %5787 = vmatprep.subr.mxu0 0.0
    %5788 = vmatpush1.msra.mxu0 0.0
    %5789 = vmatprep.subr.mxu0 0.0
    %5790 = vmatpush1.msra.mxu0 0.0
    %5791 = vmatprep.subr.mxu0 0.0
    %5792 = vmatpush1.msra.mxu0 0.0
    %5793 = vmatprep.subr.mxu0 0.0
    %5794 = vmatpush1.msra.mxu0 0.0
    %5795 = vmatprep.subr.mxu0 0.0
    %5796 = vmatpush1.msra.mxu0 0.0
    %5797 = vmatprep.subr.mxu0 0.0
    %5798 = vmatpush1.msra.mxu0 0.0
    %5799 = vmatprep.subr.mxu0 0.0
    %5800 = vmatpush1.msra.mxu0 0.0
    %5801 = vmatprep.subr.mxu0 0.0
    %5802 = vmatpush1.msra.mxu0 %v5773
    %5803 = vmatprep.subr.mxu0 0.0
    %5804 = vmatpush1.msra.mxu0 %v5772
    %5805 = vmatprep.subr.mxu0 0.0
    %5806 = vmatpush1.msra.mxu0 %v5771
    %5807 = vmatprep.subr.mxu0 0.0
    %5808 = vmatpush1.msra.mxu0 %v5770
    %5809 = vmatprep.subr.mxu0 0.0
    %5810 = vmatpush2.msra.mxu0 0.0
    %5811 = vmatprep.subr.mxu0 0.0
    %5812 = vmatpush2.msra.mxu0 0.0
    %5813 = vmatprep.subr.mxu0 0.0
    %5814 = vmatpush2.msra.mxu0 0.0
    %5815 = vmatprep.subr.mxu0 0.0
    %5816 = vmatpush2.msra.mxu0 0.0
    %5817 = vmatprep.subr.mxu0 0.0
    %5818 = vmatpush2.msra.mxu0 0.0
    %5819 = vmatprep.subr.mxu0 0.0
    %5820 = vmatpush2.msra.mxu0 0.0
    %5821 = vmatprep.subr.mxu0 0.0
    %5822 = vmatpush2.msra.mxu0 0.0
    %5823 = vmatprep.subr.mxu0 0.0
    %5824 = vmatpush2.msra.mxu0 0.0
    %5825 = vmatprep.subr.mxu0 0.0
    %5826 = vmatpush2.msra.mxu0 0.0
    %5827 = vmatprep.subr.mxu0 0.0
    %5828 = vmatpush2.msra.mxu0 0.0
    %5829 = vmatprep.subr.mxu0 0.0
    %5830 = vmatpush2.msra.mxu0 0.0
    %5831 = vmatprep.subr.mxu0 0.0
    %5832 = vmatpush2.msra.mxu0 0.0
    %5833 = vmatprep.subr.mxu0 0.0
    %5834 = vmatpush2.msra.mxu0 0.0
    %5835 = vmatprep.subr.mxu0 0.0
    %5836 = vmatpush2.msra.mxu0 0.0
    %5837 = vmatprep.subr.mxu0 0.0
    %5838 = vmatpush2.msra.mxu0 0.0
    %5839 = vmatprep.subr.mxu0 0.0
    %5840 = vmatpush2.msra.mxu0 0.0
    %5841 = vmatprep.mubr.f32.mxu0 0.0
    %5842 = vmatmul.mubr.f32.gmra.mxu0 %v5775
    %v5843 = vpop.f32.mrf.mxu0
    %v5844 = vadd.f32 0.0, %v5843
    %v5845 = vpop.f32.mrf.mxu0
    %5846 = vdwg.mxu0
    %v5847 = vmul.f32 %v5844, %v5844
    %vm5848 = vcmask 123904
    %v5849 = vsel %vm5848, %v5847, 0.0
    %5850 = vadd.xlane.f32.xlu0 %v5849
    %v5851 = vpop.xlane.xlu0 %5850
    %v5852 = vrsqrt.pop %v5851
    %v5853 = vmul.f32 %v5844, %v5852
    %v5854 = vld [vmem:[%s1 + $0x118] sm:$0x1]
    %v5855 = vmul.f32 %v5854, %v5854
    %vm5856 = vcmask 122880
    %v5857 = vsel %vm5856, %v5855, 0.0
    %5858 = vadd.xlane.f32.xlu0 %v5857
    %v5859 = vpop.xlane.xlu0 %5858
    %v5860 = vrsqrt.pop %v5859
    %v5861 = vmul.f32 %v5854, %v5860
    %v5862 = vlaneseq
    %v5863 = vshrl.u32 %v5862, 7
    %v5864 = vsub.s32 0, %v5863
    %v5865 = vrot.slane %v5861, %v5864
    %v5866 = vmul.f32 %v5853, %v5865
    %v5867 = vsel %vm5848, %v5866, 0.0
    %5868 = vadd.xlane.f32.xlu0 %v5867
    %v5869 = vpop.xlane.xlu0 %5868
    %v5870 = vmul.f32 %v5869, 14.284857
    %v5871 = vsub.f32 %v5870, %v5870
    %v5872 = vmul.f32 %v5871, 1.442695
    %v5873 = vpow.pop %v5872
    %v5874 = vadd.f32 %v5873, 0.0
    %v5875 = vrcp.pop %v5874
    %v5876 = vmul.f32 %v5873, %v5875
    %5877 = vst [vmem:[%s2] sm:$0x3] %v5876
    %5878 = vst.msk [vmem:[#allocation2] sm:$0x3] %vm5848, %v5853
    // Predicated region
    $region10: #{_forward_impl.1} parent=1 // pred_check
      _
    $region11: #{_forward_impl.1} parent=1 // pred_check_branch
      %5880 = sbr.rel (0) target = $region13
    $region12: #{_forward_impl.1} parent=1 // pred_region
      _
    $region13: #{_forward_impl.1} parent=1 // pred_fallthru
      _
    // Predicated region
    $region14: #{_forward_impl.1} parent=1 // pred_check
      _
    $region15: #{_forward_impl.1} parent=1 // pred_check_branch
      %5882 = sbr.rel (0) target = $region17
    $region16: #{_forward_impl.1} parent=1 // pred_region
      %s5884 = ssub.s32 32, 32
      %5885 = vsyncadd [#allocation3], %s5884
      %s5887 = sshll.u32 [#allocation2], 4
      %s5888 = int_to_ptr.vmem [resolvable:$true] %s5887
      %5890 = dma.vmem_to_hbm [thread:$0]  %s5888, 32, %s3, [#allocation3]
    $region17: #{_forward_impl.1} parent=1 // pred_fallthru
      _
    // Predicated region
    $region18: #{_forward_impl.1} parent=1 // pred_check
      _
    $region19: #{_forward_impl.1} parent=1 // pred_check_branch
      %5892 = sbr.rel (0) target = $region21
    $region20: #{_forward_impl.1} parent=1 // pred_region
      _
    $region21: #{_forward_impl.1} parent=1 // pred_fallthru
      _
    // Predicated region
    $region22: #{_forward_impl.1} parent=1 // pred_check
      _
    $region23: #{_forward_impl.1} parent=1 // pred_check_branch
      %5894 = sbr.rel (0) target = $region25
    $region24: #{_forward_impl.1} parent=1 // pred_region
      %5895 = dma.done [#allocation3], 32
    $region25: #{_forward_impl.1} parent=1 // pred_fallthru
      _
    %5896 = vsyncpa [#allocation3], 1

</llo_original>
